<compile_context>
chip_gen: v6e
topology: v6e:2x2x1
jax: 0.10.0
libtpu: 0.0.40
codegen_flags: <defaults>
</compile_context>

<pallas_src>
import numpy as np
import jax
import jax.numpy as jnp
from jax.experimental import pallas as pl
from jax.experimental.pallas import tpu as pltpu

BN_EPS = 1e-5


# ----------------------------------------------------------------------------
# Fused forward kernel
# ----------------------------------------------------------------------------
def _two_inputs_kernel(p1_ref, p2_ref, w1_ref, b1_ref, w2_ref, b2_ref,
                       w3_ref, b3_ref, g3_ref, pada_ref, mq_ref,
                       fcw_ref, dmask_ref, esel_ref, fcb_ref, out_ref):
    f32, bf16 = jnp.float32, jnp.bfloat16
    B = p1_ref.shape[0]
    n_tap3 = g3_ref.shape[0]      # 9  conv3 taps (3x3)
    n_tapm = mq_ref.shape[0]      # 4  maxpool taps (2x2)

    w1 = w1_ref[...]              # (16, 12)   bf16, bn1 scale folded
    b1 = b1_ref[...]              # (16, 1)    f32
    w2 = w2_ref[...]              # (8, 27)    bf16, bn2 scale folded
    b2 = b2_ref[...]              # (8, 1)     f32
    b3 = b3_ref[...]              # (16, 1)    f32
    pada = pada_ref[...]          # (100, 324) bf16
    fcw = fcw_ref[...]            # (100, C*nc) bf16
    dmask = dmask_ref[...]        # (16, C*nc) f32
    esel = esel_ref[...]          # (C*nc, nc) f32
    fcb = fcb_ref[...]            # (1, nc)    f32

    cols = []
    for b in range(B):            # B is tiny (2): unrolled
        # conv1 (k2,s2,p2) + folded bn1 -> (16, 18*18)
        x1 = jnp.dot(w1, p1_ref[b], preferred_element_type=f32) + b1
        # conv2 (k3,s2,p2) + folded bn2 (conv bias folded too) -> (8, 17*17)
        x2 = jnp.dot(w2, p2_ref[b], preferred_element_type=f32) + b2
        x2 = x2.astype(bf16)
        # conv3 (k3,s2,p2): gather each of the 9 taps with a 0/1 selection
        # matmul, then mix channels with the matching weight slice.
        acc = jnp.zeros((b3.shape[0], g3_ref.shape[2]), f32)        # (16, 100)
        for t in range(n_tap3):
            xt = jnp.dot(x2, g3_ref[t], preferred_element_type=f32)      # (8, 100)
            acc = acc + jnp.dot(w3_ref[t], xt.astype(bf16),
                                preferred_element_type=f32)              # (16, 100)
        x3 = (acc + b3).astype(bf16)
        # AdaptiveAvgPool2d(18): separable pooling weights kron'ed into one matrix
        xa = jnp.dot(x3, pada, preferred_element_type=f32)               # (16, 324)
        # add + ReLU
        y = jnp.maximum(x1 + xa, 0.0).astype(bf16)                       # (16, 324)
        # MaxPool2d(2,2,p=1): max over the 4 window taps.  y >= 0 post-ReLU,
        # so the all-zero (out-of-range) columns behave like -inf padding.
        pooled = jnp.dot(y, mq_ref[0], preferred_element_type=f32)       # (16, 100)
        for q in range(1, n_tapm):
            pooled = jnp.maximum(
                pooled, jnp.dot(y, mq_ref[q], preferred_element_type=f32))
        # fc over the NCHW flatten: contract spatial first, then keep only the
        # matching-channel block and reduce over channels.
        z = jnp.dot(pooled.astype(bf16), fcw, preferred_element_type=f32)  # (16, C*nc)
        cols.append(jnp.sum(z * dmask, axis=0, keepdims=True))             # (1, C*nc)

    col_all = jnp.concatenate(cols, axis=0)                                # (B, C*nc)
    out_ref[...] = jnp.dot(col_all, esel, preferred_element_type=f32) + fcb


# ----------------------------------------------------------------------------
# Glue: patch extraction, weight folds, constant selection matrices
# ----------------------------------------------------------------------------
def _im2col_T(x_nchw, k, stride, pad):
    """(B, k*k*Cin, Ho*Wo) patches, transposed for lane-dense matmul outputs.

    Feature order (kh, kw, ci); spatial order row-major (ho, wo)."""
    B, C, H, W = x_nchw.shape
    x = jnp.transpose(x_nchw, (0, 2, 3, 1))                    # NHWC
    xp = jnp.pad(x, ((0, 0), (pad, pad), (pad, pad), (0, 0)))
    Ho = (H + 2 * pad - k) // stride + 1
    Wo = (W + 2 * pad - k) // stride + 1
    cols = []
    for kh in range(k):
        for kw in range(k):
            cols.append(xp[:, kh:kh + stride * (Ho - 1) + 1:stride,
                           kw:kw + stride * (Wo - 1) + 1:stride, :])
    p = jnp.concatenate(cols, axis=-1)                         # (B, Ho, Wo, k*k*C)
    return jnp.transpose(p, (0, 3, 1, 2)).reshape(B, k * k * C, Ho * Wo)


def _conv_weight_rows(w_pt, scale=None):
    """(Cout, Cin, kh, kw) -> (Cout, kh*kw*Cin); optional per-Cout BN scale fold."""
    cout, cin, kh, kw = w_pt.shape
    wm = jnp.transpose(w_pt, (0, 2, 3, 1)).reshape(cout, kh * kw * cin)
    if scale is not None:
        wm = wm * scale[:, None]
    return wm


def _strided_tap_gather(in_size, k, stride, pad):
    """(k*k, in_size^2, out^2) 0/1 matrices: column (i*out+j) of tap (kh*k+kw)
    selects input element (i*stride+kh-pad, j*stride+kw-pad), zero if padded."""
    out = (in_size + 2 * pad - k) // stride + 1
    g = np.zeros((k * k, in_size * in_size, out * out), np.float32)
    for kh in range(k):
        for kw in range(k):
            t = kh * k + kw
            for i in range(out):
                h = i * stride + kh - pad
                if not 0 <= h < in_size:
                    continue
                for j in range(out):
                    w = j * stride + kw - pad
                    if not 0 <= w < in_size:
                        continue
                    g[t, h * in_size + w, i * out + j] = 1.0
    return g


def _ada_pool_matrix(out_size, in_size):
    """(in_size^2, out_size^2) separable AdaptiveAvgPool2d weights."""
    m = np.zeros((out_size, in_size), np.float32)
    for i in range(out_size):
        s = (i * in_size) // out_size
        e = -(-((i + 1) * in_size) // out_size)   # ceil
        m[i, s:e] = 1.0 / (e - s)
    return np.einsum("ih,jw->hwij", m, m).reshape(in_size * in_size,
                                                  out_size * out_size)


def _fc_prep(fc_w, fc_b, C, S):
    """fc applied to the NCHW flatten while the activation stays a (C, S) tile.

    fcw[p, c*nc+n] = fc_w[n, c*S+p];  dmask keeps only matching-channel blocks;
    esel sums the per-channel partials into the nc logits."""
    nc = fc_w.shape[0]
    fcw = jnp.transpose(fc_w.reshape(nc, C, S), (2, 1, 0)).reshape(S, C * nc)
    dmask = np.zeros((C, C * nc), np.float32)
    esel = np.zeros((C * nc, nc), np.float32)
    for c in range(C):
        dmask[c, c * nc:(c + 1) * nc] = 1.0
        esel[c * nc:(c + 1) * nc, :] = np.eye(nc, dtype=np.float32)
    return fcw, jnp.asarray(dmask), jnp.asarray(esel), fc_b.reshape(1, nc)


# ----------------------------------------------------------------------------
# TwoInputs forward
# ----------------------------------------------------------------------------
def two_inputs_forward(p, in0_nchw, in1_nchw):
    f32, bf16 = jnp.float32, jnp.bfloat16
    B = in0_nchw.shape[0]
    nc = p["fc_w"].shape[0]

    # conv1 (no bias) + bn1 folded into weight scale / bias
    s1 = p["bn1_gamma"] / jnp.sqrt(p["bn1_var"] + BN_EPS)
    b1 = p["bn1_beta"] - p["bn1_mean"] * s1
    w1 = _conv_weight_rows(p["conv1_w"], s1)                    # (16, 12)
    p1 = _im2col_T(in0_nchw, k=2, stride=2, pad=2)              # (B, 12, 324)

    # conv2 (+bias) + bn2 folded
    s2 = p["bn2_gamma"] / jnp.sqrt(p["bn2_var"] + BN_EPS)
    b2 = (p["conv2_b"] - p["bn2_mean"]) * s2 + p["bn2_beta"]
    w2 = _conv_weight_rows(p["conv2_w"], s2)                    # (8, 27)
    p2 = _im2col_T(in1_nchw, k=3, stride=2, pad=2)              # (B, 27, 289)

    # conv3 weights per tap (t = kh*3 + kw); bias added in-kernel
    w3 = jnp.transpose(p["conv3_w"], (2, 3, 0, 1)).reshape(9, 16, 8)
    b3 = p["conv3_b"]

    # Constant gather / pooling / selection matrices (values 0,1,1/2,1/4 -> exact bf16)
    g3 = jnp.asarray(_strided_tap_gather(17, k=3, stride=2, pad=2))   # (9, 289, 100)
    pada = jnp.asarray(_ada_pool_matrix(18, 10))                      # (100, 324)
    mq = jnp.asarray(_strided_tap_gather(18, k=2, stride=2, pad=1))   # (4, 324, 100)
    fcw, dmask, esel, fcb = _fc_prep(p["fc_w"], p["fc_b"], C=16, S=100)

    return pl.pallas_call(
        _two_inputs_kernel,
        out_shape=jax.ShapeDtypeStruct((B, nc), f32),
        in_specs=[pl.BlockSpec(memory_space=pltpu.MemorySpace.VMEM)] * 15,
        out_specs=pl.BlockSpec(memory_space=pltpu.MemorySpace.VMEM),
    )(p1.astype(bf16), p2.astype(bf16),
      w1.astype(bf16), b1.reshape(-1, 1).astype(f32),
      w2.astype(bf16), b2.reshape(-1, 1).astype(f32),
      w3.astype(bf16), b3.reshape(-1, 1).astype(f32),
      g3.astype(bf16), pada.astype(bf16), mq.astype(bf16),
      fcw.astype(bf16), dmask, esel, fcb.astype(f32))


def init_params(key, num_classes=3):
    ks = jax.random.split(key, 16)
    n = lambda k, s: 0.1 * jax.random.normal(k, s, jnp.float32)
    return {
        "conv1_w": n(ks[0], (16, 3, 2, 2)),
        "conv2_w": n(ks[1], (8, 3, 3, 3)),
        "conv2_b": n(ks[2], (8,)),
        "conv3_w": n(ks[3], (16, 8, 3, 3)),
        "conv3_b": n(ks[4], (16,)),
        "bn1_gamma": 1.0 + n(ks[5], (16,)),
        "bn1_beta": n(ks[6], (16,)),
        "bn1_mean": n(ks[7], (16,)),
        "bn1_var": 0.5 + jnp.abs(n(ks[8], (16,))),
        "bn2_gamma": 1.0 + n(ks[9], (8,)),
        "bn2_beta": n(ks[10], (8,)),
        "bn2_mean": n(ks[11], (8,)),
        "bn2_var": 0.5 + jnp.abs(n(ks[12], (8,))),
        "fc_w": n(ks[13], (num_classes, 1600)),
        "fc_b": n(ks[14], (num_classes,)),
    }


if __name__ == "__main__":
    key = jax.random.PRNGKey(0)
    k_params, k_in0, k_in1 = jax.random.split(key, 3)
    params = init_params(k_params, num_classes=3)
    # 32x32 inputs make fc(1600, .) line up: conv1 -> 18x18, branch2 -> 18x18,
    # maxpool -> 10x10, flatten = 16*10*10 = 1600.
    in0 = jax.random.normal(k_in0, (2, 3, 32, 32), jnp.float32)
    in1 = jax.random.normal(k_in1, (2, 3, 32, 32), jnp.float32)

    fwd = jax.jit(two_inputs_forward)
    out = jax.block_until_ready(fwd(params, in0, in1))
    assert out.shape == (2, 3), out.shape
    print("KERNEL_OK")
</pallas_src>

<mosaic_0001>
module attributes {stable_mosaic.version = 11 : i64} {
  func.func @_two_inputs_kernel(%arg0: memref<2x12x324xbf16, #tpu.memory_space<vmem>>, %arg1: memref<2x27x289xbf16, #tpu.memory_space<vmem>>, %arg2: memref<16x12xbf16, #tpu.memory_space<vmem>>, %arg3: memref<16x1xf32, #tpu.memory_space<vmem>>, %arg4: memref<8x27xbf16, #tpu.memory_space<vmem>>, %arg5: memref<8x1xf32, #tpu.memory_space<vmem>>, %arg6: memref<9x16x8xbf16, #tpu.memory_space<vmem>>, %arg7: memref<16x1xf32, #tpu.memory_space<vmem>>, %arg8: memref<9x289x100xbf16, #tpu.memory_space<vmem>>, %arg9: memref<100x324xbf16, #tpu.memory_space<vmem>>, %arg10: memref<4x324x100xbf16, #tpu.memory_space<vmem>>, %arg11: memref<100x48xbf16, #tpu.memory_space<vmem>>, %arg12: memref<16x48xf32, #tpu.memory_space<vmem>>, %arg13: memref<48x3xf32, #tpu.memory_space<vmem>>, %arg14: memref<1x3xf32, #tpu.memory_space<vmem>>, %arg15: memref<2x3xf32, #tpu.memory_space<vmem>>) attributes {dimension_semantics = [], scalar_prefetch = 0 : i64, scratch_operands = 0 : i64, tpu.core_type = #tpu.core_type<tc>} {
    %c0 = arith.constant 0 : index
    %c0_0 = arith.constant 0 : index
    %0 = vector.load %arg2[%c0, %c0_0] : memref<16x12xbf16, #tpu.memory_space<vmem>>, vector<16x12xbf16>
    %c0_1 = arith.constant 0 : index
    %c0_2 = arith.constant 0 : index
    %1 = vector.load %arg3[%c0_1, %c0_2] : memref<16x1xf32, #tpu.memory_space<vmem>>, vector<16x1xf32>
    %c0_3 = arith.constant 0 : index
    %c0_4 = arith.constant 0 : index
    %2 = vector.load %arg4[%c0_3, %c0_4] : memref<8x27xbf16, #tpu.memory_space<vmem>>, vector<8x27xbf16>
    %c0_5 = arith.constant 0 : index
    %c0_6 = arith.constant 0 : index
    %3 = vector.load %arg5[%c0_5, %c0_6] : memref<8x1xf32, #tpu.memory_space<vmem>>, vector<8x1xf32>
    %c0_7 = arith.constant 0 : index
    %c0_8 = arith.constant 0 : index
    %4 = vector.load %arg7[%c0_7, %c0_8] : memref<16x1xf32, #tpu.memory_space<vmem>>, vector<16x1xf32>
    %c0_9 = arith.constant 0 : index
    %c0_10 = arith.constant 0 : index
    %5 = vector.load %arg9[%c0_9, %c0_10] : memref<100x324xbf16, #tpu.memory_space<vmem>>, vector<100x324xbf16>
    %c0_11 = arith.constant 0 : index
    %c0_12 = arith.constant 0 : index
    %6 = vector.load %arg11[%c0_11, %c0_12] : memref<100x48xbf16, #tpu.memory_space<vmem>>, vector<100x48xbf16>
    %c0_13 = arith.constant 0 : index
    %c0_14 = arith.constant 0 : index
    %7 = vector.load %arg12[%c0_13, %c0_14] : memref<16x48xf32, #tpu.memory_space<vmem>>, vector<16x48xf32>
    %c0_15 = arith.constant 0 : index
    %c0_16 = arith.constant 0 : index
    %8 = vector.load %arg13[%c0_15, %c0_16] : memref<48x3xf32, #tpu.memory_space<vmem>>, vector<48x3xf32>
    %c0_17 = arith.constant 0 : index
    %c0_18 = arith.constant 0 : index
    %9 = vector.load %arg14[%c0_17, %c0_18] : memref<1x3xf32, #tpu.memory_space<vmem>>, vector<1x3xf32>
    %c0_19 = arith.constant 0 : index
    %c0_20 = arith.constant 0 : index
    %c0_21 = arith.constant 0 : index
    %10 = vector.load %arg0[%c0_19, %c0_20, %c0_21] : memref<2x12x324xbf16, #tpu.memory_space<vmem>>, vector<1x12x324xbf16>
    %11 = vector.shape_cast %10 : vector<1x12x324xbf16> to vector<12x324xbf16>
    %cst = arith.constant dense<0.000000e+00> : vector<16x324xf32>
    %12 = tpu.matmul %0, %11, %cst {dimension_numbers = #tpu.dot_dimension_numbers<[1], [0], [0], [1], [0, 0, 1, 1], [], []>} : vector<16x12xbf16>, vector<12x324xbf16>, vector<16x324xf32> -> vector<16x324xf32>
    %13 = vector.broadcast %1 : vector<16x1xf32> to vector<16x324xf32>
    %14 = arith.addf %12, %13 : vector<16x324xf32>
    %c0_22 = arith.constant 0 : index
    %c0_23 = arith.constant 0 : index
    %c0_24 = arith.constant 0 : index
    %15 = vector.load %arg1[%c0_22, %c0_23, %c0_24] : memref<2x27x289xbf16, #tpu.memory_space<vmem>>, vector<1x27x289xbf16>
    %16 = vector.shape_cast %15 : vector<1x27x289xbf16> to vector<27x289xbf16>
    %cst_25 = arith.constant dense<0.000000e+00> : vector<8x289xf32>
    %17 = tpu.matmul %2, %16, %cst_25 {dimension_numbers = #tpu.dot_dimension_numbers<[1], [0], [0], [1], [0, 0, 1, 1], [], []>} : vector<8x27xbf16>, vector<27x289xbf16>, vector<8x289xf32> -> vector<8x289xf32>
    %18 = vector.broadcast %3 : vector<8x1xf32> to vector<8x289xf32>
    %19 = arith.addf %17, %18 : vector<8x289xf32>
    %20 = arith.truncf %19 : vector<8x289xf32> to vector<8x289xbf16>
    %cst_26 = arith.constant 0.000000e+00 : f32
    %21 = vector.broadcast %cst_26 : f32 to vector<16x100xf32>
    %c0_27 = arith.constant 0 : index
    %c0_28 = arith.constant 0 : index
    %c0_29 = arith.constant 0 : index
    %22 = vector.load %arg8[%c0_27, %c0_28, %c0_29] : memref<9x289x100xbf16, #tpu.memory_space<vmem>>, vector<1x289x100xbf16>
    %23 = vector.shape_cast %22 : vector<1x289x100xbf16> to vector<289x100xbf16>
    %cst_30 = arith.constant dense<0.000000e+00> : vector<8x100xf32>
    %24 = tpu.matmul %20, %23, %cst_30 {dimension_numbers = #tpu.dot_dimension_numbers<[1], [0], [0], [1], [0, 0, 1, 1], [], []>} : vector<8x289xbf16>, vector<289x100xbf16>, vector<8x100xf32> -> vector<8x100xf32>
    %c0_31 = arith.constant 0 : index
    %c0_32 = arith.constant 0 : index
    %c0_33 = arith.constant 0 : index
    %25 = vector.load %arg6[%c0_31, %c0_32, %c0_33] : memref<9x16x8xbf16, #tpu.memory_space<vmem>>, vector<1x16x8xbf16>
    %26 = vector.shape_cast %25 : vector<1x16x8xbf16> to vector<16x8xbf16>
    %27 = arith.truncf %24 : vector<8x100xf32> to vector<8x100xbf16>
    %cst_34 = arith.constant dense<0.000000e+00> : vector<16x100xf32>
    %28 = tpu.matmul %26, %27, %cst_34 {dimension_numbers = #tpu.dot_dimension_numbers<[1], [0], [0], [1], [0, 0, 1, 1], [], []>} : vector<16x8xbf16>, vector<8x100xbf16>, vector<16x100xf32> -> vector<16x100xf32>
    %29 = arith.addf %21, %28 : vector<16x100xf32>
    %c1 = arith.constant 1 : index
    %c0_35 = arith.constant 0 : index
    %c0_36 = arith.constant 0 : index
    %30 = vector.load %arg8[%c1, %c0_35, %c0_36] : memref<9x289x100xbf16, #tpu.memory_space<vmem>>, vector<1x289x100xbf16>
    %31 = vector.shape_cast %30 : vector<1x289x100xbf16> to vector<289x100xbf16>
    %cst_37 = arith.constant dense<0.000000e+00> : vector<8x100xf32>
    %32 = tpu.matmul %20, %31, %cst_37 {dimension_numbers = #tpu.dot_dimension_numbers<[1], [0], [0], [1], [0, 0, 1, 1], [], []>} : vector<8x289xbf16>, vector<289x100xbf16>, vector<8x100xf32> -> vector<8x100xf32>
    %c1_38 = arith.constant 1 : index
    %c0_39 = arith.constant 0 : index
    %c0_40 = arith.constant 0 : index
    %33 = vector.load %arg6[%c1_38, %c0_39, %c0_40] : memref<9x16x8xbf16, #tpu.memory_space<vmem>>, vector<1x16x8xbf16>
    %34 = vector.shape_cast %33 : vector<1x16x8xbf16> to vector<16x8xbf16>
    %35 = arith.truncf %32 : vector<8x100xf32> to vector<8x100xbf16>
    %cst_41 = arith.constant dense<0.000000e+00> : vector<16x100xf32>
    %36 = tpu.matmul %34, %35, %cst_41 {dimension_numbers = #tpu.dot_dimension_numbers<[1], [0], [0], [1], [0, 0, 1, 1], [], []>} : vector<16x8xbf16>, vector<8x100xbf16>, vector<16x100xf32> -> vector<16x100xf32>
    %37 = arith.addf %29, %36 : vector<16x100xf32>
    %c2 = arith.constant 2 : index
    %c0_42 = arith.constant 0 : index
    %c0_43 = arith.constant 0 : index
    %38 = vector.load %arg8[%c2, %c0_42, %c0_43] : memref<9x289x100xbf16, #tpu.memory_space<vmem>>, vector<1x289x100xbf16>
    %39 = vector.shape_cast %38 : vector<1x289x100xbf16> to vector<289x100xbf16>
    %cst_44 = arith.constant dense<0.000000e+00> : vector<8x100xf32>
    %40 = tpu.matmul %20, %39, %cst_44 {dimension_numbers = #tpu.dot_dimension_numbers<[1], [0], [0], [1], [0, 0, 1, 1], [], []>} : vector<8x289xbf16>, vector<289x100xbf16>, vector<8x100xf32> -> vector<8x100xf32>
    %c2_45 = arith.constant 2 : index
    %c0_46 = arith.constant 0 : index
    %c0_47 = arith.constant 0 : index
    %41 = vector.load %arg6[%c2_45, %c0_46, %c0_47] : memref<9x16x8xbf16, #tpu.memory_space<vmem>>, vector<1x16x8xbf16>
    %42 = vector.shape_cast %41 : vector<1x16x8xbf16> to vector<16x8xbf16>
    %43 = arith.truncf %40 : vector<8x100xf32> to vector<8x100xbf16>
    %cst_48 = arith.constant dense<0.000000e+00> : vector<16x100xf32>
    %44 = tpu.matmul %42, %43, %cst_48 {dimension_numbers = #tpu.dot_dimension_numbers<[1], [0], [0], [1], [0, 0, 1, 1], [], []>} : vector<16x8xbf16>, vector<8x100xbf16>, vector<16x100xf32> -> vector<16x100xf32>
    %45 = arith.addf %37, %44 : vector<16x100xf32>
    %c3 = arith.constant 3 : index
    %c0_49 = arith.constant 0 : index
    %c0_50 = arith.constant 0 : index
    %46 = vector.load %arg8[%c3, %c0_49, %c0_50] : memref<9x289x100xbf16, #tpu.memory_space<vmem>>, vector<1x289x100xbf16>
    %47 = vector.shape_cast %46 : vector<1x289x100xbf16> to vector<289x100xbf16>
    %cst_51 = arith.constant dense<0.000000e+00> : vector<8x100xf32>
    %48 = tpu.matmul %20, %47, %cst_51 {dimension_numbers = #tpu.dot_dimension_numbers<[1], [0], [0], [1], [0, 0, 1, 1], [], []>} : vector<8x289xbf16>, vector<289x100xbf16>, vector<8x100xf32> -> vector<8x100xf32>
    %c3_52 = arith.constant 3 : index
    %c0_53 = arith.constant 0 : index
    %c0_54 = arith.constant 0 : index
    %49 = vector.load %arg6[%c3_52, %c0_53, %c0_54] : memref<9x16x8xbf16, #tpu.memory_space<vmem>>, vector<1x16x8xbf16>
    %50 = vector.shape_cast %49 : vector<1x16x8xbf16> to vector<16x8xbf16>
    %51 = arith.truncf %48 : vector<8x100xf32> to vector<8x100xbf16>
    %cst_55 = arith.constant dense<0.000000e+00> : vector<16x100xf32>
    %52 = tpu.matmul %50, %51, %cst_55 {dimension_numbers = #tpu.dot_dimension_numbers<[1], [0], [0], [1], [0, 0, 1, 1], [], []>} : vector<16x8xbf16>, vector<8x100xbf16>, vector<16x100xf32> -> vector<16x100xf32>
    %53 = arith.addf %45, %52 : vector<16x100xf32>
    %c4 = arith.constant 4 : index
    %c0_56 = arith.constant 0 : index
    %c0_57 = arith.constant 0 : index
    %54 = vector.load %arg8[%c4, %c0_56, %c0_57] : memref<9x289x100xbf16, #tpu.memory_space<vmem>>, vector<1x289x100xbf16>
    %55 = vector.shape_cast %54 : vector<1x289x100xbf16> to vector<289x100xbf16>
    %cst_58 = arith.constant dense<0.000000e+00> : vector<8x100xf32>
    %56 = tpu.matmul %20, %55, %cst_58 {dimension_numbers = #tpu.dot_dimension_numbers<[1], [0], [0], [1], [0, 0, 1, 1], [], []>} : vector<8x289xbf16>, vector<289x100xbf16>, vector<8x100xf32> -> vector<8x100xf32>
    %c4_59 = arith.constant 4 : index
    %c0_60 = arith.constant 0 : index
    %c0_61 = arith.constant 0 : index
    %57 = vector.load %arg6[%c4_59, %c0_60, %c0_61] : memref<9x16x8xbf16, #tpu.memory_space<vmem>>, vector<1x16x8xbf16>
    %58 = vector.shape_cast %57 : vector<1x16x8xbf16> to vector<16x8xbf16>
    %59 = arith.truncf %56 : vector<8x100xf32> to vector<8x100xbf16>
    %cst_62 = arith.constant dense<0.000000e+00> : vector<16x100xf32>
    %60 = tpu.matmul %58, %59, %cst_62 {dimension_numbers = #tpu.dot_dimension_numbers<[1], [0], [0], [1], [0, 0, 1, 1], [], []>} : vector<16x8xbf16>, vector<8x100xbf16>, vector<16x100xf32> -> vector<16x100xf32>
    %61 = arith.addf %53, %60 : vector<16x100xf32>
    %c5 = arith.constant 5 : index
    %c0_63 = arith.constant 0 : index
    %c0_64 = arith.constant 0 : index
    %62 = vector.load %arg8[%c5, %c0_63, %c0_64] : memref<9x289x100xbf16, #tpu.memory_space<vmem>>, vector<1x289x100xbf16>
    %63 = vector.shape_cast %62 : vector<1x289x100xbf16> to vector<289x100xbf16>
    %cst_65 = arith.constant dense<0.000000e+00> : vector<8x100xf32>
    %64 = tpu.matmul %20, %63, %cst_65 {dimension_numbers = #tpu.dot_dimension_numbers<[1], [0], [0], [1], [0, 0, 1, 1], [], []>} : vector<8x289xbf16>, vector<289x100xbf16>, vector<8x100xf32> -> vector<8x100xf32>
    %c5_66 = arith.constant 5 : index
    %c0_67 = arith.constant 0 : index
    %c0_68 = arith.constant 0 : index
    %65 = vector.load %arg6[%c5_66, %c0_67, %c0_68] : memref<9x16x8xbf16, #tpu.memory_space<vmem>>, vector<1x16x8xbf16>
    %66 = vector.shape_cast %65 : vector<1x16x8xbf16> to vector<16x8xbf16>
    %67 = arith.truncf %64 : vector<8x100xf32> to vector<8x100xbf16>
    %cst_69 = arith.constant dense<0.000000e+00> : vector<16x100xf32>
    %68 = tpu.matmul %66, %67, %cst_69 {dimension_numbers = #tpu.dot_dimension_numbers<[1], [0], [0], [1], [0, 0, 1, 1], [], []>} : vector<16x8xbf16>, vector<8x100xbf16>, vector<16x100xf32> -> vector<16x100xf32>
    %69 = arith.addf %61, %68 : vector<16x100xf32>
    %c6 = arith.constant 6 : index
    %c0_70 = arith.constant 0 : index
    %c0_71 = arith.constant 0 : index
    %70 = vector.load %arg8[%c6, %c0_70, %c0_71] : memref<9x289x100xbf16, #tpu.memory_space<vmem>>, vector<1x289x100xbf16>
    %71 = vector.shape_cast %70 : vector<1x289x100xbf16> to vector<289x100xbf16>
    %cst_72 = arith.constant dense<0.000000e+00> : vector<8x100xf32>
    %72 = tpu.matmul %20, %71, %cst_72 {dimension_numbers = #tpu.dot_dimension_numbers<[1], [0], [0], [1], [0, 0, 1, 1], [], []>} : vector<8x289xbf16>, vector<289x100xbf16>, vector<8x100xf32> -> vector<8x100xf32>
    %c6_73 = arith.constant 6 : index
    %c0_74 = arith.constant 0 : index
    %c0_75 = arith.constant 0 : index
    %73 = vector.load %arg6[%c6_73, %c0_74, %c0_75] : memref<9x16x8xbf16, #tpu.memory_space<vmem>>, vector<1x16x8xbf16>
    %74 = vector.shape_cast %73 : vector<1x16x8xbf16> to vector<16x8xbf16>
    %75 = arith.truncf %72 : vector<8x100xf32> to vector<8x100xbf16>
    %cst_76 = arith.constant dense<0.000000e+00> : vector<16x100xf32>
    %76 = tpu.matmul %74, %75, %cst_76 {dimension_numbers = #tpu.dot_dimension_numbers<[1], [0], [0], [1], [0, 0, 1, 1], [], []>} : vector<16x8xbf16>, vector<8x100xbf16>, vector<16x100xf32> -> vector<16x100xf32>
    %77 = arith.addf %69, %76 : vector<16x100xf32>
    %c7 = arith.constant 7 : index
    %c0_77 = arith.constant 0 : index
    %c0_78 = arith.constant 0 : index
    %78 = vector.load %arg8[%c7, %c0_77, %c0_78] : memref<9x289x100xbf16, #tpu.memory_space<vmem>>, vector<1x289x100xbf16>
    %79 = vector.shape_cast %78 : vector<1x289x100xbf16> to vector<289x100xbf16>
    %cst_79 = arith.constant dense<0.000000e+00> : vector<8x100xf32>
    %80 = tpu.matmul %20, %79, %cst_79 {dimension_numbers = #tpu.dot_dimension_numbers<[1], [0], [0], [1], [0, 0, 1, 1], [], []>} : vector<8x289xbf16>, vector<289x100xbf16>, vector<8x100xf32> -> vector<8x100xf32>
    %c7_80 = arith.constant 7 : index
    %c0_81 = arith.constant 0 : index
    %c0_82 = arith.constant 0 : index
    %81 = vector.load %arg6[%c7_80, %c0_81, %c0_82] : memref<9x16x8xbf16, #tpu.memory_space<vmem>>, vector<1x16x8xbf16>
    %82 = vector.shape_cast %81 : vector<1x16x8xbf16> to vector<16x8xbf16>
    %83 = arith.truncf %80 : vector<8x100xf32> to vector<8x100xbf16>
    %cst_83 = arith.constant dense<0.000000e+00> : vector<16x100xf32>
    %84 = tpu.matmul %82, %83, %cst_83 {dimension_numbers = #tpu.dot_dimension_numbers<[1], [0], [0], [1], [0, 0, 1, 1], [], []>} : vector<16x8xbf16>, vector<8x100xbf16>, vector<16x100xf32> -> vector<16x100xf32>
    %85 = arith.addf %77, %84 : vector<16x100xf32>
    %c8 = arith.constant 8 : index
    %c0_84 = arith.constant 0 : index
    %c0_85 = arith.constant 0 : index
    %86 = vector.load %arg8[%c8, %c0_84, %c0_85] : memref<9x289x100xbf16, #tpu.memory_space<vmem>>, vector<1x289x100xbf16>
    %87 = vector.shape_cast %86 : vector<1x289x100xbf16> to vector<289x100xbf16>
    %cst_86 = arith.constant dense<0.000000e+00> : vector<8x100xf32>
    %88 = tpu.matmul %20, %87, %cst_86 {dimension_numbers = #tpu.dot_dimension_numbers<[1], [0], [0], [1], [0, 0, 1, 1], [], []>} : vector<8x289xbf16>, vector<289x100xbf16>, vector<8x100xf32> -> vector<8x100xf32>
    %c8_87 = arith.constant 8 : index
    %c0_88 = arith.constant 0 : index
    %c0_89 = arith.constant 0 : index
    %89 = vector.load %arg6[%c8_87, %c0_88, %c0_89] : memref<9x16x8xbf16, #tpu.memory_space<vmem>>, vector<1x16x8xbf16>
    %90 = vector.shape_cast %89 : vector<1x16x8xbf16> to vector<16x8xbf16>
    %91 = arith.truncf %88 : vector<8x100xf32> to vector<8x100xbf16>
    %cst_90 = arith.constant dense<0.000000e+00> : vector<16x100xf32>
    %92 = tpu.matmul %90, %91, %cst_90 {dimension_numbers = #tpu.dot_dimension_numbers<[1], [0], [0], [1], [0, 0, 1, 1], [], []>} : vector<16x8xbf16>, vector<8x100xbf16>, vector<16x100xf32> -> vector<16x100xf32>
    %93 = arith.addf %85, %92 : vector<16x100xf32>
    %94 = vector.broadcast %4 : vector<16x1xf32> to vector<16x100xf32>
    %95 = arith.addf %93, %94 : vector<16x100xf32>
    %96 = arith.truncf %95 : vector<16x100xf32> to vector<16x100xbf16>
    %cst_91 = arith.constant dense<0.000000e+00> : vector<16x324xf32>
    %97 = tpu.matmul %96, %5, %cst_91 {dimension_numbers = #tpu.dot_dimension_numbers<[1], [0], [0], [1], [0, 0, 1, 1], [], []>} : vector<16x100xbf16>, vector<100x324xbf16>, vector<16x324xf32> -> vector<16x324xf32>
    %98 = arith.addf %14, %97 : vector<16x324xf32>
    %cst_92 = arith.constant 0.000000e+00 : f32
    %99 = vector.broadcast %cst_92 : f32 to vector<16x324xf32>
    %100 = arith.maximumf %98, %99 : vector<16x324xf32>
    %101 = arith.truncf %100 : vector<16x324xf32> to vector<16x324xbf16>
    %c0_93 = arith.constant 0 : index
    %c0_94 = arith.constant 0 : index
    %c0_95 = arith.constant 0 : index
    %102 = vector.load %arg10[%c0_93, %c0_94, %c0_95] : memref<4x324x100xbf16, #tpu.memory_space<vmem>>, vector<1x324x100xbf16>
    %103 = vector.shape_cast %102 : vector<1x324x100xbf16> to vector<324x100xbf16>
    %cst_96 = arith.constant dense<0.000000e+00> : vector<16x100xf32>
    %104 = tpu.matmul %101, %103, %cst_96 {dimension_numbers = #tpu.dot_dimension_numbers<[1], [0], [0], [1], [0, 0, 1, 1], [], []>} : vector<16x324xbf16>, vector<324x100xbf16>, vector<16x100xf32> -> vector<16x100xf32>
    %c1_97 = arith.constant 1 : index
    %c0_98 = arith.constant 0 : index
    %c0_99 = arith.constant 0 : index
    %105 = vector.load %arg10[%c1_97, %c0_98, %c0_99] : memref<4x324x100xbf16, #tpu.memory_space<vmem>>, vector<1x324x100xbf16>
    %106 = vector.shape_cast %105 : vector<1x324x100xbf16> to vector<324x100xbf16>
    %cst_100 = arith.constant dense<0.000000e+00> : vector<16x100xf32>
    %107 = tpu.matmul %101, %106, %cst_100 {dimension_numbers = #tpu.dot_dimension_numbers<[1], [0], [0], [1], [0, 0, 1, 1], [], []>} : vector<16x324xbf16>, vector<324x100xbf16>, vector<16x100xf32> -> vector<16x100xf32>
    %108 = arith.maximumf %104, %107 : vector<16x100xf32>
    %c2_101 = arith.constant 2 : index
    %c0_102 = arith.constant 0 : index
    %c0_103 = arith.constant 0 : index
    %109 = vector.load %arg10[%c2_101, %c0_102, %c0_103] : memref<4x324x100xbf16, #tpu.memory_space<vmem>>, vector<1x324x100xbf16>
    %110 = vector.shape_cast %109 : vector<1x324x100xbf16> to vector<324x100xbf16>
    %cst_104 = arith.constant dense<0.000000e+00> : vector<16x100xf32>
    %111 = tpu.matmul %101, %110, %cst_104 {dimension_numbers = #tpu.dot_dimension_numbers<[1], [0], [0], [1], [0, 0, 1, 1], [], []>} : vector<16x324xbf16>, vector<324x100xbf16>, vector<16x100xf32> -> vector<16x100xf32>
    %112 = arith.maximumf %108, %111 : vector<16x100xf32>
    %c3_105 = arith.constant 3 : index
    %c0_106 = arith.constant 0 : index
    %c0_107 = arith.constant 0 : index
    %113 = vector.load %arg10[%c3_105, %c0_106, %c0_107] : memref<4x324x100xbf16, #tpu.memory_space<vmem>>, vector<1x324x100xbf16>
    %114 = vector.shape_cast %113 : vector<1x324x100xbf16> to vector<324x100xbf16>
    %cst_108 = arith.constant dense<0.000000e+00> : vector<16x100xf32>
    %115 = tpu.matmul %101, %114, %cst_108 {dimension_numbers = #tpu.dot_dimension_numbers<[1], [0], [0], [1], [0, 0, 1, 1], [], []>} : vector<16x324xbf16>, vector<324x100xbf16>, vector<16x100xf32> -> vector<16x100xf32>
    %116 = arith.maximumf %112, %115 : vector<16x100xf32>
    %117 = arith.truncf %116 : vector<16x100xf32> to vector<16x100xbf16>
    %cst_109 = arith.constant dense<0.000000e+00> : vector<16x48xf32>
    %118 = tpu.matmul %117, %6, %cst_109 {dimension_numbers = #tpu.dot_dimension_numbers<[1], [0], [0], [1], [0, 0, 1, 1], [], []>} : vector<16x100xbf16>, vector<100x48xbf16>, vector<16x48xf32> -> vector<16x48xf32>
    %119 = arith.mulf %118, %7 : vector<16x48xf32>
    %cst_110 = arith.constant dense<0.000000e+00> : vector<48xf32>
    %120 = vector.multi_reduction <add>, %119, %cst_110 [0] : vector<16x48xf32> to vector<48xf32>
    %121 = vector.shape_cast %120 : vector<48xf32> to vector<1x48xf32>
    %c1_111 = arith.constant 1 : index
    %c0_112 = arith.constant 0 : index
    %c0_113 = arith.constant 0 : index
    %122 = vector.load %arg0[%c1_111, %c0_112, %c0_113] : memref<2x12x324xbf16, #tpu.memory_space<vmem>>, vector<1x12x324xbf16>
    %123 = vector.shape_cast %122 : vector<1x12x324xbf16> to vector<12x324xbf16>
    %cst_114 = arith.constant dense<0.000000e+00> : vector<16x324xf32>
    %124 = tpu.matmul %0, %123, %cst_114 {dimension_numbers = #tpu.dot_dimension_numbers<[1], [0], [0], [1], [0, 0, 1, 1], [], []>} : vector<16x12xbf16>, vector<12x324xbf16>, vector<16x324xf32> -> vector<16x324xf32>
    %125 = vector.broadcast %1 : vector<16x1xf32> to vector<16x324xf32>
    %126 = arith.addf %124, %125 : vector<16x324xf32>
    %c1_115 = arith.constant 1 : index
    %c0_116 = arith.constant 0 : index
    %c0_117 = arith.constant 0 : index
    %127 = vector.load %arg1[%c1_115, %c0_116, %c0_117] : memref<2x27x289xbf16, #tpu.memory_space<vmem>>, vector<1x27x289xbf16>
    %128 = vector.shape_cast %127 : vector<1x27x289xbf16> to vector<27x289xbf16>
    %cst_118 = arith.constant dense<0.000000e+00> : vector<8x289xf32>
    %129 = tpu.matmul %2, %128, %cst_118 {dimension_numbers = #tpu.dot_dimension_numbers<[1], [0], [0], [1], [0, 0, 1, 1], [], []>} : vector<8x27xbf16>, vector<27x289xbf16>, vector<8x289xf32> -> vector<8x289xf32>
    %130 = vector.broadcast %3 : vector<8x1xf32> to vector<8x289xf32>
    %131 = arith.addf %129, %130 : vector<8x289xf32>
    %132 = arith.truncf %131 : vector<8x289xf32> to vector<8x289xbf16>
    %cst_119 = arith.constant 0.000000e+00 : f32
    %133 = vector.broadcast %cst_119 : f32 to vector<16x100xf32>
    %c0_120 = arith.constant 0 : index
    %c0_121 = arith.constant 0 : index
    %c0_122 = arith.constant 0 : index
    %134 = vector.load %arg8[%c0_120, %c0_121, %c0_122] : memref<9x289x100xbf16, #tpu.memory_space<vmem>>, vector<1x289x100xbf16>
    %135 = vector.shape_cast %134 : vector<1x289x100xbf16> to vector<289x100xbf16>
    %cst_123 = arith.constant dense<0.000000e+00> : vector<8x100xf32>
    %136 = tpu.matmul %132, %135, %cst_123 {dimension_numbers = #tpu.dot_dimension_numbers<[1], [0], [0], [1], [0, 0, 1, 1], [], []>} : vector<8x289xbf16>, vector<289x100xbf16>, vector<8x100xf32> -> vector<8x100xf32>
    %c0_124 = arith.constant 0 : index
    %c0_125 = arith.constant 0 : index
    %c0_126 = arith.constant 0 : index
    %137 = vector.load %arg6[%c0_124, %c0_125, %c0_126] : memref<9x16x8xbf16, #tpu.memory_space<vmem>>, vector<1x16x8xbf16>
    %138 = vector.shape_cast %137 : vector<1x16x8xbf16> to vector<16x8xbf16>
    %139 = arith.truncf %136 : vector<8x100xf32> to vector<8x100xbf16>
    %cst_127 = arith.constant dense<0.000000e+00> : vector<16x100xf32>
    %140 = tpu.matmul %138, %139, %cst_127 {dimension_numbers = #tpu.dot_dimension_numbers<[1], [0], [0], [1], [0, 0, 1, 1], [], []>} : vector<16x8xbf16>, vector<8x100xbf16>, vector<16x100xf32> -> vector<16x100xf32>
    %141 = arith.addf %133, %140 : vector<16x100xf32>
    %c1_128 = arith.constant 1 : index
    %c0_129 = arith.constant 0 : index
    %c0_130 = arith.constant 0 : index
    %142 = vector.load %arg8[%c1_128, %c0_129, %c0_130] : memref<9x289x100xbf16, #tpu.memory_space<vmem>>, vector<1x289x100xbf16>
    %143 = vector.shape_cast %142 : vector<1x289x100xbf16> to vector<289x100xbf16>
    %cst_131 = arith.constant dense<0.000000e+00> : vector<8x100xf32>
    %144 = tpu.matmul %132, %143, %cst_131 {dimension_numbers = #tpu.dot_dimension_numbers<[1], [0], [0], [1], [0, 0, 1, 1], [], []>} : vector<8x289xbf16>, vector<289x100xbf16>, vector<8x100xf32> -> vector<8x100xf32>
    %c1_132 = arith.constant 1 : index
    %c0_133 = arith.constant 0 : index
    %c0_134 = arith.constant 0 : index
    %145 = vector.load %arg6[%c1_132, %c0_133, %c0_134] : memref<9x16x8xbf16, #tpu.memory_space<vmem>>, vector<1x16x8xbf16>
    %146 = vector.shape_cast %145 : vector<1x16x8xbf16> to vector<16x8xbf16>
    %147 = arith.truncf %144 : vector<8x100xf32> to vector<8x100xbf16>
    %cst_135 = arith.constant dense<0.000000e+00> : vector<16x100xf32>
    %148 = tpu.matmul %146, %147, %cst_135 {dimension_numbers = #tpu.dot_dimension_numbers<[1], [0], [0], [1], [0, 0, 1, 1], [], []>} : vector<16x8xbf16>, vector<8x100xbf16>, vector<16x100xf32> -> vector<16x100xf32>
    %149 = arith.addf %141, %148 : vector<16x100xf32>
    %c2_136 = arith.constant 2 : index
    %c0_137 = arith.constant 0 : index
    %c0_138 = arith.constant 0 : index
    %150 = vector.load %arg8[%c2_136, %c0_137, %c0_138] : memref<9x289x100xbf16, #tpu.memory_space<vmem>>, vector<1x289x100xbf16>
    %151 = vector.shape_cast %150 : vector<1x289x100xbf16> to vector<289x100xbf16>
    %cst_139 = arith.constant dense<0.000000e+00> : vector<8x100xf32>
    %152 = tpu.matmul %132, %151, %cst_139 {dimension_numbers = #tpu.dot_dimension_numbers<[1], [0], [0], [1], [0, 0, 1, 1], [], []>} : vector<8x289xbf16>, vector<289x100xbf16>, vector<8x100xf32> -> vector<8x100xf32>
    %c2_140 = arith.constant 2 : index
    %c0_141 = arith.constant 0 : index
    %c0_142 = arith.constant 0 : index
    %153 = vector.load %arg6[%c2_140, %c0_141, %c0_142] : memref<9x16x8xbf16, #tpu.memory_space<vmem>>, vector<1x16x8xbf16>
    %154 = vector.shape_cast %153 : vector<1x16x8xbf16> to vector<16x8xbf16>
    %155 = arith.truncf %152 : vector<8x100xf32> to vector<8x100xbf16>
    %cst_143 = arith.constant dense<0.000000e+00> : vector<16x100xf32>
    %156 = tpu.matmul %154, %155, %cst_143 {dimension_numbers = #tpu.dot_dimension_numbers<[1], [0], [0], [1], [0, 0, 1, 1], [], []>} : vector<16x8xbf16>, vector<8x100xbf16>, vector<16x100xf32> -> vector<16x100xf32>
    %157 = arith.addf %149, %156 : vector<16x100xf32>
    %c3_144 = arith.constant 3 : index
    %c0_145 = arith.constant 0 : index
    %c0_146 = arith.constant 0 : index
    %158 = vector.load %arg8[%c3_144, %c0_145, %c0_146] : memref<9x289x100xbf16, #tpu.memory_space<vmem>>, vector<1x289x100xbf16>
    %159 = vector.shape_cast %158 : vector<1x289x100xbf16> to vector<289x100xbf16>
    %cst_147 = arith.constant dense<0.000000e+00> : vector<8x100xf32>
    %160 = tpu.matmul %132, %159, %cst_147 {dimension_numbers = #tpu.dot_dimension_numbers<[1], [0], [0], [1], [0, 0, 1, 1], [], []>} : vector<8x289xbf16>, vector<289x100xbf16>, vector<8x100xf32> -> vector<8x100xf32>
    %c3_148 = arith.constant 3 : index
    %c0_149 = arith.constant 0 : index
    %c0_150 = arith.constant 0 : index
    %161 = vector.load %arg6[%c3_148, %c0_149, %c0_150] : memref<9x16x8xbf16, #tpu.memory_space<vmem>>, vector<1x16x8xbf16>
    %162 = vector.shape_cast %161 : vector<1x16x8xbf16> to vector<16x8xbf16>
    %163 = arith.truncf %160 : vector<8x100xf32> to vector<8x100xbf16>
    %cst_151 = arith.constant dense<0.000000e+00> : vector<16x100xf32>
    %164 = tpu.matmul %162, %163, %cst_151 {dimension_numbers = #tpu.dot_dimension_numbers<[1], [0], [0], [1], [0, 0, 1, 1], [], []>} : vector<16x8xbf16>, vector<8x100xbf16>, vector<16x100xf32> -> vector<16x100xf32>
    %165 = arith.addf %157, %164 : vector<16x100xf32>
    %c4_152 = arith.constant 4 : index
    %c0_153 = arith.constant 0 : index
    %c0_154 = arith.constant 0 : index
    %166 = vector.load %arg8[%c4_152, %c0_153, %c0_154] : memref<9x289x100xbf16, #tpu.memory_space<vmem>>, vector<1x289x100xbf16>
    %167 = vector.shape_cast %166 : vector<1x289x100xbf16> to vector<289x100xbf16>
    %cst_155 = arith.constant dense<0.000000e+00> : vector<8x100xf32>
    %168 = tpu.matmul %132, %167, %cst_155 {dimension_numbers = #tpu.dot_dimension_numbers<[1], [0], [0], [1], [0, 0, 1, 1], [], []>} : vector<8x289xbf16>, vector<289x100xbf16>, vector<8x100xf32> -> vector<8x100xf32>
    %c4_156 = arith.constant 4 : index
    %c0_157 = arith.constant 0 : index
    %c0_158 = arith.constant 0 : index
    %169 = vector.load %arg6[%c4_156, %c0_157, %c0_158] : memref<9x16x8xbf16, #tpu.memory_space<vmem>>, vector<1x16x8xbf16>
    %170 = vector.shape_cast %169 : vector<1x16x8xbf16> to vector<16x8xbf16>
    %171 = arith.truncf %168 : vector<8x100xf32> to vector<8x100xbf16>
    %cst_159 = arith.constant dense<0.000000e+00> : vector<16x100xf32>
    %172 = tpu.matmul %170, %171, %cst_159 {dimension_numbers = #tpu.dot_dimension_numbers<[1], [0], [0], [1], [0, 0, 1, 1], [], []>} : vector<16x8xbf16>, vector<8x100xbf16>, vector<16x100xf32> -> vector<16x100xf32>
    %173 = arith.addf %165, %172 : vector<16x100xf32>
    %c5_160 = arith.constant 5 : index
    %c0_161 = arith.constant 0 : index
    %c0_162 = arith.constant 0 : index
    %174 = vector.load %arg8[%c5_160, %c0_161, %c0_162] : memref<9x289x100xbf16, #tpu.memory_space<vmem>>, vector<1x289x100xbf16>
    %175 = vector.shape_cast %174 : vector<1x289x100xbf16> to vector<289x100xbf16>
    %cst_163 = arith.constant dense<0.000000e+00> : vector<8x100xf32>
    %176 = tpu.matmul %132, %175, %cst_163 {dimension_numbers = #tpu.dot_dimension_numbers<[1], [0], [0], [1], [0, 0, 1, 1], [], []>} : vector<8x289xbf16>, vector<289x100xbf16>, vector<8x100xf32> -> vector<8x100xf32>
    %c5_164 = arith.constant 5 : index
    %c0_165 = arith.constant 0 : index
    %c0_166 = arith.constant 0 : index
    %177 = vector.load %arg6[%c5_164, %c0_165, %c0_166] : memref<9x16x8xbf16, #tpu.memory_space<vmem>>, vector<1x16x8xbf16>
    %178 = vector.shape_cast %177 : vector<1x16x8xbf16> to vector<16x8xbf16>
    %179 = arith.truncf %176 : vector<8x100xf32> to vector<8x100xbf16>
    %cst_167 = arith.constant dense<0.000000e+00> : vector<16x100xf32>
    %180 = tpu.matmul %178, %179, %cst_167 {dimension_numbers = #tpu.dot_dimension_numbers<[1], [0], [0], [1], [0, 0, 1, 1], [], []>} : vector<16x8xbf16>, vector<8x100xbf16>, vector<16x100xf32> -> vector<16x100xf32>
    %181 = arith.addf %173, %180 : vector<16x100xf32>
    %c6_168 = arith.constant 6 : index
    %c0_169 = arith.constant 0 : index
    %c0_170 = arith.constant 0 : index
    %182 = vector.load %arg8[%c6_168, %c0_169, %c0_170] : memref<9x289x100xbf16, #tpu.memory_space<vmem>>, vector<1x289x100xbf16>
    %183 = vector.shape_cast %182 : vector<1x289x100xbf16> to vector<289x100xbf16>
    %cst_171 = arith.constant dense<0.000000e+00> : vector<8x100xf32>
    %184 = tpu.matmul %132, %183, %cst_171 {dimension_numbers = #tpu.dot_dimension_numbers<[1], [0], [0], [1], [0, 0, 1, 1], [], []>} : vector<8x289xbf16>, vector<289x100xbf16>, vector<8x100xf32> -> vector<8x100xf32>
    %c6_172 = arith.constant 6 : index
    %c0_173 = arith.constant 0 : index
    %c0_174 = arith.constant 0 : index
    %185 = vector.load %arg6[%c6_172, %c0_173, %c0_174] : memref<9x16x8xbf16, #tpu.memory_space<vmem>>, vector<1x16x8xbf16>
    %186 = vector.shape_cast %185 : vector<1x16x8xbf16> to vector<16x8xbf16>
    %187 = arith.truncf %184 : vector<8x100xf32> to vector<8x100xbf16>
    %cst_175 = arith.constant dense<0.000000e+00> : vector<16x100xf32>
    %188 = tpu.matmul %186, %187, %cst_175 {dimension_numbers = #tpu.dot_dimension_numbers<[1], [0], [0], [1], [0, 0, 1, 1], [], []>} : vector<16x8xbf16>, vector<8x100xbf16>, vector<16x100xf32> -> vector<16x100xf32>
    %189 = arith.addf %181, %188 : vector<16x100xf32>
    %c7_176 = arith.constant 7 : index
    %c0_177 = arith.constant 0 : index
    %c0_178 = arith.constant 0 : index
    %190 = vector.load %arg8[%c7_176, %c0_177, %c0_178] : memref<9x289x100xbf16, #tpu.memory_space<vmem>>, vector<1x289x100xbf16>
    %191 = vector.shape_cast %190 : vector<1x289x100xbf16> to vector<289x100xbf16>
    %cst_179 = arith.constant dense<0.000000e+00> : vector<8x100xf32>
    %192 = tpu.matmul %132, %191, %cst_179 {dimension_numbers = #tpu.dot_dimension_numbers<[1], [0], [0], [1], [0, 0, 1, 1], [], []>} : vector<8x289xbf16>, vector<289x100xbf16>, vector<8x100xf32> -> vector<8x100xf32>
    %c7_180 = arith.constant 7 : index
    %c0_181 = arith.constant 0 : index
    %c0_182 = arith.constant 0 : index
    %193 = vector.load %arg6[%c7_180, %c0_181, %c0_182] : memref<9x16x8xbf16, #tpu.memory_space<vmem>>, vector<1x16x8xbf16>
    %194 = vector.shape_cast %193 : vector<1x16x8xbf16> to vector<16x8xbf16>
    %195 = arith.truncf %192 : vector<8x100xf32> to vector<8x100xbf16>
    %cst_183 = arith.constant dense<0.000000e+00> : vector<16x100xf32>
    %196 = tpu.matmul %194, %195, %cst_183 {dimension_numbers = #tpu.dot_dimension_numbers<[1], [0], [0], [1], [0, 0, 1, 1], [], []>} : vector<16x8xbf16>, vector<8x100xbf16>, vector<16x100xf32> -> vector<16x100xf32>
    %197 = arith.addf %189, %196 : vector<16x100xf32>
    %c8_184 = arith.constant 8 : index
    %c0_185 = arith.constant 0 : index
    %c0_186 = arith.constant 0 : index
    %198 = vector.load %arg8[%c8_184, %c0_185, %c0_186] : memref<9x289x100xbf16, #tpu.memory_space<vmem>>, vector<1x289x100xbf16>
    %199 = vector.shape_cast %198 : vector<1x289x100xbf16> to vector<289x100xbf16>
    %cst_187 = arith.constant dense<0.000000e+00> : vector<8x100xf32>
    %200 = tpu.matmul %132, %199, %cst_187 {dimension_numbers = #tpu.dot_dimension_numbers<[1], [0], [0], [1], [0, 0, 1, 1], [], []>} : vector<8x289xbf16>, vector<289x100xbf16>, vector<8x100xf32> -> vector<8x100xf32>
    %c8_188 = arith.constant 8 : index
    %c0_189 = arith.constant 0 : index
    %c0_190 = arith.constant 0 : index
    %201 = vector.load %arg6[%c8_188, %c0_189, %c0_190] : memref<9x16x8xbf16, #tpu.memory_space<vmem>>, vector<1x16x8xbf16>
    %202 = vector.shape_cast %201 : vector<1x16x8xbf16> to vector<16x8xbf16>
    %203 = arith.truncf %200 : vector<8x100xf32> to vector<8x100xbf16>
    %cst_191 = arith.constant dense<0.000000e+00> : vector<16x100xf32>
    %204 = tpu.matmul %202, %203, %cst_191 {dimension_numbers = #tpu.dot_dimension_numbers<[1], [0], [0], [1], [0, 0, 1, 1], [], []>} : vector<16x8xbf16>, vector<8x100xbf16>, vector<16x100xf32> -> vector<16x100xf32>
    %205 = arith.addf %197, %204 : vector<16x100xf32>
    %206 = vector.broadcast %4 : vector<16x1xf32> to vector<16x100xf32>
    %207 = arith.addf %205, %206 : vector<16x100xf32>
    %208 = arith.truncf %207 : vector<16x100xf32> to vector<16x100xbf16>
    %cst_192 = arith.constant dense<0.000000e+00> : vector<16x324xf32>
    %209 = tpu.matmul %208, %5, %cst_192 {dimension_numbers = #tpu.dot_dimension_numbers<[1], [0], [0], [1], [0, 0, 1, 1], [], []>} : vector<16x100xbf16>, vector<100x324xbf16>, vector<16x324xf32> -> vector<16x324xf32>
    %210 = arith.addf %126, %209 : vector<16x324xf32>
    %cst_193 = arith.constant 0.000000e+00 : f32
    %211 = vector.broadcast %cst_193 : f32 to vector<16x324xf32>
    %212 = arith.maximumf %210, %211 : vector<16x324xf32>
    %213 = arith.truncf %212 : vector<16x324xf32> to vector<16x324xbf16>
    %c0_194 = arith.constant 0 : index
    %c0_195 = arith.constant 0 : index
    %c0_196 = arith.constant 0 : index
    %214 = vector.load %arg10[%c0_194, %c0_195, %c0_196] : memref<4x324x100xbf16, #tpu.memory_space<vmem>>, vector<1x324x100xbf16>
    %215 = vector.shape_cast %214 : vector<1x324x100xbf16> to vector<324x100xbf16>
    %cst_197 = arith.constant dense<0.000000e+00> : vector<16x100xf32>
    %216 = tpu.matmul %213, %215, %cst_197 {dimension_numbers = #tpu.dot_dimension_numbers<[1], [0], [0], [1], [0, 0, 1, 1], [], []>} : vector<16x324xbf16>, vector<324x100xbf16>, vector<16x100xf32> -> vector<16x100xf32>
    %c1_198 = arith.constant 1 : index
    %c0_199 = arith.constant 0 : index
    %c0_200 = arith.constant 0 : index
    %217 = vector.load %arg10[%c1_198, %c0_199, %c0_200] : memref<4x324x100xbf16, #tpu.memory_space<vmem>>, vector<1x324x100xbf16>
    %218 = vector.shape_cast %217 : vector<1x324x100xbf16> to vector<324x100xbf16>
    %cst_201 = arith.constant dense<0.000000e+00> : vector<16x100xf32>
    %219 = tpu.matmul %213, %218, %cst_201 {dimension_numbers = #tpu.dot_dimension_numbers<[1], [0], [0], [1], [0, 0, 1, 1], [], []>} : vector<16x324xbf16>, vector<324x100xbf16>, vector<16x100xf32> -> vector<16x100xf32>
    %220 = arith.maximumf %216, %219 : vector<16x100xf32>
    %c2_202 = arith.constant 2 : index
    %c0_203 = arith.constant 0 : index
    %c0_204 = arith.constant 0 : index
    %221 = vector.load %arg10[%c2_202, %c0_203, %c0_204] : memref<4x324x100xbf16, #tpu.memory_space<vmem>>, vector<1x324x100xbf16>
    %222 = vector.shape_cast %221 : vector<1x324x100xbf16> to vector<324x100xbf16>
    %cst_205 = arith.constant dense<0.000000e+00> : vector<16x100xf32>
    %223 = tpu.matmul %213, %222, %cst_205 {dimension_numbers = #tpu.dot_dimension_numbers<[1], [0], [0], [1], [0, 0, 1, 1], [], []>} : vector<16x324xbf16>, vector<324x100xbf16>, vector<16x100xf32> -> vector<16x100xf32>
    %224 = arith.maximumf %220, %223 : vector<16x100xf32>
    %c3_206 = arith.constant 3 : index
    %c0_207 = arith.constant 0 : index
    %c0_208 = arith.constant 0 : index
    %225 = vector.load %arg10[%c3_206, %c0_207, %c0_208] : memref<4x324x100xbf16, #tpu.memory_space<vmem>>, vector<1x324x100xbf16>
    %226 = vector.shape_cast %225 : vector<1x324x100xbf16> to vector<324x100xbf16>
    %cst_209 = arith.constant dense<0.000000e+00> : vector<16x100xf32>
    %227 = tpu.matmul %213, %226, %cst_209 {dimension_numbers = #tpu.dot_dimension_numbers<[1], [0], [0], [1], [0, 0, 1, 1], [], []>} : vector<16x324xbf16>, vector<324x100xbf16>, vector<16x100xf32> -> vector<16x100xf32>
    %228 = arith.maximumf %224, %227 : vector<16x100xf32>
    %229 = arith.truncf %228 : vector<16x100xf32> to vector<16x100xbf16>
    %cst_210 = arith.constant dense<0.000000e+00> : vector<16x48xf32>
    %230 = tpu.matmul %229, %6, %cst_210 {dimension_numbers = #tpu.dot_dimension_numbers<[1], [0], [0], [1], [0, 0, 1, 1], [], []>} : vector<16x100xbf16>, vector<100x48xbf16>, vector<16x48xf32> -> vector<16x48xf32>
    %231 = arith.mulf %230, %7 : vector<16x48xf32>
    %cst_211 = arith.constant dense<0.000000e+00> : vector<48xf32>
    %232 = vector.multi_reduction <add>, %231, %cst_211 [0] : vector<16x48xf32> to vector<48xf32>
    %233 = vector.shape_cast %232 : vector<48xf32> to vector<1x48xf32>
    %234 = tpu.concatenate %121, %233 in 0 : vector<1x48xf32>, vector<1x48xf32> -> vector<2x48xf32>
    %cst_212 = arith.constant dense<0.000000e+00> : vector<2x3xf32>
    %235 = tpu.matmul %234, %8, %cst_212 {dimension_numbers = #tpu.dot_dimension_numbers<[1], [0], [0], [1], [0, 0, 1, 1], [], []>} : vector<2x48xf32>, vector<48x3xf32>, vector<2x3xf32> -> vector<2x3xf32>
    %236 = vector.broadcast %9 : vector<1x3xf32> to vector<2x3xf32>
    %237 = arith.addf %235, %236 : vector<2x3xf32>
    %c0_213 = arith.constant 0 : index
    %c0_214 = arith.constant 0 : index
    %238 = vector.load %arg15[%c0_213, %c0_214] : memref<2x3xf32, #tpu.memory_space<vmem>>, vector<2x3xf32>
    tpu.vector_store %arg15[%c0_213, %c0_214], %237 {strides = array<i32>} : memref<2x3xf32, #tpu.memory_space<vmem>>, vector<2x3xf32>,
    return
  }
}

</mosaic_0001>

<llo_original>
// kernel: two_inputs_forward.1
$region0: #{two_inputs_forward.1}
  #allocation0 [shape = 'u32[]', space=smem, size = 0x4, offset = 0x4, fixed_abs, tag = 'smem constant byte address 0x4 - core index']
  #allocation1 [shape = 'u32[144,128]{1,0:T(1,128)}', space=vmem, size = 0x12000, scoped, tag = 'internal scratch']
  %s0 = inlined_call_operand.vmem [shape: bf16[2,12,324], index: 0, kind: input, shape index: {}]
  %s1 = inlined_call_operand.vmem [shape: bf16[2,27,289], index: 1, kind: input, shape index: {}]
  %s2 = inlined_call_operand.vmem [shape: bf16[16,12], index: 2, kind: input, shape index: {}]
  %s3 = inlined_call_operand.vmem [shape: f32[16,1], index: 3, kind: input, shape index: {}]
  %s4 = inlined_call_operand.vmem [shape: bf16[8,27], index: 4, kind: input, shape index: {}]
  %s5 = inlined_call_operand.vmem [shape: f32[8,1], index: 5, kind: input, shape index: {}]
  %s6 = inlined_call_operand.vmem [shape: bf16[9,16,8], index: 6, kind: input, shape index: {}]
  %s7 = inlined_call_operand.vmem [shape: f32[16,1], index: 7, kind: input, shape index: {}]
  %s8 = inlined_call_operand.vmem [shape: bf16[9,289,100], index: 8, kind: input, shape index: {}]
  %s9 = inlined_call_operand.vmem [shape: bf16[100,324], index: 9, kind: input, shape index: {}]
  %s10 = inlined_call_operand.vmem [shape: bf16[4,324,100], index: 10, kind: input, shape index: {}]
  %s11 = inlined_call_operand.vmem [shape: bf16[100,48], index: 11, kind: input, shape index: {}]
  %s12 = inlined_call_operand.vmem [shape: f32[16,48], index: 12, kind: input, shape index: {}]
  %s13 = inlined_call_operand.vmem [shape: f32[48,3], index: 13, kind: input, shape index: {}]
  %s14 = inlined_call_operand.vmem [shape: f32[1,3], index: 14, kind: input, shape index: {}]
  %s15 = inlined_call_operand.hbm [shape: f32[2,3], index: 15, kind: output, shape index: {}]
  %s16 = sld [smem:[#allocation0]]
  $region70: #{two_inputs_forward.1} parent=0
    _
  %s18 = ssub.s32 1, %s16
  %s19 = scalar_select 0, %s18, %s16
  $region1: #{two_inputs_forward.1} parent=0
    #allocation2 [shape = 'u8[1024]{0}', space=vmem, size = 0x400, scoped, tag = 'output window, operand 0, single buffered']
    #allocation3 [shape = 's32[1]{0}', space=sflag, size = 0x4, scoped, tag = 'scoped memory for two_inputs_forward.1']
    %20 = vsyncpa [#allocation3], 0
    // Predicated region
    $region2: #{two_inputs_forward.1} parent=1 // pred_check
      _
    $region3: #{two_inputs_forward.1} parent=1 // pred_check_branch
      %22 = sbr.rel (0) target = $region5
    $region4: #{two_inputs_forward.1} parent=1 // pred_region
      _
    $region5: #{two_inputs_forward.1} parent=1 // pred_fallthru
      _
    // Predicated region
    $region6: #{two_inputs_forward.1} parent=1 // pred_check
      _
    $region7: #{two_inputs_forward.1} parent=1 // pred_check_branch
      %24 = sbr.rel (0) target = $region9
    $region8: #{two_inputs_forward.1} parent=1 // pred_region
      _
    $region9: #{two_inputs_forward.1} parent=1 // pred_fallthru
      _
    // Predicated region
    $region10: #{two_inputs_forward.1} parent=1 // pred_check
      _
    $region11: #{two_inputs_forward.1} parent=1 // pred_check_branch
      %26 = sbr.rel (0) target = $region13
    $region12: #{two_inputs_forward.1} parent=1 // pred_region
      _
    $region13: #{two_inputs_forward.1} parent=1 // pred_fallthru
      _
    // Predicated region
    $region14: #{two_inputs_forward.1} parent=1 // pred_check
      _
    $region15: #{two_inputs_forward.1} parent=1 // pred_check_branch
      %28 = sbr.rel (0) target = $region17
    $region16: #{two_inputs_forward.1} parent=1 // pred_region
      _
    $region17: #{two_inputs_forward.1} parent=1 // pred_fallthru
      _
    // Predicated region
    $region18: #{two_inputs_forward.1} parent=1 // pred_check
      _
    $region19: #{two_inputs_forward.1} parent=1 // pred_check_branch
      %30 = sbr.rel (0) target = $region21
    $region20: #{two_inputs_forward.1} parent=1 // pred_region
      _
    $region21: #{two_inputs_forward.1} parent=1 // pred_fallthru
      _
    // Predicated region
    $region22: #{two_inputs_forward.1} parent=1 // pred_check
      _
    $region23: #{two_inputs_forward.1} parent=1 // pred_check_branch
      %32 = sbr.rel (0) target = $region25
    $region24: #{two_inputs_forward.1} parent=1 // pred_region
      _
    $region25: #{two_inputs_forward.1} parent=1 // pred_fallthru
      _
    // Predicated region
    $region26: #{two_inputs_forward.1} parent=1 // pred_check
      _
    $region27: #{two_inputs_forward.1} parent=1 // pred_check_branch
      %34 = sbr.rel (0) target = $region29
    $region28: #{two_inputs_forward.1} parent=1 // pred_region
      _
    $region29: #{two_inputs_forward.1} parent=1 // pred_fallthru
      _
    // Predicated region
    $region30: #{two_inputs_forward.1} parent=1 // pred_check
      _
    $region31: #{two_inputs_forward.1} parent=1 // pred_check_branch
      %36 = sbr.rel (0) target = $region33
    $region32: #{two_inputs_forward.1} parent=1 // pred_region
      _
    $region33: #{two_inputs_forward.1} parent=1 // pred_fallthru
      _
    // Predicated region
    $region34: #{two_inputs_forward.1} parent=1 // pred_check
      _
    $region35: #{two_inputs_forward.1} parent=1 // pred_check_branch
      %38 = sbr.rel (0) target = $region37
    $region36: #{two_inputs_forward.1} parent=1 // pred_region
      _
    $region37: #{two_inputs_forward.1} parent=1 // pred_fallthru
      _
    // Predicated region
    $region38: #{two_inputs_forward.1} parent=1 // pred_check
      _
    $region39: #{two_inputs_forward.1} parent=1 // pred_check_branch
      %40 = sbr.rel (0) target = $region41
    $region40: #{two_inputs_forward.1} parent=1 // pred_region
      _
    $region41: #{two_inputs_forward.1} parent=1 // pred_fallthru
      _
    // Predicated region
    $region42: #{two_inputs_forward.1} parent=1 // pred_check
      _
    $region43: #{two_inputs_forward.1} parent=1 // pred_check_branch
      %42 = sbr.rel (0) target = $region45
    $region44: #{two_inputs_forward.1} parent=1 // pred_region
      _
    $region45: #{two_inputs_forward.1} parent=1 // pred_fallthru
      _
    // Predicated region
    $region46: #{two_inputs_forward.1} parent=1 // pred_check
      _
    $region47: #{two_inputs_forward.1} parent=1 // pred_check_branch
      %44 = sbr.rel (0) target = $region49
    $region48: #{two_inputs_forward.1} parent=1 // pred_region
      _
    $region49: #{two_inputs_forward.1} parent=1 // pred_fallthru
      _
    // Predicated region
    $region50: #{two_inputs_forward.1} parent=1 // pred_check
      _
    $region51: #{two_inputs_forward.1} parent=1 // pred_check_branch
      %46 = sbr.rel (0) target = $region53
    $region52: #{two_inputs_forward.1} parent=1 // pred_region
      _
    $region53: #{two_inputs_forward.1} parent=1 // pred_fallthru
      _
    // Predicated region
    $region54: #{two_inputs_forward.1} parent=1 // pred_check
      _
    $region55: #{two_inputs_forward.1} parent=1 // pred_check_branch
      %48 = sbr.rel (0) target = $region57
    $region56: #{two_inputs_forward.1} parent=1 // pred_region
      _
    $region57: #{two_inputs_forward.1} parent=1 // pred_fallthru
      _
    // Predicated region
    $region58: #{two_inputs_forward.1} parent=1 // pred_check
      _
    $region59: #{two_inputs_forward.1} parent=1 // pred_check_branch
      %50 = sbr.rel (0) target = $region61
    $region60: #{two_inputs_forward.1} parent=1 // pred_region
      _
    $region61: #{two_inputs_forward.1} parent=1 // pred_fallthru
      _
    %v52 = vld [vmem:[%s2] sm:$0xf]
    %v53 = vld [vmem:[%s2 + $0x4] sm:$0xf]
    %v54 = vld [vmem:[%s3] sm:$0xff]
    %v55 = vld [vmem:[%s3 + $0x8] sm:$0xff]
    %v56 = vld [vmem:[%s4] sm:$0xf]
    %v57 = vld [vmem:[%s5] sm:$0xff]
    %v58 = vld [vmem:[%s7] sm:$0xff]
    %v59 = vld [vmem:[%s7 + $0x8] sm:$0xff]
    %v60 = vld [vmem:[%s9] sm:$0xff]
    %v61 = vld [vmem:[%s9 + $0x8] sm:$0xf]
    %v62 = vld [vmem:[%s9 + $0xc] sm:$0xff]
    %v63 = vld [vmem:[%s9 + $0x14] sm:$0xf]
    %v64 = vld [vmem:[%s9 + $0x18] sm:$0xff]
    %v65 = vld [vmem:[%s9 + $0x20] sm:$0xf]
    %v66 = vld [vmem:[%s9 + $0x24] sm:$0xff]
    %v67 = vld [vmem:[%s9 + $0x2c] sm:$0xf]
    %v68 = vld [vmem:[%s9 + $0x30] sm:$0xff]
    %v69 = vld [vmem:[%s9 + $0x38] sm:$0xf]
    %v70 = vld [vmem:[%s9 + $0x3c] sm:$0xff]
    %v71 = vld [vmem:[%s9 + $0x44] sm:$0xf]
    %v72 = vld [vmem:[%s9 + $0x48] sm:$0xff]
    %v73 = vld [vmem:[%s9 + $0x50] sm:$0xf]
    %v74 = vld [vmem:[%s9 + $0x54] sm:$0xff]
    %v75 = vld [vmem:[%s9 + $0x5c] sm:$0xf]
    %v76 = vld [vmem:[%s9 + $0x60] sm:$0xff]
    %v77 = vld [vmem:[%s9 + $0x68] sm:$0xf]
    %v78 = vld [vmem:[%s9 + $0x6c] sm:$0xff]
    %v79 = vld [vmem:[%s9 + $0x74] sm:$0xf]
    %v80 = vld [vmem:[%s9 + $0x78] sm:$0xff]
    %v81 = vld [vmem:[%s9 + $0x80] sm:$0xf]
    %v82 = vld [vmem:[%s9 + $0x84] sm:$0xff]
    %v83 = vld [vmem:[%s9 + $0x8c] sm:$0xf]
    %v84 = vld [vmem:[%s9 + $0x90] sm:$0x33]
    %v85 = vld [vmem:[%s9 + $0x98] sm:$0x3]
    %v86 = vld [vmem:[%s11] sm:$0xf]
    %v87 = vld [vmem:[%s11 + $0x4] sm:$0xf]
    %v88 = vld [vmem:[%s11 + $0x8] sm:$0xf]
    %v89 = vld [vmem:[%s11 + $0xc] sm:$0xf]
    %v90 = vld [vmem:[%s11 + $0x10] sm:$0xf]
    %v91 = vld [vmem:[%s11 + $0x14] sm:$0xf]
    %v92 = vld [vmem:[%s11 + $0x18] sm:$0xf]
    %v93 = vld [vmem:[%s11 + $0x1c] sm:$0xf]
    %v94 = vld [vmem:[%s11 + $0x20] sm:$0xf]
    %v95 = vld [vmem:[%s11 + $0x24] sm:$0xf]
    %v96 = vld [vmem:[%s11 + $0x28] sm:$0xf]
    %v97 = vld [vmem:[%s11 + $0x2c] sm:$0xf]
    %v98 = vld [vmem:[%s11 + $0x30] sm:$0x3]
    %v99 = vld [vmem:[%s12] sm:$0xff]
    %v100 = vld [vmem:[%s12 + $0x8] sm:$0xff]
    %v101 = vld [vmem:[%s13] sm:$0xff]
    %v102 = vld [vmem:[%s13 + $0x8] sm:$0xff]
    %v103 = vld [vmem:[%s13 + $0x10] sm:$0xff]
    %v104 = vld [vmem:[%s13 + $0x18] sm:$0xff]
    %v105 = vld [vmem:[%s13 + $0x20] sm:$0xff]
    %v106 = vld [vmem:[%s13 + $0x28] sm:$0xff]
    %v107 = vld [vmem:[%s14] sm:$0x1]
    %v108 = vld [vmem:[%s0] sm:$0xff]
    %v109 = vld [vmem:[%s0 + $0x8] sm:$0xf]
    %v110 = vld [vmem:[%s0 + $0xc] sm:$0x33]
    %v111 = vld [vmem:[%s0 + $0x14] sm:$0x3]
    %113 = vset.pattern.permute.xlu0 0
    %114 = vperm.xlu0 %113, %v54
    %v115 = vpop.permute.xlu0 %114
    %118 = vset.pattern.permute.xlu0 0
    %119 = vperm.xlu0 %118, %v55
    %v120 = vpop.permute.xlu0 %119
    %v124 = vunpack.c.l.b16 %v52
    %v125 = vunpack.c.l.b16 %v53
    %v126 = vpack.c.b16 %v125, %v124
    %v131 = vunpack.c.l.b16 %v108
    %v132 = vunpack.c.h.b16 %v108
    %v133 = vunpack.c.l.b16 %v109
    %v134 = vunpack.c.l.b16 %v110
    %v135 = vunpack.c.h.b16 %v110
    %v136 = vunpack.c.l.b16 %v111
    %v137 = vpack.c.b16 %v134, %v131
    %v138 = vpack.c.b16 %v135, %v132
    %v139 = vpack.c.b16 %v136, %v133
    %vm140 = vcmask 97280
    %v142 = vsel %vm140, %v126, 0
    %vm144 = vcmask 1045504
    %v146 = vsel %vm144, %v137, 0
    %v149 = vsel %vm144, %v138, 0
    %v152 = vsel %vm144, %v139, 0
    %154 = vmatprep.subr.bf16.mxu0 0
    %155 = vmatpush1.bf16.msra.mxu0 0
    %156 = vmatprep.subr.bf16.mxu0 0
    %157 = vmatpush1.bf16.msra.mxu0 0
    %158 = vmatprep.subr.bf16.mxu0 0
    %159 = vmatpush1.bf16.msra.mxu0 0
    %160 = vmatprep.subr.bf16.mxu0 0
    %161 = vmatpush1.bf16.msra.mxu0 0
    %162 = vmatprep.subr.bf16.mxu0 0
    %163 = vmatpush1.bf16.msra.mxu0 0
    %164 = vmatprep.subr.bf16.mxu0 0
    %165 = vmatpush1.bf16.msra.mxu0 0
    %166 = vmatprep.subr.bf16.mxu0 0
    %167 = vmatpush1.bf16.msra.mxu0 0
    %168 = vmatprep.subr.bf16.mxu0 %v149
    %169 = vmatpush1.bf16.msra.mxu0 %v146
    %170 = vmatprep.subr.bf16.mxu0 0
    %171 = vmatpush2.bf16.msra.mxu0 0
    %172 = vmatprep.subr.bf16.mxu0 0
    %173 = vmatpush2.bf16.msra.mxu0 0
    %174 = vmatprep.subr.bf16.mxu0 0
    %175 = vmatpush2.bf16.msra.mxu0 0
    %176 = vmatprep.subr.bf16.mxu0 0
    %177 = vmatpush2.bf16.msra.mxu0 0
    %178 = vmatprep.subr.bf16.mxu0 0
    %179 = vmatpush2.bf16.msra.mxu0 0
    %180 = vmatprep.subr.bf16.mxu0 0
    %181 = vmatpush2.bf16.msra.mxu0 0
    %182 = vmatprep.subr.bf16.mxu0 0
    %183 = vmatpush2.bf16.msra.mxu0 0
    %184 = vmatprep.subr.bf16.mxu0 0
    %185 = vmatpush2.bf16.msra.mxu0 0
    %186 = vmatprep.mubr.bf16.mxu0 0
    %187 = vmatmul.mubr.bf16.gmra.mxu0 %v142
    %v188 = vpop.f32.mrf.mxu0
    %v189 = vadd.f32 %v115, %v188
    %v190 = vpop.f32.mrf.mxu0
    %v191 = vadd.f32 %v115, %v190
    %v192 = vpop.f32.mrf.mxu0
    %v193 = vadd.f32 %v120, %v192
    %v194 = vpop.f32.mrf.mxu0
    %v195 = vadd.f32 %v120, %v194
    %196 = vdwg.mxu0
    %197 = vmatprep.subr.bf16.mxu0 0
    %198 = vmatpush1.bf16.msra.mxu0 0
    %199 = vmatprep.subr.bf16.mxu0 0
    %200 = vmatpush1.bf16.msra.mxu0 0
    %201 = vmatprep.subr.bf16.mxu0 0
    %202 = vmatpush1.bf16.msra.mxu0 0
    %203 = vmatprep.subr.bf16.mxu0 0
    %204 = vmatpush1.bf16.msra.mxu0 0
    %205 = vmatprep.subr.bf16.mxu0 0
    %206 = vmatpush1.bf16.msra.mxu0 0
    %207 = vmatprep.subr.bf16.mxu0 0
    %208 = vmatpush1.bf16.msra.mxu0 0
    %209 = vmatprep.subr.bf16.mxu0 0
    %210 = vmatpush1.bf16.msra.mxu0 0
    %211 = vmatprep.subr.bf16.mxu0 0
    %212 = vmatpush1.bf16.msra.mxu0 %v152
    %213 = vmatprep.subr.bf16.mxu0 0
    %214 = vmatpush2.bf16.msra.mxu0 0
    %215 = vmatprep.subr.bf16.mxu0 0
    %216 = vmatpush2.bf16.msra.mxu0 0
    %217 = vmatprep.subr.bf16.mxu0 0
    %218 = vmatpush2.bf16.msra.mxu0 0
    %219 = vmatprep.subr.bf16.mxu0 0
    %220 = vmatpush2.bf16.msra.mxu0 0
    %221 = vmatprep.subr.bf16.mxu0 0
    %222 = vmatpush2.bf16.msra.mxu0 0
    %223 = vmatprep.subr.bf16.mxu0 0
    %224 = vmatpush2.bf16.msra.mxu0 0
    %225 = vmatprep.subr.bf16.mxu0 0
    %226 = vmatpush2.bf16.msra.mxu0 0
    %227 = vmatprep.subr.bf16.mxu0 0
    %228 = vmatpush2.bf16.msra.mxu0 0
    %229 = vmatprep.mubr.bf16.mxu0 0
    %230 = vmatmul.mubr.bf16.gmra.mxu0 %v142
    %v231 = vpop.f32.mrf.mxu0
    %v232 = vadd.f32 %v115, %v231
    %v233 = vpop.f32.mrf.mxu0
    %v234 = vpop.f32.mrf.mxu0
    %v235 = vadd.f32 %v120, %v234
    %v236 = vpop.f32.mrf.mxu0
    %237 = vdwg.mxu0
    %v238 = vld [vmem:[%s1] sm:$0xff]
    %v239 = vld [vmem:[%s1 + $0x8] sm:$0xf]
    %v240 = vld [vmem:[%s1 + $0xc] sm:$0xff]
    %v241 = vld [vmem:[%s1 + $0x14] sm:$0xf]
    %v242 = vld [vmem:[%s1 + $0x18] sm:$0xff]
    %v243 = vld [vmem:[%s1 + $0x20] sm:$0xf]
    %v244 = vld [vmem:[%s1 + $0x24] sm:$0x33]
    %v245 = vld [vmem:[%s1 + $0x2c] sm:$0x3]
    %247 = vset.pattern.permute.xlu0 0
    %248 = vperm.xlu0 %247, %v57
    %v249 = vpop.permute.xlu0 %248
    %v259 = vunpack.c.l.b16 %v238
    %v260 = vunpack.c.h.b16 %v238
    %v261 = vunpack.c.l.b16 %v239
    %v262 = vunpack.c.l.b16 %v240
    %v263 = vunpack.c.h.b16 %v240
    %v264 = vunpack.c.l.b16 %v241
    %v265 = vunpack.c.l.b16 %v242
    %v266 = vunpack.c.h.b16 %v242
    %v267 = vunpack.c.l.b16 %v243
    %v268 = vunpack.c.l.b16 %v244
    %v269 = vunpack.c.h.b16 %v244
    %v270 = vunpack.c.l.b16 %v245
    %v271 = vpack.c.b16 %v262, %v259
    %v272 = vpack.c.b16 %v263, %v260
    %v273 = vpack.c.b16 %v264, %v261
    %v274 = vpack.c.b16 %v268, %v265
    %v275 = vpack.c.b16 %v269, %v266
    %v276 = vpack.c.b16 %v270, %v267
    %vm280 = vcmask 220160
    %v282 = vsel %vm280, %v56, 0
    %vm284 = vcmask 1044480
    %v285 = vsel %vm284, 4294967295, 65535
    %v286 = vsel %vm144, %v285, 0
    %v288 = vand.u32 %v274, %v286
    %v291 = vand.u32 %v275, %v286
    %v294 = vand.u32 %v276, %v286
    %296 = vmatprep.subr.bf16.mxu0 0
    %297 = vmatpush1.bf16.msra.mxu0 0
    %298 = vmatprep.subr.bf16.mxu0 0
    %299 = vmatpush1.bf16.msra.mxu0 0
    %300 = vmatprep.subr.bf16.mxu0 0
    %301 = vmatpush1.bf16.msra.mxu0 0
    %302 = vmatprep.subr.bf16.mxu0 0
    %303 = vmatpush1.bf16.msra.mxu0 0
    %304 = vmatprep.subr.bf16.mxu0 0
    %305 = vmatpush1.bf16.msra.mxu0 0
    %306 = vmatprep.subr.bf16.mxu0 0
    %307 = vmatpush1.bf16.msra.mxu0 0
    %308 = vmatprep.subr.bf16.mxu0 %v291
    %309 = vmatpush1.bf16.msra.mxu0 %v288
    %310 = vmatprep.subr.bf16.mxu0 %v272
    %311 = vmatpush1.bf16.msra.mxu0 %v271
    %312 = vmatprep.subr.bf16.mxu0 0
    %313 = vmatpush2.bf16.msra.mxu0 0
    %314 = vmatprep.subr.bf16.mxu0 0
    %315 = vmatpush2.bf16.msra.mxu0 0
    %316 = vmatprep.subr.bf16.mxu0 0
    %317 = vmatpush2.bf16.msra.mxu0 0
    %318 = vmatprep.subr.bf16.mxu0 0
    %319 = vmatpush2.bf16.msra.mxu0 0
    %320 = vmatprep.subr.bf16.mxu0 0
    %321 = vmatpush2.bf16.msra.mxu0 0
    %322 = vmatprep.subr.bf16.mxu0 0
    %323 = vmatpush2.bf16.msra.mxu0 0
    %324 = vmatprep.subr.bf16.mxu0 0
    %325 = vmatpush2.bf16.msra.mxu0 0
    %326 = vmatprep.subr.bf16.mxu0 0
    %327 = vmatpush2.bf16.msra.mxu0 0
    %328 = vmatprep.mubr.bf16.mxu0 0
    %329 = vmatmul.mubr.bf16.gmra.mxu0 %v282
    %v330 = vpop.f32.mrf.mxu0
    %v331 = vadd.f32 %v249, %v330
    %v332 = vpop.f32.mrf.mxu0
    %v333 = vadd.f32 %v249, %v332
    %v334 = vpop.f32.mrf.mxu0
    %v335 = vpop.f32.mrf.mxu0
    %336 = vdwg.mxu0
    %337 = vmatprep.subr.bf16.mxu0 0
    %338 = vmatpush1.bf16.msra.mxu0 0
    %339 = vmatprep.subr.bf16.mxu0 0
    %340 = vmatpush1.bf16.msra.mxu0 0
    %341 = vmatprep.subr.bf16.mxu0 0
    %342 = vmatpush1.bf16.msra.mxu0 0
    %343 = vmatprep.subr.bf16.mxu0 0
    %344 = vmatpush1.bf16.msra.mxu0 0
    %345 = vmatprep.subr.bf16.mxu0 0
    %346 = vmatpush1.bf16.msra.mxu0 0
    %347 = vmatprep.subr.bf16.mxu0 0
    %348 = vmatpush1.bf16.msra.mxu0 0
    %349 = vmatprep.subr.bf16.mxu0 0
    %350 = vmatpush1.bf16.msra.mxu0 %v294
    %351 = vmatprep.subr.bf16.mxu0 0
    %352 = vmatpush1.bf16.msra.mxu0 %v273
    %353 = vmatprep.subr.bf16.mxu0 0
    %354 = vmatpush2.bf16.msra.mxu0 0
    %355 = vmatprep.subr.bf16.mxu0 0
    %356 = vmatpush2.bf16.msra.mxu0 0
    %357 = vmatprep.subr.bf16.mxu0 0
    %358 = vmatpush2.bf16.msra.mxu0 0
    %359 = vmatprep.subr.bf16.mxu0 0
    %360 = vmatpush2.bf16.msra.mxu0 0
    %361 = vmatprep.subr.bf16.mxu0 0
    %362 = vmatpush2.bf16.msra.mxu0 0
    %363 = vmatprep.subr.bf16.mxu0 0
    %364 = vmatpush2.bf16.msra.mxu0 0
    %365 = vmatprep.subr.bf16.mxu0 0
    %366 = vmatpush2.bf16.msra.mxu0 0
    %367 = vmatprep.subr.bf16.mxu0 0
    %368 = vmatpush2.bf16.msra.mxu0 0
    %369 = vmatprep.mubr.bf16.mxu0 0
    %370 = vmatmul.mubr.bf16.gmra.mxu0 %v282
    %v371 = vpop.f32.mrf.mxu0
    %v372 = vadd.f32 %v249, %v371
    %v373 = vpop.f32.mrf.mxu0
    %v374 = vpop.f32.mrf.mxu0
    %v375 = vpop.f32.mrf.mxu0
    %376 = vdwg.mxu0
    %v377 = vpack.c.bf16 %v331, %v331
    %v378 = vpack.c.bf16 %v333, %v333
    %v379 = vpack.c.bf16 %v372, %v372
    %v380 = vld [vmem:[%s8] sm:$0xf]
    %v381 = vld [vmem:[%s8 + $0x4] sm:$0xf]
    %v382 = vld [vmem:[%s8 + $0x8] sm:$0xf]
    %v383 = vld [vmem:[%s8 + $0xc] sm:$0xf]
    %v384 = vld [vmem:[%s8 + $0x10] sm:$0xf]
    %v385 = vld [vmem:[%s8 + $0x14] sm:$0xf]
    %v386 = vld [vmem:[%s8 + $0x18] sm:$0xf]
    %v387 = vld [vmem:[%s8 + $0x1c] sm:$0xf]
    %v388 = vld [vmem:[%s8 + $0x20] sm:$0xf]
    %v389 = vld [vmem:[%s8 + $0x24] sm:$0xf]
    %v390 = vld [vmem:[%s8 + $0x28] sm:$0xf]
    %v391 = vld [vmem:[%s8 + $0x2c] sm:$0xf]
    %v392 = vld [vmem:[%s8 + $0x30] sm:$0xf]
    %v393 = vld [vmem:[%s8 + $0x34] sm:$0xf]
    %v394 = vld [vmem:[%s8 + $0x38] sm:$0xf]
    %v395 = vld [vmem:[%s8 + $0x3c] sm:$0xf]
    %v396 = vld [vmem:[%s8 + $0x40] sm:$0xf]
    %v397 = vld [vmem:[%s8 + $0x44] sm:$0xf]
    %v398 = vld [vmem:[%s8 + $0x48] sm:$0xf]
    %v399 = vld [vmem:[%s8 + $0x4c] sm:$0xf]
    %v400 = vld [vmem:[%s8 + $0x50] sm:$0xf]
    %v401 = vld [vmem:[%s8 + $0x54] sm:$0xf]
    %v402 = vld [vmem:[%s8 + $0x58] sm:$0xf]
    %v403 = vld [vmem:[%s8 + $0x5c] sm:$0xf]
    %v404 = vld [vmem:[%s8 + $0x60] sm:$0xf]
    %v405 = vld [vmem:[%s8 + $0x64] sm:$0xf]
    %v406 = vld [vmem:[%s8 + $0x68] sm:$0xf]
    %v407 = vld [vmem:[%s8 + $0x6c] sm:$0xf]
    %v408 = vld [vmem:[%s8 + $0x70] sm:$0xf]
    %v409 = vld [vmem:[%s8 + $0x74] sm:$0xf]
    %v410 = vld [vmem:[%s8 + $0x78] sm:$0xf]
    %v411 = vld [vmem:[%s8 + $0x7c] sm:$0xf]
    %v412 = vld [vmem:[%s8 + $0x80] sm:$0xf]
    %v413 = vld [vmem:[%s8 + $0x84] sm:$0xf]
    %v414 = vld [vmem:[%s8 + $0x88] sm:$0xf]
    %v415 = vld [vmem:[%s8 + $0x8c] sm:$0xf]
    %v416 = vld [vmem:[%s8 + $0x90] sm:$0x1]
    %v454 = vunpack.c.l.b16 %v380
    %v455 = vunpack.c.l.b16 %v381
    %v456 = vunpack.c.l.b16 %v382
    %v457 = vunpack.c.l.b16 %v383
    %v458 = vunpack.c.l.b16 %v384
    %v459 = vunpack.c.l.b16 %v385
    %v460 = vunpack.c.l.b16 %v386
    %v461 = vunpack.c.l.b16 %v387
    %v462 = vunpack.c.l.b16 %v388
    %v463 = vunpack.c.l.b16 %v389
    %v464 = vunpack.c.l.b16 %v390
    %v465 = vunpack.c.l.b16 %v391
    %v466 = vunpack.c.l.b16 %v392
    %v467 = vunpack.c.l.b16 %v393
    %v468 = vunpack.c.l.b16 %v394
    %v469 = vunpack.c.l.b16 %v395
    %v470 = vunpack.c.l.b16 %v396
    %v471 = vunpack.c.l.b16 %v397
    %v472 = vunpack.c.l.b16 %v398
    %v473 = vunpack.c.l.b16 %v399
    %v474 = vunpack.c.l.b16 %v400
    %v475 = vunpack.c.l.b16 %v401
    %v476 = vunpack.c.l.b16 %v402
    %v477 = vunpack.c.l.b16 %v403
    %v478 = vunpack.c.l.b16 %v404
    %v479 = vunpack.c.l.b16 %v405
    %v480 = vunpack.c.l.b16 %v406
    %v481 = vunpack.c.l.b16 %v407
    %v482 = vunpack.c.l.b16 %v408
    %v483 = vunpack.c.l.b16 %v409
    %v484 = vunpack.c.l.b16 %v410
    %v485 = vunpack.c.l.b16 %v411
    %v486 = vunpack.c.l.b16 %v412
    %v487 = vunpack.c.l.b16 %v413
    %v488 = vunpack.c.l.b16 %v414
    %v489 = vunpack.c.l.b16 %v415
    %v490 = vunpack.c.l.b16 %v416
    %v491 = vpack.c.b16 %v455, %v454
    %v492 = vpack.c.b16 %v457, %v456
    %v493 = vpack.c.b16 %v459, %v458
    %v494 = vpack.c.b16 %v461, %v460
    %v495 = vpack.c.b16 %v463, %v462
    %v496 = vpack.c.b16 %v465, %v464
    %v497 = vpack.c.b16 %v467, %v466
    %v498 = vpack.c.b16 %v469, %v468
    %v499 = vpack.c.b16 %v471, %v470
    %v500 = vpack.c.b16 %v473, %v472
    %v501 = vpack.c.b16 %v475, %v474
    %v502 = vpack.c.b16 %v477, %v476
    %v503 = vpack.c.b16 %v479, %v478
    %v504 = vpack.c.b16 %v481, %v480
    %v505 = vpack.c.b16 %v483, %v482
    %v506 = vpack.c.b16 %v485, %v484
    %v507 = vpack.c.b16 %v487, %v486
    %v508 = vpack.c.b16 %v489, %v488
    %v509 = vpack.c.b16 %v490, %v490
    %vm528 = vcmask 269312
    %v530 = vsel %vm528, %v379, 0
    %vm532 = vcmask 1040384
    %v533 = vsel 0, 4294967295, 65535
    %v534 = vsel %vm532, %v533, 0
    %v536 = vand.u32 %v509, %v534
    %538 = vmatprep.subr.bf16.mxu0 0
    %539 = vmatpush1.bf16.msra.mxu0 %v498
    %540 = vmatprep.subr.bf16.mxu0 0
    %541 = vmatpush1.bf16.msra.mxu0 %v497
    %542 = vmatprep.subr.bf16.mxu0 0
    %543 = vmatpush1.bf16.msra.mxu0 %v496
    %544 = vmatprep.subr.bf16.mxu0 0
    %545 = vmatpush1.bf16.msra.mxu0 %v495
    %546 = vmatprep.subr.bf16.mxu0 0
    %547 = vmatpush1.bf16.msra.mxu0 %v494
    %548 = vmatprep.subr.bf16.mxu0 0
    %549 = vmatpush1.bf16.msra.mxu0 %v493
    %550 = vmatprep.subr.bf16.mxu0 0
    %551 = vmatpush1.bf16.msra.mxu0 %v492
    %552 = vmatprep.subr.bf16.mxu0 0
    %553 = vmatpush1.bf16.msra.mxu0 %v491
    %554 = vmatprep.subr.bf16.mxu0 0
    %555 = vmatpush2.bf16.msra.mxu0 %v506
    %556 = vmatprep.subr.bf16.mxu0 0
    %557 = vmatpush2.bf16.msra.mxu0 %v505
    %558 = vmatprep.subr.bf16.mxu0 0
    %559 = vmatpush2.bf16.msra.mxu0 %v504
    %560 = vmatprep.subr.bf16.mxu0 0
    %561 = vmatpush2.bf16.msra.mxu0 %v503
    %562 = vmatprep.subr.bf16.mxu0 0
    %563 = vmatpush2.bf16.msra.mxu0 %v502
    %564 = vmatprep.subr.bf16.mxu0 0
    %565 = vmatpush2.bf16.msra.mxu0 %v501
    %566 = vmatprep.subr.bf16.mxu0 0
    %567 = vmatpush2.bf16.msra.mxu0 %v500
    %568 = vmatprep.subr.bf16.mxu0 0
    %569 = vmatpush2.bf16.msra.mxu0 %v499
    %570 = vmatprep.mubr.bf16.mxu0 %v378
    %571 = vmatmul.mubr.bf16.gmra.mxu0 %v377
    %v572 = vpop.f32.mrf.mxu0
    %v573 = vadd.f32 0.0, %v572
    %v574 = vpop.f32.mrf.mxu0
    %v575 = vpop.f32.mrf.mxu0
    %v576 = vpop.f32.mrf.mxu0
    %577 = vdwg.mxu0
    %578 = vmatprep.subr.bf16.mxu0 0
    %579 = vmatpush1.bf16.msra.mxu0 0
    %580 = vmatprep.subr.bf16.mxu0 0
    %581 = vmatpush1.bf16.msra.mxu0 0
    %582 = vmatprep.subr.bf16.mxu0 0
    %583 = vmatpush1.bf16.msra.mxu0 0
    %584 = vmatprep.subr.bf16.mxu0 0
    %585 = vmatpush1.bf16.msra.mxu0 0
    %586 = vmatprep.subr.bf16.mxu0 0
    %587 = vmatpush1.bf16.msra.mxu0 0
    %588 = vmatprep.subr.bf16.mxu0 0
    %589 = vmatpush1.bf16.msra.mxu0 %v536
    %590 = vmatprep.subr.bf16.mxu0 0
    %591 = vmatpush1.bf16.msra.mxu0 %v508
    %592 = vmatprep.subr.bf16.mxu0 0
    %593 = vmatpush1.bf16.msra.mxu0 %v507
    %594 = vmatprep.subr.bf16.mxu0 0
    %595 = vmatpush2.bf16.msra.mxu0 0
    %596 = vmatprep.subr.bf16.mxu0 0
    %597 = vmatpush2.bf16.msra.mxu0 0
    %598 = vmatprep.subr.bf16.mxu0 0
    %599 = vmatpush2.bf16.msra.mxu0 0
    %600 = vmatprep.subr.bf16.mxu0 0
    %601 = vmatpush2.bf16.msra.mxu0 0
    %602 = vmatprep.subr.bf16.mxu0 0
    %603 = vmatpush2.bf16.msra.mxu0 0
    %604 = vmatprep.subr.bf16.mxu0 0
    %605 = vmatpush2.bf16.msra.mxu0 0
    %606 = vmatprep.subr.bf16.mxu0 0
    %607 = vmatpush2.bf16.msra.mxu0 0
    %608 = vmatprep.subr.bf16.mxu0 0
    %609 = vmatpush2.bf16.msra.mxu0 0
    %610 = vmatprep.mubr.bf16.mxu0 0
    %611 = vmatmul.mubr.bf16.gmra.mxu0 %v530
    %v612 = vpop.f32.mrf.mxu0
    %v613 = vadd.f32 %v573, %v612
    %v614 = vpop.f32.mrf.mxu0
    %v615 = vpop.f32.mrf.mxu0
    %v616 = vpop.f32.mrf.mxu0
    %617 = vdwg.mxu0
    %v618 = vld [vmem:[%s6] sm:$0xf]
    %v619 = vld [vmem:[%s6 + $0x4] sm:$0xf]
    %v620 = vpack.c.bf16 %v613, %v613
    %s621 = scalar_lea.vmem %s8, 148
    %v622 = vld [vmem:[%s621] sm:$0xf]
    %v623 = vld [vmem:[%s621 + $0x4] sm:$0xf]
    %v624 = vld [vmem:[%s621 + $0x8] sm:$0xf]
    %v625 = vld [vmem:[%s621 + $0xc] sm:$0xf]
    %v626 = vld [vmem:[%s621 + $0x10] sm:$0xf]
    %v627 = vld [vmem:[%s621 + $0x14] sm:$0xf]
    %v628 = vld [vmem:[%s621 + $0x18] sm:$0xf]
    %v629 = vld [vmem:[%s621 + $0x1c] sm:$0xf]
    %v630 = vld [vmem:[%s621 + $0x20] sm:$0xf]
    %v631 = vld [vmem:[%s621 + $0x24] sm:$0xf]
    %v632 = vld [vmem:[%s621 + $0x28] sm:$0xf]
    %v633 = vld [vmem:[%s621 + $0x2c] sm:$0xf]
    %v634 = vld [vmem:[%s621 + $0x30] sm:$0xf]
    %v635 = vld [vmem:[%s621 + $0x34] sm:$0xf]
    %v636 = vld [vmem:[%s621 + $0x38] sm:$0xf]
    %v637 = vld [vmem:[%s621 + $0x3c] sm:$0xf]
    %v638 = vld [vmem:[%s621 + $0x40] sm:$0xf]
    %v639 = vld [vmem:[%s621 + $0x44] sm:$0xf]
    %v640 = vld [vmem:[%s621 + $0x48] sm:$0xf]
    %v641 = vld [vmem:[%s621 + $0x4c] sm:$0xf]
    %v642 = vld [vmem:[%s621 + $0x50] sm:$0xf]
    %v643 = vld [vmem:[%s621 + $0x54] sm:$0xf]
    %v644 = vld [vmem:[%s621 + $0x58] sm:$0xf]
    %v645 = vld [vmem:[%s621 + $0x5c] sm:$0xf]
    %v646 = vld [vmem:[%s621 + $0x60] sm:$0xf]
    %v647 = vld [vmem:[%s621 + $0x64] sm:$0xf]
    %v648 = vld [vmem:[%s621 + $0x68] sm:$0xf]
    %v649 = vld [vmem:[%s621 + $0x6c] sm:$0xf]
    %v650 = vld [vmem:[%s621 + $0x70] sm:$0xf]
    %v651 = vld [vmem:[%s621 + $0x74] sm:$0xf]
    %v652 = vld [vmem:[%s621 + $0x78] sm:$0xf]
    %v653 = vld [vmem:[%s621 + $0x7c] sm:$0xf]
    %v654 = vld [vmem:[%s621 + $0x80] sm:$0xf]
    %v655 = vld [vmem:[%s621 + $0x84] sm:$0xf]
    %v656 = vld [vmem:[%s621 + $0x88] sm:$0xf]
    %v657 = vld [vmem:[%s621 + $0x8c] sm:$0xf]
    %v658 = vld [vmem:[%s621 + $0x90] sm:$0x1]
    %v696 = vunpack.c.l.b16 %v622
    %v697 = vunpack.c.l.b16 %v623
    %v698 = vunpack.c.l.b16 %v624
    %v699 = vunpack.c.l.b16 %v625
    %v700 = vunpack.c.l.b16 %v626
    %v701 = vunpack.c.l.b16 %v627
    %v702 = vunpack.c.l.b16 %v628
    %v703 = vunpack.c.l.b16 %v629
    %v704 = vunpack.c.l.b16 %v630
    %v705 = vunpack.c.l.b16 %v631
    %v706 = vunpack.c.l.b16 %v632
    %v707 = vunpack.c.l.b16 %v633
    %v708 = vunpack.c.l.b16 %v634
    %v709 = vunpack.c.l.b16 %v635
    %v710 = vunpack.c.l.b16 %v636
    %v711 = vunpack.c.l.b16 %v637
    %v712 = vunpack.c.l.b16 %v638
    %v713 = vunpack.c.l.b16 %v639
    %v714 = vunpack.c.l.b16 %v640
    %v715 = vunpack.c.l.b16 %v641
    %v716 = vunpack.c.l.b16 %v642
    %v717 = vunpack.c.l.b16 %v643
    %v718 = vunpack.c.l.b16 %v644
    %v719 = vunpack.c.l.b16 %v645
    %v720 = vunpack.c.l.b16 %v646
    %v721 = vunpack.c.l.b16 %v647
    %v722 = vunpack.c.l.b16 %v648
    %v723 = vunpack.c.l.b16 %v649
    %v724 = vunpack.c.l.b16 %v650
    %v725 = vunpack.c.l.b16 %v651
    %v726 = vunpack.c.l.b16 %v652
    %v727 = vunpack.c.l.b16 %v653
    %v728 = vunpack.c.l.b16 %v654
    %v729 = vunpack.c.l.b16 %v655
    %v730 = vunpack.c.l.b16 %v656
    %v731 = vunpack.c.l.b16 %v657
    %v732 = vunpack.c.l.b16 %v658
    %v733 = vpack.c.b16 %v697, %v696
    %v734 = vpack.c.b16 %v699, %v698
    %v735 = vpack.c.b16 %v701, %v700
    %v736 = vpack.c.b16 %v703, %v702
    %v737 = vpack.c.b16 %v705, %v704
    %v738 = vpack.c.b16 %v707, %v706
    %v739 = vpack.c.b16 %v709, %v708
    %v740 = vpack.c.b16 %v711, %v710
    %v741 = vpack.c.b16 %v713, %v712
    %v742 = vpack.c.b16 %v715, %v714
    %v743 = vpack.c.b16 %v717, %v716
    %v744 = vpack.c.b16 %v719, %v718
    %v745 = vpack.c.b16 %v721, %v720
    %v746 = vpack.c.b16 %v723, %v722
    %v747 = vpack.c.b16 %v725, %v724
    %v748 = vpack.c.b16 %v727, %v726
    %v749 = vpack.c.b16 %v729, %v728
    %v750 = vpack.c.b16 %v731, %v730
    %v751 = vpack.c.b16 %v732, %v732
    %v771 = vand.u32 %v751, %v534
    %773 = vmatprep.subr.bf16.mxu0 0
    %774 = vmatpush1.bf16.msra.mxu0 %v740
    %775 = vmatprep.subr.bf16.mxu0 0
    %776 = vmatpush1.bf16.msra.mxu0 %v739
    %777 = vmatprep.subr.bf16.mxu0 0
    %778 = vmatpush1.bf16.msra.mxu0 %v738
    %779 = vmatprep.subr.bf16.mxu0 0
    %780 = vmatpush1.bf16.msra.mxu0 %v737
    %781 = vmatprep.subr.bf16.mxu0 0
    %782 = vmatpush1.bf16.msra.mxu0 %v736
    %783 = vmatprep.subr.bf16.mxu0 0
    %784 = vmatpush1.bf16.msra.mxu0 %v735
    %785 = vmatprep.subr.bf16.mxu0 0
    %786 = vmatpush1.bf16.msra.mxu0 %v734
    %787 = vmatprep.subr.bf16.mxu0 0
    %788 = vmatpush1.bf16.msra.mxu0 %v733
    %789 = vmatprep.subr.bf16.mxu0 0
    %790 = vmatpush2.bf16.msra.mxu0 %v748
    %791 = vmatprep.subr.bf16.mxu0 0
    %792 = vmatpush2.bf16.msra.mxu0 %v747
    %793 = vmatprep.subr.bf16.mxu0 0
    %794 = vmatpush2.bf16.msra.mxu0 %v746
    %795 = vmatprep.subr.bf16.mxu0 0
    %796 = vmatpush2.bf16.msra.mxu0 %v745
    %797 = vmatprep.subr.bf16.mxu0 0
    %798 = vmatpush2.bf16.msra.mxu0 %v744
    %799 = vmatprep.subr.bf16.mxu0 0
    %800 = vmatpush2.bf16.msra.mxu0 %v743
    %801 = vmatprep.subr.bf16.mxu0 0
    %802 = vmatpush2.bf16.msra.mxu0 %v742
    %803 = vmatprep.subr.bf16.mxu0 0
    %804 = vmatpush2.bf16.msra.mxu0 %v741
    %805 = vmatprep.mubr.bf16.mxu0 %v378
    %806 = vmatmul.mubr.bf16.gmra.mxu0 %v377
    %v807 = vpop.f32.mrf.mxu0
    %v808 = vadd.f32 0.0, %v807
    %v809 = vpop.f32.mrf.mxu0
    %v810 = vpop.f32.mrf.mxu0
    %v811 = vpop.f32.mrf.mxu0
    %812 = vdwg.mxu0
    %813 = vmatprep.subr.bf16.mxu0 0
    %814 = vmatpush1.bf16.msra.mxu0 0
    %815 = vmatprep.subr.bf16.mxu0 0
    %816 = vmatpush1.bf16.msra.mxu0 0
    %817 = vmatprep.subr.bf16.mxu0 0
    %818 = vmatpush1.bf16.msra.mxu0 0
    %819 = vmatprep.subr.bf16.mxu0 0
    %820 = vmatpush1.bf16.msra.mxu0 0
    %821 = vmatprep.subr.bf16.mxu0 0
    %822 = vmatpush1.bf16.msra.mxu0 0
    %823 = vmatprep.subr.bf16.mxu0 0
    %824 = vmatpush1.bf16.msra.mxu0 %v771
    %825 = vmatprep.subr.bf16.mxu0 0
    %826 = vmatpush1.bf16.msra.mxu0 %v750
    %827 = vmatprep.subr.bf16.mxu0 0
    %828 = vmatpush1.bf16.msra.mxu0 %v749
    %829 = vmatprep.subr.bf16.mxu0 0
    %830 = vmatpush2.bf16.msra.mxu0 0
    %831 = vmatprep.subr.bf16.mxu0 0
    %832 = vmatpush2.bf16.msra.mxu0 0
    %833 = vmatprep.subr.bf16.mxu0 0
    %834 = vmatpush2.bf16.msra.mxu0 0
    %835 = vmatprep.subr.bf16.mxu0 0
    %836 = vmatpush2.bf16.msra.mxu0 0
    %837 = vmatprep.subr.bf16.mxu0 0
    %838 = vmatpush2.bf16.msra.mxu0 0
    %839 = vmatprep.subr.bf16.mxu0 0
    %840 = vmatpush2.bf16.msra.mxu0 0
    %841 = vmatprep.subr.bf16.mxu0 0
    %842 = vmatpush2.bf16.msra.mxu0 0
    %843 = vmatprep.subr.bf16.mxu0 0
    %844 = vmatpush2.bf16.msra.mxu0 0
    %845 = vmatprep.mubr.bf16.mxu0 0
    %846 = vmatmul.mubr.bf16.gmra.mxu0 %v530
    %v847 = vpop.f32.mrf.mxu0
    %v848 = vadd.f32 %v808, %v847
    %v849 = vpop.f32.mrf.mxu0
    %v850 = vpop.f32.mrf.mxu0
    %v851 = vpop.f32.mrf.mxu0
    %852 = vdwg.mxu0
    %s853 = scalar_lea.vmem %s6, 8
    %v854 = vld [vmem:[%s853] sm:$0xf]
    %v855 = vld [vmem:[%s853 + $0x4] sm:$0xf]
    %v856 = vpack.c.bf16 %v848, %v848
    %v859 = vunpack.c.l.b16 %v854
    %v860 = vunpack.c.l.b16 %v855
    %v861 = vpack.c.b16 %v860, %v859
    %vm862 = vcmask 64512
    %v864 = vsel %vm862, %v861, 0
    %vm866 = vcmask 1043456
    %v868 = vsel %vm866, %v856, 0
    %870 = vmatprep.subr.bf16.mxu0 0
    %871 = vmatpush1.bf16.msra.mxu0 0
    %872 = vmatprep.subr.bf16.mxu0 0
    %873 = vmatpush1.bf16.msra.mxu0 0
    %874 = vmatprep.subr.bf16.mxu0 0
    %875 = vmatpush1.bf16.msra.mxu0 0
    %876 = vmatprep.subr.bf16.mxu0 0
    %877 = vmatpush1.bf16.msra.mxu0 0
    %878 = vmatprep.subr.bf16.mxu0 0
    %879 = vmatpush1.bf16.msra.mxu0 0
    %880 = vmatprep.subr.bf16.mxu0 0
    %881 = vmatpush1.bf16.msra.mxu0 0
    %882 = vmatprep.subr.bf16.mxu0 0
    %883 = vmatpush1.bf16.msra.mxu0 0
    %884 = vmatprep.subr.bf16.mxu0 0
    %885 = vmatpush1.bf16.msra.mxu0 %v868
    %886 = vmatprep.subr.bf16.mxu0 0
    %887 = vmatpush2.bf16.msra.mxu0 0
    %888 = vmatprep.subr.bf16.mxu0 0
    %889 = vmatpush2.bf16.msra.mxu0 0
    %890 = vmatprep.subr.bf16.mxu0 0
    %891 = vmatpush2.bf16.msra.mxu0 0
    %892 = vmatprep.subr.bf16.mxu0 0
    %893 = vmatpush2.bf16.msra.mxu0 0
    %894 = vmatprep.subr.bf16.mxu0 0
    %895 = vmatpush2.bf16.msra.mxu0 0
    %896 = vmatprep.subr.bf16.mxu0 0
    %897 = vmatpush2.bf16.msra.mxu0 0
    %898 = vmatprep.subr.bf16.mxu0 0
    %899 = vmatpush2.bf16.msra.mxu0 0
    %900 = vmatprep.subr.bf16.mxu0 0
    %901 = vmatpush2.bf16.msra.mxu0 0
    %902 = vmatprep.mubr.bf16.mxu0 0
    %903 = vmatmul.mubr.bf16.gmra.mxu0 %v864
    %v904 = vpop.f32.mrf.mxu0
    %v905 = vadd.f32 0.0, %v904
    %v906 = vpop.f32.mrf.mxu0
    %v907 = vpop.f32.mrf.mxu0
    %v908 = vadd.f32 0.0, %v907
    %v909 = vpop.f32.mrf.mxu0
    %910 = vdwg.mxu0
    %v913 = vunpack.c.l.b16 %v618
    %v914 = vunpack.c.l.b16 %v619
    %v915 = vpack.c.b16 %v914, %v913
    %v917 = vsel %vm862, %v915, 0
    %v920 = vsel %vm866, %v620, 0
    %922 = vmatprep.subr.bf16.mxu0 0
    %923 = vmatpush1.bf16.msra.mxu0 0
    %924 = vmatprep.subr.bf16.mxu0 0
    %925 = vmatpush1.bf16.msra.mxu0 0
    %926 = vmatprep.subr.bf16.mxu0 0
    %927 = vmatpush1.bf16.msra.mxu0 0
    %928 = vmatprep.subr.bf16.mxu0 0
    %929 = vmatpush1.bf16.msra.mxu0 0
    %930 = vmatprep.subr.bf16.mxu0 0
    %931 = vmatpush1.bf16.msra.mxu0 0
    %932 = vmatprep.subr.bf16.mxu0 0
    %933 = vmatpush1.bf16.msra.mxu0 0
    %934 = vmatprep.subr.bf16.mxu0 0
    %935 = vmatpush1.bf16.msra.mxu0 0
    %936 = vmatprep.subr.bf16.mxu0 0
    %937 = vmatpush1.bf16.msra.mxu0 %v920
    %938 = vmatprep.subr.bf16.mxu0 0
    %939 = vmatpush2.bf16.msra.mxu0 0
    %940 = vmatprep.subr.bf16.mxu0 0
    %941 = vmatpush2.bf16.msra.mxu0 0
    %942 = vmatprep.subr.bf16.mxu0 0
    %943 = vmatpush2.bf16.msra.mxu0 0
    %944 = vmatprep.subr.bf16.mxu0 0
    %945 = vmatpush2.bf16.msra.mxu0 0
    %946 = vmatprep.subr.bf16.mxu0 0
    %947 = vmatpush2.bf16.msra.mxu0 0
    %948 = vmatprep.subr.bf16.mxu0 0
    %949 = vmatpush2.bf16.msra.mxu0 0
    %950 = vmatprep.subr.bf16.mxu0 0
    %951 = vmatpush2.bf16.msra.mxu0 0
    %952 = vmatprep.subr.bf16.mxu0 0
    %953 = vmatpush2.bf16.msra.mxu0 0
    %954 = vmatprep.mubr.bf16.mxu0 0
    %955 = vmatmul.mubr.bf16.gmra.mxu0 %v917
    %v956 = vpop.f32.mrf.mxu0
    %v957 = vadd.f32 %v905, %v956
    %v958 = vpop.f32.mrf.mxu0
    %v959 = vpop.f32.mrf.mxu0
    %v960 = vadd.f32 %v908, %v959
    %v961 = vpop.f32.mrf.mxu0
    %962 = vdwg.mxu0
    %s963 = scalar_lea.vmem %s8, 296
    %v964 = vld [vmem:[%s963] sm:$0xf]
    %v965 = vld [vmem:[%s963 + $0x4] sm:$0xf]
    %v966 = vld [vmem:[%s963 + $0x8] sm:$0xf]
    %v967 = vld [vmem:[%s963 + $0xc] sm:$0xf]
    %v968 = vld [vmem:[%s963 + $0x10] sm:$0xf]
    %v969 = vld [vmem:[%s963 + $0x14] sm:$0xf]
    %v970 = vld [vmem:[%s963 + $0x18] sm:$0xf]
    %v971 = vld [vmem:[%s963 + $0x1c] sm:$0xf]
    %v972 = vld [vmem:[%s963 + $0x20] sm:$0xf]
    %v973 = vld [vmem:[%s963 + $0x24] sm:$0xf]
    %v974 = vld [vmem:[%s963 + $0x28] sm:$0xf]
    %v975 = vld [vmem:[%s963 + $0x2c] sm:$0xf]
    %v976 = vld [vmem:[%s963 + $0x30] sm:$0xf]
    %v977 = vld [vmem:[%s963 + $0x34] sm:$0xf]
    %v978 = vld [vmem:[%s963 + $0x38] sm:$0xf]
    %v979 = vld [vmem:[%s963 + $0x3c] sm:$0xf]
    %v980 = vld [vmem:[%s963 + $0x40] sm:$0xf]
    %v981 = vld [vmem:[%s963 + $0x44] sm:$0xf]
    %v982 = vld [vmem:[%s963 + $0x48] sm:$0xf]
    %v983 = vld [vmem:[%s963 + $0x4c] sm:$0xf]
    %v984 = vld [vmem:[%s963 + $0x50] sm:$0xf]
    %v985 = vld [vmem:[%s963 + $0x54] sm:$0xf]
    %v986 = vld [vmem:[%s963 + $0x58] sm:$0xf]
    %v987 = vld [vmem:[%s963 + $0x5c] sm:$0xf]
    %v988 = vld [vmem:[%s963 + $0x60] sm:$0xf]
    %v989 = vld [vmem:[%s963 + $0x64] sm:$0xf]
    %v990 = vld [vmem:[%s963 + $0x68] sm:$0xf]
    %v991 = vld [vmem:[%s963 + $0x6c] sm:$0xf]
    %v992 = vld [vmem:[%s963 + $0x70] sm:$0xf]
    %v993 = vld [vmem:[%s963 + $0x74] sm:$0xf]
    %v994 = vld [vmem:[%s963 + $0x78] sm:$0xf]
    %v995 = vld [vmem:[%s963 + $0x7c] sm:$0xf]
    %v996 = vld [vmem:[%s963 + $0x80] sm:$0xf]
    %v997 = vld [vmem:[%s963 + $0x84] sm:$0xf]
    %v998 = vld [vmem:[%s963 + $0x88] sm:$0xf]
    %v999 = vld [vmem:[%s963 + $0x8c] sm:$0xf]
    %v1000 = vld [vmem:[%s963 + $0x90] sm:$0x1]
    %v1038 = vunpack.c.l.b16 %v964
    %v1039 = vunpack.c.l.b16 %v965
    %v1040 = vunpack.c.l.b16 %v966
    %v1041 = vunpack.c.l.b16 %v967
    %v1042 = vunpack.c.l.b16 %v968
    %v1043 = vunpack.c.l.b16 %v969
    %v1044 = vunpack.c.l.b16 %v970
    %v1045 = vunpack.c.l.b16 %v971
    %v1046 = vunpack.c.l.b16 %v972
    %v1047 = vunpack.c.l.b16 %v973
    %v1048 = vunpack.c.l.b16 %v974
    %v1049 = vunpack.c.l.b16 %v975
    %v1050 = vunpack.c.l.b16 %v976
    %v1051 = vunpack.c.l.b16 %v977
    %v1052 = vunpack.c.l.b16 %v978
    %v1053 = vunpack.c.l.b16 %v979
    %v1054 = vunpack.c.l.b16 %v980
    %v1055 = vunpack.c.l.b16 %v981
    %v1056 = vunpack.c.l.b16 %v982
    %v1057 = vunpack.c.l.b16 %v983
    %v1058 = vunpack.c.l.b16 %v984
    %v1059 = vunpack.c.l.b16 %v985
    %v1060 = vunpack.c.l.b16 %v986
    %v1061 = vunpack.c.l.b16 %v987
    %v1062 = vunpack.c.l.b16 %v988
    %v1063 = vunpack.c.l.b16 %v989
    %v1064 = vunpack.c.l.b16 %v990
    %v1065 = vunpack.c.l.b16 %v991
    %v1066 = vunpack.c.l.b16 %v992
    %v1067 = vunpack.c.l.b16 %v993
    %v1068 = vunpack.c.l.b16 %v994
    %v1069 = vunpack.c.l.b16 %v995
    %v1070 = vunpack.c.l.b16 %v996
    %v1071 = vunpack.c.l.b16 %v997
    %v1072 = vunpack.c.l.b16 %v998
    %v1073 = vunpack.c.l.b16 %v999
    %v1074 = vunpack.c.l.b16 %v1000
    %v1075 = vpack.c.b16 %v1039, %v1038
    %v1076 = vpack.c.b16 %v1041, %v1040
    %v1077 = vpack.c.b16 %v1043, %v1042
    %v1078 = vpack.c.b16 %v1045, %v1044
    %v1079 = vpack.c.b16 %v1047, %v1046
    %v1080 = vpack.c.b16 %v1049, %v1048
    %v1081 = vpack.c.b16 %v1051, %v1050
    %v1082 = vpack.c.b16 %v1053, %v1052
    %v1083 = vpack.c.b16 %v1055, %v1054
    %v1084 = vpack.c.b16 %v1057, %v1056
    %v1085 = vpack.c.b16 %v1059, %v1058
    %v1086 = vpack.c.b16 %v1061, %v1060
    %v1087 = vpack.c.b16 %v1063, %v1062
    %v1088 = vpack.c.b16 %v1065, %v1064
    %v1089 = vpack.c.b16 %v1067, %v1066
    %v1090 = vpack.c.b16 %v1069, %v1068
    %v1091 = vpack.c.b16 %v1071, %v1070
    %v1092 = vpack.c.b16 %v1073, %v1072
    %v1093 = vpack.c.b16 %v1074, %v1074
    %v1113 = vand.u32 %v1093, %v534
    %1115 = vmatprep.subr.bf16.mxu0 0
    %1116 = vmatpush1.bf16.msra.mxu0 %v1082
    %1117 = vmatprep.subr.bf16.mxu0 0
    %1118 = vmatpush1.bf16.msra.mxu0 %v1081
    %1119 = vmatprep.subr.bf16.mxu0 0
    %1120 = vmatpush1.bf16.msra.mxu0 %v1080
    %1121 = vmatprep.subr.bf16.mxu0 0
    %1122 = vmatpush1.bf16.msra.mxu0 %v1079
    %1123 = vmatprep.subr.bf16.mxu0 0
    %1124 = vmatpush1.bf16.msra.mxu0 %v1078
    %1125 = vmatprep.subr.bf16.mxu0 0
    %1126 = vmatpush1.bf16.msra.mxu0 %v1077
    %1127 = vmatprep.subr.bf16.mxu0 0
    %1128 = vmatpush1.bf16.msra.mxu0 %v1076
    %1129 = vmatprep.subr.bf16.mxu0 0
    %1130 = vmatpush1.bf16.msra.mxu0 %v1075
    %1131 = vmatprep.subr.bf16.mxu0 0
    %1132 = vmatpush2.bf16.msra.mxu0 %v1090
    %1133 = vmatprep.subr.bf16.mxu0 0
    %1134 = vmatpush2.bf16.msra.mxu0 %v1089
    %1135 = vmatprep.subr.bf16.mxu0 0
    %1136 = vmatpush2.bf16.msra.mxu0 %v1088
    %1137 = vmatprep.subr.bf16.mxu0 0
    %1138 = vmatpush2.bf16.msra.mxu0 %v1087
    %1139 = vmatprep.subr.bf16.mxu0 0
    %1140 = vmatpush2.bf16.msra.mxu0 %v1086
    %1141 = vmatprep.subr.bf16.mxu0 0
    %1142 = vmatpush2.bf16.msra.mxu0 %v1085
    %1143 = vmatprep.subr.bf16.mxu0 0
    %1144 = vmatpush2.bf16.msra.mxu0 %v1084
    %1145 = vmatprep.subr.bf16.mxu0 0
    %1146 = vmatpush2.bf16.msra.mxu0 %v1083
    %1147 = vmatprep.mubr.bf16.mxu0 %v378
    %1148 = vmatmul.mubr.bf16.gmra.mxu0 %v377
    %v1149 = vpop.f32.mrf.mxu0
    %v1150 = vadd.f32 0.0, %v1149
    %v1151 = vpop.f32.mrf.mxu0
    %v1152 = vpop.f32.mrf.mxu0
    %v1153 = vpop.f32.mrf.mxu0
    %1154 = vdwg.mxu0
    %1155 = vmatprep.subr.bf16.mxu0 0
    %1156 = vmatpush1.bf16.msra.mxu0 0
    %1157 = vmatprep.subr.bf16.mxu0 0
    %1158 = vmatpush1.bf16.msra.mxu0 0
    %1159 = vmatprep.subr.bf16.mxu0 0
    %1160 = vmatpush1.bf16.msra.mxu0 0
    %1161 = vmatprep.subr.bf16.mxu0 0
    %1162 = vmatpush1.bf16.msra.mxu0 0
    %1163 = vmatprep.subr.bf16.mxu0 0
    %1164 = vmatpush1.bf16.msra.mxu0 0
    %1165 = vmatprep.subr.bf16.mxu0 0
    %1166 = vmatpush1.bf16.msra.mxu0 %v1113
    %1167 = vmatprep.subr.bf16.mxu0 0
    %1168 = vmatpush1.bf16.msra.mxu0 %v1092
    %1169 = vmatprep.subr.bf16.mxu0 0
    %1170 = vmatpush1.bf16.msra.mxu0 %v1091
    %1171 = vmatprep.subr.bf16.mxu0 0
    %1172 = vmatpush2.bf16.msra.mxu0 0
    %1173 = vmatprep.subr.bf16.mxu0 0
    %1174 = vmatpush2.bf16.msra.mxu0 0
    %1175 = vmatprep.subr.bf16.mxu0 0
    %1176 = vmatpush2.bf16.msra.mxu0 0
    %1177 = vmatprep.subr.bf16.mxu0 0
    %1178 = vmatpush2.bf16.msra.mxu0 0
    %1179 = vmatprep.subr.bf16.mxu0 0
    %1180 = vmatpush2.bf16.msra.mxu0 0
    %1181 = vmatprep.subr.bf16.mxu0 0
    %1182 = vmatpush2.bf16.msra.mxu0 0
    %1183 = vmatprep.subr.bf16.mxu0 0
    %1184 = vmatpush2.bf16.msra.mxu0 0
    %1185 = vmatprep.subr.bf16.mxu0 0
    %1186 = vmatpush2.bf16.msra.mxu0 0
    %1187 = vmatprep.mubr.bf16.mxu0 0
    %1188 = vmatmul.mubr.bf16.gmra.mxu0 %v530
    %v1189 = vpop.f32.mrf.mxu0
    %v1190 = vadd.f32 %v1150, %v1189
    %v1191 = vpop.f32.mrf.mxu0
    %v1192 = vpop.f32.mrf.mxu0
    %v1193 = vpop.f32.mrf.mxu0
    %1194 = vdwg.mxu0
    %s1195 = scalar_lea.vmem %s6, 16
    %v1196 = vld [vmem:[%s1195] sm:$0xf]
    %v1197 = vld [vmem:[%s1195 + $0x4] sm:$0xf]
    %v1198 = vpack.c.bf16 %v1190, %v1190
    %v1201 = vunpack.c.l.b16 %v1196
    %v1202 = vunpack.c.l.b16 %v1197
    %v1203 = vpack.c.b16 %v1202, %v1201
    %v1205 = vsel %vm862, %v1203, 0
    %v1208 = vsel %vm866, %v1198, 0
    %1210 = vmatprep.subr.bf16.mxu0 0
    %1211 = vmatpush1.bf16.msra.mxu0 0
    %1212 = vmatprep.subr.bf16.mxu0 0
    %1213 = vmatpush1.bf16.msra.mxu0 0
    %1214 = vmatprep.subr.bf16.mxu0 0
    %1215 = vmatpush1.bf16.msra.mxu0 0
    %1216 = vmatprep.subr.bf16.mxu0 0
    %1217 = vmatpush1.bf16.msra.mxu0 0
    %1218 = vmatprep.subr.bf16.mxu0 0
    %1219 = vmatpush1.bf16.msra.mxu0 0
    %1220 = vmatprep.subr.bf16.mxu0 0
    %1221 = vmatpush1.bf16.msra.mxu0 0
    %1222 = vmatprep.subr.bf16.mxu0 0
    %1223 = vmatpush1.bf16.msra.mxu0 0
    %1224 = vmatprep.subr.bf16.mxu0 0
    %1225 = vmatpush1.bf16.msra.mxu0 %v1208
    %1226 = vmatprep.subr.bf16.mxu0 0
    %1227 = vmatpush2.bf16.msra.mxu0 0
    %1228 = vmatprep.subr.bf16.mxu0 0
    %1229 = vmatpush2.bf16.msra.mxu0 0
    %1230 = vmatprep.subr.bf16.mxu0 0
    %1231 = vmatpush2.bf16.msra.mxu0 0
    %1232 = vmatprep.subr.bf16.mxu0 0
    %1233 = vmatpush2.bf16.msra.mxu0 0
    %1234 = vmatprep.subr.bf16.mxu0 0
    %1235 = vmatpush2.bf16.msra.mxu0 0
    %1236 = vmatprep.subr.bf16.mxu0 0
    %1237 = vmatpush2.bf16.msra.mxu0 0
    %1238 = vmatprep.subr.bf16.mxu0 0
    %1239 = vmatpush2.bf16.msra.mxu0 0
    %1240 = vmatprep.subr.bf16.mxu0 0
    %1241 = vmatpush2.bf16.msra.mxu0 0
    %1242 = vmatprep.mubr.bf16.mxu0 0
    %1243 = vmatmul.mubr.bf16.gmra.mxu0 %v1205
    %v1244 = vpop.f32.mrf.mxu0
    %v1245 = vadd.f32 0.0, %v1244
    %v1246 = vpop.f32.mrf.mxu0
    %v1247 = vpop.f32.mrf.mxu0
    %v1248 = vadd.f32 0.0, %v1247
    %v1249 = vpop.f32.mrf.mxu0
    %1250 = vdwg.mxu0
    %v1251 = vadd.f32 %v957, %v1245
    %v1252 = vadd.f32 %v960, %v1248
    %s1253 = scalar_lea.vmem %s8, 444
    %v1254 = vld [vmem:[%s1253] sm:$0xf]
    %v1255 = vld [vmem:[%s1253 + $0x4] sm:$0xf]
    %v1256 = vld [vmem:[%s1253 + $0x8] sm:$0xf]
    %v1257 = vld [vmem:[%s1253 + $0xc] sm:$0xf]
    %v1258 = vld [vmem:[%s1253 + $0x10] sm:$0xf]
    %v1259 = vld [vmem:[%s1253 + $0x14] sm:$0xf]
    %v1260 = vld [vmem:[%s1253 + $0x18] sm:$0xf]
    %v1261 = vld [vmem:[%s1253 + $0x1c] sm:$0xf]
    %v1262 = vld [vmem:[%s1253 + $0x20] sm:$0xf]
    %v1263 = vld [vmem:[%s1253 + $0x24] sm:$0xf]
    %v1264 = vld [vmem:[%s1253 + $0x28] sm:$0xf]
    %v1265 = vld [vmem:[%s1253 + $0x2c] sm:$0xf]
    %v1266 = vld [vmem:[%s1253 + $0x30] sm:$0xf]
    %v1267 = vld [vmem:[%s1253 + $0x34] sm:$0xf]
    %v1268 = vld [vmem:[%s1253 + $0x38] sm:$0xf]
    %v1269 = vld [vmem:[%s1253 + $0x3c] sm:$0xf]
    %v1270 = vld [vmem:[%s1253 + $0x40] sm:$0xf]
    %v1271 = vld [vmem:[%s1253 + $0x44] sm:$0xf]
    %v1272 = vld [vmem:[%s1253 + $0x48] sm:$0xf]
    %v1273 = vld [vmem:[%s1253 + $0x4c] sm:$0xf]
    %v1274 = vld [vmem:[%s1253 + $0x50] sm:$0xf]
    %v1275 = vld [vmem:[%s1253 + $0x54] sm:$0xf]
    %v1276 = vld [vmem:[%s1253 + $0x58] sm:$0xf]
    %v1277 = vld [vmem:[%s1253 + $0x5c] sm:$0xf]
    %v1278 = vld [vmem:[%s1253 + $0x60] sm:$0xf]
    %v1279 = vld [vmem:[%s1253 + $0x64] sm:$0xf]
    %v1280 = vld [vmem:[%s1253 + $0x68] sm:$0xf]
    %v1281 = vld [vmem:[%s1253 + $0x6c] sm:$0xf]
    %v1282 = vld [vmem:[%s1253 + $0x70] sm:$0xf]
    %v1283 = vld [vmem:[%s1253 + $0x74] sm:$0xf]
    %v1284 = vld [vmem:[%s1253 + $0x78] sm:$0xf]
    %v1285 = vld [vmem:[%s1253 + $0x7c] sm:$0xf]
    %v1286 = vld [vmem:[%s1253 + $0x80] sm:$0xf]
    %v1287 = vld [vmem:[%s1253 + $0x84] sm:$0xf]
    %v1288 = vld [vmem:[%s1253 + $0x88] sm:$0xf]
    %v1289 = vld [vmem:[%s1253 + $0x8c] sm:$0xf]
    %v1290 = vld [vmem:[%s1253 + $0x90] sm:$0x1]
    %v1328 = vunpack.c.l.b16 %v1254
    %v1329 = vunpack.c.l.b16 %v1255
    %v1330 = vunpack.c.l.b16 %v1256
    %v1331 = vunpack.c.l.b16 %v1257
    %v1332 = vunpack.c.l.b16 %v1258
    %v1333 = vunpack.c.l.b16 %v1259
    %v1334 = vunpack.c.l.b16 %v1260
    %v1335 = vunpack.c.l.b16 %v1261
    %v1336 = vunpack.c.l.b16 %v1262
    %v1337 = vunpack.c.l.b16 %v1263
    %v1338 = vunpack.c.l.b16 %v1264
    %v1339 = vunpack.c.l.b16 %v1265
    %v1340 = vunpack.c.l.b16 %v1266
    %v1341 = vunpack.c.l.b16 %v1267
    %v1342 = vunpack.c.l.b16 %v1268
    %v1343 = vunpack.c.l.b16 %v1269
    %v1344 = vunpack.c.l.b16 %v1270
    %v1345 = vunpack.c.l.b16 %v1271
    %v1346 = vunpack.c.l.b16 %v1272
    %v1347 = vunpack.c.l.b16 %v1273
    %v1348 = vunpack.c.l.b16 %v1274
    %v1349 = vunpack.c.l.b16 %v1275
    %v1350 = vunpack.c.l.b16 %v1276
    %v1351 = vunpack.c.l.b16 %v1277
    %v1352 = vunpack.c.l.b16 %v1278
    %v1353 = vunpack.c.l.b16 %v1279
    %v1354 = vunpack.c.l.b16 %v1280
    %v1355 = vunpack.c.l.b16 %v1281
    %v1356 = vunpack.c.l.b16 %v1282
    %v1357 = vunpack.c.l.b16 %v1283
    %v1358 = vunpack.c.l.b16 %v1284
    %v1359 = vunpack.c.l.b16 %v1285
    %v1360 = vunpack.c.l.b16 %v1286
    %v1361 = vunpack.c.l.b16 %v1287
    %v1362 = vunpack.c.l.b16 %v1288
    %v1363 = vunpack.c.l.b16 %v1289
    %v1364 = vunpack.c.l.b16 %v1290
    %v1365 = vpack.c.b16 %v1329, %v1328
    %v1366 = vpack.c.b16 %v1331, %v1330
    %v1367 = vpack.c.b16 %v1333, %v1332
    %v1368 = vpack.c.b16 %v1335, %v1334
    %v1369 = vpack.c.b16 %v1337, %v1336
    %v1370 = vpack.c.b16 %v1339, %v1338
    %v1371 = vpack.c.b16 %v1341, %v1340
    %v1372 = vpack.c.b16 %v1343, %v1342
    %v1373 = vpack.c.b16 %v1345, %v1344
    %v1374 = vpack.c.b16 %v1347, %v1346
    %v1375 = vpack.c.b16 %v1349, %v1348
    %v1376 = vpack.c.b16 %v1351, %v1350
    %v1377 = vpack.c.b16 %v1353, %v1352
    %v1378 = vpack.c.b16 %v1355, %v1354
    %v1379 = vpack.c.b16 %v1357, %v1356
    %v1380 = vpack.c.b16 %v1359, %v1358
    %v1381 = vpack.c.b16 %v1361, %v1360
    %v1382 = vpack.c.b16 %v1363, %v1362
    %v1383 = vpack.c.b16 %v1364, %v1364
    %v1403 = vand.u32 %v1383, %v534
    %1405 = vmatprep.subr.bf16.mxu0 0
    %1406 = vmatpush1.bf16.msra.mxu0 %v1372
    %1407 = vmatprep.subr.bf16.mxu0 0
    %1408 = vmatpush1.bf16.msra.mxu0 %v1371
    %1409 = vmatprep.subr.bf16.mxu0 0
    %1410 = vmatpush1.bf16.msra.mxu0 %v1370
    %1411 = vmatprep.subr.bf16.mxu0 0
    %1412 = vmatpush1.bf16.msra.mxu0 %v1369
    %1413 = vmatprep.subr.bf16.mxu0 0
    %1414 = vmatpush1.bf16.msra.mxu0 %v1368
    %1415 = vmatprep.subr.bf16.mxu0 0
    %1416 = vmatpush1.bf16.msra.mxu0 %v1367
    %1417 = vmatprep.subr.bf16.mxu0 0
    %1418 = vmatpush1.bf16.msra.mxu0 %v1366
    %1419 = vmatprep.subr.bf16.mxu0 0
    %1420 = vmatpush1.bf16.msra.mxu0 %v1365
    %1421 = vmatprep.subr.bf16.mxu0 0
    %1422 = vmatpush2.bf16.msra.mxu0 %v1380
    %1423 = vmatprep.subr.bf16.mxu0 0
    %1424 = vmatpush2.bf16.msra.mxu0 %v1379
    %1425 = vmatprep.subr.bf16.mxu0 0
    %1426 = vmatpush2.bf16.msra.mxu0 %v1378
    %1427 = vmatprep.subr.bf16.mxu0 0
    %1428 = vmatpush2.bf16.msra.mxu0 %v1377
    %1429 = vmatprep.subr.bf16.mxu0 0
    %1430 = vmatpush2.bf16.msra.mxu0 %v1376
    %1431 = vmatprep.subr.bf16.mxu0 0
    %1432 = vmatpush2.bf16.msra.mxu0 %v1375
    %1433 = vmatprep.subr.bf16.mxu0 0
    %1434 = vmatpush2.bf16.msra.mxu0 %v1374
    %1435 = vmatprep.subr.bf16.mxu0 0
    %1436 = vmatpush2.bf16.msra.mxu0 %v1373
    %1437 = vmatprep.mubr.bf16.mxu0 %v378
    %1438 = vmatmul.mubr.bf16.gmra.mxu0 %v377
    %v1439 = vpop.f32.mrf.mxu0
    %v1440 = vadd.f32 0.0, %v1439
    %v1441 = vpop.f32.mrf.mxu0
    %v1442 = vpop.f32.mrf.mxu0
    %v1443 = vpop.f32.mrf.mxu0
    %1444 = vdwg.mxu0
    %1445 = vmatprep.subr.bf16.mxu0 0
    %1446 = vmatpush1.bf16.msra.mxu0 0
    %1447 = vmatprep.subr.bf16.mxu0 0
    %1448 = vmatpush1.bf16.msra.mxu0 0
    %1449 = vmatprep.subr.bf16.mxu0 0
    %1450 = vmatpush1.bf16.msra.mxu0 0
    %1451 = vmatprep.subr.bf16.mxu0 0
    %1452 = vmatpush1.bf16.msra.mxu0 0
    %1453 = vmatprep.subr.bf16.mxu0 0
    %1454 = vmatpush1.bf16.msra.mxu0 0
    %1455 = vmatprep.subr.bf16.mxu0 0
    %1456 = vmatpush1.bf16.msra.mxu0 %v1403
    %1457 = vmatprep.subr.bf16.mxu0 0
    %1458 = vmatpush1.bf16.msra.mxu0 %v1382
    %1459 = vmatprep.subr.bf16.mxu0 0
    %1460 = vmatpush1.bf16.msra.mxu0 %v1381
    %1461 = vmatprep.subr.bf16.mxu0 0
    %1462 = vmatpush2.bf16.msra.mxu0 0
    %1463 = vmatprep.subr.bf16.mxu0 0
    %1464 = vmatpush2.bf16.msra.mxu0 0
    %1465 = vmatprep.subr.bf16.mxu0 0
    %1466 = vmatpush2.bf16.msra.mxu0 0
    %1467 = vmatprep.subr.bf16.mxu0 0
    %1468 = vmatpush2.bf16.msra.mxu0 0
    %1469 = vmatprep.subr.bf16.mxu0 0
    %1470 = vmatpush2.bf16.msra.mxu0 0
    %1471 = vmatprep.subr.bf16.mxu0 0
    %1472 = vmatpush2.bf16.msra.mxu0 0
    %1473 = vmatprep.subr.bf16.mxu0 0
    %1474 = vmatpush2.bf16.msra.mxu0 0
    %1475 = vmatprep.subr.bf16.mxu0 0
    %1476 = vmatpush2.bf16.msra.mxu0 0
    %1477 = vmatprep.mubr.bf16.mxu0 0
    %1478 = vmatmul.mubr.bf16.gmra.mxu0 %v530
    %v1479 = vpop.f32.mrf.mxu0
    %v1480 = vadd.f32 %v1440, %v1479
    %v1481 = vpop.f32.mrf.mxu0
    %v1482 = vpop.f32.mrf.mxu0
    %v1483 = vpop.f32.mrf.mxu0
    %1484 = vdwg.mxu0
    %s1485 = scalar_lea.vmem %s6, 24
    %v1486 = vld [vmem:[%s1485] sm:$0xf]
    %v1487 = vld [vmem:[%s1485 + $0x4] sm:$0xf]
    %v1488 = vpack.c.bf16 %v1480, %v1480
    %v1491 = vunpack.c.l.b16 %v1486
    %v1492 = vunpack.c.l.b16 %v1487
    %v1493 = vpack.c.b16 %v1492, %v1491
    %v1495 = vsel %vm862, %v1493, 0
    %v1498 = vsel %vm866, %v1488, 0
    %1500 = vmatprep.subr.bf16.mxu0 0
    %1501 = vmatpush1.bf16.msra.mxu0 0
    %1502 = vmatprep.subr.bf16.mxu0 0
    %1503 = vmatpush1.bf16.msra.mxu0 0
    %1504 = vmatprep.subr.bf16.mxu0 0
    %1505 = vmatpush1.bf16.msra.mxu0 0
    %1506 = vmatprep.subr.bf16.mxu0 0
    %1507 = vmatpush1.bf16.msra.mxu0 0
    %1508 = vmatprep.subr.bf16.mxu0 0
    %1509 = vmatpush1.bf16.msra.mxu0 0
    %1510 = vmatprep.subr.bf16.mxu0 0
    %1511 = vmatpush1.bf16.msra.mxu0 0
    %1512 = vmatprep.subr.bf16.mxu0 0
    %1513 = vmatpush1.bf16.msra.mxu0 0
    %1514 = vmatprep.subr.bf16.mxu0 0
    %1515 = vmatpush1.bf16.msra.mxu0 %v1498
    %1516 = vmatprep.subr.bf16.mxu0 0
    %1517 = vmatpush2.bf16.msra.mxu0 0
    %1518 = vmatprep.subr.bf16.mxu0 0
    %1519 = vmatpush2.bf16.msra.mxu0 0
    %1520 = vmatprep.subr.bf16.mxu0 0
    %1521 = vmatpush2.bf16.msra.mxu0 0
    %1522 = vmatprep.subr.bf16.mxu0 0
    %1523 = vmatpush2.bf16.msra.mxu0 0
    %1524 = vmatprep.subr.bf16.mxu0 0
    %1525 = vmatpush2.bf16.msra.mxu0 0
    %1526 = vmatprep.subr.bf16.mxu0 0
    %1527 = vmatpush2.bf16.msra.mxu0 0
    %1528 = vmatprep.subr.bf16.mxu0 0
    %1529 = vmatpush2.bf16.msra.mxu0 0
    %1530 = vmatprep.subr.bf16.mxu0 0
    %1531 = vmatpush2.bf16.msra.mxu0 0
    %1532 = vmatprep.mubr.bf16.mxu0 0
    %1533 = vmatmul.mubr.bf16.gmra.mxu0 %v1495
    %v1534 = vpop.f32.mrf.mxu0
    %v1535 = vadd.f32 0.0, %v1534
    %v1536 = vpop.f32.mrf.mxu0
    %v1537 = vpop.f32.mrf.mxu0
    %v1538 = vadd.f32 0.0, %v1537
    %v1539 = vpop.f32.mrf.mxu0
    %1540 = vdwg.mxu0
    %v1541 = vadd.f32 %v1251, %v1535
    %v1542 = vadd.f32 %v1252, %v1538
    %s1543 = scalar_lea.vmem %s8, 592
    %v1544 = vld [vmem:[%s1543] sm:$0xf]
    %v1545 = vld [vmem:[%s1543 + $0x4] sm:$0xf]
    %v1546 = vld [vmem:[%s1543 + $0x8] sm:$0xf]
    %v1547 = vld [vmem:[%s1543 + $0xc] sm:$0xf]
    %v1548 = vld [vmem:[%s1543 + $0x10] sm:$0xf]
    %v1549 = vld [vmem:[%s1543 + $0x14] sm:$0xf]
    %v1550 = vld [vmem:[%s1543 + $0x18] sm:$0xf]
    %v1551 = vld [vmem:[%s1543 + $0x1c] sm:$0xf]
    %v1552 = vld [vmem:[%s1543 + $0x20] sm:$0xf]
    %v1553 = vld [vmem:[%s1543 + $0x24] sm:$0xf]
    %v1554 = vld [vmem:[%s1543 + $0x28] sm:$0xf]
    %v1555 = vld [vmem:[%s1543 + $0x2c] sm:$0xf]
    %v1556 = vld [vmem:[%s1543 + $0x30] sm:$0xf]
    %v1557 = vld [vmem:[%s1543 + $0x34] sm:$0xf]
    %v1558 = vld [vmem:[%s1543 + $0x38] sm:$0xf]
    %v1559 = vld [vmem:[%s1543 + $0x3c] sm:$0xf]
    %v1560 = vld [vmem:[%s1543 + $0x40] sm:$0xf]
    %v1561 = vld [vmem:[%s1543 + $0x44] sm:$0xf]
    %v1562 = vld [vmem:[%s1543 + $0x48] sm:$0xf]
    %v1563 = vld [vmem:[%s1543 + $0x4c] sm:$0xf]
    %v1564 = vld [vmem:[%s1543 + $0x50] sm:$0xf]
    %v1565 = vld [vmem:[%s1543 + $0x54] sm:$0xf]
    %v1566 = vld [vmem:[%s1543 + $0x58] sm:$0xf]
    %v1567 = vld [vmem:[%s1543 + $0x5c] sm:$0xf]
    %v1568 = vld [vmem:[%s1543 + $0x60] sm:$0xf]
    %v1569 = vld [vmem:[%s1543 + $0x64] sm:$0xf]
    %v1570 = vld [vmem:[%s1543 + $0x68] sm:$0xf]
    %v1571 = vld [vmem:[%s1543 + $0x6c] sm:$0xf]
    %v1572 = vld [vmem:[%s1543 + $0x70] sm:$0xf]
    %v1573 = vld [vmem:[%s1543 + $0x74] sm:$0xf]
    %v1574 = vld [vmem:[%s1543 + $0x78] sm:$0xf]
    %v1575 = vld [vmem:[%s1543 + $0x7c] sm:$0xf]
    %v1576 = vld [vmem:[%s1543 + $0x80] sm:$0xf]
    %v1577 = vld [vmem:[%s1543 + $0x84] sm:$0xf]
    %v1578 = vld [vmem:[%s1543 + $0x88] sm:$0xf]
    %v1579 = vld [vmem:[%s1543 + $0x8c] sm:$0xf]
    %v1580 = vld [vmem:[%s1543 + $0x90] sm:$0x1]
    %v1618 = vunpack.c.l.b16 %v1544
    %v1619 = vunpack.c.l.b16 %v1545
    %v1620 = vunpack.c.l.b16 %v1546
    %v1621 = vunpack.c.l.b16 %v1547
    %v1622 = vunpack.c.l.b16 %v1548
    %v1623 = vunpack.c.l.b16 %v1549
    %v1624 = vunpack.c.l.b16 %v1550
    %v1625 = vunpack.c.l.b16 %v1551
    %v1626 = vunpack.c.l.b16 %v1552
    %v1627 = vunpack.c.l.b16 %v1553
    %v1628 = vunpack.c.l.b16 %v1554
    %v1629 = vunpack.c.l.b16 %v1555
    %v1630 = vunpack.c.l.b16 %v1556
    %v1631 = vunpack.c.l.b16 %v1557
    %v1632 = vunpack.c.l.b16 %v1558
    %v1633 = vunpack.c.l.b16 %v1559
    %v1634 = vunpack.c.l.b16 %v1560
    %v1635 = vunpack.c.l.b16 %v1561
    %v1636 = vunpack.c.l.b16 %v1562
    %v1637 = vunpack.c.l.b16 %v1563
    %v1638 = vunpack.c.l.b16 %v1564
    %v1639 = vunpack.c.l.b16 %v1565
    %v1640 = vunpack.c.l.b16 %v1566
    %v1641 = vunpack.c.l.b16 %v1567
    %v1642 = vunpack.c.l.b16 %v1568
    %v1643 = vunpack.c.l.b16 %v1569
    %v1644 = vunpack.c.l.b16 %v1570
    %v1645 = vunpack.c.l.b16 %v1571
    %v1646 = vunpack.c.l.b16 %v1572
    %v1647 = vunpack.c.l.b16 %v1573
    %v1648 = vunpack.c.l.b16 %v1574
    %v1649 = vunpack.c.l.b16 %v1575
    %v1650 = vunpack.c.l.b16 %v1576
    %v1651 = vunpack.c.l.b16 %v1577
    %v1652 = vunpack.c.l.b16 %v1578
    %v1653 = vunpack.c.l.b16 %v1579
    %v1654 = vunpack.c.l.b16 %v1580
    %v1655 = vpack.c.b16 %v1619, %v1618
    %v1656 = vpack.c.b16 %v1621, %v1620
    %v1657 = vpack.c.b16 %v1623, %v1622
    %v1658 = vpack.c.b16 %v1625, %v1624
    %v1659 = vpack.c.b16 %v1627, %v1626
    %v1660 = vpack.c.b16 %v1629, %v1628
    %v1661 = vpack.c.b16 %v1631, %v1630
    %v1662 = vpack.c.b16 %v1633, %v1632
    %v1663 = vpack.c.b16 %v1635, %v1634
    %v1664 = vpack.c.b16 %v1637, %v1636
    %v1665 = vpack.c.b16 %v1639, %v1638
    %v1666 = vpack.c.b16 %v1641, %v1640
    %v1667 = vpack.c.b16 %v1643, %v1642
    %v1668 = vpack.c.b16 %v1645, %v1644
    %v1669 = vpack.c.b16 %v1647, %v1646
    %v1670 = vpack.c.b16 %v1649, %v1648
    %v1671 = vpack.c.b16 %v1651, %v1650
    %v1672 = vpack.c.b16 %v1653, %v1652
    %v1673 = vpack.c.b16 %v1654, %v1654
    %v1693 = vand.u32 %v1673, %v534
    %1695 = vmatprep.subr.bf16.mxu0 0
    %1696 = vmatpush1.bf16.msra.mxu0 %v1662
    %1697 = vmatprep.subr.bf16.mxu0 0
    %1698 = vmatpush1.bf16.msra.mxu0 %v1661
    %1699 = vmatprep.subr.bf16.mxu0 0
    %1700 = vmatpush1.bf16.msra.mxu0 %v1660
    %1701 = vmatprep.subr.bf16.mxu0 0
    %1702 = vmatpush1.bf16.msra.mxu0 %v1659
    %1703 = vmatprep.subr.bf16.mxu0 0
    %1704 = vmatpush1.bf16.msra.mxu0 %v1658
    %1705 = vmatprep.subr.bf16.mxu0 0
    %1706 = vmatpush1.bf16.msra.mxu0 %v1657
    %1707 = vmatprep.subr.bf16.mxu0 0
    %1708 = vmatpush1.bf16.msra.mxu0 %v1656
    %1709 = vmatprep.subr.bf16.mxu0 0
    %1710 = vmatpush1.bf16.msra.mxu0 %v1655
    %1711 = vmatprep.subr.bf16.mxu0 0
    %1712 = vmatpush2.bf16.msra.mxu0 %v1670
    %1713 = vmatprep.subr.bf16.mxu0 0
    %1714 = vmatpush2.bf16.msra.mxu0 %v1669
    %1715 = vmatprep.subr.bf16.mxu0 0
    %1716 = vmatpush2.bf16.msra.mxu0 %v1668
    %1717 = vmatprep.subr.bf16.mxu0 0
    %1718 = vmatpush2.bf16.msra.mxu0 %v1667
    %1719 = vmatprep.subr.bf16.mxu0 0
    %1720 = vmatpush2.bf16.msra.mxu0 %v1666
    %1721 = vmatprep.subr.bf16.mxu0 0
    %1722 = vmatpush2.bf16.msra.mxu0 %v1665
    %1723 = vmatprep.subr.bf16.mxu0 0
    %1724 = vmatpush2.bf16.msra.mxu0 %v1664
    %1725 = vmatprep.subr.bf16.mxu0 0
    %1726 = vmatpush2.bf16.msra.mxu0 %v1663
    %1727 = vmatprep.mubr.bf16.mxu0 %v378
    %1728 = vmatmul.mubr.bf16.gmra.mxu0 %v377
    %v1729 = vpop.f32.mrf.mxu0
    %v1730 = vadd.f32 0.0, %v1729
    %v1731 = vpop.f32.mrf.mxu0
    %v1732 = vpop.f32.mrf.mxu0
    %v1733 = vpop.f32.mrf.mxu0
    %1734 = vdwg.mxu0
    %1735 = vmatprep.subr.bf16.mxu0 0
    %1736 = vmatpush1.bf16.msra.mxu0 0
    %1737 = vmatprep.subr.bf16.mxu0 0
    %1738 = vmatpush1.bf16.msra.mxu0 0
    %1739 = vmatprep.subr.bf16.mxu0 0
    %1740 = vmatpush1.bf16.msra.mxu0 0
    %1741 = vmatprep.subr.bf16.mxu0 0
    %1742 = vmatpush1.bf16.msra.mxu0 0
    %1743 = vmatprep.subr.bf16.mxu0 0
    %1744 = vmatpush1.bf16.msra.mxu0 0
    %1745 = vmatprep.subr.bf16.mxu0 0
    %1746 = vmatpush1.bf16.msra.mxu0 %v1693
    %1747 = vmatprep.subr.bf16.mxu0 0
    %1748 = vmatpush1.bf16.msra.mxu0 %v1672
    %1749 = vmatprep.subr.bf16.mxu0 0
    %1750 = vmatpush1.bf16.msra.mxu0 %v1671
    %1751 = vmatprep.subr.bf16.mxu0 0
    %1752 = vmatpush2.bf16.msra.mxu0 0
    %1753 = vmatprep.subr.bf16.mxu0 0
    %1754 = vmatpush2.bf16.msra.mxu0 0
    %1755 = vmatprep.subr.bf16.mxu0 0
    %1756 = vmatpush2.bf16.msra.mxu0 0
    %1757 = vmatprep.subr.bf16.mxu0 0
    %1758 = vmatpush2.bf16.msra.mxu0 0
    %1759 = vmatprep.subr.bf16.mxu0 0
    %1760 = vmatpush2.bf16.msra.mxu0 0
    %1761 = vmatprep.subr.bf16.mxu0 0
    %1762 = vmatpush2.bf16.msra.mxu0 0
    %1763 = vmatprep.subr.bf16.mxu0 0
    %1764 = vmatpush2.bf16.msra.mxu0 0
    %1765 = vmatprep.subr.bf16.mxu0 0
    %1766 = vmatpush2.bf16.msra.mxu0 0
    %1767 = vmatprep.mubr.bf16.mxu0 0
    %1768 = vmatmul.mubr.bf16.gmra.mxu0 %v530
    %v1769 = vpop.f32.mrf.mxu0
    %v1770 = vadd.f32 %v1730, %v1769
    %v1771 = vpop.f32.mrf.mxu0
    %v1772 = vpop.f32.mrf.mxu0
    %v1773 = vpop.f32.mrf.mxu0
    %1774 = vdwg.mxu0
    %s1775 = scalar_lea.vmem %s6, 32
    %v1776 = vld [vmem:[%s1775] sm:$0xf]
    %v1777 = vld [vmem:[%s1775 + $0x4] sm:$0xf]
    %v1778 = vpack.c.bf16 %v1770, %v1770
    %v1781 = vunpack.c.l.b16 %v1776
    %v1782 = vunpack.c.l.b16 %v1777
    %v1783 = vpack.c.b16 %v1782, %v1781
    %v1785 = vsel %vm862, %v1783, 0
    %v1788 = vsel %vm866, %v1778, 0
    %1790 = vmatprep.subr.bf16.mxu0 0
    %1791 = vmatpush1.bf16.msra.mxu0 0
    %1792 = vmatprep.subr.bf16.mxu0 0
    %1793 = vmatpush1.bf16.msra.mxu0 0
    %1794 = vmatprep.subr.bf16.mxu0 0
    %1795 = vmatpush1.bf16.msra.mxu0 0
    %1796 = vmatprep.subr.bf16.mxu0 0
    %1797 = vmatpush1.bf16.msra.mxu0 0
    %1798 = vmatprep.subr.bf16.mxu0 0
    %1799 = vmatpush1.bf16.msra.mxu0 0
    %1800 = vmatprep.subr.bf16.mxu0 0
    %1801 = vmatpush1.bf16.msra.mxu0 0
    %1802 = vmatprep.subr.bf16.mxu0 0
    %1803 = vmatpush1.bf16.msra.mxu0 0
    %1804 = vmatprep.subr.bf16.mxu0 0
    %1805 = vmatpush1.bf16.msra.mxu0 %v1788
    %1806 = vmatprep.subr.bf16.mxu0 0
    %1807 = vmatpush2.bf16.msra.mxu0 0
    %1808 = vmatprep.subr.bf16.mxu0 0
    %1809 = vmatpush2.bf16.msra.mxu0 0
    %1810 = vmatprep.subr.bf16.mxu0 0
    %1811 = vmatpush2.bf16.msra.mxu0 0
    %1812 = vmatprep.subr.bf16.mxu0 0
    %1813 = vmatpush2.bf16.msra.mxu0 0
    %1814 = vmatprep.subr.bf16.mxu0 0
    %1815 = vmatpush2.bf16.msra.mxu0 0
    %1816 = vmatprep.subr.bf16.mxu0 0
    %1817 = vmatpush2.bf16.msra.mxu0 0
    %1818 = vmatprep.subr.bf16.mxu0 0
    %1819 = vmatpush2.bf16.msra.mxu0 0
    %1820 = vmatprep.subr.bf16.mxu0 0
    %1821 = vmatpush2.bf16.msra.mxu0 0
    %1822 = vmatprep.mubr.bf16.mxu0 0
    %1823 = vmatmul.mubr.bf16.gmra.mxu0 %v1785
    %v1824 = vpop.f32.mrf.mxu0
    %v1825 = vadd.f32 0.0, %v1824
    %v1826 = vpop.f32.mrf.mxu0
    %v1827 = vpop.f32.mrf.mxu0
    %v1828 = vadd.f32 0.0, %v1827
    %v1829 = vpop.f32.mrf.mxu0
    %1830 = vdwg.mxu0
    %v1831 = vadd.f32 %v1541, %v1825
    %v1832 = vadd.f32 %v1542, %v1828
    %s1833 = scalar_lea.vmem %s8, 740
    %v1834 = vld [vmem:[%s1833] sm:$0xf]
    %v1835 = vld [vmem:[%s1833 + $0x4] sm:$0xf]
    %v1836 = vld [vmem:[%s1833 + $0x8] sm:$0xf]
    %v1837 = vld [vmem:[%s1833 + $0xc] sm:$0xf]
    %v1838 = vld [vmem:[%s1833 + $0x10] sm:$0xf]
    %v1839 = vld [vmem:[%s1833 + $0x14] sm:$0xf]
    %v1840 = vld [vmem:[%s1833 + $0x18] sm:$0xf]
    %v1841 = vld [vmem:[%s1833 + $0x1c] sm:$0xf]
    %v1842 = vld [vmem:[%s1833 + $0x20] sm:$0xf]
    %v1843 = vld [vmem:[%s1833 + $0x24] sm:$0xf]
    %v1844 = vld [vmem:[%s1833 + $0x28] sm:$0xf]
    %v1845 = vld [vmem:[%s1833 + $0x2c] sm:$0xf]
    %v1846 = vld [vmem:[%s1833 + $0x30] sm:$0xf]
    %v1847 = vld [vmem:[%s1833 + $0x34] sm:$0xf]
    %v1848 = vld [vmem:[%s1833 + $0x38] sm:$0xf]
    %v1849 = vld [vmem:[%s1833 + $0x3c] sm:$0xf]
    %v1850 = vld [vmem:[%s1833 + $0x40] sm:$0xf]
    %v1851 = vld [vmem:[%s1833 + $0x44] sm:$0xf]
    %v1852 = vld [vmem:[%s1833 + $0x48] sm:$0xf]
    %v1853 = vld [vmem:[%s1833 + $0x4c] sm:$0xf]
    %v1854 = vld [vmem:[%s1833 + $0x50] sm:$0xf]
    %v1855 = vld [vmem:[%s1833 + $0x54] sm:$0xf]
    %v1856 = vld [vmem:[%s1833 + $0x58] sm:$0xf]
    %v1857 = vld [vmem:[%s1833 + $0x5c] sm:$0xf]
    %v1858 = vld [vmem:[%s1833 + $0x60] sm:$0xf]
    %v1859 = vld [vmem:[%s1833 + $0x64] sm:$0xf]
    %v1860 = vld [vmem:[%s1833 + $0x68] sm:$0xf]
    %v1861 = vld [vmem:[%s1833 + $0x6c] sm:$0xf]
    %v1862 = vld [vmem:[%s1833 + $0x70] sm:$0xf]
    %v1863 = vld [vmem:[%s1833 + $0x74] sm:$0xf]
    %v1864 = vld [vmem:[%s1833 + $0x78] sm:$0xf]
    %v1865 = vld [vmem:[%s1833 + $0x7c] sm:$0xf]
    %v1866 = vld [vmem:[%s1833 + $0x80] sm:$0xf]
    %v1867 = vld [vmem:[%s1833 + $0x84] sm:$0xf]
    %v1868 = vld [vmem:[%s1833 + $0x88] sm:$0xf]
    %v1869 = vld [vmem:[%s1833 + $0x8c] sm:$0xf]
    %v1870 = vld [vmem:[%s1833 + $0x90] sm:$0x1]
    %v1908 = vunpack.c.l.b16 %v1834
    %v1909 = vunpack.c.l.b16 %v1835
    %v1910 = vunpack.c.l.b16 %v1836
    %v1911 = vunpack.c.l.b16 %v1837
    %v1912 = vunpack.c.l.b16 %v1838
    %v1913 = vunpack.c.l.b16 %v1839
    %v1914 = vunpack.c.l.b16 %v1840
    %v1915 = vunpack.c.l.b16 %v1841
    %v1916 = vunpack.c.l.b16 %v1842
    %v1917 = vunpack.c.l.b16 %v1843
    %v1918 = vunpack.c.l.b16 %v1844
    %v1919 = vunpack.c.l.b16 %v1845
    %v1920 = vunpack.c.l.b16 %v1846
    %v1921 = vunpack.c.l.b16 %v1847
    %v1922 = vunpack.c.l.b16 %v1848
    %v1923 = vunpack.c.l.b16 %v1849
    %v1924 = vunpack.c.l.b16 %v1850
    %v1925 = vunpack.c.l.b16 %v1851
    %v1926 = vunpack.c.l.b16 %v1852
    %v1927 = vunpack.c.l.b16 %v1853
    %v1928 = vunpack.c.l.b16 %v1854
    %v1929 = vunpack.c.l.b16 %v1855
    %v1930 = vunpack.c.l.b16 %v1856
    %v1931 = vunpack.c.l.b16 %v1857
    %v1932 = vunpack.c.l.b16 %v1858
    %v1933 = vunpack.c.l.b16 %v1859
    %v1934 = vunpack.c.l.b16 %v1860
    %v1935 = vunpack.c.l.b16 %v1861
    %v1936 = vunpack.c.l.b16 %v1862
    %v1937 = vunpack.c.l.b16 %v1863
    %v1938 = vunpack.c.l.b16 %v1864
    %v1939 = vunpack.c.l.b16 %v1865
    %v1940 = vunpack.c.l.b16 %v1866
    %v1941 = vunpack.c.l.b16 %v1867
    %v1942 = vunpack.c.l.b16 %v1868
    %v1943 = vunpack.c.l.b16 %v1869
    %v1944 = vunpack.c.l.b16 %v1870
    %v1945 = vpack.c.b16 %v1909, %v1908
    %v1946 = vpack.c.b16 %v1911, %v1910
    %v1947 = vpack.c.b16 %v1913, %v1912
    %v1948 = vpack.c.b16 %v1915, %v1914
    %v1949 = vpack.c.b16 %v1917, %v1916
    %v1950 = vpack.c.b16 %v1919, %v1918
    %v1951 = vpack.c.b16 %v1921, %v1920
    %v1952 = vpack.c.b16 %v1923, %v1922
    %v1953 = vpack.c.b16 %v1925, %v1924
    %v1954 = vpack.c.b16 %v1927, %v1926
    %v1955 = vpack.c.b16 %v1929, %v1928
    %v1956 = vpack.c.b16 %v1931, %v1930
    %v1957 = vpack.c.b16 %v1933, %v1932
    %v1958 = vpack.c.b16 %v1935, %v1934
    %v1959 = vpack.c.b16 %v1937, %v1936
    %v1960 = vpack.c.b16 %v1939, %v1938
    %v1961 = vpack.c.b16 %v1941, %v1940
    %v1962 = vpack.c.b16 %v1943, %v1942
    %v1963 = vpack.c.b16 %v1944, %v1944
    %v1983 = vand.u32 %v1963, %v534
    %1985 = vmatprep.subr.bf16.mxu0 0
    %1986 = vmatpush1.bf16.msra.mxu0 %v1952
    %1987 = vmatprep.subr.bf16.mxu0 0
    %1988 = vmatpush1.bf16.msra.mxu0 %v1951
    %1989 = vmatprep.subr.bf16.mxu0 0
    %1990 = vmatpush1.bf16.msra.mxu0 %v1950
    %1991 = vmatprep.subr.bf16.mxu0 0
    %1992 = vmatpush1.bf16.msra.mxu0 %v1949
    %1993 = vmatprep.subr.bf16.mxu0 0
    %1994 = vmatpush1.bf16.msra.mxu0 %v1948
    %1995 = vmatprep.subr.bf16.mxu0 0
    %1996 = vmatpush1.bf16.msra.mxu0 %v1947
    %1997 = vmatprep.subr.bf16.mxu0 0
    %1998 = vmatpush1.bf16.msra.mxu0 %v1946
    %1999 = vmatprep.subr.bf16.mxu0 0
    %2000 = vmatpush1.bf16.msra.mxu0 %v1945
    %2001 = vmatprep.subr.bf16.mxu0 0
    %2002 = vmatpush2.bf16.msra.mxu0 %v1960
    %2003 = vmatprep.subr.bf16.mxu0 0
    %2004 = vmatpush2.bf16.msra.mxu0 %v1959
    %2005 = vmatprep.subr.bf16.mxu0 0
    %2006 = vmatpush2.bf16.msra.mxu0 %v1958
    %2007 = vmatprep.subr.bf16.mxu0 0
    %2008 = vmatpush2.bf16.msra.mxu0 %v1957
    %2009 = vmatprep.subr.bf16.mxu0 0
    %2010 = vmatpush2.bf16.msra.mxu0 %v1956
    %2011 = vmatprep.subr.bf16.mxu0 0
    %2012 = vmatpush2.bf16.msra.mxu0 %v1955
    %2013 = vmatprep.subr.bf16.mxu0 0
    %2014 = vmatpush2.bf16.msra.mxu0 %v1954
    %2015 = vmatprep.subr.bf16.mxu0 0
    %2016 = vmatpush2.bf16.msra.mxu0 %v1953
    %2017 = vmatprep.mubr.bf16.mxu0 %v378
    %2018 = vmatmul.mubr.bf16.gmra.mxu0 %v377
    %v2019 = vpop.f32.mrf.mxu0
    %v2020 = vadd.f32 0.0, %v2019
    %v2021 = vpop.f32.mrf.mxu0
    %v2022 = vpop.f32.mrf.mxu0
    %v2023 = vpop.f32.mrf.mxu0
    %2024 = vdwg.mxu0
    %2025 = vmatprep.subr.bf16.mxu0 0
    %2026 = vmatpush1.bf16.msra.mxu0 0
    %2027 = vmatprep.subr.bf16.mxu0 0
    %2028 = vmatpush1.bf16.msra.mxu0 0
    %2029 = vmatprep.subr.bf16.mxu0 0
    %2030 = vmatpush1.bf16.msra.mxu0 0
    %2031 = vmatprep.subr.bf16.mxu0 0
    %2032 = vmatpush1.bf16.msra.mxu0 0
    %2033 = vmatprep.subr.bf16.mxu0 0
    %2034 = vmatpush1.bf16.msra.mxu0 0
    %2035 = vmatprep.subr.bf16.mxu0 0
    %2036 = vmatpush1.bf16.msra.mxu0 %v1983
    %2037 = vmatprep.subr.bf16.mxu0 0
    %2038 = vmatpush1.bf16.msra.mxu0 %v1962
    %2039 = vmatprep.subr.bf16.mxu0 0
    %2040 = vmatpush1.bf16.msra.mxu0 %v1961
    %2041 = vmatprep.subr.bf16.mxu0 0
    %2042 = vmatpush2.bf16.msra.mxu0 0
    %2043 = vmatprep.subr.bf16.mxu0 0
    %2044 = vmatpush2.bf16.msra.mxu0 0
    %2045 = vmatprep.subr.bf16.mxu0 0
    %2046 = vmatpush2.bf16.msra.mxu0 0
    %2047 = vmatprep.subr.bf16.mxu0 0
    %2048 = vmatpush2.bf16.msra.mxu0 0
    %2049 = vmatprep.subr.bf16.mxu0 0
    %2050 = vmatpush2.bf16.msra.mxu0 0
    %2051 = vmatprep.subr.bf16.mxu0 0
    %2052 = vmatpush2.bf16.msra.mxu0 0
    %2053 = vmatprep.subr.bf16.mxu0 0
    %2054 = vmatpush2.bf16.msra.mxu0 0
    %2055 = vmatprep.subr.bf16.mxu0 0
    %2056 = vmatpush2.bf16.msra.mxu0 0
    %2057 = vmatprep.mubr.bf16.mxu0 0
    %2058 = vmatmul.mubr.bf16.gmra.mxu0 %v530
    %v2059 = vpop.f32.mrf.mxu0
    %v2060 = vadd.f32 %v2020, %v2059
    %v2061 = vpop.f32.mrf.mxu0
    %v2062 = vpop.f32.mrf.mxu0
    %v2063 = vpop.f32.mrf.mxu0
    %2064 = vdwg.mxu0
    %s2065 = scalar_lea.vmem %s6, 40
    %v2066 = vld [vmem:[%s2065] sm:$0xf]
    %v2067 = vld [vmem:[%s2065 + $0x4] sm:$0xf]
    %v2068 = vpack.c.bf16 %v2060, %v2060
    %v2071 = vunpack.c.l.b16 %v2066
    %v2072 = vunpack.c.l.b16 %v2067
    %v2073 = vpack.c.b16 %v2072, %v2071
    %v2075 = vsel %vm862, %v2073, 0
    %v2078 = vsel %vm866, %v2068, 0
    %2080 = vmatprep.subr.bf16.mxu0 0
    %2081 = vmatpush1.bf16.msra.mxu0 0
    %2082 = vmatprep.subr.bf16.mxu0 0
    %2083 = vmatpush1.bf16.msra.mxu0 0
    %2084 = vmatprep.subr.bf16.mxu0 0
    %2085 = vmatpush1.bf16.msra.mxu0 0
    %2086 = vmatprep.subr.bf16.mxu0 0
    %2087 = vmatpush1.bf16.msra.mxu0 0
    %2088 = vmatprep.subr.bf16.mxu0 0
    %2089 = vmatpush1.bf16.msra.mxu0 0
    %2090 = vmatprep.subr.bf16.mxu0 0
    %2091 = vmatpush1.bf16.msra.mxu0 0
    %2092 = vmatprep.subr.bf16.mxu0 0
    %2093 = vmatpush1.bf16.msra.mxu0 0
    %2094 = vmatprep.subr.bf16.mxu0 0
    %2095 = vmatpush1.bf16.msra.mxu0 %v2078
    %2096 = vmatprep.subr.bf16.mxu0 0
    %2097 = vmatpush2.bf16.msra.mxu0 0
    %2098 = vmatprep.subr.bf16.mxu0 0
    %2099 = vmatpush2.bf16.msra.mxu0 0
    %2100 = vmatprep.subr.bf16.mxu0 0
    %2101 = vmatpush2.bf16.msra.mxu0 0
    %2102 = vmatprep.subr.bf16.mxu0 0
    %2103 = vmatpush2.bf16.msra.mxu0 0
    %2104 = vmatprep.subr.bf16.mxu0 0
    %2105 = vmatpush2.bf16.msra.mxu0 0
    %2106 = vmatprep.subr.bf16.mxu0 0
    %2107 = vmatpush2.bf16.msra.mxu0 0
    %2108 = vmatprep.subr.bf16.mxu0 0
    %2109 = vmatpush2.bf16.msra.mxu0 0
    %2110 = vmatprep.subr.bf16.mxu0 0
    %2111 = vmatpush2.bf16.msra.mxu0 0
    %2112 = vmatprep.mubr.bf16.mxu0 0
    %2113 = vmatmul.mubr.bf16.gmra.mxu0 %v2075
    %v2114 = vpop.f32.mrf.mxu0
    %v2115 = vadd.f32 0.0, %v2114
    %v2116 = vpop.f32.mrf.mxu0
    %v2117 = vpop.f32.mrf.mxu0
    %v2118 = vadd.f32 0.0, %v2117
    %v2119 = vpop.f32.mrf.mxu0
    %2120 = vdwg.mxu0
    %v2121 = vadd.f32 %v1831, %v2115
    %v2122 = vadd.f32 %v1832, %v2118
    %s2123 = scalar_lea.vmem %s8, 888
    %v2124 = vld [vmem:[%s2123] sm:$0xf]
    %v2125 = vld [vmem:[%s2123 + $0x4] sm:$0xf]
    %v2126 = vld [vmem:[%s2123 + $0x8] sm:$0xf]
    %v2127 = vld [vmem:[%s2123 + $0xc] sm:$0xf]
    %v2128 = vld [vmem:[%s2123 + $0x10] sm:$0xf]
    %v2129 = vld [vmem:[%s2123 + $0x14] sm:$0xf]
    %v2130 = vld [vmem:[%s2123 + $0x18] sm:$0xf]
    %v2131 = vld [vmem:[%s2123 + $0x1c] sm:$0xf]
    %v2132 = vld [vmem:[%s2123 + $0x20] sm:$0xf]
    %v2133 = vld [vmem:[%s2123 + $0x24] sm:$0xf]
    %v2134 = vld [vmem:[%s2123 + $0x28] sm:$0xf]
    %v2135 = vld [vmem:[%s2123 + $0x2c] sm:$0xf]
    %v2136 = vld [vmem:[%s2123 + $0x30] sm:$0xf]
    %v2137 = vld [vmem:[%s2123 + $0x34] sm:$0xf]
    %v2138 = vld [vmem:[%s2123 + $0x38] sm:$0xf]
    %v2139 = vld [vmem:[%s2123 + $0x3c] sm:$0xf]
    %v2140 = vld [vmem:[%s2123 + $0x40] sm:$0xf]
    %v2141 = vld [vmem:[%s2123 + $0x44] sm:$0xf]
    %v2142 = vld [vmem:[%s2123 + $0x48] sm:$0xf]
    %v2143 = vld [vmem:[%s2123 + $0x4c] sm:$0xf]
    %v2144 = vld [vmem:[%s2123 + $0x50] sm:$0xf]
    %v2145 = vld [vmem:[%s2123 + $0x54] sm:$0xf]
    %v2146 = vld [vmem:[%s2123 + $0x58] sm:$0xf]
    %v2147 = vld [vmem:[%s2123 + $0x5c] sm:$0xf]
    %v2148 = vld [vmem:[%s2123 + $0x60] sm:$0xf]
    %v2149 = vld [vmem:[%s2123 + $0x64] sm:$0xf]
    %v2150 = vld [vmem:[%s2123 + $0x68] sm:$0xf]
    %v2151 = vld [vmem:[%s2123 + $0x6c] sm:$0xf]
    %v2152 = vld [vmem:[%s2123 + $0x70] sm:$0xf]
    %v2153 = vld [vmem:[%s2123 + $0x74] sm:$0xf]
    %v2154 = vld [vmem:[%s2123 + $0x78] sm:$0xf]
    %v2155 = vld [vmem:[%s2123 + $0x7c] sm:$0xf]
    %v2156 = vld [vmem:[%s2123 + $0x80] sm:$0xf]
    %v2157 = vld [vmem:[%s2123 + $0x84] sm:$0xf]
    %v2158 = vld [vmem:[%s2123 + $0x88] sm:$0xf]
    %v2159 = vld [vmem:[%s2123 + $0x8c] sm:$0xf]
    %v2160 = vld [vmem:[%s2123 + $0x90] sm:$0x1]
    %v2198 = vunpack.c.l.b16 %v2124
    %v2199 = vunpack.c.l.b16 %v2125
    %v2200 = vunpack.c.l.b16 %v2126
    %v2201 = vunpack.c.l.b16 %v2127
    %v2202 = vunpack.c.l.b16 %v2128
    %v2203 = vunpack.c.l.b16 %v2129
    %v2204 = vunpack.c.l.b16 %v2130
    %v2205 = vunpack.c.l.b16 %v2131
    %v2206 = vunpack.c.l.b16 %v2132
    %v2207 = vunpack.c.l.b16 %v2133
    %v2208 = vunpack.c.l.b16 %v2134
    %v2209 = vunpack.c.l.b16 %v2135
    %v2210 = vunpack.c.l.b16 %v2136
    %v2211 = vunpack.c.l.b16 %v2137
    %v2212 = vunpack.c.l.b16 %v2138
    %v2213 = vunpack.c.l.b16 %v2139
    %v2214 = vunpack.c.l.b16 %v2140
    %v2215 = vunpack.c.l.b16 %v2141
    %v2216 = vunpack.c.l.b16 %v2142
    %v2217 = vunpack.c.l.b16 %v2143
    %v2218 = vunpack.c.l.b16 %v2144
    %v2219 = vunpack.c.l.b16 %v2145
    %v2220 = vunpack.c.l.b16 %v2146
    %v2221 = vunpack.c.l.b16 %v2147
    %v2222 = vunpack.c.l.b16 %v2148
    %v2223 = vunpack.c.l.b16 %v2149
    %v2224 = vunpack.c.l.b16 %v2150
    %v2225 = vunpack.c.l.b16 %v2151
    %v2226 = vunpack.c.l.b16 %v2152
    %v2227 = vunpack.c.l.b16 %v2153
    %v2228 = vunpack.c.l.b16 %v2154
    %v2229 = vunpack.c.l.b16 %v2155
    %v2230 = vunpack.c.l.b16 %v2156
    %v2231 = vunpack.c.l.b16 %v2157
    %v2232 = vunpack.c.l.b16 %v2158
    %v2233 = vunpack.c.l.b16 %v2159
    %v2234 = vunpack.c.l.b16 %v2160
    %v2235 = vpack.c.b16 %v2199, %v2198
    %v2236 = vpack.c.b16 %v2201, %v2200
    %v2237 = vpack.c.b16 %v2203, %v2202
    %v2238 = vpack.c.b16 %v2205, %v2204
    %v2239 = vpack.c.b16 %v2207, %v2206
    %v2240 = vpack.c.b16 %v2209, %v2208
    %v2241 = vpack.c.b16 %v2211, %v2210
    %v2242 = vpack.c.b16 %v2213, %v2212
    %v2243 = vpack.c.b16 %v2215, %v2214
    %v2244 = vpack.c.b16 %v2217, %v2216
    %v2245 = vpack.c.b16 %v2219, %v2218
    %v2246 = vpack.c.b16 %v2221, %v2220
    %v2247 = vpack.c.b16 %v2223, %v2222
    %v2248 = vpack.c.b16 %v2225, %v2224
    %v2249 = vpack.c.b16 %v2227, %v2226
    %v2250 = vpack.c.b16 %v2229, %v2228
    %v2251 = vpack.c.b16 %v2231, %v2230
    %v2252 = vpack.c.b16 %v2233, %v2232
    %v2253 = vpack.c.b16 %v2234, %v2234
    %v2273 = vand.u32 %v2253, %v534
    %2275 = vmatprep.subr.bf16.mxu0 0
    %2276 = vmatpush1.bf16.msra.mxu0 %v2242
    %2277 = vmatprep.subr.bf16.mxu0 0
    %2278 = vmatpush1.bf16.msra.mxu0 %v2241
    %2279 = vmatprep.subr.bf16.mxu0 0
    %2280 = vmatpush1.bf16.msra.mxu0 %v2240
    %2281 = vmatprep.subr.bf16.mxu0 0
    %2282 = vmatpush1.bf16.msra.mxu0 %v2239
    %2283 = vmatprep.subr.bf16.mxu0 0
    %2284 = vmatpush1.bf16.msra.mxu0 %v2238
    %2285 = vmatprep.subr.bf16.mxu0 0
    %2286 = vmatpush1.bf16.msra.mxu0 %v2237
    %2287 = vmatprep.subr.bf16.mxu0 0
    %2288 = vmatpush1.bf16.msra.mxu0 %v2236
    %2289 = vmatprep.subr.bf16.mxu0 0
    %2290 = vmatpush1.bf16.msra.mxu0 %v2235
    %2291 = vmatprep.subr.bf16.mxu0 0
    %2292 = vmatpush2.bf16.msra.mxu0 %v2250
    %2293 = vmatprep.subr.bf16.mxu0 0
    %2294 = vmatpush2.bf16.msra.mxu0 %v2249
    %2295 = vmatprep.subr.bf16.mxu0 0
    %2296 = vmatpush2.bf16.msra.mxu0 %v2248
    %2297 = vmatprep.subr.bf16.mxu0 0
    %2298 = vmatpush2.bf16.msra.mxu0 %v2247
    %2299 = vmatprep.subr.bf16.mxu0 0
    %2300 = vmatpush2.bf16.msra.mxu0 %v2246
    %2301 = vmatprep.subr.bf16.mxu0 0
    %2302 = vmatpush2.bf16.msra.mxu0 %v2245
    %2303 = vmatprep.subr.bf16.mxu0 0
    %2304 = vmatpush2.bf16.msra.mxu0 %v2244
    %2305 = vmatprep.subr.bf16.mxu0 0
    %2306 = vmatpush2.bf16.msra.mxu0 %v2243
    %2307 = vmatprep.mubr.bf16.mxu0 %v378
    %2308 = vmatmul.mubr.bf16.gmra.mxu0 %v377
    %v2309 = vpop.f32.mrf.mxu0
    %v2310 = vadd.f32 0.0, %v2309
    %v2311 = vpop.f32.mrf.mxu0
    %v2312 = vpop.f32.mrf.mxu0
    %v2313 = vpop.f32.mrf.mxu0
    %2314 = vdwg.mxu0
    %2315 = vmatprep.subr.bf16.mxu0 0
    %2316 = vmatpush1.bf16.msra.mxu0 0
    %2317 = vmatprep.subr.bf16.mxu0 0
    %2318 = vmatpush1.bf16.msra.mxu0 0
    %2319 = vmatprep.subr.bf16.mxu0 0
    %2320 = vmatpush1.bf16.msra.mxu0 0
    %2321 = vmatprep.subr.bf16.mxu0 0
    %2322 = vmatpush1.bf16.msra.mxu0 0
    %2323 = vmatprep.subr.bf16.mxu0 0
    %2324 = vmatpush1.bf16.msra.mxu0 0
    %2325 = vmatprep.subr.bf16.mxu0 0
    %2326 = vmatpush1.bf16.msra.mxu0 %v2273
    %2327 = vmatprep.subr.bf16.mxu0 0
    %2328 = vmatpush1.bf16.msra.mxu0 %v2252
    %2329 = vmatprep.subr.bf16.mxu0 0
    %2330 = vmatpush1.bf16.msra.mxu0 %v2251
    %2331 = vmatprep.subr.bf16.mxu0 0
    %2332 = vmatpush2.bf16.msra.mxu0 0
    %2333 = vmatprep.subr.bf16.mxu0 0
    %2334 = vmatpush2.bf16.msra.mxu0 0
    %2335 = vmatprep.subr.bf16.mxu0 0
    %2336 = vmatpush2.bf16.msra.mxu0 0
    %2337 = vmatprep.subr.bf16.mxu0 0
    %2338 = vmatpush2.bf16.msra.mxu0 0
    %2339 = vmatprep.subr.bf16.mxu0 0
    %2340 = vmatpush2.bf16.msra.mxu0 0
    %2341 = vmatprep.subr.bf16.mxu0 0
    %2342 = vmatpush2.bf16.msra.mxu0 0
    %2343 = vmatprep.subr.bf16.mxu0 0
    %2344 = vmatpush2.bf16.msra.mxu0 0
    %2345 = vmatprep.subr.bf16.mxu0 0
    %2346 = vmatpush2.bf16.msra.mxu0 0
    %2347 = vmatprep.mubr.bf16.mxu0 0
    %2348 = vmatmul.mubr.bf16.gmra.mxu0 %v530
    %v2349 = vpop.f32.mrf.mxu0
    %v2350 = vadd.f32 %v2310, %v2349
    %v2351 = vpop.f32.mrf.mxu0
    %v2352 = vpop.f32.mrf.mxu0
    %v2353 = vpop.f32.mrf.mxu0
    %2354 = vdwg.mxu0
    %s2355 = scalar_lea.vmem %s6, 48
    %v2356 = vld [vmem:[%s2355] sm:$0xf]
    %v2357 = vld [vmem:[%s2355 + $0x4] sm:$0xf]
    %v2358 = vpack.c.bf16 %v2350, %v2350
    %v2361 = vunpack.c.l.b16 %v2356
    %v2362 = vunpack.c.l.b16 %v2357
    %v2363 = vpack.c.b16 %v2362, %v2361
    %v2365 = vsel %vm862, %v2363, 0
    %v2368 = vsel %vm866, %v2358, 0
    %2370 = vmatprep.subr.bf16.mxu0 0
    %2371 = vmatpush1.bf16.msra.mxu0 0
    %2372 = vmatprep.subr.bf16.mxu0 0
    %2373 = vmatpush1.bf16.msra.mxu0 0
    %2374 = vmatprep.subr.bf16.mxu0 0
    %2375 = vmatpush1.bf16.msra.mxu0 0
    %2376 = vmatprep.subr.bf16.mxu0 0
    %2377 = vmatpush1.bf16.msra.mxu0 0
    %2378 = vmatprep.subr.bf16.mxu0 0
    %2379 = vmatpush1.bf16.msra.mxu0 0
    %2380 = vmatprep.subr.bf16.mxu0 0
    %2381 = vmatpush1.bf16.msra.mxu0 0
    %2382 = vmatprep.subr.bf16.mxu0 0
    %2383 = vmatpush1.bf16.msra.mxu0 0
    %2384 = vmatprep.subr.bf16.mxu0 0
    %2385 = vmatpush1.bf16.msra.mxu0 %v2368
    %2386 = vmatprep.subr.bf16.mxu0 0
    %2387 = vmatpush2.bf16.msra.mxu0 0
    %2388 = vmatprep.subr.bf16.mxu0 0
    %2389 = vmatpush2.bf16.msra.mxu0 0
    %2390 = vmatprep.subr.bf16.mxu0 0
    %2391 = vmatpush2.bf16.msra.mxu0 0
    %2392 = vmatprep.subr.bf16.mxu0 0
    %2393 = vmatpush2.bf16.msra.mxu0 0
    %2394 = vmatprep.subr.bf16.mxu0 0
    %2395 = vmatpush2.bf16.msra.mxu0 0
    %2396 = vmatprep.subr.bf16.mxu0 0
    %2397 = vmatpush2.bf16.msra.mxu0 0
    %2398 = vmatprep.subr.bf16.mxu0 0
    %2399 = vmatpush2.bf16.msra.mxu0 0
    %2400 = vmatprep.subr.bf16.mxu0 0
    %2401 = vmatpush2.bf16.msra.mxu0 0
    %2402 = vmatprep.mubr.bf16.mxu0 0
    %2403 = vmatmul.mubr.bf16.gmra.mxu0 %v2365
    %v2404 = vpop.f32.mrf.mxu0
    %v2405 = vadd.f32 0.0, %v2404
    %v2406 = vpop.f32.mrf.mxu0
    %v2407 = vpop.f32.mrf.mxu0
    %v2408 = vadd.f32 0.0, %v2407
    %v2409 = vpop.f32.mrf.mxu0
    %2410 = vdwg.mxu0
    %v2411 = vadd.f32 %v2121, %v2405
    %v2412 = vadd.f32 %v2122, %v2408
    %s2413 = scalar_lea.vmem %s8, 1036
    %v2414 = vld [vmem:[%s2413] sm:$0xf]
    %v2415 = vld [vmem:[%s2413 + $0x4] sm:$0xf]
    %v2416 = vld [vmem:[%s2413 + $0x8] sm:$0xf]
    %v2417 = vld [vmem:[%s2413 + $0xc] sm:$0xf]
    %v2418 = vld [vmem:[%s2413 + $0x10] sm:$0xf]
    %v2419 = vld [vmem:[%s2413 + $0x14] sm:$0xf]
    %v2420 = vld [vmem:[%s2413 + $0x18] sm:$0xf]
    %v2421 = vld [vmem:[%s2413 + $0x1c] sm:$0xf]
    %v2422 = vld [vmem:[%s2413 + $0x20] sm:$0xf]
    %v2423 = vld [vmem:[%s2413 + $0x24] sm:$0xf]
    %v2424 = vld [vmem:[%s2413 + $0x28] sm:$0xf]
    %v2425 = vld [vmem:[%s2413 + $0x2c] sm:$0xf]
    %v2426 = vld [vmem:[%s2413 + $0x30] sm:$0xf]
    %v2427 = vld [vmem:[%s2413 + $0x34] sm:$0xf]
    %v2428 = vld [vmem:[%s2413 + $0x38] sm:$0xf]
    %v2429 = vld [vmem:[%s2413 + $0x3c] sm:$0xf]
    %v2430 = vld [vmem:[%s2413 + $0x40] sm:$0xf]
    %v2431 = vld [vmem:[%s2413 + $0x44] sm:$0xf]
    %v2432 = vld [vmem:[%s2413 + $0x48] sm:$0xf]
    %v2433 = vld [vmem:[%s2413 + $0x4c] sm:$0xf]
    %v2434 = vld [vmem:[%s2413 + $0x50] sm:$0xf]
    %v2435 = vld [vmem:[%s2413 + $0x54] sm:$0xf]
    %v2436 = vld [vmem:[%s2413 + $0x58] sm:$0xf]
    %v2437 = vld [vmem:[%s2413 + $0x5c] sm:$0xf]
    %v2438 = vld [vmem:[%s2413 + $0x60] sm:$0xf]
    %v2439 = vld [vmem:[%s2413 + $0x64] sm:$0xf]
    %v2440 = vld [vmem:[%s2413 + $0x68] sm:$0xf]
    %v2441 = vld [vmem:[%s2413 + $0x6c] sm:$0xf]
    %v2442 = vld [vmem:[%s2413 + $0x70] sm:$0xf]
    %v2443 = vld [vmem:[%s2413 + $0x74] sm:$0xf]
    %v2444 = vld [vmem:[%s2413 + $0x78] sm:$0xf]
    %v2445 = vld [vmem:[%s2413 + $0x7c] sm:$0xf]
    %v2446 = vld [vmem:[%s2413 + $0x80] sm:$0xf]
    %v2447 = vld [vmem:[%s2413 + $0x84] sm:$0xf]
    %v2448 = vld [vmem:[%s2413 + $0x88] sm:$0xf]
    %v2449 = vld [vmem:[%s2413 + $0x8c] sm:$0xf]
    %v2450 = vld [vmem:[%s2413 + $0x90] sm:$0x1]
    %v2488 = vunpack.c.l.b16 %v2414
    %v2489 = vunpack.c.l.b16 %v2415
    %v2490 = vunpack.c.l.b16 %v2416
    %v2491 = vunpack.c.l.b16 %v2417
    %v2492 = vunpack.c.l.b16 %v2418
    %v2493 = vunpack.c.l.b16 %v2419
    %v2494 = vunpack.c.l.b16 %v2420
    %v2495 = vunpack.c.l.b16 %v2421
    %v2496 = vunpack.c.l.b16 %v2422
    %v2497 = vunpack.c.l.b16 %v2423
    %v2498 = vunpack.c.l.b16 %v2424
    %v2499 = vunpack.c.l.b16 %v2425
    %v2500 = vunpack.c.l.b16 %v2426
    %v2501 = vunpack.c.l.b16 %v2427
    %v2502 = vunpack.c.l.b16 %v2428
    %v2503 = vunpack.c.l.b16 %v2429
    %v2504 = vunpack.c.l.b16 %v2430
    %v2505 = vunpack.c.l.b16 %v2431
    %v2506 = vunpack.c.l.b16 %v2432
    %v2507 = vunpack.c.l.b16 %v2433
    %v2508 = vunpack.c.l.b16 %v2434
    %v2509 = vunpack.c.l.b16 %v2435
    %v2510 = vunpack.c.l.b16 %v2436
    %v2511 = vunpack.c.l.b16 %v2437
    %v2512 = vunpack.c.l.b16 %v2438
    %v2513 = vunpack.c.l.b16 %v2439
    %v2514 = vunpack.c.l.b16 %v2440
    %v2515 = vunpack.c.l.b16 %v2441
    %v2516 = vunpack.c.l.b16 %v2442
    %v2517 = vunpack.c.l.b16 %v2443
    %v2518 = vunpack.c.l.b16 %v2444
    %v2519 = vunpack.c.l.b16 %v2445
    %v2520 = vunpack.c.l.b16 %v2446
    %v2521 = vunpack.c.l.b16 %v2447
    %v2522 = vunpack.c.l.b16 %v2448
    %v2523 = vunpack.c.l.b16 %v2449
    %v2524 = vunpack.c.l.b16 %v2450
    %v2525 = vpack.c.b16 %v2489, %v2488
    %v2526 = vpack.c.b16 %v2491, %v2490
    %v2527 = vpack.c.b16 %v2493, %v2492
    %v2528 = vpack.c.b16 %v2495, %v2494
    %v2529 = vpack.c.b16 %v2497, %v2496
    %v2530 = vpack.c.b16 %v2499, %v2498
    %v2531 = vpack.c.b16 %v2501, %v2500
    %v2532 = vpack.c.b16 %v2503, %v2502
    %v2533 = vpack.c.b16 %v2505, %v2504
    %v2534 = vpack.c.b16 %v2507, %v2506
    %v2535 = vpack.c.b16 %v2509, %v2508
    %v2536 = vpack.c.b16 %v2511, %v2510
    %v2537 = vpack.c.b16 %v2513, %v2512
    %v2538 = vpack.c.b16 %v2515, %v2514
    %v2539 = vpack.c.b16 %v2517, %v2516
    %v2540 = vpack.c.b16 %v2519, %v2518
    %v2541 = vpack.c.b16 %v2521, %v2520
    %v2542 = vpack.c.b16 %v2523, %v2522
    %v2543 = vpack.c.b16 %v2524, %v2524
    %v2563 = vand.u32 %v2543, %v534
    %2565 = vmatprep.subr.bf16.mxu0 0
    %2566 = vmatpush1.bf16.msra.mxu0 %v2532
    %2567 = vmatprep.subr.bf16.mxu0 0
    %2568 = vmatpush1.bf16.msra.mxu0 %v2531
    %2569 = vmatprep.subr.bf16.mxu0 0
    %2570 = vmatpush1.bf16.msra.mxu0 %v2530
    %2571 = vmatprep.subr.bf16.mxu0 0
    %2572 = vmatpush1.bf16.msra.mxu0 %v2529
    %2573 = vmatprep.subr.bf16.mxu0 0
    %2574 = vmatpush1.bf16.msra.mxu0 %v2528
    %2575 = vmatprep.subr.bf16.mxu0 0
    %2576 = vmatpush1.bf16.msra.mxu0 %v2527
    %2577 = vmatprep.subr.bf16.mxu0 0
    %2578 = vmatpush1.bf16.msra.mxu0 %v2526
    %2579 = vmatprep.subr.bf16.mxu0 0
    %2580 = vmatpush1.bf16.msra.mxu0 %v2525
    %2581 = vmatprep.subr.bf16.mxu0 0
    %2582 = vmatpush2.bf16.msra.mxu0 %v2540
    %2583 = vmatprep.subr.bf16.mxu0 0
    %2584 = vmatpush2.bf16.msra.mxu0 %v2539
    %2585 = vmatprep.subr.bf16.mxu0 0
    %2586 = vmatpush2.bf16.msra.mxu0 %v2538
    %2587 = vmatprep.subr.bf16.mxu0 0
    %2588 = vmatpush2.bf16.msra.mxu0 %v2537
    %2589 = vmatprep.subr.bf16.mxu0 0
    %2590 = vmatpush2.bf16.msra.mxu0 %v2536
    %2591 = vmatprep.subr.bf16.mxu0 0
    %2592 = vmatpush2.bf16.msra.mxu0 %v2535
    %2593 = vmatprep.subr.bf16.mxu0 0
    %2594 = vmatpush2.bf16.msra.mxu0 %v2534
    %2595 = vmatprep.subr.bf16.mxu0 0
    %2596 = vmatpush2.bf16.msra.mxu0 %v2533
    %2597 = vmatprep.mubr.bf16.mxu0 %v378
    %2598 = vmatmul.mubr.bf16.gmra.mxu0 %v377
    %v2599 = vpop.f32.mrf.mxu0
    %v2600 = vadd.f32 0.0, %v2599
    %v2601 = vpop.f32.mrf.mxu0
    %v2602 = vpop.f32.mrf.mxu0
    %v2603 = vpop.f32.mrf.mxu0
    %2604 = vdwg.mxu0
    %2605 = vmatprep.subr.bf16.mxu0 0
    %2606 = vmatpush1.bf16.msra.mxu0 0
    %2607 = vmatprep.subr.bf16.mxu0 0
    %2608 = vmatpush1.bf16.msra.mxu0 0
    %2609 = vmatprep.subr.bf16.mxu0 0
    %2610 = vmatpush1.bf16.msra.mxu0 0
    %2611 = vmatprep.subr.bf16.mxu0 0
    %2612 = vmatpush1.bf16.msra.mxu0 0
    %2613 = vmatprep.subr.bf16.mxu0 0
    %2614 = vmatpush1.bf16.msra.mxu0 0
    %2615 = vmatprep.subr.bf16.mxu0 0
    %2616 = vmatpush1.bf16.msra.mxu0 %v2563
    %2617 = vmatprep.subr.bf16.mxu0 0
    %2618 = vmatpush1.bf16.msra.mxu0 %v2542
    %2619 = vmatprep.subr.bf16.mxu0 0
    %2620 = vmatpush1.bf16.msra.mxu0 %v2541
    %2621 = vmatprep.subr.bf16.mxu0 0
    %2622 = vmatpush2.bf16.msra.mxu0 0
    %2623 = vmatprep.subr.bf16.mxu0 0
    %2624 = vmatpush2.bf16.msra.mxu0 0
    %2625 = vmatprep.subr.bf16.mxu0 0
    %2626 = vmatpush2.bf16.msra.mxu0 0
    %2627 = vmatprep.subr.bf16.mxu0 0
    %2628 = vmatpush2.bf16.msra.mxu0 0
    %2629 = vmatprep.subr.bf16.mxu0 0
    %2630 = vmatpush2.bf16.msra.mxu0 0
    %2631 = vmatprep.subr.bf16.mxu0 0
    %2632 = vmatpush2.bf16.msra.mxu0 0
    %2633 = vmatprep.subr.bf16.mxu0 0
    %2634 = vmatpush2.bf16.msra.mxu0 0
    %2635 = vmatprep.subr.bf16.mxu0 0
    %2636 = vmatpush2.bf16.msra.mxu0 0
    %2637 = vmatprep.mubr.bf16.mxu0 0
    %2638 = vmatmul.mubr.bf16.gmra.mxu0 %v530
    %v2639 = vpop.f32.mrf.mxu0
    %v2640 = vadd.f32 %v2600, %v2639
    %v2641 = vpop.f32.mrf.mxu0
    %v2642 = vpop.f32.mrf.mxu0
    %v2643 = vpop.f32.mrf.mxu0
    %2644 = vdwg.mxu0
    %s2645 = scalar_lea.vmem %s6, 56
    %v2646 = vld [vmem:[%s2645] sm:$0xf]
    %v2647 = vld [vmem:[%s2645 + $0x4] sm:$0xf]
    %v2648 = vpack.c.bf16 %v2640, %v2640
    %v2651 = vunpack.c.l.b16 %v2646
    %v2652 = vunpack.c.l.b16 %v2647
    %v2653 = vpack.c.b16 %v2652, %v2651
    %v2655 = vsel %vm862, %v2653, 0
    %v2658 = vsel %vm866, %v2648, 0
    %2660 = vmatprep.subr.bf16.mxu0 0
    %2661 = vmatpush1.bf16.msra.mxu0 0
    %2662 = vmatprep.subr.bf16.mxu0 0
    %2663 = vmatpush1.bf16.msra.mxu0 0
    %2664 = vmatprep.subr.bf16.mxu0 0
    %2665 = vmatpush1.bf16.msra.mxu0 0
    %2666 = vmatprep.subr.bf16.mxu0 0
    %2667 = vmatpush1.bf16.msra.mxu0 0
    %2668 = vmatprep.subr.bf16.mxu0 0
    %2669 = vmatpush1.bf16.msra.mxu0 0
    %2670 = vmatprep.subr.bf16.mxu0 0
    %2671 = vmatpush1.bf16.msra.mxu0 0
    %2672 = vmatprep.subr.bf16.mxu0 0
    %2673 = vmatpush1.bf16.msra.mxu0 0
    %2674 = vmatprep.subr.bf16.mxu0 0
    %2675 = vmatpush1.bf16.msra.mxu0 %v2658
    %2676 = vmatprep.subr.bf16.mxu0 0
    %2677 = vmatpush2.bf16.msra.mxu0 0
    %2678 = vmatprep.subr.bf16.mxu0 0
    %2679 = vmatpush2.bf16.msra.mxu0 0
    %2680 = vmatprep.subr.bf16.mxu0 0
    %2681 = vmatpush2.bf16.msra.mxu0 0
    %2682 = vmatprep.subr.bf16.mxu0 0
    %2683 = vmatpush2.bf16.msra.mxu0 0
    %2684 = vmatprep.subr.bf16.mxu0 0
    %2685 = vmatpush2.bf16.msra.mxu0 0
    %2686 = vmatprep.subr.bf16.mxu0 0
    %2687 = vmatpush2.bf16.msra.mxu0 0
    %2688 = vmatprep.subr.bf16.mxu0 0
    %2689 = vmatpush2.bf16.msra.mxu0 0
    %2690 = vmatprep.subr.bf16.mxu0 0
    %2691 = vmatpush2.bf16.msra.mxu0 0
    %2692 = vmatprep.mubr.bf16.mxu0 0
    %2693 = vmatmul.mubr.bf16.gmra.mxu0 %v2655
    %v2694 = vpop.f32.mrf.mxu0
    %v2695 = vadd.f32 0.0, %v2694
    %v2696 = vpop.f32.mrf.mxu0
    %v2697 = vpop.f32.mrf.mxu0
    %v2698 = vadd.f32 0.0, %v2697
    %v2699 = vpop.f32.mrf.mxu0
    %2700 = vdwg.mxu0
    %v2701 = vadd.f32 %v2411, %v2695
    %v2702 = vadd.f32 %v2412, %v2698
    %s2703 = scalar_lea.vmem %s8, 1184
    %v2704 = vld [vmem:[%s2703] sm:$0xf]
    %v2705 = vld [vmem:[%s2703 + $0x4] sm:$0xf]
    %v2706 = vld [vmem:[%s2703 + $0x8] sm:$0xf]
    %v2707 = vld [vmem:[%s2703 + $0xc] sm:$0xf]
    %v2708 = vld [vmem:[%s2703 + $0x10] sm:$0xf]
    %v2709 = vld [vmem:[%s2703 + $0x14] sm:$0xf]
    %v2710 = vld [vmem:[%s2703 + $0x18] sm:$0xf]
    %v2711 = vld [vmem:[%s2703 + $0x1c] sm:$0xf]
    %v2712 = vld [vmem:[%s2703 + $0x20] sm:$0xf]
    %v2713 = vld [vmem:[%s2703 + $0x24] sm:$0xf]
    %v2714 = vld [vmem:[%s2703 + $0x28] sm:$0xf]
    %v2715 = vld [vmem:[%s2703 + $0x2c] sm:$0xf]
    %v2716 = vld [vmem:[%s2703 + $0x30] sm:$0xf]
    %v2717 = vld [vmem:[%s2703 + $0x34] sm:$0xf]
    %v2718 = vld [vmem:[%s2703 + $0x38] sm:$0xf]
    %v2719 = vld [vmem:[%s2703 + $0x3c] sm:$0xf]
    %v2720 = vld [vmem:[%s2703 + $0x40] sm:$0xf]
    %v2721 = vld [vmem:[%s2703 + $0x44] sm:$0xf]
    %v2722 = vld [vmem:[%s2703 + $0x48] sm:$0xf]
    %v2723 = vld [vmem:[%s2703 + $0x4c] sm:$0xf]
    %v2724 = vld [vmem:[%s2703 + $0x50] sm:$0xf]
    %v2725 = vld [vmem:[%s2703 + $0x54] sm:$0xf]
    %v2726 = vld [vmem:[%s2703 + $0x58] sm:$0xf]
    %v2727 = vld [vmem:[%s2703 + $0x5c] sm:$0xf]
    %v2728 = vld [vmem:[%s2703 + $0x60] sm:$0xf]
    %v2729 = vld [vmem:[%s2703 + $0x64] sm:$0xf]
    %v2730 = vld [vmem:[%s2703 + $0x68] sm:$0xf]
    %v2731 = vld [vmem:[%s2703 + $0x6c] sm:$0xf]
    %v2732 = vld [vmem:[%s2703 + $0x70] sm:$0xf]
    %v2733 = vld [vmem:[%s2703 + $0x74] sm:$0xf]
    %v2734 = vld [vmem:[%s2703 + $0x78] sm:$0xf]
    %v2735 = vld [vmem:[%s2703 + $0x7c] sm:$0xf]
    %v2736 = vld [vmem:[%s2703 + $0x80] sm:$0xf]
    %v2737 = vld [vmem:[%s2703 + $0x84] sm:$0xf]
    %v2738 = vld [vmem:[%s2703 + $0x88] sm:$0xf]
    %v2739 = vld [vmem:[%s2703 + $0x8c] sm:$0xf]
    %v2740 = vld [vmem:[%s2703 + $0x90] sm:$0x1]
    %v2778 = vunpack.c.l.b16 %v2704
    %v2779 = vunpack.c.l.b16 %v2705
    %v2780 = vunpack.c.l.b16 %v2706
    %v2781 = vunpack.c.l.b16 %v2707
    %v2782 = vunpack.c.l.b16 %v2708
    %v2783 = vunpack.c.l.b16 %v2709
    %v2784 = vunpack.c.l.b16 %v2710
    %v2785 = vunpack.c.l.b16 %v2711
    %v2786 = vunpack.c.l.b16 %v2712
    %v2787 = vunpack.c.l.b16 %v2713
    %v2788 = vunpack.c.l.b16 %v2714
    %v2789 = vunpack.c.l.b16 %v2715
    %v2790 = vunpack.c.l.b16 %v2716
    %v2791 = vunpack.c.l.b16 %v2717
    %v2792 = vunpack.c.l.b16 %v2718
    %v2793 = vunpack.c.l.b16 %v2719
    %v2794 = vunpack.c.l.b16 %v2720
    %v2795 = vunpack.c.l.b16 %v2721
    %v2796 = vunpack.c.l.b16 %v2722
    %v2797 = vunpack.c.l.b16 %v2723
    %v2798 = vunpack.c.l.b16 %v2724
    %v2799 = vunpack.c.l.b16 %v2725
    %v2800 = vunpack.c.l.b16 %v2726
    %v2801 = vunpack.c.l.b16 %v2727
    %v2802 = vunpack.c.l.b16 %v2728
    %v2803 = vunpack.c.l.b16 %v2729
    %v2804 = vunpack.c.l.b16 %v2730
    %v2805 = vunpack.c.l.b16 %v2731
    %v2806 = vunpack.c.l.b16 %v2732
    %v2807 = vunpack.c.l.b16 %v2733
    %v2808 = vunpack.c.l.b16 %v2734
    %v2809 = vunpack.c.l.b16 %v2735
    %v2810 = vunpack.c.l.b16 %v2736
    %v2811 = vunpack.c.l.b16 %v2737
    %v2812 = vunpack.c.l.b16 %v2738
    %v2813 = vunpack.c.l.b16 %v2739
    %v2814 = vunpack.c.l.b16 %v2740
    %v2815 = vpack.c.b16 %v2779, %v2778
    %v2816 = vpack.c.b16 %v2781, %v2780
    %v2817 = vpack.c.b16 %v2783, %v2782
    %v2818 = vpack.c.b16 %v2785, %v2784
    %v2819 = vpack.c.b16 %v2787, %v2786
    %v2820 = vpack.c.b16 %v2789, %v2788
    %v2821 = vpack.c.b16 %v2791, %v2790
    %v2822 = vpack.c.b16 %v2793, %v2792
    %v2823 = vpack.c.b16 %v2795, %v2794
    %v2824 = vpack.c.b16 %v2797, %v2796
    %v2825 = vpack.c.b16 %v2799, %v2798
    %v2826 = vpack.c.b16 %v2801, %v2800
    %v2827 = vpack.c.b16 %v2803, %v2802
    %v2828 = vpack.c.b16 %v2805, %v2804
    %v2829 = vpack.c.b16 %v2807, %v2806
    %v2830 = vpack.c.b16 %v2809, %v2808
    %v2831 = vpack.c.b16 %v2811, %v2810
    %v2832 = vpack.c.b16 %v2813, %v2812
    %v2833 = vpack.c.b16 %v2814, %v2814
    %v2853 = vand.u32 %v2833, %v534
    %2855 = vmatprep.subr.bf16.mxu0 0
    %2856 = vmatpush1.bf16.msra.mxu0 %v2822
    %2857 = vmatprep.subr.bf16.mxu0 0
    %2858 = vmatpush1.bf16.msra.mxu0 %v2821
    %2859 = vmatprep.subr.bf16.mxu0 0
    %2860 = vmatpush1.bf16.msra.mxu0 %v2820
    %2861 = vmatprep.subr.bf16.mxu0 0
    %2862 = vmatpush1.bf16.msra.mxu0 %v2819
    %2863 = vmatprep.subr.bf16.mxu0 0
    %2864 = vmatpush1.bf16.msra.mxu0 %v2818
    %2865 = vmatprep.subr.bf16.mxu0 0
    %2866 = vmatpush1.bf16.msra.mxu0 %v2817
    %2867 = vmatprep.subr.bf16.mxu0 0
    %2868 = vmatpush1.bf16.msra.mxu0 %v2816
    %2869 = vmatprep.subr.bf16.mxu0 0
    %2870 = vmatpush1.bf16.msra.mxu0 %v2815
    %2871 = vmatprep.subr.bf16.mxu0 0
    %2872 = vmatpush2.bf16.msra.mxu0 %v2830
    %2873 = vmatprep.subr.bf16.mxu0 0
    %2874 = vmatpush2.bf16.msra.mxu0 %v2829
    %2875 = vmatprep.subr.bf16.mxu0 0
    %2876 = vmatpush2.bf16.msra.mxu0 %v2828
    %2877 = vmatprep.subr.bf16.mxu0 0
    %2878 = vmatpush2.bf16.msra.mxu0 %v2827
    %2879 = vmatprep.subr.bf16.mxu0 0
    %2880 = vmatpush2.bf16.msra.mxu0 %v2826
    %2881 = vmatprep.subr.bf16.mxu0 0
    %2882 = vmatpush2.bf16.msra.mxu0 %v2825
    %2883 = vmatprep.subr.bf16.mxu0 0
    %2884 = vmatpush2.bf16.msra.mxu0 %v2824
    %2885 = vmatprep.subr.bf16.mxu0 0
    %2886 = vmatpush2.bf16.msra.mxu0 %v2823
    %2887 = vmatprep.mubr.bf16.mxu0 %v378
    %2888 = vmatmul.mubr.bf16.gmra.mxu0 %v377
    %v2889 = vpop.f32.mrf.mxu0
    %v2890 = vadd.f32 0.0, %v2889
    %v2891 = vpop.f32.mrf.mxu0
    %v2892 = vpop.f32.mrf.mxu0
    %v2893 = vpop.f32.mrf.mxu0
    %2894 = vdwg.mxu0
    %2895 = vmatprep.subr.bf16.mxu0 0
    %2896 = vmatpush1.bf16.msra.mxu0 0
    %2897 = vmatprep.subr.bf16.mxu0 0
    %2898 = vmatpush1.bf16.msra.mxu0 0
    %2899 = vmatprep.subr.bf16.mxu0 0
    %2900 = vmatpush1.bf16.msra.mxu0 0
    %2901 = vmatprep.subr.bf16.mxu0 0
    %2902 = vmatpush1.bf16.msra.mxu0 0
    %2903 = vmatprep.subr.bf16.mxu0 0
    %2904 = vmatpush1.bf16.msra.mxu0 0
    %2905 = vmatprep.subr.bf16.mxu0 0
    %2906 = vmatpush1.bf16.msra.mxu0 %v2853
    %2907 = vmatprep.subr.bf16.mxu0 0
    %2908 = vmatpush1.bf16.msra.mxu0 %v2832
    %2909 = vmatprep.subr.bf16.mxu0 0
    %2910 = vmatpush1.bf16.msra.mxu0 %v2831
    %2911 = vmatprep.subr.bf16.mxu0 0
    %2912 = vmatpush2.bf16.msra.mxu0 0
    %2913 = vmatprep.subr.bf16.mxu0 0
    %2914 = vmatpush2.bf16.msra.mxu0 0
    %2915 = vmatprep.subr.bf16.mxu0 0
    %2916 = vmatpush2.bf16.msra.mxu0 0
    %2917 = vmatprep.subr.bf16.mxu0 0
    %2918 = vmatpush2.bf16.msra.mxu0 0
    %2919 = vmatprep.subr.bf16.mxu0 0
    %2920 = vmatpush2.bf16.msra.mxu0 0
    %2921 = vmatprep.subr.bf16.mxu0 0
    %2922 = vmatpush2.bf16.msra.mxu0 0
    %2923 = vmatprep.subr.bf16.mxu0 0
    %2924 = vmatpush2.bf16.msra.mxu0 0
    %2925 = vmatprep.subr.bf16.mxu0 0
    %2926 = vmatpush2.bf16.msra.mxu0 0
    %2927 = vmatprep.mubr.bf16.mxu0 0
    %2928 = vmatmul.mubr.bf16.gmra.mxu0 %v530
    %v2929 = vpop.f32.mrf.mxu0
    %v2930 = vadd.f32 %v2890, %v2929
    %v2931 = vpop.f32.mrf.mxu0
    %v2932 = vpop.f32.mrf.mxu0
    %v2933 = vpop.f32.mrf.mxu0
    %2934 = vdwg.mxu0
    %s2935 = scalar_lea.vmem %s6, 64
    %v2936 = vld [vmem:[%s2935] sm:$0xf]
    %v2937 = vld [vmem:[%s2935 + $0x4] sm:$0xf]
    %v2938 = vpack.c.bf16 %v2930, %v2930
    %v2941 = vunpack.c.l.b16 %v2936
    %v2942 = vunpack.c.l.b16 %v2937
    %v2943 = vpack.c.b16 %v2942, %v2941
    %v2945 = vsel %vm862, %v2943, 0
    %v2948 = vsel %vm866, %v2938, 0
    %2950 = vmatprep.subr.bf16.mxu0 0
    %2951 = vmatpush1.bf16.msra.mxu0 0
    %2952 = vmatprep.subr.bf16.mxu0 0
    %2953 = vmatpush1.bf16.msra.mxu0 0
    %2954 = vmatprep.subr.bf16.mxu0 0
    %2955 = vmatpush1.bf16.msra.mxu0 0
    %2956 = vmatprep.subr.bf16.mxu0 0
    %2957 = vmatpush1.bf16.msra.mxu0 0
    %2958 = vmatprep.subr.bf16.mxu0 0
    %2959 = vmatpush1.bf16.msra.mxu0 0
    %2960 = vmatprep.subr.bf16.mxu0 0
    %2961 = vmatpush1.bf16.msra.mxu0 0
    %2962 = vmatprep.subr.bf16.mxu0 0
    %2963 = vmatpush1.bf16.msra.mxu0 0
    %2964 = vmatprep.subr.bf16.mxu0 0
    %2965 = vmatpush1.bf16.msra.mxu0 %v2948
    %2966 = vmatprep.subr.bf16.mxu0 0
    %2967 = vmatpush2.bf16.msra.mxu0 0
    %2968 = vmatprep.subr.bf16.mxu0 0
    %2969 = vmatpush2.bf16.msra.mxu0 0
    %2970 = vmatprep.subr.bf16.mxu0 0
    %2971 = vmatpush2.bf16.msra.mxu0 0
    %2972 = vmatprep.subr.bf16.mxu0 0
    %2973 = vmatpush2.bf16.msra.mxu0 0
    %2974 = vmatprep.subr.bf16.mxu0 0
    %2975 = vmatpush2.bf16.msra.mxu0 0
    %2976 = vmatprep.subr.bf16.mxu0 0
    %2977 = vmatpush2.bf16.msra.mxu0 0
    %2978 = vmatprep.subr.bf16.mxu0 0
    %2979 = vmatpush2.bf16.msra.mxu0 0
    %2980 = vmatprep.subr.bf16.mxu0 0
    %2981 = vmatpush2.bf16.msra.mxu0 0
    %2982 = vmatprep.mubr.bf16.mxu0 0
    %2983 = vmatmul.mubr.bf16.gmra.mxu0 %v2945
    %v2984 = vpop.f32.mrf.mxu0
    %v2985 = vadd.f32 0.0, %v2984
    %v2986 = vpop.f32.mrf.mxu0
    %v2987 = vpop.f32.mrf.mxu0
    %v2988 = vadd.f32 0.0, %v2987
    %v2989 = vpop.f32.mrf.mxu0
    %2990 = vdwg.mxu0
    %v2991 = vadd.f32 %v2701, %v2985
    %v2992 = vadd.f32 %v2702, %v2988
    %2994 = vset.pattern.permute.xlu0 0
    %2995 = vperm.xlu0 %2994, %v58
    %v2996 = vpop.permute.xlu0 %2995
    %2999 = vset.pattern.permute.xlu0 0
    %3000 = vperm.xlu0 %2999, %v59
    %v3001 = vpop.permute.xlu0 %3000
    %v3003 = vadd.f32 %v2991, %v2996
    %v3004 = vadd.f32 %v2992, %v3001
    %v3005 = vpack.c.bf16 %v3004, %v3003
    %v3032 = vunpack.c.l.b16 %v60
    %v3033 = vunpack.c.h.b16 %v60
    %v3034 = vunpack.c.l.b16 %v61
    %v3035 = vunpack.c.l.b16 %v62
    %v3036 = vunpack.c.h.b16 %v62
    %v3037 = vunpack.c.l.b16 %v63
    %v3038 = vunpack.c.l.b16 %v64
    %v3039 = vunpack.c.h.b16 %v64
    %v3040 = vunpack.c.l.b16 %v65
    %v3041 = vunpack.c.l.b16 %v66
    %v3042 = vunpack.c.h.b16 %v66
    %v3043 = vunpack.c.l.b16 %v67
    %v3044 = vunpack.c.l.b16 %v68
    %v3045 = vunpack.c.h.b16 %v68
    %v3046 = vunpack.c.l.b16 %v69
    %v3047 = vunpack.c.l.b16 %v70
    %v3048 = vunpack.c.h.b16 %v70
    %v3049 = vunpack.c.l.b16 %v71
    %v3050 = vunpack.c.l.b16 %v72
    %v3051 = vunpack.c.h.b16 %v72
    %v3052 = vunpack.c.l.b16 %v73
    %v3053 = vunpack.c.l.b16 %v74
    %v3054 = vunpack.c.h.b16 %v74
    %v3055 = vunpack.c.l.b16 %v75
    %v3056 = vunpack.c.l.b16 %v76
    %v3057 = vunpack.c.h.b16 %v76
    %v3058 = vunpack.c.l.b16 %v77
    %v3059 = vunpack.c.l.b16 %v78
    %v3060 = vunpack.c.h.b16 %v78
    %v3061 = vunpack.c.l.b16 %v79
    %v3062 = vunpack.c.l.b16 %v80
    %v3063 = vunpack.c.h.b16 %v80
    %v3064 = vunpack.c.l.b16 %v81
    %v3065 = vunpack.c.l.b16 %v82
    %v3066 = vunpack.c.h.b16 %v82
    %v3067 = vunpack.c.l.b16 %v83
    %v3068 = vunpack.c.l.b16 %v84
    %v3069 = vunpack.c.h.b16 %v84
    %v3070 = vunpack.c.l.b16 %v85
    %v3071 = vpack.c.b16 %v3035, %v3032
    %v3072 = vpack.c.b16 %v3036, %v3033
    %v3073 = vpack.c.b16 %v3037, %v3034
    %v3074 = vpack.c.b16 %v3041, %v3038
    %v3075 = vpack.c.b16 %v3042, %v3039
    %v3076 = vpack.c.b16 %v3043, %v3040
    %v3077 = vpack.c.b16 %v3047, %v3044
    %v3078 = vpack.c.b16 %v3048, %v3045
    %v3079 = vpack.c.b16 %v3049, %v3046
    %v3080 = vpack.c.b16 %v3053, %v3050
    %v3081 = vpack.c.b16 %v3054, %v3051
    %v3082 = vpack.c.b16 %v3055, %v3052
    %v3083 = vpack.c.b16 %v3059, %v3056
    %v3084 = vpack.c.b16 %v3060, %v3057
    %v3085 = vpack.c.b16 %v3061, %v3058
    %v3086 = vpack.c.b16 %v3065, %v3062
    %v3087 = vpack.c.b16 %v3066, %v3063
    %v3088 = vpack.c.b16 %v3067, %v3064
    %v3089 = vpack.c.b16 %v3068, %v3068
    %v3090 = vpack.c.b16 %v3069, %v3069
    %v3091 = vpack.c.b16 %v3070, %v3070
    %vm3110 = vcmask 818176
    %v3112 = vsel %vm3110, %v3005, 0
    %vm3114 = vcmask 1041408
    %v3116 = vsel %vm3114, %v3089, 0
    %v3119 = vsel %vm3114, %v3090, 0
    %v3122 = vsel %vm3114, %v3091, 0
    %3124 = vmatprep.subr.bf16.mxu0 0
    %3125 = vmatpush1.bf16.msra.mxu0 0
    %3126 = vmatprep.subr.bf16.mxu0 %v3119
    %3127 = vmatpush1.bf16.msra.mxu0 %v3116
    %3128 = vmatprep.subr.bf16.mxu0 %v3087
    %3129 = vmatpush1.bf16.msra.mxu0 %v3086
    %3130 = vmatprep.subr.bf16.mxu0 %v3084
    %3131 = vmatpush1.bf16.msra.mxu0 %v3083
    %3132 = vmatprep.subr.bf16.mxu0 %v3081
    %3133 = vmatpush1.bf16.msra.mxu0 %v3080
    %3134 = vmatprep.subr.bf16.mxu0 %v3078
    %3135 = vmatpush1.bf16.msra.mxu0 %v3077
    %3136 = vmatprep.subr.bf16.mxu0 %v3075
    %3137 = vmatpush1.bf16.msra.mxu0 %v3074
    %3138 = vmatprep.subr.bf16.mxu0 %v3072
    %3139 = vmatpush1.bf16.msra.mxu0 %v3071
    %3140 = vmatprep.subr.bf16.mxu0 0
    %3141 = vmatpush2.bf16.msra.mxu0 0
    %3142 = vmatprep.subr.bf16.mxu0 0
    %3143 = vmatpush2.bf16.msra.mxu0 0
    %3144 = vmatprep.subr.bf16.mxu0 0
    %3145 = vmatpush2.bf16.msra.mxu0 0
    %3146 = vmatprep.subr.bf16.mxu0 0
    %3147 = vmatpush2.bf16.msra.mxu0 0
    %3148 = vmatprep.subr.bf16.mxu0 0
    %3149 = vmatpush2.bf16.msra.mxu0 0
    %3150 = vmatprep.subr.bf16.mxu0 0
    %3151 = vmatpush2.bf16.msra.mxu0 0
    %3152 = vmatprep.subr.bf16.mxu0 0
    %3153 = vmatpush2.bf16.msra.mxu0 0
    %3154 = vmatprep.subr.bf16.mxu0 0
    %3155 = vmatpush2.bf16.msra.mxu0 0
    %3156 = vmatprep.mubr.bf16.mxu0 0
    %3157 = vmatmul.mubr.bf16.gmra.mxu0 %v3112
    %v3158 = vpop.f32.mrf.mxu0
    %v3159 = vadd.f32 0.0, %v3158
    %v3160 = vpop.f32.mrf.mxu0
    %v3161 = vadd.f32 0.0, %v3160
    %v3162 = vpop.f32.mrf.mxu0
    %v3163 = vadd.f32 0.0, %v3162
    %v3164 = vpop.f32.mrf.mxu0
    %v3165 = vadd.f32 0.0, %v3164
    %3166 = vdwg.mxu0
    %3167 = vmatprep.subr.bf16.mxu0 0
    %3168 = vmatpush1.bf16.msra.mxu0 0
    %3169 = vmatprep.subr.bf16.mxu0 0
    %3170 = vmatpush1.bf16.msra.mxu0 %v3122
    %3171 = vmatprep.subr.bf16.mxu0 0
    %3172 = vmatpush1.bf16.msra.mxu0 %v3088
    %3173 = vmatprep.subr.bf16.mxu0 0
    %3174 = vmatpush1.bf16.msra.mxu0 %v3085
    %3175 = vmatprep.subr.bf16.mxu0 0
    %3176 = vmatpush1.bf16.msra.mxu0 %v3082
    %3177 = vmatprep.subr.bf16.mxu0 0
    %3178 = vmatpush1.bf16.msra.mxu0 %v3079
    %3179 = vmatprep.subr.bf16.mxu0 0
    %3180 = vmatpush1.bf16.msra.mxu0 %v3076
    %3181 = vmatprep.subr.bf16.mxu0 0
    %3182 = vmatpush1.bf16.msra.mxu0 %v3073
    %3183 = vmatprep.subr.bf16.mxu0 0
    %3184 = vmatpush2.bf16.msra.mxu0 0
    %3185 = vmatprep.subr.bf16.mxu0 0
    %3186 = vmatpush2.bf16.msra.mxu0 0
    %3187 = vmatprep.subr.bf16.mxu0 0
    %3188 = vmatpush2.bf16.msra.mxu0 0
    %3189 = vmatprep.subr.bf16.mxu0 0
    %3190 = vmatpush2.bf16.msra.mxu0 0
    %3191 = vmatprep.subr.bf16.mxu0 0
    %3192 = vmatpush2.bf16.msra.mxu0 0
    %3193 = vmatprep.subr.bf16.mxu0 0
    %3194 = vmatpush2.bf16.msra.mxu0 0
    %3195 = vmatprep.subr.bf16.mxu0 0
    %3196 = vmatpush2.bf16.msra.mxu0 0
    %3197 = vmatprep.subr.bf16.mxu0 0
    %3198 = vmatpush2.bf16.msra.mxu0 0
    %3199 = vmatprep.mubr.bf16.mxu0 0
    %3200 = vmatmul.mubr.bf16.gmra.mxu0 %v3112
    %v3201 = vpop.f32.mrf.mxu0
    %v3202 = vadd.f32 0.0, %v3201
    %v3203 = vpop.f32.mrf.mxu0
    %v3204 = vpop.f32.mrf.mxu0
    %v3205 = vadd.f32 0.0, %v3204
    %v3206 = vpop.f32.mrf.mxu0
    %3207 = vdwg.mxu0
    %v3208 = vadd.f32 %v189, %v3159
    %v3209 = vadd.f32 %v191, %v3161
    %v3210 = vadd.f32 %v232, %v3202
    %v3211 = vadd.f32 %v193, %v3163
    %v3212 = vadd.f32 %v195, %v3165
    %v3213 = vadd.f32 %v235, %v3205
    %v3214 = vmax.f32 %v3208, 0.0
    %v3215 = vmax.f32 %v3209, 0.0
    %v3216 = vmax.f32 %v3210, 0.0
    %v3217 = vmax.f32 %v3211, 0.0
    %v3218 = vmax.f32 %v3212, 0.0
    %v3219 = vmax.f32 %v3213, 0.0
    %v3220 = vpack.c.bf16 %v3217, %v3214
    %v3221 = vpack.c.bf16 %v3218, %v3215
    %v3222 = vpack.c.bf16 %v3219, %v3216
    %v3223 = vld [vmem:[%s10] sm:$0xf]
    %v3224 = vld [vmem:[%s10 + $0x4] sm:$0xf]
    %v3225 = vld [vmem:[%s10 + $0x8] sm:$0xf]
    %v3226 = vld [vmem:[%s10 + $0xc] sm:$0xf]
    %v3227 = vld [vmem:[%s10 + $0x10] sm:$0xf]
    %v3228 = vld [vmem:[%s10 + $0x14] sm:$0xf]
    %v3229 = vld [vmem:[%s10 + $0x18] sm:$0xf]
    %v3230 = vld [vmem:[%s10 + $0x1c] sm:$0xf]
    %v3231 = vld [vmem:[%s10 + $0x20] sm:$0xf]
    %v3232 = vld [vmem:[%s10 + $0x24] sm:$0xf]
    %v3233 = vld [vmem:[%s10 + $0x28] sm:$0xf]
    %v3234 = vld [vmem:[%s10 + $0x2c] sm:$0xf]
    %v3235 = vld [vmem:[%s10 + $0x30] sm:$0xf]
    %v3236 = vld [vmem:[%s10 + $0x34] sm:$0xf]
    %v3237 = vld [vmem:[%s10 + $0x38] sm:$0xf]
    %v3238 = vld [vmem:[%s10 + $0x3c] sm:$0xf]
    %v3239 = vld [vmem:[%s10 + $0x40] sm:$0xf]
    %v3240 = vld [vmem:[%s10 + $0x44] sm:$0xf]
    %v3241 = vld [vmem:[%s10 + $0x48] sm:$0xf]
    %v3242 = vld [vmem:[%s10 + $0x4c] sm:$0xf]
    %v3243 = vld [vmem:[%s10 + $0x50] sm:$0xf]
    %v3244 = vld [vmem:[%s10 + $0x54] sm:$0xf]
    %v3245 = vld [vmem:[%s10 + $0x58] sm:$0xf]
    %v3246 = vld [vmem:[%s10 + $0x5c] sm:$0xf]
    %v3247 = vld [vmem:[%s10 + $0x60] sm:$0xf]
    %v3248 = vld [vmem:[%s10 + $0x64] sm:$0xf]
    %v3249 = vld [vmem:[%s10 + $0x68] sm:$0xf]
    %v3250 = vld [vmem:[%s10 + $0x6c] sm:$0xf]
    %v3251 = vld [vmem:[%s10 + $0x70] sm:$0xf]
    %v3252 = vld [vmem:[%s10 + $0x74] sm:$0xf]
    %v3253 = vld [vmem:[%s10 + $0x78] sm:$0xf]
    %v3254 = vld [vmem:[%s10 + $0x7c] sm:$0xf]
    %v3255 = vld [vmem:[%s10 + $0x80] sm:$0xf]
    %v3256 = vld [vmem:[%s10 + $0x84] sm:$0xf]
    %v3257 = vld [vmem:[%s10 + $0x88] sm:$0xf]
    %v3258 = vld [vmem:[%s10 + $0x8c] sm:$0xf]
    %v3259 = vld [vmem:[%s10 + $0x90] sm:$0xf]
    %v3260 = vld [vmem:[%s10 + $0x94] sm:$0xf]
    %v3261 = vld [vmem:[%s10 + $0x98] sm:$0xf]
    %v3262 = vld [vmem:[%s10 + $0x9c] sm:$0xf]
    %v3263 = vld [vmem:[%s10 + $0xa0] sm:$0x3]
    %v3305 = vunpack.c.l.b16 %v3223
    %v3306 = vunpack.c.l.b16 %v3224
    %v3307 = vunpack.c.l.b16 %v3225
    %v3308 = vunpack.c.l.b16 %v3226
    %v3309 = vunpack.c.l.b16 %v3227
    %v3310 = vunpack.c.l.b16 %v3228
    %v3311 = vunpack.c.l.b16 %v3229
    %v3312 = vunpack.c.l.b16 %v3230
    %v3313 = vunpack.c.l.b16 %v3231
    %v3314 = vunpack.c.l.b16 %v3232
    %v3315 = vunpack.c.l.b16 %v3233
    %v3316 = vunpack.c.l.b16 %v3234
    %v3317 = vunpack.c.l.b16 %v3235
    %v3318 = vunpack.c.l.b16 %v3236
    %v3319 = vunpack.c.l.b16 %v3237
    %v3320 = vunpack.c.l.b16 %v3238
    %v3321 = vunpack.c.l.b16 %v3239
    %v3322 = vunpack.c.l.b16 %v3240
    %v3323 = vunpack.c.l.b16 %v3241
    %v3324 = vunpack.c.l.b16 %v3242
    %v3325 = vunpack.c.l.b16 %v3243
    %v3326 = vunpack.c.l.b16 %v3244
    %v3327 = vunpack.c.l.b16 %v3245
    %v3328 = vunpack.c.l.b16 %v3246
    %v3329 = vunpack.c.l.b16 %v3247
    %v3330 = vunpack.c.l.b16 %v3248
    %v3331 = vunpack.c.l.b16 %v3249
    %v3332 = vunpack.c.l.b16 %v3250
    %v3333 = vunpack.c.l.b16 %v3251
    %v3334 = vunpack.c.l.b16 %v3252
    %v3335 = vunpack.c.l.b16 %v3253
    %v3336 = vunpack.c.l.b16 %v3254
    %v3337 = vunpack.c.l.b16 %v3255
    %v3338 = vunpack.c.l.b16 %v3256
    %v3339 = vunpack.c.l.b16 %v3257
    %v3340 = vunpack.c.l.b16 %v3258
    %v3341 = vunpack.c.l.b16 %v3259
    %v3342 = vunpack.c.l.b16 %v3260
    %v3343 = vunpack.c.l.b16 %v3261
    %v3344 = vunpack.c.l.b16 %v3262
    %v3345 = vunpack.c.l.b16 %v3263
    %v3346 = vpack.c.b16 %v3306, %v3305
    %v3347 = vpack.c.b16 %v3308, %v3307
    %v3348 = vpack.c.b16 %v3310, %v3309
    %v3349 = vpack.c.b16 %v3312, %v3311
    %v3350 = vpack.c.b16 %v3314, %v3313
    %v3351 = vpack.c.b16 %v3316, %v3315
    %v3352 = vpack.c.b16 %v3318, %v3317
    %v3353 = vpack.c.b16 %v3320, %v3319
    %v3354 = vpack.c.b16 %v3322, %v3321
    %v3355 = vpack.c.b16 %v3324, %v3323
    %v3356 = vpack.c.b16 %v3326, %v3325
    %v3357 = vpack.c.b16 %v3328, %v3327
    %v3358 = vpack.c.b16 %v3330, %v3329
    %v3359 = vpack.c.b16 %v3332, %v3331
    %v3360 = vpack.c.b16 %v3334, %v3333
    %v3361 = vpack.c.b16 %v3336, %v3335
    %v3362 = vpack.c.b16 %v3338, %v3337
    %v3363 = vpack.c.b16 %v3340, %v3339
    %v3364 = vpack.c.b16 %v3342, %v3341
    %v3365 = vpack.c.b16 %v3344, %v3343
    %v3366 = vpack.c.b16 %v3345, %v3345
    %vm3387 = vcmask 556032
    %v3389 = vsel %vm3387, %v3222, 0
    %v3392 = vsel %vm3114, %v3366, 0
    %3394 = vmatprep.subr.bf16.mxu0 0
    %3395 = vmatpush1.bf16.msra.mxu0 %v3353
    %3396 = vmatprep.subr.bf16.mxu0 0
    %3397 = vmatpush1.bf16.msra.mxu0 %v3352
    %3398 = vmatprep.subr.bf16.mxu0 0
    %3399 = vmatpush1.bf16.msra.mxu0 %v3351
    %3400 = vmatprep.subr.bf16.mxu0 0
    %3401 = vmatpush1.bf16.msra.mxu0 %v3350
    %3402 = vmatprep.subr.bf16.mxu0 0
    %3403 = vmatpush1.bf16.msra.mxu0 %v3349
    %3404 = vmatprep.subr.bf16.mxu0 0
    %3405 = vmatpush1.bf16.msra.mxu0 %v3348
    %3406 = vmatprep.subr.bf16.mxu0 0
    %3407 = vmatpush1.bf16.msra.mxu0 %v3347
    %3408 = vmatprep.subr.bf16.mxu0 0
    %3409 = vmatpush1.bf16.msra.mxu0 %v3346
    %3410 = vmatprep.subr.bf16.mxu0 0
    %3411 = vmatpush2.bf16.msra.mxu0 %v3361
    %3412 = vmatprep.subr.bf16.mxu0 0
    %3413 = vmatpush2.bf16.msra.mxu0 %v3360
    %3414 = vmatprep.subr.bf16.mxu0 0
    %3415 = vmatpush2.bf16.msra.mxu0 %v3359
    %3416 = vmatprep.subr.bf16.mxu0 0
    %3417 = vmatpush2.bf16.msra.mxu0 %v3358
    %3418 = vmatprep.subr.bf16.mxu0 0
    %3419 = vmatpush2.bf16.msra.mxu0 %v3357
    %3420 = vmatprep.subr.bf16.mxu0 0
    %3421 = vmatpush2.bf16.msra.mxu0 %v3356
    %3422 = vmatprep.subr.bf16.mxu0 0
    %3423 = vmatpush2.bf16.msra.mxu0 %v3355
    %3424 = vmatprep.subr.bf16.mxu0 0
    %3425 = vmatpush2.bf16.msra.mxu0 %v3354
    %3426 = vmatprep.mubr.bf16.mxu0 %v3221
    %3427 = vmatmul.mubr.bf16.gmra.mxu0 %v3220
    %v3428 = vpop.f32.mrf.mxu0
    %v3429 = vadd.f32 0.0, %v3428
    %v3430 = vpop.f32.mrf.mxu0
    %v3431 = vpop.f32.mrf.mxu0
    %v3432 = vadd.f32 0.0, %v3431
    %v3433 = vpop.f32.mrf.mxu0
    %3434 = vdwg.mxu0
    %3435 = vmatprep.subr.bf16.mxu0 0
    %3436 = vmatpush1.bf16.msra.mxu0 0
    %3437 = vmatprep.subr.bf16.mxu0 0
    %3438 = vmatpush1.bf16.msra.mxu0 0
    %3439 = vmatprep.subr.bf16.mxu0 0
    %3440 = vmatpush1.bf16.msra.mxu0 0
    %3441 = vmatprep.subr.bf16.mxu0 0
    %3442 = vmatpush1.bf16.msra.mxu0 %v3392
    %3443 = vmatprep.subr.bf16.mxu0 0
    %3444 = vmatpush1.bf16.msra.mxu0 %v3365
    %3445 = vmatprep.subr.bf16.mxu0 0
    %3446 = vmatpush1.bf16.msra.mxu0 %v3364
    %3447 = vmatprep.subr.bf16.mxu0 0
    %3448 = vmatpush1.bf16.msra.mxu0 %v3363
    %3449 = vmatprep.subr.bf16.mxu0 0
    %3450 = vmatpush1.bf16.msra.mxu0 %v3362
    %3451 = vmatprep.subr.bf16.mxu0 0
    %3452 = vmatpush2.bf16.msra.mxu0 0
    %3453 = vmatprep.subr.bf16.mxu0 0
    %3454 = vmatpush2.bf16.msra.mxu0 0
    %3455 = vmatprep.subr.bf16.mxu0 0
    %3456 = vmatpush2.bf16.msra.mxu0 0
    %3457 = vmatprep.subr.bf16.mxu0 0
    %3458 = vmatpush2.bf16.msra.mxu0 0
    %3459 = vmatprep.subr.bf16.mxu0 0
    %3460 = vmatpush2.bf16.msra.mxu0 0
    %3461 = vmatprep.subr.bf16.mxu0 0
    %3462 = vmatpush2.bf16.msra.mxu0 0
    %3463 = vmatprep.subr.bf16.mxu0 0
    %3464 = vmatpush2.bf16.msra.mxu0 0
    %3465 = vmatprep.subr.bf16.mxu0 0
    %3466 = vmatpush2.bf16.msra.mxu0 0
    %3467 = vmatprep.mubr.bf16.mxu0 0
    %3468 = vmatmul.mubr.bf16.gmra.mxu0 %v3389
    %v3469 = vpop.f32.mrf.mxu0
    %v3470 = vadd.f32 %v3429, %v3469
    %v3471 = vpop.f32.mrf.mxu0
    %v3472 = vpop.f32.mrf.mxu0
    %v3473 = vadd.f32 %v3432, %v3472
    %v3474 = vpop.f32.mrf.mxu0
    %3475 = vdwg.mxu0
    %s3476 = scalar_lea.vmem %s10, 164
    %v3477 = vld [vmem:[%s3476] sm:$0xf]
    %v3478 = vld [vmem:[%s3476 + $0x4] sm:$0xf]
    %v3479 = vld [vmem:[%s3476 + $0x8] sm:$0xf]
    %v3480 = vld [vmem:[%s3476 + $0xc] sm:$0xf]
    %v3481 = vld [vmem:[%s3476 + $0x10] sm:$0xf]
    %v3482 = vld [vmem:[%s3476 + $0x14] sm:$0xf]
    %v3483 = vld [vmem:[%s3476 + $0x18] sm:$0xf]
    %v3484 = vld [vmem:[%s3476 + $0x1c] sm:$0xf]
    %v3485 = vld [vmem:[%s3476 + $0x20] sm:$0xf]
    %v3486 = vld [vmem:[%s3476 + $0x24] sm:$0xf]
    %v3487 = vld [vmem:[%s3476 + $0x28] sm:$0xf]
    %v3488 = vld [vmem:[%s3476 + $0x2c] sm:$0xf]
    %v3489 = vld [vmem:[%s3476 + $0x30] sm:$0xf]
    %v3490 = vld [vmem:[%s3476 + $0x34] sm:$0xf]
    %v3491 = vld [vmem:[%s3476 + $0x38] sm:$0xf]
    %v3492 = vld [vmem:[%s3476 + $0x3c] sm:$0xf]
    %v3493 = vld [vmem:[%s3476 + $0x40] sm:$0xf]
    %v3494 = vld [vmem:[%s3476 + $0x44] sm:$0xf]
    %v3495 = vld [vmem:[%s3476 + $0x48] sm:$0xf]
    %v3496 = vld [vmem:[%s3476 + $0x4c] sm:$0xf]
    %v3497 = vld [vmem:[%s3476 + $0x50] sm:$0xf]
    %v3498 = vld [vmem:[%s3476 + $0x54] sm:$0xf]
    %v3499 = vld [vmem:[%s3476 + $0x58] sm:$0xf]
    %v3500 = vld [vmem:[%s3476 + $0x5c] sm:$0xf]
    %v3501 = vld [vmem:[%s3476 + $0x60] sm:$0xf]
    %v3502 = vld [vmem:[%s3476 + $0x64] sm:$0xf]
    %v3503 = vld [vmem:[%s3476 + $0x68] sm:$0xf]
    %v3504 = vld [vmem:[%s3476 + $0x6c] sm:$0xf]
    %v3505 = vld [vmem:[%s3476 + $0x70] sm:$0xf]
    %v3506 = vld [vmem:[%s3476 + $0x74] sm:$0xf]
    %v3507 = vld [vmem:[%s3476 + $0x78] sm:$0xf]
    %v3508 = vld [vmem:[%s3476 + $0x7c] sm:$0xf]
    %v3509 = vld [vmem:[%s3476 + $0x80] sm:$0xf]
    %v3510 = vld [vmem:[%s3476 + $0x84] sm:$0xf]
    %v3511 = vld [vmem:[%s3476 + $0x88] sm:$0xf]
    %v3512 = vld [vmem:[%s3476 + $0x8c] sm:$0xf]
    %v3513 = vld [vmem:[%s3476 + $0x90] sm:$0xf]
    %v3514 = vld [vmem:[%s3476 + $0x94] sm:$0xf]
    %v3515 = vld [vmem:[%s3476 + $0x98] sm:$0xf]
    %v3516 = vld [vmem:[%s3476 + $0x9c] sm:$0xf]
    %v3517 = vld [vmem:[%s3476 + $0xa0] sm:$0x3]
    %v3559 = vunpack.c.l.b16 %v3477
    %v3560 = vunpack.c.l.b16 %v3478
    %v3561 = vunpack.c.l.b16 %v3479
    %v3562 = vunpack.c.l.b16 %v3480
    %v3563 = vunpack.c.l.b16 %v3481
    %v3564 = vunpack.c.l.b16 %v3482
    %v3565 = vunpack.c.l.b16 %v3483
    %v3566 = vunpack.c.l.b16 %v3484
    %v3567 = vunpack.c.l.b16 %v3485
    %v3568 = vunpack.c.l.b16 %v3486
    %v3569 = vunpack.c.l.b16 %v3487
    %v3570 = vunpack.c.l.b16 %v3488
    %v3571 = vunpack.c.l.b16 %v3489
    %v3572 = vunpack.c.l.b16 %v3490
    %v3573 = vunpack.c.l.b16 %v3491
    %v3574 = vunpack.c.l.b16 %v3492
    %v3575 = vunpack.c.l.b16 %v3493
    %v3576 = vunpack.c.l.b16 %v3494
    %v3577 = vunpack.c.l.b16 %v3495
    %v3578 = vunpack.c.l.b16 %v3496
    %v3579 = vunpack.c.l.b16 %v3497
    %v3580 = vunpack.c.l.b16 %v3498
    %v3581 = vunpack.c.l.b16 %v3499
    %v3582 = vunpack.c.l.b16 %v3500
    %v3583 = vunpack.c.l.b16 %v3501
    %v3584 = vunpack.c.l.b16 %v3502
    %v3585 = vunpack.c.l.b16 %v3503
    %v3586 = vunpack.c.l.b16 %v3504
    %v3587 = vunpack.c.l.b16 %v3505
    %v3588 = vunpack.c.l.b16 %v3506
    %v3589 = vunpack.c.l.b16 %v3507
    %v3590 = vunpack.c.l.b16 %v3508
    %v3591 = vunpack.c.l.b16 %v3509
    %v3592 = vunpack.c.l.b16 %v3510
    %v3593 = vunpack.c.l.b16 %v3511
    %v3594 = vunpack.c.l.b16 %v3512
    %v3595 = vunpack.c.l.b16 %v3513
    %v3596 = vunpack.c.l.b16 %v3514
    %v3597 = vunpack.c.l.b16 %v3515
    %v3598 = vunpack.c.l.b16 %v3516
    %v3599 = vunpack.c.l.b16 %v3517
    %v3600 = vpack.c.b16 %v3560, %v3559
    %v3601 = vpack.c.b16 %v3562, %v3561
    %v3602 = vpack.c.b16 %v3564, %v3563
    %v3603 = vpack.c.b16 %v3566, %v3565
    %v3604 = vpack.c.b16 %v3568, %v3567
    %v3605 = vpack.c.b16 %v3570, %v3569
    %v3606 = vpack.c.b16 %v3572, %v3571
    %v3607 = vpack.c.b16 %v3574, %v3573
    %v3608 = vpack.c.b16 %v3576, %v3575
    %v3609 = vpack.c.b16 %v3578, %v3577
    %v3610 = vpack.c.b16 %v3580, %v3579
    %v3611 = vpack.c.b16 %v3582, %v3581
    %v3612 = vpack.c.b16 %v3584, %v3583
    %v3613 = vpack.c.b16 %v3586, %v3585
    %v3614 = vpack.c.b16 %v3588, %v3587
    %v3615 = vpack.c.b16 %v3590, %v3589
    %v3616 = vpack.c.b16 %v3592, %v3591
    %v3617 = vpack.c.b16 %v3594, %v3593
    %v3618 = vpack.c.b16 %v3596, %v3595
    %v3619 = vpack.c.b16 %v3598, %v3597
    %v3620 = vpack.c.b16 %v3599, %v3599
    %v3642 = vsel %vm3114, %v3620, 0
    %3644 = vmatprep.subr.bf16.mxu0 0
    %3645 = vmatpush1.bf16.msra.mxu0 %v3607
    %3646 = vmatprep.subr.bf16.mxu0 0
    %3647 = vmatpush1.bf16.msra.mxu0 %v3606
    %3648 = vmatprep.subr.bf16.mxu0 0
    %3649 = vmatpush1.bf16.msra.mxu0 %v3605
    %3650 = vmatprep.subr.bf16.mxu0 0
    %3651 = vmatpush1.bf16.msra.mxu0 %v3604
    %3652 = vmatprep.subr.bf16.mxu0 0
    %3653 = vmatpush1.bf16.msra.mxu0 %v3603
    %3654 = vmatprep.subr.bf16.mxu0 0
    %3655 = vmatpush1.bf16.msra.mxu0 %v3602
    %3656 = vmatprep.subr.bf16.mxu0 0
    %3657 = vmatpush1.bf16.msra.mxu0 %v3601
    %3658 = vmatprep.subr.bf16.mxu0 0
    %3659 = vmatpush1.bf16.msra.mxu0 %v3600
    %3660 = vmatprep.subr.bf16.mxu0 0
    %3661 = vmatpush2.bf16.msra.mxu0 %v3615
    %3662 = vmatprep.subr.bf16.mxu0 0
    %3663 = vmatpush2.bf16.msra.mxu0 %v3614
    %3664 = vmatprep.subr.bf16.mxu0 0
    %3665 = vmatpush2.bf16.msra.mxu0 %v3613
    %3666 = vmatprep.subr.bf16.mxu0 0
    %3667 = vmatpush2.bf16.msra.mxu0 %v3612
    %3668 = vmatprep.subr.bf16.mxu0 0
    %3669 = vmatpush2.bf16.msra.mxu0 %v3611
    %3670 = vmatprep.subr.bf16.mxu0 0
    %3671 = vmatpush2.bf16.msra.mxu0 %v3610
    %3672 = vmatprep.subr.bf16.mxu0 0
    %3673 = vmatpush2.bf16.msra.mxu0 %v3609
    %3674 = vmatprep.subr.bf16.mxu0 0
    %3675 = vmatpush2.bf16.msra.mxu0 %v3608
    %3676 = vmatprep.mubr.bf16.mxu0 %v3221
    %3677 = vmatmul.mubr.bf16.gmra.mxu0 %v3220
    %v3678 = vpop.f32.mrf.mxu0
    %v3679 = vadd.f32 0.0, %v3678
    %v3680 = vpop.f32.mrf.mxu0
    %v3681 = vpop.f32.mrf.mxu0
    %v3682 = vadd.f32 0.0, %v3681
    %v3683 = vpop.f32.mrf.mxu0
    %3684 = vdwg.mxu0
    %3685 = vmatprep.subr.bf16.mxu0 0
    %3686 = vmatpush1.bf16.msra.mxu0 0
    %3687 = vmatprep.subr.bf16.mxu0 0
    %3688 = vmatpush1.bf16.msra.mxu0 0
    %3689 = vmatprep.subr.bf16.mxu0 0
    %3690 = vmatpush1.bf16.msra.mxu0 0
    %3691 = vmatprep.subr.bf16.mxu0 0
    %3692 = vmatpush1.bf16.msra.mxu0 %v3642
    %3693 = vmatprep.subr.bf16.mxu0 0
    %3694 = vmatpush1.bf16.msra.mxu0 %v3619
    %3695 = vmatprep.subr.bf16.mxu0 0
    %3696 = vmatpush1.bf16.msra.mxu0 %v3618
    %3697 = vmatprep.subr.bf16.mxu0 0
    %3698 = vmatpush1.bf16.msra.mxu0 %v3617
    %3699 = vmatprep.subr.bf16.mxu0 0
    %3700 = vmatpush1.bf16.msra.mxu0 %v3616
    %3701 = vmatprep.subr.bf16.mxu0 0
    %3702 = vmatpush2.bf16.msra.mxu0 0
    %3703 = vmatprep.subr.bf16.mxu0 0
    %3704 = vmatpush2.bf16.msra.mxu0 0
    %3705 = vmatprep.subr.bf16.mxu0 0
    %3706 = vmatpush2.bf16.msra.mxu0 0
    %3707 = vmatprep.subr.bf16.mxu0 0
    %3708 = vmatpush2.bf16.msra.mxu0 0
    %3709 = vmatprep.subr.bf16.mxu0 0
    %3710 = vmatpush2.bf16.msra.mxu0 0
    %3711 = vmatprep.subr.bf16.mxu0 0
    %3712 = vmatpush2.bf16.msra.mxu0 0
    %3713 = vmatprep.subr.bf16.mxu0 0
    %3714 = vmatpush2.bf16.msra.mxu0 0
    %3715 = vmatprep.subr.bf16.mxu0 0
    %3716 = vmatpush2.bf16.msra.mxu0 0
    %3717 = vmatprep.mubr.bf16.mxu0 0
    %3718 = vmatmul.mubr.bf16.gmra.mxu0 %v3389
    %v3719 = vpop.f32.mrf.mxu0
    %v3720 = vadd.f32 %v3679, %v3719
    %v3721 = vpop.f32.mrf.mxu0
    %v3722 = vpop.f32.mrf.mxu0
    %v3723 = vadd.f32 %v3682, %v3722
    %v3724 = vpop.f32.mrf.mxu0
    %3725 = vdwg.mxu0
    %v3726 = vmax.f32 %v3470, %v3720
    %v3727 = vmax.f32 %v3473, %v3723
    %s3728 = scalar_lea.vmem %s10, 328
    %v3729 = vld [vmem:[%s3728] sm:$0xf]
    %v3730 = vld [vmem:[%s3728 + $0x4] sm:$0xf]
    %v3731 = vld [vmem:[%s3728 + $0x8] sm:$0xf]
    %v3732 = vld [vmem:[%s3728 + $0xc] sm:$0xf]
    %v3733 = vld [vmem:[%s3728 + $0x10] sm:$0xf]
    %v3734 = vld [vmem:[%s3728 + $0x14] sm:$0xf]
    %v3735 = vld [vmem:[%s3728 + $0x18] sm:$0xf]
    %v3736 = vld [vmem:[%s3728 + $0x1c] sm:$0xf]
    %v3737 = vld [vmem:[%s3728 + $0x20] sm:$0xf]
    %v3738 = vld [vmem:[%s3728 + $0x24] sm:$0xf]
    %v3739 = vld [vmem:[%s3728 + $0x28] sm:$0xf]
    %v3740 = vld [vmem:[%s3728 + $0x2c] sm:$0xf]
    %v3741 = vld [vmem:[%s3728 + $0x30] sm:$0xf]
    %v3742 = vld [vmem:[%s3728 + $0x34] sm:$0xf]
    %v3743 = vld [vmem:[%s3728 + $0x38] sm:$0xf]
    %v3744 = vld [vmem:[%s3728 + $0x3c] sm:$0xf]
    %v3745 = vld [vmem:[%s3728 + $0x40] sm:$0xf]
    %v3746 = vld [vmem:[%s3728 + $0x44] sm:$0xf]
    %v3747 = vld [vmem:[%s3728 + $0x48] sm:$0xf]
    %v3748 = vld [vmem:[%s3728 + $0x4c] sm:$0xf]
    %v3749 = vld [vmem:[%s3728 + $0x50] sm:$0xf]
    %v3750 = vld [vmem:[%s3728 + $0x54] sm:$0xf]
    %v3751 = vld [vmem:[%s3728 + $0x58] sm:$0xf]
    %v3752 = vld [vmem:[%s3728 + $0x5c] sm:$0xf]
    %v3753 = vld [vmem:[%s3728 + $0x60] sm:$0xf]
    %v3754 = vld [vmem:[%s3728 + $0x64] sm:$0xf]
    %v3755 = vld [vmem:[%s3728 + $0x68] sm:$0xf]
    %v3756 = vld [vmem:[%s3728 + $0x6c] sm:$0xf]
    %v3757 = vld [vmem:[%s3728 + $0x70] sm:$0xf]
    %v3758 = vld [vmem:[%s3728 + $0x74] sm:$0xf]
    %v3759 = vld [vmem:[%s3728 + $0x78] sm:$0xf]
    %v3760 = vld [vmem:[%s3728 + $0x7c] sm:$0xf]
    %v3761 = vld [vmem:[%s3728 + $0x80] sm:$0xf]
    %v3762 = vld [vmem:[%s3728 + $0x84] sm:$0xf]
    %v3763 = vld [vmem:[%s3728 + $0x88] sm:$0xf]
    %v3764 = vld [vmem:[%s3728 + $0x8c] sm:$0xf]
    %v3765 = vld [vmem:[%s3728 + $0x90] sm:$0xf]
    %v3766 = vld [vmem:[%s3728 + $0x94] sm:$0xf]
    %v3767 = vld [vmem:[%s3728 + $0x98] sm:$0xf]
    %v3768 = vld [vmem:[%s3728 + $0x9c] sm:$0xf]
    %v3769 = vld [vmem:[%s3728 + $0xa0] sm:$0x3]
    %v3811 = vunpack.c.l.b16 %v3729
    %v3812 = vunpack.c.l.b16 %v3730
    %v3813 = vunpack.c.l.b16 %v3731
    %v3814 = vunpack.c.l.b16 %v3732
    %v3815 = vunpack.c.l.b16 %v3733
    %v3816 = vunpack.c.l.b16 %v3734
    %v3817 = vunpack.c.l.b16 %v3735
    %v3818 = vunpack.c.l.b16 %v3736
    %v3819 = vunpack.c.l.b16 %v3737
    %v3820 = vunpack.c.l.b16 %v3738
    %v3821 = vunpack.c.l.b16 %v3739
    %v3822 = vunpack.c.l.b16 %v3740
    %v3823 = vunpack.c.l.b16 %v3741
    %v3824 = vunpack.c.l.b16 %v3742
    %v3825 = vunpack.c.l.b16 %v3743
    %v3826 = vunpack.c.l.b16 %v3744
    %v3827 = vunpack.c.l.b16 %v3745
    %v3828 = vunpack.c.l.b16 %v3746
    %v3829 = vunpack.c.l.b16 %v3747
    %v3830 = vunpack.c.l.b16 %v3748
    %v3831 = vunpack.c.l.b16 %v3749
    %v3832 = vunpack.c.l.b16 %v3750
    %v3833 = vunpack.c.l.b16 %v3751
    %v3834 = vunpack.c.l.b16 %v3752
    %v3835 = vunpack.c.l.b16 %v3753
    %v3836 = vunpack.c.l.b16 %v3754
    %v3837 = vunpack.c.l.b16 %v3755
    %v3838 = vunpack.c.l.b16 %v3756
    %v3839 = vunpack.c.l.b16 %v3757
    %v3840 = vunpack.c.l.b16 %v3758
    %v3841 = vunpack.c.l.b16 %v3759
    %v3842 = vunpack.c.l.b16 %v3760
    %v3843 = vunpack.c.l.b16 %v3761
    %v3844 = vunpack.c.l.b16 %v3762
    %v3845 = vunpack.c.l.b16 %v3763
    %v3846 = vunpack.c.l.b16 %v3764
    %v3847 = vunpack.c.l.b16 %v3765
    %v3848 = vunpack.c.l.b16 %v3766
    %v3849 = vunpack.c.l.b16 %v3767
    %v3850 = vunpack.c.l.b16 %v3768
    %v3851 = vunpack.c.l.b16 %v3769
    %v3852 = vpack.c.b16 %v3812, %v3811
    %v3853 = vpack.c.b16 %v3814, %v3813
    %v3854 = vpack.c.b16 %v3816, %v3815
    %v3855 = vpack.c.b16 %v3818, %v3817
    %v3856 = vpack.c.b16 %v3820, %v3819
    %v3857 = vpack.c.b16 %v3822, %v3821
    %v3858 = vpack.c.b16 %v3824, %v3823
    %v3859 = vpack.c.b16 %v3826, %v3825
    %v3860 = vpack.c.b16 %v3828, %v3827
    %v3861 = vpack.c.b16 %v3830, %v3829
    %v3862 = vpack.c.b16 %v3832, %v3831
    %v3863 = vpack.c.b16 %v3834, %v3833
    %v3864 = vpack.c.b16 %v3836, %v3835
    %v3865 = vpack.c.b16 %v3838, %v3837
    %v3866 = vpack.c.b16 %v3840, %v3839
    %v3867 = vpack.c.b16 %v3842, %v3841
    %v3868 = vpack.c.b16 %v3844, %v3843
    %v3869 = vpack.c.b16 %v3846, %v3845
    %v3870 = vpack.c.b16 %v3848, %v3847
    %v3871 = vpack.c.b16 %v3850, %v3849
    %v3872 = vpack.c.b16 %v3851, %v3851
    %v3894 = vsel %vm3114, %v3872, 0
    %3896 = vmatprep.subr.bf16.mxu0 0
    %3897 = vmatpush1.bf16.msra.mxu0 %v3859
    %3898 = vmatprep.subr.bf16.mxu0 0
    %3899 = vmatpush1.bf16.msra.mxu0 %v3858
    %3900 = vmatprep.subr.bf16.mxu0 0
    %3901 = vmatpush1.bf16.msra.mxu0 %v3857
    %3902 = vmatprep.subr.bf16.mxu0 0
    %3903 = vmatpush1.bf16.msra.mxu0 %v3856
    %3904 = vmatprep.subr.bf16.mxu0 0
    %3905 = vmatpush1.bf16.msra.mxu0 %v3855
    %3906 = vmatprep.subr.bf16.mxu0 0
    %3907 = vmatpush1.bf16.msra.mxu0 %v3854
    %3908 = vmatprep.subr.bf16.mxu0 0
    %3909 = vmatpush1.bf16.msra.mxu0 %v3853
    %3910 = vmatprep.subr.bf16.mxu0 0
    %3911 = vmatpush1.bf16.msra.mxu0 %v3852
    %3912 = vmatprep.subr.bf16.mxu0 0
    %3913 = vmatpush2.bf16.msra.mxu0 %v3867
    %3914 = vmatprep.subr.bf16.mxu0 0
    %3915 = vmatpush2.bf16.msra.mxu0 %v3866
    %3916 = vmatprep.subr.bf16.mxu0 0
    %3917 = vmatpush2.bf16.msra.mxu0 %v3865
    %3918 = vmatprep.subr.bf16.mxu0 0
    %3919 = vmatpush2.bf16.msra.mxu0 %v3864
    %3920 = vmatprep.subr.bf16.mxu0 0
    %3921 = vmatpush2.bf16.msra.mxu0 %v3863
    %3922 = vmatprep.subr.bf16.mxu0 0
    %3923 = vmatpush2.bf16.msra.mxu0 %v3862
    %3924 = vmatprep.subr.bf16.mxu0 0
    %3925 = vmatpush2.bf16.msra.mxu0 %v3861
    %3926 = vmatprep.subr.bf16.mxu0 0
    %3927 = vmatpush2.bf16.msra.mxu0 %v3860
    %3928 = vmatprep.mubr.bf16.mxu0 %v3221
    %3929 = vmatmul.mubr.bf16.gmra.mxu0 %v3220
    %v3930 = vpop.f32.mrf.mxu0
    %v3931 = vadd.f32 0.0, %v3930
    %v3932 = vpop.f32.mrf.mxu0
    %v3933 = vpop.f32.mrf.mxu0
    %v3934 = vadd.f32 0.0, %v3933
    %v3935 = vpop.f32.mrf.mxu0
    %3936 = vdwg.mxu0
    %3937 = vmatprep.subr.bf16.mxu0 0
    %3938 = vmatpush1.bf16.msra.mxu0 0
    %3939 = vmatprep.subr.bf16.mxu0 0
    %3940 = vmatpush1.bf16.msra.mxu0 0
    %3941 = vmatprep.subr.bf16.mxu0 0
    %3942 = vmatpush1.bf16.msra.mxu0 0
    %3943 = vmatprep.subr.bf16.mxu0 0
    %3944 = vmatpush1.bf16.msra.mxu0 %v3894
    %3945 = vmatprep.subr.bf16.mxu0 0
    %3946 = vmatpush1.bf16.msra.mxu0 %v3871
    %3947 = vmatprep.subr.bf16.mxu0 0
    %3948 = vmatpush1.bf16.msra.mxu0 %v3870
    %3949 = vmatprep.subr.bf16.mxu0 0
    %3950 = vmatpush1.bf16.msra.mxu0 %v3869
    %3951 = vmatprep.subr.bf16.mxu0 0
    %3952 = vmatpush1.bf16.msra.mxu0 %v3868
    %3953 = vmatprep.subr.bf16.mxu0 0
    %3954 = vmatpush2.bf16.msra.mxu0 0
    %3955 = vmatprep.subr.bf16.mxu0 0
    %3956 = vmatpush2.bf16.msra.mxu0 0
    %3957 = vmatprep.subr.bf16.mxu0 0
    %3958 = vmatpush2.bf16.msra.mxu0 0
    %3959 = vmatprep.subr.bf16.mxu0 0
    %3960 = vmatpush2.bf16.msra.mxu0 0
    %3961 = vmatprep.subr.bf16.mxu0 0
    %3962 = vmatpush2.bf16.msra.mxu0 0
    %3963 = vmatprep.subr.bf16.mxu0 0
    %3964 = vmatpush2.bf16.msra.mxu0 0
    %3965 = vmatprep.subr.bf16.mxu0 0
    %3966 = vmatpush2.bf16.msra.mxu0 0
    %3967 = vmatprep.subr.bf16.mxu0 0
    %3968 = vmatpush2.bf16.msra.mxu0 0
    %3969 = vmatprep.mubr.bf16.mxu0 0
    %3970 = vmatmul.mubr.bf16.gmra.mxu0 %v3389
    %v3971 = vpop.f32.mrf.mxu0
    %v3972 = vadd.f32 %v3931, %v3971
    %v3973 = vpop.f32.mrf.mxu0
    %v3974 = vpop.f32.mrf.mxu0
    %v3975 = vadd.f32 %v3934, %v3974
    %v3976 = vpop.f32.mrf.mxu0
    %3977 = vdwg.mxu0
    %v3978 = vmax.f32 %v3726, %v3972
    %v3979 = vmax.f32 %v3727, %v3975
    %s3980 = scalar_lea.vmem %s10, 492
    %v3981 = vld [vmem:[%s3980] sm:$0xf]
    %v3982 = vld [vmem:[%s3980 + $0x4] sm:$0xf]
    %v3983 = vld [vmem:[%s3980 + $0x8] sm:$0xf]
    %v3984 = vld [vmem:[%s3980 + $0xc] sm:$0xf]
    %v3985 = vld [vmem:[%s3980 + $0x10] sm:$0xf]
    %v3986 = vld [vmem:[%s3980 + $0x14] sm:$0xf]
    %v3987 = vld [vmem:[%s3980 + $0x18] sm:$0xf]
    %v3988 = vld [vmem:[%s3980 + $0x1c] sm:$0xf]
    %v3989 = vld [vmem:[%s3980 + $0x20] sm:$0xf]
    %v3990 = vld [vmem:[%s3980 + $0x24] sm:$0xf]
    %v3991 = vld [vmem:[%s3980 + $0x28] sm:$0xf]
    %v3992 = vld [vmem:[%s3980 + $0x2c] sm:$0xf]
    %v3993 = vld [vmem:[%s3980 + $0x30] sm:$0xf]
    %v3994 = vld [vmem:[%s3980 + $0x34] sm:$0xf]
    %v3995 = vld [vmem:[%s3980 + $0x38] sm:$0xf]
    %v3996 = vld [vmem:[%s3980 + $0x3c] sm:$0xf]
    %v3997 = vld [vmem:[%s3980 + $0x40] sm:$0xf]
    %v3998 = vld [vmem:[%s3980 + $0x44] sm:$0xf]
    %v3999 = vld [vmem:[%s3980 + $0x48] sm:$0xf]
    %v4000 = vld [vmem:[%s3980 + $0x4c] sm:$0xf]
    %v4001 = vld [vmem:[%s3980 + $0x50] sm:$0xf]
    %v4002 = vld [vmem:[%s3980 + $0x54] sm:$0xf]
    %v4003 = vld [vmem:[%s3980 + $0x58] sm:$0xf]
    %v4004 = vld [vmem:[%s3980 + $0x5c] sm:$0xf]
    %v4005 = vld [vmem:[%s3980 + $0x60] sm:$0xf]
    %v4006 = vld [vmem:[%s3980 + $0x64] sm:$0xf]
    %v4007 = vld [vmem:[%s3980 + $0x68] sm:$0xf]
    %v4008 = vld [vmem:[%s3980 + $0x6c] sm:$0xf]
    %v4009 = vld [vmem:[%s3980 + $0x70] sm:$0xf]
    %v4010 = vld [vmem:[%s3980 + $0x74] sm:$0xf]
    %v4011 = vld [vmem:[%s3980 + $0x78] sm:$0xf]
    %v4012 = vld [vmem:[%s3980 + $0x7c] sm:$0xf]
    %v4013 = vld [vmem:[%s3980 + $0x80] sm:$0xf]
    %v4014 = vld [vmem:[%s3980 + $0x84] sm:$0xf]
    %v4015 = vld [vmem:[%s3980 + $0x88] sm:$0xf]
    %v4016 = vld [vmem:[%s3980 + $0x8c] sm:$0xf]
    %v4017 = vld [vmem:[%s3980 + $0x90] sm:$0xf]
    %v4018 = vld [vmem:[%s3980 + $0x94] sm:$0xf]
    %v4019 = vld [vmem:[%s3980 + $0x98] sm:$0xf]
    %v4020 = vld [vmem:[%s3980 + $0x9c] sm:$0xf]
    %v4021 = vld [vmem:[%s3980 + $0xa0] sm:$0x3]
    %v4063 = vunpack.c.l.b16 %v3981
    %v4064 = vunpack.c.l.b16 %v3982
    %v4065 = vunpack.c.l.b16 %v3983
    %v4066 = vunpack.c.l.b16 %v3984
    %v4067 = vunpack.c.l.b16 %v3985
    %v4068 = vunpack.c.l.b16 %v3986
    %v4069 = vunpack.c.l.b16 %v3987
    %v4070 = vunpack.c.l.b16 %v3988
    %v4071 = vunpack.c.l.b16 %v3989
    %v4072 = vunpack.c.l.b16 %v3990
    %v4073 = vunpack.c.l.b16 %v3991
    %v4074 = vunpack.c.l.b16 %v3992
    %v4075 = vunpack.c.l.b16 %v3993
    %v4076 = vunpack.c.l.b16 %v3994
    %v4077 = vunpack.c.l.b16 %v3995
    %v4078 = vunpack.c.l.b16 %v3996
    %v4079 = vunpack.c.l.b16 %v3997
    %v4080 = vunpack.c.l.b16 %v3998
    %v4081 = vunpack.c.l.b16 %v3999
    %v4082 = vunpack.c.l.b16 %v4000
    %v4083 = vunpack.c.l.b16 %v4001
    %v4084 = vunpack.c.l.b16 %v4002
    %v4085 = vunpack.c.l.b16 %v4003
    %v4086 = vunpack.c.l.b16 %v4004
    %v4087 = vunpack.c.l.b16 %v4005
    %v4088 = vunpack.c.l.b16 %v4006
    %v4089 = vunpack.c.l.b16 %v4007
    %v4090 = vunpack.c.l.b16 %v4008
    %v4091 = vunpack.c.l.b16 %v4009
    %v4092 = vunpack.c.l.b16 %v4010
    %v4093 = vunpack.c.l.b16 %v4011
    %v4094 = vunpack.c.l.b16 %v4012
    %v4095 = vunpack.c.l.b16 %v4013
    %v4096 = vunpack.c.l.b16 %v4014
    %v4097 = vunpack.c.l.b16 %v4015
    %v4098 = vunpack.c.l.b16 %v4016
    %v4099 = vunpack.c.l.b16 %v4017
    %v4100 = vunpack.c.l.b16 %v4018
    %v4101 = vunpack.c.l.b16 %v4019
    %v4102 = vunpack.c.l.b16 %v4020
    %v4103 = vunpack.c.l.b16 %v4021
    %v4104 = vpack.c.b16 %v4064, %v4063
    %v4105 = vpack.c.b16 %v4066, %v4065
    %v4106 = vpack.c.b16 %v4068, %v4067
    %v4107 = vpack.c.b16 %v4070, %v4069
    %v4108 = vpack.c.b16 %v4072, %v4071
    %v4109 = vpack.c.b16 %v4074, %v4073
    %v4110 = vpack.c.b16 %v4076, %v4075
    %v4111 = vpack.c.b16 %v4078, %v4077
    %v4112 = vpack.c.b16 %v4080, %v4079
    %v4113 = vpack.c.b16 %v4082, %v4081
    %v4114 = vpack.c.b16 %v4084, %v4083
    %v4115 = vpack.c.b16 %v4086, %v4085
    %v4116 = vpack.c.b16 %v4088, %v4087
    %v4117 = vpack.c.b16 %v4090, %v4089
    %v4118 = vpack.c.b16 %v4092, %v4091
    %v4119 = vpack.c.b16 %v4094, %v4093
    %v4120 = vpack.c.b16 %v4096, %v4095
    %v4121 = vpack.c.b16 %v4098, %v4097
    %v4122 = vpack.c.b16 %v4100, %v4099
    %v4123 = vpack.c.b16 %v4102, %v4101
    %v4124 = vpack.c.b16 %v4103, %v4103
    %v4146 = vsel %vm3114, %v4124, 0
    %4148 = vmatprep.subr.bf16.mxu0 0
    %4149 = vmatpush1.bf16.msra.mxu0 %v4111
    %4150 = vmatprep.subr.bf16.mxu0 0
    %4151 = vmatpush1.bf16.msra.mxu0 %v4110
    %4152 = vmatprep.subr.bf16.mxu0 0
    %4153 = vmatpush1.bf16.msra.mxu0 %v4109
    %4154 = vmatprep.subr.bf16.mxu0 0
    %4155 = vmatpush1.bf16.msra.mxu0 %v4108
    %4156 = vmatprep.subr.bf16.mxu0 0
    %4157 = vmatpush1.bf16.msra.mxu0 %v4107
    %4158 = vmatprep.subr.bf16.mxu0 0
    %4159 = vmatpush1.bf16.msra.mxu0 %v4106
    %4160 = vmatprep.subr.bf16.mxu0 0
    %4161 = vmatpush1.bf16.msra.mxu0 %v4105
    %4162 = vmatprep.subr.bf16.mxu0 0
    %4163 = vmatpush1.bf16.msra.mxu0 %v4104
    %4164 = vmatprep.subr.bf16.mxu0 0
    %4165 = vmatpush2.bf16.msra.mxu0 %v4119
    %4166 = vmatprep.subr.bf16.mxu0 0
    %4167 = vmatpush2.bf16.msra.mxu0 %v4118
    %4168 = vmatprep.subr.bf16.mxu0 0
    %4169 = vmatpush2.bf16.msra.mxu0 %v4117
    %4170 = vmatprep.subr.bf16.mxu0 0
    %4171 = vmatpush2.bf16.msra.mxu0 %v4116
    %4172 = vmatprep.subr.bf16.mxu0 0
    %4173 = vmatpush2.bf16.msra.mxu0 %v4115
    %4174 = vmatprep.subr.bf16.mxu0 0
    %4175 = vmatpush2.bf16.msra.mxu0 %v4114
    %4176 = vmatprep.subr.bf16.mxu0 0
    %4177 = vmatpush2.bf16.msra.mxu0 %v4113
    %4178 = vmatprep.subr.bf16.mxu0 0
    %4179 = vmatpush2.bf16.msra.mxu0 %v4112
    %4180 = vmatprep.mubr.bf16.mxu0 %v3221
    %4181 = vmatmul.mubr.bf16.gmra.mxu0 %v3220
    %v4182 = vpop.f32.mrf.mxu0
    %v4183 = vadd.f32 0.0, %v4182
    %v4184 = vpop.f32.mrf.mxu0
    %v4185 = vpop.f32.mrf.mxu0
    %v4186 = vadd.f32 0.0, %v4185
    %v4187 = vpop.f32.mrf.mxu0
    %4188 = vdwg.mxu0
    %4189 = vmatprep.subr.bf16.mxu0 0
    %4190 = vmatpush1.bf16.msra.mxu0 0
    %4191 = vmatprep.subr.bf16.mxu0 0
    %4192 = vmatpush1.bf16.msra.mxu0 0
    %4193 = vmatprep.subr.bf16.mxu0 0
    %4194 = vmatpush1.bf16.msra.mxu0 0
    %4195 = vmatprep.subr.bf16.mxu0 0
    %4196 = vmatpush1.bf16.msra.mxu0 %v4146
    %4197 = vmatprep.subr.bf16.mxu0 0
    %4198 = vmatpush1.bf16.msra.mxu0 %v4123
    %4199 = vmatprep.subr.bf16.mxu0 0
    %4200 = vmatpush1.bf16.msra.mxu0 %v4122
    %4201 = vmatprep.subr.bf16.mxu0 0
    %4202 = vmatpush1.bf16.msra.mxu0 %v4121
    %4203 = vmatprep.subr.bf16.mxu0 0
    %4204 = vmatpush1.bf16.msra.mxu0 %v4120
    %4205 = vmatprep.subr.bf16.mxu0 0
    %4206 = vmatpush2.bf16.msra.mxu0 0
    %4207 = vmatprep.subr.bf16.mxu0 0
    %4208 = vmatpush2.bf16.msra.mxu0 0
    %4209 = vmatprep.subr.bf16.mxu0 0
    %4210 = vmatpush2.bf16.msra.mxu0 0
    %4211 = vmatprep.subr.bf16.mxu0 0
    %4212 = vmatpush2.bf16.msra.mxu0 0
    %4213 = vmatprep.subr.bf16.mxu0 0
    %4214 = vmatpush2.bf16.msra.mxu0 0
    %4215 = vmatprep.subr.bf16.mxu0 0
    %4216 = vmatpush2.bf16.msra.mxu0 0
    %4217 = vmatprep.subr.bf16.mxu0 0
    %4218 = vmatpush2.bf16.msra.mxu0 0
    %4219 = vmatprep.subr.bf16.mxu0 0
    %4220 = vmatpush2.bf16.msra.mxu0 0
    %4221 = vmatprep.mubr.bf16.mxu0 0
    %4222 = vmatmul.mubr.bf16.gmra.mxu0 %v3389
    %v4223 = vpop.f32.mrf.mxu0
    %v4224 = vadd.f32 %v4183, %v4223
    %v4225 = vpop.f32.mrf.mxu0
    %v4226 = vpop.f32.mrf.mxu0
    %v4227 = vadd.f32 %v4186, %v4226
    %v4228 = vpop.f32.mrf.mxu0
    %4229 = vdwg.mxu0
    %v4230 = vmax.f32 %v3978, %v4224
    %v4231 = vmax.f32 %v3979, %v4227
    %v4232 = vpack.c.bf16 %v4231, %v4230
    %v4246 = vunpack.c.l.b16 %v86
    %v4247 = vunpack.c.l.b16 %v87
    %v4248 = vunpack.c.l.b16 %v88
    %v4249 = vunpack.c.l.b16 %v89
    %v4250 = vunpack.c.l.b16 %v90
    %v4251 = vunpack.c.l.b16 %v91
    %v4252 = vunpack.c.l.b16 %v92
    %v4253 = vunpack.c.l.b16 %v93
    %v4254 = vunpack.c.l.b16 %v94
    %v4255 = vunpack.c.l.b16 %v95
    %v4256 = vunpack.c.l.b16 %v96
    %v4257 = vunpack.c.l.b16 %v97
    %v4258 = vunpack.c.l.b16 %v98
    %v4259 = vpack.c.b16 %v4247, %v4246
    %v4260 = vpack.c.b16 %v4249, %v4248
    %v4261 = vpack.c.b16 %v4251, %v4250
    %v4262 = vpack.c.b16 %v4253, %v4252
    %v4263 = vpack.c.b16 %v4255, %v4254
    %v4264 = vpack.c.b16 %v4257, %v4256
    %v4265 = vpack.c.b16 %v4258, %v4258
    %v4273 = vsel %vm3110, %v4232, 0
    %v4276 = vsel %vm3114, %v4265, 0
    %4278 = vmatprep.subr.bf16.mxu0 0
    %4279 = vmatpush1.bf16.msra.mxu0 0
    %4280 = vmatprep.subr.bf16.mxu0 0
    %4281 = vmatpush1.bf16.msra.mxu0 %v4276
    %4282 = vmatprep.subr.bf16.mxu0 0
    %4283 = vmatpush1.bf16.msra.mxu0 %v4264
    %4284 = vmatprep.subr.bf16.mxu0 0
    %4285 = vmatpush1.bf16.msra.mxu0 %v4263
    %4286 = vmatprep.subr.bf16.mxu0 0
    %4287 = vmatpush1.bf16.msra.mxu0 %v4262
    %4288 = vmatprep.subr.bf16.mxu0 0
    %4289 = vmatpush1.bf16.msra.mxu0 %v4261
    %4290 = vmatprep.subr.bf16.mxu0 0
    %4291 = vmatpush1.bf16.msra.mxu0 %v4260
    %4292 = vmatprep.subr.bf16.mxu0 0
    %4293 = vmatpush1.bf16.msra.mxu0 %v4259
    %4294 = vmatprep.subr.bf16.mxu0 0
    %4295 = vmatpush2.bf16.msra.mxu0 0
    %4296 = vmatprep.subr.bf16.mxu0 0
    %4297 = vmatpush2.bf16.msra.mxu0 0
    %4298 = vmatprep.subr.bf16.mxu0 0
    %4299 = vmatpush2.bf16.msra.mxu0 0
    %4300 = vmatprep.subr.bf16.mxu0 0
    %4301 = vmatpush2.bf16.msra.mxu0 0
    %4302 = vmatprep.subr.bf16.mxu0 0
    %4303 = vmatpush2.bf16.msra.mxu0 0
    %4304 = vmatprep.subr.bf16.mxu0 0
    %4305 = vmatpush2.bf16.msra.mxu0 0
    %4306 = vmatprep.subr.bf16.mxu0 0
    %4307 = vmatpush2.bf16.msra.mxu0 0
    %4308 = vmatprep.subr.bf16.mxu0 0
    %4309 = vmatpush2.bf16.msra.mxu0 0
    %4310 = vmatprep.mubr.bf16.mxu0 0
    %4311 = vmatmul.mubr.bf16.gmra.mxu0 %v4273
    %v4312 = vpop.f32.mrf.mxu0
    %v4313 = vadd.f32 0.0, %v4312
    %v4314 = vpop.f32.mrf.mxu0
    %v4315 = vpop.f32.mrf.mxu0
    %v4316 = vadd.f32 0.0, %v4315
    %v4317 = vpop.f32.mrf.mxu0
    %4318 = vdwg.mxu0
    %v4319 = vmul.f32 %v4313, %v99
    %v4320 = vmul.f32 %v4316, %v100
    %vm4321 = vcmask 392192
    %v4322 = vsel %vm4321, %v4319, 0.0
    %v4323 = vsel %vm4321, %v4320, 0.0
    %v4324 = vadd.f32 %v4322, %v4323
    %v4325 = vrot.slane %v4324, 4
    %v4326 = vadd.f32 %v4324, %v4325
    %v4327 = vrot.slane %v4326, 2
    %v4328 = vadd.f32 %v4326, %v4327
    %v4329 = vrot.slane %v4328, 1
    %v4330 = vadd.f32 %v4328, %v4329
    %s4331 = scalar_lea.vmem %s0, 24
    %v4332 = vld [vmem:[%s4331] sm:$0xff]
    %v4333 = vld [vmem:[%s4331 + $0x8] sm:$0xf]
    %v4334 = vld [vmem:[%s4331 + $0xc] sm:$0x33]
    %v4335 = vld [vmem:[%s4331 + $0x14] sm:$0x3]
    %v4340 = vunpack.c.l.b16 %v4332
    %v4341 = vunpack.c.h.b16 %v4332
    %v4342 = vunpack.c.l.b16 %v4333
    %v4343 = vunpack.c.l.b16 %v4334
    %v4344 = vunpack.c.h.b16 %v4334
    %v4345 = vunpack.c.l.b16 %v4335
    %v4346 = vpack.c.b16 %v4343, %v4340
    %v4347 = vpack.c.b16 %v4344, %v4341
    %v4348 = vpack.c.b16 %v4345, %v4342
    %v4350 = vsel %vm144, %v4346, 0
    %v4353 = vsel %vm144, %v4347, 0
    %v4356 = vsel %vm144, %v4348, 0
    %4358 = vmatprep.subr.bf16.mxu0 0
    %4359 = vmatpush1.bf16.msra.mxu0 0
    %4360 = vmatprep.subr.bf16.mxu0 0
    %4361 = vmatpush1.bf16.msra.mxu0 0
    %4362 = vmatprep.subr.bf16.mxu0 0
    %4363 = vmatpush1.bf16.msra.mxu0 0
    %4364 = vmatprep.subr.bf16.mxu0 0
    %4365 = vmatpush1.bf16.msra.mxu0 0
    %4366 = vmatprep.subr.bf16.mxu0 0
    %4367 = vmatpush1.bf16.msra.mxu0 0
    %4368 = vmatprep.subr.bf16.mxu0 0
    %4369 = vmatpush1.bf16.msra.mxu0 0
    %4370 = vmatprep.subr.bf16.mxu0 0
    %4371 = vmatpush1.bf16.msra.mxu0 0
    %4372 = vmatprep.subr.bf16.mxu0 %v4353
    %4373 = vmatpush1.bf16.msra.mxu0 %v4350
    %4374 = vmatprep.subr.bf16.mxu0 0
    %4375 = vmatpush2.bf16.msra.mxu0 0
    %4376 = vmatprep.subr.bf16.mxu0 0
    %4377 = vmatpush2.bf16.msra.mxu0 0
    %4378 = vmatprep.subr.bf16.mxu0 0
    %4379 = vmatpush2.bf16.msra.mxu0 0
    %4380 = vmatprep.subr.bf16.mxu0 0
    %4381 = vmatpush2.bf16.msra.mxu0 0
    %4382 = vmatprep.subr.bf16.mxu0 0
    %4383 = vmatpush2.bf16.msra.mxu0 0
    %4384 = vmatprep.subr.bf16.mxu0 0
    %4385 = vmatpush2.bf16.msra.mxu0 0
    %4386 = vmatprep.subr.bf16.mxu0 0
    %4387 = vmatpush2.bf16.msra.mxu0 0
    %4388 = vmatprep.subr.bf16.mxu0 0
    %4389 = vmatpush2.bf16.msra.mxu0 0
    %4390 = vmatprep.mubr.bf16.mxu0 0
    %4391 = vmatmul.mubr.bf16.gmra.mxu0 %v142
    %v4392 = vpop.f32.mrf.mxu0
    %v4393 = vadd.f32 %v115, %v4392
    %v4394 = vpop.f32.mrf.mxu0
    %v4395 = vadd.f32 %v115, %v4394
    %v4396 = vpop.f32.mrf.mxu0
    %v4397 = vadd.f32 %v120, %v4396
    %v4398 = vpop.f32.mrf.mxu0
    %v4399 = vadd.f32 %v120, %v4398
    %4400 = vdwg.mxu0
    %4401 = vmatprep.subr.bf16.mxu0 0
    %4402 = vmatpush1.bf16.msra.mxu0 0
    %4403 = vmatprep.subr.bf16.mxu0 0
    %4404 = vmatpush1.bf16.msra.mxu0 0
    %4405 = vmatprep.subr.bf16.mxu0 0
    %4406 = vmatpush1.bf16.msra.mxu0 0
    %4407 = vmatprep.subr.bf16.mxu0 0
    %4408 = vmatpush1.bf16.msra.mxu0 0
    %4409 = vmatprep.subr.bf16.mxu0 0
    %4410 = vmatpush1.bf16.msra.mxu0 0
    %4411 = vmatprep.subr.bf16.mxu0 0
    %4412 = vmatpush1.bf16.msra.mxu0 0
    %4413 = vmatprep.subr.bf16.mxu0 0
    %4414 = vmatpush1.bf16.msra.mxu0 0
    %4415 = vmatprep.subr.bf16.mxu0 0
    %4416 = vmatpush1.bf16.msra.mxu0 %v4356
    %4417 = vmatprep.subr.bf16.mxu0 0
    %4418 = vmatpush2.bf16.msra.mxu0 0
    %4419 = vmatprep.subr.bf16.mxu0 0
    %4420 = vmatpush2.bf16.msra.mxu0 0
    %4421 = vmatprep.subr.bf16.mxu0 0
    %4422 = vmatpush2.bf16.msra.mxu0 0
    %4423 = vmatprep.subr.bf16.mxu0 0
    %4424 = vmatpush2.bf16.msra.mxu0 0
    %4425 = vmatprep.subr.bf16.mxu0 0
    %4426 = vmatpush2.bf16.msra.mxu0 0
    %4427 = vmatprep.subr.bf16.mxu0 0
    %4428 = vmatpush2.bf16.msra.mxu0 0
    %4429 = vmatprep.subr.bf16.mxu0 0
    %4430 = vmatpush2.bf16.msra.mxu0 0
    %4431 = vmatprep.subr.bf16.mxu0 0
    %4432 = vmatpush2.bf16.msra.mxu0 0
    %4433 = vmatprep.mubr.bf16.mxu0 0
    %4434 = vmatmul.mubr.bf16.gmra.mxu0 %v142
    %v4435 = vpop.f32.mrf.mxu0
    %v4436 = vadd.f32 %v115, %v4435
    %v4437 = vpop.f32.mrf.mxu0
    %v4438 = vpop.f32.mrf.mxu0
    %v4439 = vadd.f32 %v120, %v4438
    %v4440 = vpop.f32.mrf.mxu0
    %4441 = vdwg.mxu0
    %s4442 = scalar_lea.vmem %s1, 48
    %v4443 = vld [vmem:[%s4442] sm:$0xff]
    %v4444 = vld [vmem:[%s4442 + $0x8] sm:$0xf]
    %v4445 = vld [vmem:[%s4442 + $0xc] sm:$0xff]
    %v4446 = vld [vmem:[%s4442 + $0x14] sm:$0xf]
    %v4447 = vld [vmem:[%s4442 + $0x18] sm:$0xff]
    %v4448 = vld [vmem:[%s4442 + $0x20] sm:$0xf]
    %v4449 = vld [vmem:[%s4442 + $0x24] sm:$0x33]
    %v4450 = vld [vmem:[%s4442 + $0x2c] sm:$0x3]
    %v4459 = vunpack.c.l.b16 %v4443
    %v4460 = vunpack.c.h.b16 %v4443
    %v4461 = vunpack.c.l.b16 %v4444
    %v4462 = vunpack.c.l.b16 %v4445
    %v4463 = vunpack.c.h.b16 %v4445
    %v4464 = vunpack.c.l.b16 %v4446
    %v4465 = vunpack.c.l.b16 %v4447
    %v4466 = vunpack.c.h.b16 %v4447
    %v4467 = vunpack.c.l.b16 %v4448
    %v4468 = vunpack.c.l.b16 %v4449
    %v4469 = vunpack.c.h.b16 %v4449
    %v4470 = vunpack.c.l.b16 %v4450
    %v4471 = vpack.c.b16 %v4462, %v4459
    %v4472 = vpack.c.b16 %v4463, %v4460
    %v4473 = vpack.c.b16 %v4464, %v4461
    %v4474 = vpack.c.b16 %v4468, %v4465
    %v4475 = vpack.c.b16 %v4469, %v4466
    %v4476 = vpack.c.b16 %v4470, %v4467
    %v4481 = vand.u32 %v4474, %v286
    %v4484 = vand.u32 %v4475, %v286
    %v4487 = vand.u32 %v4476, %v286
    %4489 = vmatprep.subr.bf16.mxu0 0
    %4490 = vmatpush1.bf16.msra.mxu0 0
    %4491 = vmatprep.subr.bf16.mxu0 0
    %4492 = vmatpush1.bf16.msra.mxu0 0
    %4493 = vmatprep.subr.bf16.mxu0 0
    %4494 = vmatpush1.bf16.msra.mxu0 0
    %4495 = vmatprep.subr.bf16.mxu0 0
    %4496 = vmatpush1.bf16.msra.mxu0 0
    %4497 = vmatprep.subr.bf16.mxu0 0
    %4498 = vmatpush1.bf16.msra.mxu0 0
    %4499 = vmatprep.subr.bf16.mxu0 0
    %4500 = vmatpush1.bf16.msra.mxu0 0
    %4501 = vmatprep.subr.bf16.mxu0 %v4484
    %4502 = vmatpush1.bf16.msra.mxu0 %v4481
    %4503 = vmatprep.subr.bf16.mxu0 %v4472
    %4504 = vmatpush1.bf16.msra.mxu0 %v4471
    %4505 = vmatprep.subr.bf16.mxu0 0
    %4506 = vmatpush2.bf16.msra.mxu0 0
    %4507 = vmatprep.subr.bf16.mxu0 0
    %4508 = vmatpush2.bf16.msra.mxu0 0
    %4509 = vmatprep.subr.bf16.mxu0 0
    %4510 = vmatpush2.bf16.msra.mxu0 0
    %4511 = vmatprep.subr.bf16.mxu0 0
    %4512 = vmatpush2.bf16.msra.mxu0 0
    %4513 = vmatprep.subr.bf16.mxu0 0
    %4514 = vmatpush2.bf16.msra.mxu0 0
    %4515 = vmatprep.subr.bf16.mxu0 0
    %4516 = vmatpush2.bf16.msra.mxu0 0
    %4517 = vmatprep.subr.bf16.mxu0 0
    %4518 = vmatpush2.bf16.msra.mxu0 0
    %4519 = vmatprep.subr.bf16.mxu0 0
    %4520 = vmatpush2.bf16.msra.mxu0 0
    %4521 = vmatprep.mubr.bf16.mxu0 0
    %4522 = vmatmul.mubr.bf16.gmra.mxu0 %v282
    %v4523 = vpop.f32.mrf.mxu0
    %v4524 = vadd.f32 %v249, %v4523
    %v4525 = vpop.f32.mrf.mxu0
    %v4526 = vadd.f32 %v249, %v4525
    %v4527 = vpop.f32.mrf.mxu0
    %v4528 = vpop.f32.mrf.mxu0
    %4529 = vdwg.mxu0
    %4530 = vmatprep.subr.bf16.mxu0 0
    %4531 = vmatpush1.bf16.msra.mxu0 0
    %4532 = vmatprep.subr.bf16.mxu0 0
    %4533 = vmatpush1.bf16.msra.mxu0 0
    %4534 = vmatprep.subr.bf16.mxu0 0
    %4535 = vmatpush1.bf16.msra.mxu0 0
    %4536 = vmatprep.subr.bf16.mxu0 0
    %4537 = vmatpush1.bf16.msra.mxu0 0
    %4538 = vmatprep.subr.bf16.mxu0 0
    %4539 = vmatpush1.bf16.msra.mxu0 0
    %4540 = vmatprep.subr.bf16.mxu0 0
    %4541 = vmatpush1.bf16.msra.mxu0 0
    %4542 = vmatprep.subr.bf16.mxu0 0
    %4543 = vmatpush1.bf16.msra.mxu0 %v4487
    %4544 = vmatprep.subr.bf16.mxu0 0
    %4545 = vmatpush1.bf16.msra.mxu0 %v4473
    %4546 = vmatprep.subr.bf16.mxu0 0
    %4547 = vmatpush2.bf16.msra.mxu0 0
    %4548 = vmatprep.subr.bf16.mxu0 0
    %4549 = vmatpush2.bf16.msra.mxu0 0
    %4550 = vmatprep.subr.bf16.mxu0 0
    %4551 = vmatpush2.bf16.msra.mxu0 0
    %4552 = vmatprep.subr.bf16.mxu0 0
    %4553 = vmatpush2.bf16.msra.mxu0 0
    %4554 = vmatprep.subr.bf16.mxu0 0
    %4555 = vmatpush2.bf16.msra.mxu0 0
    %4556 = vmatprep.subr.bf16.mxu0 0
    %4557 = vmatpush2.bf16.msra.mxu0 0
    %4558 = vmatprep.subr.bf16.mxu0 0
    %4559 = vmatpush2.bf16.msra.mxu0 0
    %4560 = vmatprep.subr.bf16.mxu0 0
    %4561 = vmatpush2.bf16.msra.mxu0 0
    %4562 = vmatprep.mubr.bf16.mxu0 0
    %4563 = vmatmul.mubr.bf16.gmra.mxu0 %v282
    %v4564 = vpop.f32.mrf.mxu0
    %v4565 = vadd.f32 %v249, %v4564
    %v4566 = vpop.f32.mrf.mxu0
    %v4567 = vpop.f32.mrf.mxu0
    %v4568 = vpop.f32.mrf.mxu0
    %4569 = vdwg.mxu0
    %v4570 = vpack.c.bf16 %v4524, %v4524
    %v4571 = vpack.c.bf16 %v4526, %v4526
    %v4572 = vpack.c.bf16 %v4565, %v4565
    %v4574 = vsel %vm528, %v4572, 0
    %4576 = vmatprep.subr.bf16.mxu0 0
    %4577 = vmatpush1.bf16.msra.mxu0 %v498
    %4578 = vmatprep.subr.bf16.mxu0 0
    %4579 = vmatpush1.bf16.msra.mxu0 %v497
    %4580 = vmatprep.subr.bf16.mxu0 0
    %4581 = vmatpush1.bf16.msra.mxu0 %v496
    %4582 = vmatprep.subr.bf16.mxu0 0
    %4583 = vmatpush1.bf16.msra.mxu0 %v495
    %4584 = vmatprep.subr.bf16.mxu0 0
    %4585 = vmatpush1.bf16.msra.mxu0 %v494
    %4586 = vmatprep.subr.bf16.mxu0 0
    %4587 = vmatpush1.bf16.msra.mxu0 %v493
    %4588 = vmatprep.subr.bf16.mxu0 0
    %4589 = vmatpush1.bf16.msra.mxu0 %v492
    %4590 = vmatprep.subr.bf16.mxu0 0
    %4591 = vmatpush1.bf16.msra.mxu0 %v491
    %4592 = vmatprep.subr.bf16.mxu0 0
    %4593 = vmatpush2.bf16.msra.mxu0 %v506
    %4594 = vmatprep.subr.bf16.mxu0 0
    %4595 = vmatpush2.bf16.msra.mxu0 %v505
    %4596 = vmatprep.subr.bf16.mxu0 0
    %4597 = vmatpush2.bf16.msra.mxu0 %v504
    %4598 = vmatprep.subr.bf16.mxu0 0
    %4599 = vmatpush2.bf16.msra.mxu0 %v503
    %4600 = vmatprep.subr.bf16.mxu0 0
    %4601 = vmatpush2.bf16.msra.mxu0 %v502
    %4602 = vmatprep.subr.bf16.mxu0 0
    %4603 = vmatpush2.bf16.msra.mxu0 %v501
    %4604 = vmatprep.subr.bf16.mxu0 0
    %4605 = vmatpush2.bf16.msra.mxu0 %v500
    %4606 = vmatprep.subr.bf16.mxu0 0
    %4607 = vmatpush2.bf16.msra.mxu0 %v499
    %4608 = vmatprep.mubr.bf16.mxu0 %v4571
    %4609 = vmatmul.mubr.bf16.gmra.mxu0 %v4570
    %v4610 = vpop.f32.mrf.mxu0
    %v4611 = vadd.f32 0.0, %v4610
    %v4612 = vpop.f32.mrf.mxu0
    %v4613 = vpop.f32.mrf.mxu0
    %v4614 = vpop.f32.mrf.mxu0
    %4615 = vdwg.mxu0
    %4616 = vmatprep.subr.bf16.mxu0 0
    %4617 = vmatpush1.bf16.msra.mxu0 0
    %4618 = vmatprep.subr.bf16.mxu0 0
    %4619 = vmatpush1.bf16.msra.mxu0 0
    %4620 = vmatprep.subr.bf16.mxu0 0
    %4621 = vmatpush1.bf16.msra.mxu0 0
    %4622 = vmatprep.subr.bf16.mxu0 0
    %4623 = vmatpush1.bf16.msra.mxu0 0
    %4624 = vmatprep.subr.bf16.mxu0 0
    %4625 = vmatpush1.bf16.msra.mxu0 0
    %4626 = vmatprep.subr.bf16.mxu0 0
    %4627 = vmatpush1.bf16.msra.mxu0 %v536
    %4628 = vmatprep.subr.bf16.mxu0 0
    %4629 = vmatpush1.bf16.msra.mxu0 %v508
    %4630 = vmatprep.subr.bf16.mxu0 0
    %4631 = vmatpush1.bf16.msra.mxu0 %v507
    %4632 = vmatprep.subr.bf16.mxu0 0
    %4633 = vmatpush2.bf16.msra.mxu0 0
    %4634 = vmatprep.subr.bf16.mxu0 0
    %4635 = vmatpush2.bf16.msra.mxu0 0
    %4636 = vmatprep.subr.bf16.mxu0 0
    %4637 = vmatpush2.bf16.msra.mxu0 0
    %4638 = vmatprep.subr.bf16.mxu0 0
    %4639 = vmatpush2.bf16.msra.mxu0 0
    %4640 = vmatprep.subr.bf16.mxu0 0
    %4641 = vmatpush2.bf16.msra.mxu0 0
    %4642 = vmatprep.subr.bf16.mxu0 0
    %4643 = vmatpush2.bf16.msra.mxu0 0
    %4644 = vmatprep.subr.bf16.mxu0 0
    %4645 = vmatpush2.bf16.msra.mxu0 0
    %4646 = vmatprep.subr.bf16.mxu0 0
    %4647 = vmatpush2.bf16.msra.mxu0 0
    %4648 = vmatprep.mubr.bf16.mxu0 0
    %4649 = vmatmul.mubr.bf16.gmra.mxu0 %v4574
    %v4650 = vpop.f32.mrf.mxu0
    %v4651 = vadd.f32 %v4611, %v4650
    %v4652 = vpop.f32.mrf.mxu0
    %v4653 = vpop.f32.mrf.mxu0
    %v4654 = vpop.f32.mrf.mxu0
    %4655 = vdwg.mxu0
    %v4656 = vpack.c.bf16 %v4651, %v4651
    %4657 = vmatprep.subr.bf16.mxu0 0
    %4658 = vmatpush1.bf16.msra.mxu0 %v740
    %4659 = vmatprep.subr.bf16.mxu0 0
    %4660 = vmatpush1.bf16.msra.mxu0 %v739
    %4661 = vmatprep.subr.bf16.mxu0 0
    %4662 = vmatpush1.bf16.msra.mxu0 %v738
    %4663 = vmatprep.subr.bf16.mxu0 0
    %4664 = vmatpush1.bf16.msra.mxu0 %v737
    %4665 = vmatprep.subr.bf16.mxu0 0
    %4666 = vmatpush1.bf16.msra.mxu0 %v736
    %4667 = vmatprep.subr.bf16.mxu0 0
    %4668 = vmatpush1.bf16.msra.mxu0 %v735
    %4669 = vmatprep.subr.bf16.mxu0 0
    %4670 = vmatpush1.bf16.msra.mxu0 %v734
    %4671 = vmatprep.subr.bf16.mxu0 0
    %4672 = vmatpush1.bf16.msra.mxu0 %v733
    %4673 = vmatprep.subr.bf16.mxu0 0
    %4674 = vmatpush2.bf16.msra.mxu0 %v748
    %4675 = vmatprep.subr.bf16.mxu0 0
    %4676 = vmatpush2.bf16.msra.mxu0 %v747
    %4677 = vmatprep.subr.bf16.mxu0 0
    %4678 = vmatpush2.bf16.msra.mxu0 %v746
    %4679 = vmatprep.subr.bf16.mxu0 0
    %4680 = vmatpush2.bf16.msra.mxu0 %v745
    %4681 = vmatprep.subr.bf16.mxu0 0
    %4682 = vmatpush2.bf16.msra.mxu0 %v744
    %4683 = vmatprep.subr.bf16.mxu0 0
    %4684 = vmatpush2.bf16.msra.mxu0 %v743
    %4685 = vmatprep.subr.bf16.mxu0 0
    %4686 = vmatpush2.bf16.msra.mxu0 %v742
    %4687 = vmatprep.subr.bf16.mxu0 0
    %4688 = vmatpush2.bf16.msra.mxu0 %v741
    %4689 = vmatprep.mubr.bf16.mxu0 %v4571
    %4690 = vmatmul.mubr.bf16.gmra.mxu0 %v4570
    %v4691 = vpop.f32.mrf.mxu0
    %v4692 = vadd.f32 0.0, %v4691
    %v4693 = vpop.f32.mrf.mxu0
    %v4694 = vpop.f32.mrf.mxu0
    %v4695 = vpop.f32.mrf.mxu0
    %4696 = vdwg.mxu0
    %4697 = vmatprep.subr.bf16.mxu0 0
    %4698 = vmatpush1.bf16.msra.mxu0 0
    %4699 = vmatprep.subr.bf16.mxu0 0
    %4700 = vmatpush1.bf16.msra.mxu0 0
    %4701 = vmatprep.subr.bf16.mxu0 0
    %4702 = vmatpush1.bf16.msra.mxu0 0
    %4703 = vmatprep.subr.bf16.mxu0 0
    %4704 = vmatpush1.bf16.msra.mxu0 0
    %4705 = vmatprep.subr.bf16.mxu0 0
    %4706 = vmatpush1.bf16.msra.mxu0 0
    %4707 = vmatprep.subr.bf16.mxu0 0
    %4708 = vmatpush1.bf16.msra.mxu0 %v771
    %4709 = vmatprep.subr.bf16.mxu0 0
    %4710 = vmatpush1.bf16.msra.mxu0 %v750
    %4711 = vmatprep.subr.bf16.mxu0 0
    %4712 = vmatpush1.bf16.msra.mxu0 %v749
    %4713 = vmatprep.subr.bf16.mxu0 0
    %4714 = vmatpush2.bf16.msra.mxu0 0
    %4715 = vmatprep.subr.bf16.mxu0 0
    %4716 = vmatpush2.bf16.msra.mxu0 0
    %4717 = vmatprep.subr.bf16.mxu0 0
    %4718 = vmatpush2.bf16.msra.mxu0 0
    %4719 = vmatprep.subr.bf16.mxu0 0
    %4720 = vmatpush2.bf16.msra.mxu0 0
    %4721 = vmatprep.subr.bf16.mxu0 0
    %4722 = vmatpush2.bf16.msra.mxu0 0
    %4723 = vmatprep.subr.bf16.mxu0 0
    %4724 = vmatpush2.bf16.msra.mxu0 0
    %4725 = vmatprep.subr.bf16.mxu0 0
    %4726 = vmatpush2.bf16.msra.mxu0 0
    %4727 = vmatprep.subr.bf16.mxu0 0
    %4728 = vmatpush2.bf16.msra.mxu0 0
    %4729 = vmatprep.mubr.bf16.mxu0 0
    %4730 = vmatmul.mubr.bf16.gmra.mxu0 %v4574
    %v4731 = vpop.f32.mrf.mxu0
    %v4732 = vadd.f32 %v4692, %v4731
    %v4733 = vpop.f32.mrf.mxu0
    %v4734 = vpop.f32.mrf.mxu0
    %v4735 = vpop.f32.mrf.mxu0
    %4736 = vdwg.mxu0
    %v4737 = vpack.c.bf16 %v4732, %v4732
    %v4739 = vsel %vm866, %v4737, 0
    %4741 = vmatprep.subr.bf16.mxu0 0
    %4742 = vmatpush1.bf16.msra.mxu0 0
    %4743 = vmatprep.subr.bf16.mxu0 0
    %4744 = vmatpush1.bf16.msra.mxu0 0
    %4745 = vmatprep.subr.bf16.mxu0 0
    %4746 = vmatpush1.bf16.msra.mxu0 0
    %4747 = vmatprep.subr.bf16.mxu0 0
    %4748 = vmatpush1.bf16.msra.mxu0 0
    %4749 = vmatprep.subr.bf16.mxu0 0
    %4750 = vmatpush1.bf16.msra.mxu0 0
    %4751 = vmatprep.subr.bf16.mxu0 0
    %4752 = vmatpush1.bf16.msra.mxu0 0
    %4753 = vmatprep.subr.bf16.mxu0 0
    %4754 = vmatpush1.bf16.msra.mxu0 0
    %4755 = vmatprep.subr.bf16.mxu0 0
    %4756 = vmatpush1.bf16.msra.mxu0 %v4739
    %4757 = vmatprep.subr.bf16.mxu0 0
    %4758 = vmatpush2.bf16.msra.mxu0 0
    %4759 = vmatprep.subr.bf16.mxu0 0
    %4760 = vmatpush2.bf16.msra.mxu0 0
    %4761 = vmatprep.subr.bf16.mxu0 0
    %4762 = vmatpush2.bf16.msra.mxu0 0
    %4763 = vmatprep.subr.bf16.mxu0 0
    %4764 = vmatpush2.bf16.msra.mxu0 0
    %4765 = vmatprep.subr.bf16.mxu0 0
    %4766 = vmatpush2.bf16.msra.mxu0 0
    %4767 = vmatprep.subr.bf16.mxu0 0
    %4768 = vmatpush2.bf16.msra.mxu0 0
    %4769 = vmatprep.subr.bf16.mxu0 0
    %4770 = vmatpush2.bf16.msra.mxu0 0
    %4771 = vmatprep.subr.bf16.mxu0 0
    %4772 = vmatpush2.bf16.msra.mxu0 0
    %4773 = vmatprep.mubr.bf16.mxu0 0
    %4774 = vmatmul.mubr.bf16.gmra.mxu0 %v864
    %v4775 = vpop.f32.mrf.mxu0
    %v4776 = vadd.f32 0.0, %v4775
    %v4777 = vpop.f32.mrf.mxu0
    %v4778 = vpop.f32.mrf.mxu0
    %v4779 = vadd.f32 0.0, %v4778
    %v4780 = vpop.f32.mrf.mxu0
    %4781 = vdwg.mxu0
    %v4783 = vsel %vm866, %v4656, 0
    %4785 = vmatprep.subr.bf16.mxu0 0
    %4786 = vmatpush1.bf16.msra.mxu0 0
    %4787 = vmatprep.subr.bf16.mxu0 0
    %4788 = vmatpush1.bf16.msra.mxu0 0
    %4789 = vmatprep.subr.bf16.mxu0 0
    %4790 = vmatpush1.bf16.msra.mxu0 0
    %4791 = vmatprep.subr.bf16.mxu0 0
    %4792 = vmatpush1.bf16.msra.mxu0 0
    %4793 = vmatprep.subr.bf16.mxu0 0
    %4794 = vmatpush1.bf16.msra.mxu0 0
    %4795 = vmatprep.subr.bf16.mxu0 0
    %4796 = vmatpush1.bf16.msra.mxu0 0
    %4797 = vmatprep.subr.bf16.mxu0 0
    %4798 = vmatpush1.bf16.msra.mxu0 0
    %4799 = vmatprep.subr.bf16.mxu0 0
    %4800 = vmatpush1.bf16.msra.mxu0 %v4783
    %4801 = vmatprep.subr.bf16.mxu0 0
    %4802 = vmatpush2.bf16.msra.mxu0 0
    %4803 = vmatprep.subr.bf16.mxu0 0
    %4804 = vmatpush2.bf16.msra.mxu0 0
    %4805 = vmatprep.subr.bf16.mxu0 0
    %4806 = vmatpush2.bf16.msra.mxu0 0
    %4807 = vmatprep.subr.bf16.mxu0 0
    %4808 = vmatpush2.bf16.msra.mxu0 0
    %4809 = vmatprep.subr.bf16.mxu0 0
    %4810 = vmatpush2.bf16.msra.mxu0 0
    %4811 = vmatprep.subr.bf16.mxu0 0
    %4812 = vmatpush2.bf16.msra.mxu0 0
    %4813 = vmatprep.subr.bf16.mxu0 0
    %4814 = vmatpush2.bf16.msra.mxu0 0
    %4815 = vmatprep.subr.bf16.mxu0 0
    %4816 = vmatpush2.bf16.msra.mxu0 0
    %4817 = vmatprep.mubr.bf16.mxu0 0
    %4818 = vmatmul.mubr.bf16.gmra.mxu0 %v917
    %v4819 = vpop.f32.mrf.mxu0
    %v4820 = vadd.f32 %v4776, %v4819
    %v4821 = vpop.f32.mrf.mxu0
    %v4822 = vpop.f32.mrf.mxu0
    %v4823 = vadd.f32 %v4779, %v4822
    %v4824 = vpop.f32.mrf.mxu0
    %4825 = vdwg.mxu0
    %4826 = vmatprep.subr.bf16.mxu0 0
    %4827 = vmatpush1.bf16.msra.mxu0 %v1082
    %4828 = vmatprep.subr.bf16.mxu0 0
    %4829 = vmatpush1.bf16.msra.mxu0 %v1081
    %4830 = vmatprep.subr.bf16.mxu0 0
    %4831 = vmatpush1.bf16.msra.mxu0 %v1080
    %4832 = vmatprep.subr.bf16.mxu0 0
    %4833 = vmatpush1.bf16.msra.mxu0 %v1079
    %4834 = vmatprep.subr.bf16.mxu0 0
    %4835 = vmatpush1.bf16.msra.mxu0 %v1078
    %4836 = vmatprep.subr.bf16.mxu0 0
    %4837 = vmatpush1.bf16.msra.mxu0 %v1077
    %4838 = vmatprep.subr.bf16.mxu0 0
    %4839 = vmatpush1.bf16.msra.mxu0 %v1076
    %4840 = vmatprep.subr.bf16.mxu0 0
    %4841 = vmatpush1.bf16.msra.mxu0 %v1075
    %4842 = vmatprep.subr.bf16.mxu0 0
    %4843 = vmatpush2.bf16.msra.mxu0 %v1090
    %4844 = vmatprep.subr.bf16.mxu0 0
    %4845 = vmatpush2.bf16.msra.mxu0 %v1089
    %4846 = vmatprep.subr.bf16.mxu0 0
    %4847 = vmatpush2.bf16.msra.mxu0 %v1088
    %4848 = vmatprep.subr.bf16.mxu0 0
    %4849 = vmatpush2.bf16.msra.mxu0 %v1087
    %4850 = vmatprep.subr.bf16.mxu0 0
    %4851 = vmatpush2.bf16.msra.mxu0 %v1086
    %4852 = vmatprep.subr.bf16.mxu0 0
    %4853 = vmatpush2.bf16.msra.mxu0 %v1085
    %4854 = vmatprep.subr.bf16.mxu0 0
    %4855 = vmatpush2.bf16.msra.mxu0 %v1084
    %4856 = vmatprep.subr.bf16.mxu0 0
    %4857 = vmatpush2.bf16.msra.mxu0 %v1083
    %4858 = vmatprep.mubr.bf16.mxu0 %v4571
    %4859 = vmatmul.mubr.bf16.gmra.mxu0 %v4570
    %v4860 = vpop.f32.mrf.mxu0
    %v4861 = vadd.f32 0.0, %v4860
    %v4862 = vpop.f32.mrf.mxu0
    %v4863 = vpop.f32.mrf.mxu0
    %v4864 = vpop.f32.mrf.mxu0
    %4865 = vdwg.mxu0
    %4866 = vmatprep.subr.bf16.mxu0 0
    %4867 = vmatpush1.bf16.msra.mxu0 0
    %4868 = vmatprep.subr.bf16.mxu0 0
    %4869 = vmatpush1.bf16.msra.mxu0 0
    %4870 = vmatprep.subr.bf16.mxu0 0
    %4871 = vmatpush1.bf16.msra.mxu0 0
    %4872 = vmatprep.subr.bf16.mxu0 0
    %4873 = vmatpush1.bf16.msra.mxu0 0
    %4874 = vmatprep.subr.bf16.mxu0 0
    %4875 = vmatpush1.bf16.msra.mxu0 0
    %4876 = vmatprep.subr.bf16.mxu0 0
    %4877 = vmatpush1.bf16.msra.mxu0 %v1113
    %4878 = vmatprep.subr.bf16.mxu0 0
    %4879 = vmatpush1.bf16.msra.mxu0 %v1092
    %4880 = vmatprep.subr.bf16.mxu0 0
    %4881 = vmatpush1.bf16.msra.mxu0 %v1091
    %4882 = vmatprep.subr.bf16.mxu0 0
    %4883 = vmatpush2.bf16.msra.mxu0 0
    %4884 = vmatprep.subr.bf16.mxu0 0
    %4885 = vmatpush2.bf16.msra.mxu0 0
    %4886 = vmatprep.subr.bf16.mxu0 0
    %4887 = vmatpush2.bf16.msra.mxu0 0
    %4888 = vmatprep.subr.bf16.mxu0 0
    %4889 = vmatpush2.bf16.msra.mxu0 0
    %4890 = vmatprep.subr.bf16.mxu0 0
    %4891 = vmatpush2.bf16.msra.mxu0 0
    %4892 = vmatprep.subr.bf16.mxu0 0
    %4893 = vmatpush2.bf16.msra.mxu0 0
    %4894 = vmatprep.subr.bf16.mxu0 0
    %4895 = vmatpush2.bf16.msra.mxu0 0
    %4896 = vmatprep.subr.bf16.mxu0 0
    %4897 = vmatpush2.bf16.msra.mxu0 0
    %4898 = vmatprep.mubr.bf16.mxu0 0
    %4899 = vmatmul.mubr.bf16.gmra.mxu0 %v4574
    %v4900 = vpop.f32.mrf.mxu0
    %v4901 = vadd.f32 %v4861, %v4900
    %v4902 = vpop.f32.mrf.mxu0
    %v4903 = vpop.f32.mrf.mxu0
    %v4904 = vpop.f32.mrf.mxu0
    %4905 = vdwg.mxu0
    %v4906 = vpack.c.bf16 %v4901, %v4901
    %v4908 = vsel %vm866, %v4906, 0
    %4910 = vmatprep.subr.bf16.mxu0 0
    %4911 = vmatpush1.bf16.msra.mxu0 0
    %4912 = vmatprep.subr.bf16.mxu0 0
    %4913 = vmatpush1.bf16.msra.mxu0 0
    %4914 = vmatprep.subr.bf16.mxu0 0
    %4915 = vmatpush1.bf16.msra.mxu0 0
    %4916 = vmatprep.subr.bf16.mxu0 0
    %4917 = vmatpush1.bf16.msra.mxu0 0
    %4918 = vmatprep.subr.bf16.mxu0 0
    %4919 = vmatpush1.bf16.msra.mxu0 0
    %4920 = vmatprep.subr.bf16.mxu0 0
    %4921 = vmatpush1.bf16.msra.mxu0 0
    %4922 = vmatprep.subr.bf16.mxu0 0
    %4923 = vmatpush1.bf16.msra.mxu0 0
    %4924 = vmatprep.subr.bf16.mxu0 0
    %4925 = vmatpush1.bf16.msra.mxu0 %v4908
    %4926 = vmatprep.subr.bf16.mxu0 0
    %4927 = vmatpush2.bf16.msra.mxu0 0
    %4928 = vmatprep.subr.bf16.mxu0 0
    %4929 = vmatpush2.bf16.msra.mxu0 0
    %4930 = vmatprep.subr.bf16.mxu0 0
    %4931 = vmatpush2.bf16.msra.mxu0 0
    %4932 = vmatprep.subr.bf16.mxu0 0
    %4933 = vmatpush2.bf16.msra.mxu0 0
    %4934 = vmatprep.subr.bf16.mxu0 0
    %4935 = vmatpush2.bf16.msra.mxu0 0
    %4936 = vmatprep.subr.bf16.mxu0 0
    %4937 = vmatpush2.bf16.msra.mxu0 0
    %4938 = vmatprep.subr.bf16.mxu0 0
    %4939 = vmatpush2.bf16.msra.mxu0 0
    %4940 = vmatprep.subr.bf16.mxu0 0
    %4941 = vmatpush2.bf16.msra.mxu0 0
    %4942 = vmatprep.mubr.bf16.mxu0 0
    %4943 = vmatmul.mubr.bf16.gmra.mxu0 %v1205
    %v4944 = vpop.f32.mrf.mxu0
    %v4945 = vadd.f32 0.0, %v4944
    %v4946 = vpop.f32.mrf.mxu0
    %v4947 = vpop.f32.mrf.mxu0
    %v4948 = vadd.f32 0.0, %v4947
    %v4949 = vpop.f32.mrf.mxu0
    %4950 = vdwg.mxu0
    %v4951 = vadd.f32 %v4820, %v4945
    %v4952 = vadd.f32 %v4823, %v4948
    %4953 = vmatprep.subr.bf16.mxu0 0
    %4954 = vmatpush1.bf16.msra.mxu0 %v1372
    %4955 = vmatprep.subr.bf16.mxu0 0
    %4956 = vmatpush1.bf16.msra.mxu0 %v1371
    %4957 = vmatprep.subr.bf16.mxu0 0
    %4958 = vmatpush1.bf16.msra.mxu0 %v1370
    %4959 = vmatprep.subr.bf16.mxu0 0
    %4960 = vmatpush1.bf16.msra.mxu0 %v1369
    %4961 = vmatprep.subr.bf16.mxu0 0
    %4962 = vmatpush1.bf16.msra.mxu0 %v1368
    %4963 = vmatprep.subr.bf16.mxu0 0
    %4964 = vmatpush1.bf16.msra.mxu0 %v1367
    %4965 = vmatprep.subr.bf16.mxu0 0
    %4966 = vmatpush1.bf16.msra.mxu0 %v1366
    %4967 = vmatprep.subr.bf16.mxu0 0
    %4968 = vmatpush1.bf16.msra.mxu0 %v1365
    %4969 = vmatprep.subr.bf16.mxu0 0
    %4970 = vmatpush2.bf16.msra.mxu0 %v1380
    %4971 = vmatprep.subr.bf16.mxu0 0
    %4972 = vmatpush2.bf16.msra.mxu0 %v1379
    %4973 = vmatprep.subr.bf16.mxu0 0
    %4974 = vmatpush2.bf16.msra.mxu0 %v1378
    %4975 = vmatprep.subr.bf16.mxu0 0
    %4976 = vmatpush2.bf16.msra.mxu0 %v1377
    %4977 = vmatprep.subr.bf16.mxu0 0
    %4978 = vmatpush2.bf16.msra.mxu0 %v1376
    %4979 = vmatprep.subr.bf16.mxu0 0
    %4980 = vmatpush2.bf16.msra.mxu0 %v1375
    %4981 = vmatprep.subr.bf16.mxu0 0
    %4982 = vmatpush2.bf16.msra.mxu0 %v1374
    %4983 = vmatprep.subr.bf16.mxu0 0
    %4984 = vmatpush2.bf16.msra.mxu0 %v1373
    %4985 = vmatprep.mubr.bf16.mxu0 %v4571
    %4986 = vmatmul.mubr.bf16.gmra.mxu0 %v4570
    %v4987 = vpop.f32.mrf.mxu0
    %v4988 = vadd.f32 0.0, %v4987
    %v4989 = vpop.f32.mrf.mxu0
    %v4990 = vpop.f32.mrf.mxu0
    %v4991 = vpop.f32.mrf.mxu0
    %4992 = vdwg.mxu0
    %4993 = vmatprep.subr.bf16.mxu0 0
    %4994 = vmatpush1.bf16.msra.mxu0 0
    %4995 = vmatprep.subr.bf16.mxu0 0
    %4996 = vmatpush1.bf16.msra.mxu0 0
    %4997 = vmatprep.subr.bf16.mxu0 0
    %4998 = vmatpush1.bf16.msra.mxu0 0
    %4999 = vmatprep.subr.bf16.mxu0 0
    %5000 = vmatpush1.bf16.msra.mxu0 0
    %5001 = vmatprep.subr.bf16.mxu0 0
    %5002 = vmatpush1.bf16.msra.mxu0 0
    %5003 = vmatprep.subr.bf16.mxu0 0
    %5004 = vmatpush1.bf16.msra.mxu0 %v1403
    %5005 = vmatprep.subr.bf16.mxu0 0
    %5006 = vmatpush1.bf16.msra.mxu0 %v1382
    %5007 = vmatprep.subr.bf16.mxu0 0
    %5008 = vmatpush1.bf16.msra.mxu0 %v1381
    %5009 = vmatprep.subr.bf16.mxu0 0
    %5010 = vmatpush2.bf16.msra.mxu0 0
    %5011 = vmatprep.subr.bf16.mxu0 0
    %5012 = vmatpush2.bf16.msra.mxu0 0
    %5013 = vmatprep.subr.bf16.mxu0 0
    %5014 = vmatpush2.bf16.msra.mxu0 0
    %5015 = vmatprep.subr.bf16.mxu0 0
    %5016 = vmatpush2.bf16.msra.mxu0 0
    %5017 = vmatprep.subr.bf16.mxu0 0
    %5018 = vmatpush2.bf16.msra.mxu0 0
    %5019 = vmatprep.subr.bf16.mxu0 0
    %5020 = vmatpush2.bf16.msra.mxu0 0
    %5021 = vmatprep.subr.bf16.mxu0 0
    %5022 = vmatpush2.bf16.msra.mxu0 0
    %5023 = vmatprep.subr.bf16.mxu0 0
    %5024 = vmatpush2.bf16.msra.mxu0 0
    %5025 = vmatprep.mubr.bf16.mxu0 0
    %5026 = vmatmul.mubr.bf16.gmra.mxu0 %v4574
    %v5027 = vpop.f32.mrf.mxu0
    %v5028 = vadd.f32 %v4988, %v5027
    %v5029 = vpop.f32.mrf.mxu0
    %v5030 = vpop.f32.mrf.mxu0
    %v5031 = vpop.f32.mrf.mxu0
    %5032 = vdwg.mxu0
    %v5033 = vpack.c.bf16 %v5028, %v5028
    %v5035 = vsel %vm866, %v5033, 0
    %5037 = vmatprep.subr.bf16.mxu0 0
    %5038 = vmatpush1.bf16.msra.mxu0 0
    %5039 = vmatprep.subr.bf16.mxu0 0
    %5040 = vmatpush1.bf16.msra.mxu0 0
    %5041 = vmatprep.subr.bf16.mxu0 0
    %5042 = vmatpush1.bf16.msra.mxu0 0
    %5043 = vmatprep.subr.bf16.mxu0 0
    %5044 = vmatpush1.bf16.msra.mxu0 0
    %5045 = vmatprep.subr.bf16.mxu0 0
    %5046 = vmatpush1.bf16.msra.mxu0 0
    %5047 = vmatprep.subr.bf16.mxu0 0
    %5048 = vmatpush1.bf16.msra.mxu0 0
    %5049 = vmatprep.subr.bf16.mxu0 0
    %5050 = vmatpush1.bf16.msra.mxu0 0
    %5051 = vmatprep.subr.bf16.mxu0 0
    %5052 = vmatpush1.bf16.msra.mxu0 %v5035
    %5053 = vmatprep.subr.bf16.mxu0 0
    %5054 = vmatpush2.bf16.msra.mxu0 0
    %5055 = vmatprep.subr.bf16.mxu0 0
    %5056 = vmatpush2.bf16.msra.mxu0 0
    %5057 = vmatprep.subr.bf16.mxu0 0
    %5058 = vmatpush2.bf16.msra.mxu0 0
    %5059 = vmatprep.subr.bf16.mxu0 0
    %5060 = vmatpush2.bf16.msra.mxu0 0
    %5061 = vmatprep.subr.bf16.mxu0 0
    %5062 = vmatpush2.bf16.msra.mxu0 0
    %5063 = vmatprep.subr.bf16.mxu0 0
    %5064 = vmatpush2.bf16.msra.mxu0 0
    %5065 = vmatprep.subr.bf16.mxu0 0
    %5066 = vmatpush2.bf16.msra.mxu0 0
    %5067 = vmatprep.subr.bf16.mxu0 0
    %5068 = vmatpush2.bf16.msra.mxu0 0
    %5069 = vmatprep.mubr.bf16.mxu0 0
    %5070 = vmatmul.mubr.bf16.gmra.mxu0 %v1495
    %v5071 = vpop.f32.mrf.mxu0
    %v5072 = vadd.f32 0.0, %v5071
    %v5073 = vpop.f32.mrf.mxu0
    %v5074 = vpop.f32.mrf.mxu0
    %v5075 = vadd.f32 0.0, %v5074
    %v5076 = vpop.f32.mrf.mxu0
    %5077 = vdwg.mxu0
    %v5078 = vadd.f32 %v4951, %v5072
    %v5079 = vadd.f32 %v4952, %v5075
    %5080 = vmatprep.subr.bf16.mxu0 0
    %5081 = vmatpush1.bf16.msra.mxu0 %v1662
    %5082 = vmatprep.subr.bf16.mxu0 0
    %5083 = vmatpush1.bf16.msra.mxu0 %v1661
    %5084 = vmatprep.subr.bf16.mxu0 0
    %5085 = vmatpush1.bf16.msra.mxu0 %v1660
    %5086 = vmatprep.subr.bf16.mxu0 0
    %5087 = vmatpush1.bf16.msra.mxu0 %v1659
    %5088 = vmatprep.subr.bf16.mxu0 0
    %5089 = vmatpush1.bf16.msra.mxu0 %v1658
    %5090 = vmatprep.subr.bf16.mxu0 0
    %5091 = vmatpush1.bf16.msra.mxu0 %v1657
    %5092 = vmatprep.subr.bf16.mxu0 0
    %5093 = vmatpush1.bf16.msra.mxu0 %v1656
    %5094 = vmatprep.subr.bf16.mxu0 0
    %5095 = vmatpush1.bf16.msra.mxu0 %v1655
    %5096 = vmatprep.subr.bf16.mxu0 0
    %5097 = vmatpush2.bf16.msra.mxu0 %v1670
    %5098 = vmatprep.subr.bf16.mxu0 0
    %5099 = vmatpush2.bf16.msra.mxu0 %v1669
    %5100 = vmatprep.subr.bf16.mxu0 0
    %5101 = vmatpush2.bf16.msra.mxu0 %v1668
    %5102 = vmatprep.subr.bf16.mxu0 0
    %5103 = vmatpush2.bf16.msra.mxu0 %v1667
    %5104 = vmatprep.subr.bf16.mxu0 0
    %5105 = vmatpush2.bf16.msra.mxu0 %v1666
    %5106 = vmatprep.subr.bf16.mxu0 0
    %5107 = vmatpush2.bf16.msra.mxu0 %v1665
    %5108 = vmatprep.subr.bf16.mxu0 0
    %5109 = vmatpush2.bf16.msra.mxu0 %v1664
    %5110 = vmatprep.subr.bf16.mxu0 0
    %5111 = vmatpush2.bf16.msra.mxu0 %v1663
    %5112 = vmatprep.mubr.bf16.mxu0 %v4571
    %5113 = vmatmul.mubr.bf16.gmra.mxu0 %v4570
    %v5114 = vpop.f32.mrf.mxu0
    %v5115 = vadd.f32 0.0, %v5114
    %v5116 = vpop.f32.mrf.mxu0
    %v5117 = vpop.f32.mrf.mxu0
    %v5118 = vpop.f32.mrf.mxu0
    %5119 = vdwg.mxu0
    %5120 = vmatprep.subr.bf16.mxu0 0
    %5121 = vmatpush1.bf16.msra.mxu0 0
    %5122 = vmatprep.subr.bf16.mxu0 0
    %5123 = vmatpush1.bf16.msra.mxu0 0
    %5124 = vmatprep.subr.bf16.mxu0 0
    %5125 = vmatpush1.bf16.msra.mxu0 0
    %5126 = vmatprep.subr.bf16.mxu0 0
    %5127 = vmatpush1.bf16.msra.mxu0 0
    %5128 = vmatprep.subr.bf16.mxu0 0
    %5129 = vmatpush1.bf16.msra.mxu0 0
    %5130 = vmatprep.subr.bf16.mxu0 0
    %5131 = vmatpush1.bf16.msra.mxu0 %v1693
    %5132 = vmatprep.subr.bf16.mxu0 0
    %5133 = vmatpush1.bf16.msra.mxu0 %v1672
    %5134 = vmatprep.subr.bf16.mxu0 0
    %5135 = vmatpush1.bf16.msra.mxu0 %v1671
    %5136 = vmatprep.subr.bf16.mxu0 0
    %5137 = vmatpush2.bf16.msra.mxu0 0
    %5138 = vmatprep.subr.bf16.mxu0 0
    %5139 = vmatpush2.bf16.msra.mxu0 0
    %5140 = vmatprep.subr.bf16.mxu0 0
    %5141 = vmatpush2.bf16.msra.mxu0 0
    %5142 = vmatprep.subr.bf16.mxu0 0
    %5143 = vmatpush2.bf16.msra.mxu0 0
    %5144 = vmatprep.subr.bf16.mxu0 0
    %5145 = vmatpush2.bf16.msra.mxu0 0
    %5146 = vmatprep.subr.bf16.mxu0 0
    %5147 = vmatpush2.bf16.msra.mxu0 0
    %5148 = vmatprep.subr.bf16.mxu0 0
    %5149 = vmatpush2.bf16.msra.mxu0 0
    %5150 = vmatprep.subr.bf16.mxu0 0
    %5151 = vmatpush2.bf16.msra.mxu0 0
    %5152 = vmatprep.mubr.bf16.mxu0 0
    %5153 = vmatmul.mubr.bf16.gmra.mxu0 %v4574
    %v5154 = vpop.f32.mrf.mxu0
    %v5155 = vadd.f32 %v5115, %v5154
    %v5156 = vpop.f32.mrf.mxu0
    %v5157 = vpop.f32.mrf.mxu0
    %v5158 = vpop.f32.mrf.mxu0
    %5159 = vdwg.mxu0
    %v5160 = vpack.c.bf16 %v5155, %v5155
    %v5162 = vsel %vm866, %v5160, 0
    %5164 = vmatprep.subr.bf16.mxu0 0
    %5165 = vmatpush1.bf16.msra.mxu0 0
    %5166 = vmatprep.subr.bf16.mxu0 0
    %5167 = vmatpush1.bf16.msra.mxu0 0
    %5168 = vmatprep.subr.bf16.mxu0 0
    %5169 = vmatpush1.bf16.msra.mxu0 0
    %5170 = vmatprep.subr.bf16.mxu0 0
    %5171 = vmatpush1.bf16.msra.mxu0 0
    %5172 = vmatprep.subr.bf16.mxu0 0
    %5173 = vmatpush1.bf16.msra.mxu0 0
    %5174 = vmatprep.subr.bf16.mxu0 0
    %5175 = vmatpush1.bf16.msra.mxu0 0
    %5176 = vmatprep.subr.bf16.mxu0 0
    %5177 = vmatpush1.bf16.msra.mxu0 0
    %5178 = vmatprep.subr.bf16.mxu0 0
    %5179 = vmatpush1.bf16.msra.mxu0 %v5162
    %5180 = vmatprep.subr.bf16.mxu0 0
    %5181 = vmatpush2.bf16.msra.mxu0 0
    %5182 = vmatprep.subr.bf16.mxu0 0
    %5183 = vmatpush2.bf16.msra.mxu0 0
    %5184 = vmatprep.subr.bf16.mxu0 0
    %5185 = vmatpush2.bf16.msra.mxu0 0
    %5186 = vmatprep.subr.bf16.mxu0 0
    %5187 = vmatpush2.bf16.msra.mxu0 0
    %5188 = vmatprep.subr.bf16.mxu0 0
    %5189 = vmatpush2.bf16.msra.mxu0 0
    %5190 = vmatprep.subr.bf16.mxu0 0
    %5191 = vmatpush2.bf16.msra.mxu0 0
    %5192 = vmatprep.subr.bf16.mxu0 0
    %5193 = vmatpush2.bf16.msra.mxu0 0
    %5194 = vmatprep.subr.bf16.mxu0 0
    %5195 = vmatpush2.bf16.msra.mxu0 0
    %5196 = vmatprep.mubr.bf16.mxu0 0
    %5197 = vmatmul.mubr.bf16.gmra.mxu0 %v1785
    %v5198 = vpop.f32.mrf.mxu0
    %v5199 = vadd.f32 0.0, %v5198
    %v5200 = vpop.f32.mrf.mxu0
    %v5201 = vpop.f32.mrf.mxu0
    %v5202 = vadd.f32 0.0, %v5201
    %v5203 = vpop.f32.mrf.mxu0
    %5204 = vdwg.mxu0
    %v5205 = vadd.f32 %v5078, %v5199
    %v5206 = vadd.f32 %v5079, %v5202
    %5207 = vmatprep.subr.bf16.mxu0 0
    %5208 = vmatpush1.bf16.msra.mxu0 %v1952
    %5209 = vmatprep.subr.bf16.mxu0 0
    %5210 = vmatpush1.bf16.msra.mxu0 %v1951
    %5211 = vmatprep.subr.bf16.mxu0 0
    %5212 = vmatpush1.bf16.msra.mxu0 %v1950
    %5213 = vmatprep.subr.bf16.mxu0 0
    %5214 = vmatpush1.bf16.msra.mxu0 %v1949
    %5215 = vmatprep.subr.bf16.mxu0 0
    %5216 = vmatpush1.bf16.msra.mxu0 %v1948
    %5217 = vmatprep.subr.bf16.mxu0 0
    %5218 = vmatpush1.bf16.msra.mxu0 %v1947
    %5219 = vmatprep.subr.bf16.mxu0 0
    %5220 = vmatpush1.bf16.msra.mxu0 %v1946
    %5221 = vmatprep.subr.bf16.mxu0 0
    %5222 = vmatpush1.bf16.msra.mxu0 %v1945
    %5223 = vmatprep.subr.bf16.mxu0 0
    %5224 = vmatpush2.bf16.msra.mxu0 %v1960
    %5225 = vmatprep.subr.bf16.mxu0 0
    %5226 = vmatpush2.bf16.msra.mxu0 %v1959
    %5227 = vmatprep.subr.bf16.mxu0 0
    %5228 = vmatpush2.bf16.msra.mxu0 %v1958
    %5229 = vmatprep.subr.bf16.mxu0 0
    %5230 = vmatpush2.bf16.msra.mxu0 %v1957
    %5231 = vmatprep.subr.bf16.mxu0 0
    %5232 = vmatpush2.bf16.msra.mxu0 %v1956
    %5233 = vmatprep.subr.bf16.mxu0 0
    %5234 = vmatpush2.bf16.msra.mxu0 %v1955
    %5235 = vmatprep.subr.bf16.mxu0 0
    %5236 = vmatpush2.bf16.msra.mxu0 %v1954
    %5237 = vmatprep.subr.bf16.mxu0 0
    %5238 = vmatpush2.bf16.msra.mxu0 %v1953
    %5239 = vmatprep.mubr.bf16.mxu0 %v4571
    %5240 = vmatmul.mubr.bf16.gmra.mxu0 %v4570
    %v5241 = vpop.f32.mrf.mxu0
    %v5242 = vadd.f32 0.0, %v5241
    %v5243 = vpop.f32.mrf.mxu0
    %v5244 = vpop.f32.mrf.mxu0
    %v5245 = vpop.f32.mrf.mxu0
    %5246 = vdwg.mxu0
    %5247 = vmatprep.subr.bf16.mxu0 0
    %5248 = vmatpush1.bf16.msra.mxu0 0
    %5249 = vmatprep.subr.bf16.mxu0 0
    %5250 = vmatpush1.bf16.msra.mxu0 0
    %5251 = vmatprep.subr.bf16.mxu0 0
    %5252 = vmatpush1.bf16.msra.mxu0 0
    %5253 = vmatprep.subr.bf16.mxu0 0
    %5254 = vmatpush1.bf16.msra.mxu0 0
    %5255 = vmatprep.subr.bf16.mxu0 0
    %5256 = vmatpush1.bf16.msra.mxu0 0
    %5257 = vmatprep.subr.bf16.mxu0 0
    %5258 = vmatpush1.bf16.msra.mxu0 %v1983
    %5259 = vmatprep.subr.bf16.mxu0 0
    %5260 = vmatpush1.bf16.msra.mxu0 %v1962
    %5261 = vmatprep.subr.bf16.mxu0 0
    %5262 = vmatpush1.bf16.msra.mxu0 %v1961
    %5263 = vmatprep.subr.bf16.mxu0 0
    %5264 = vmatpush2.bf16.msra.mxu0 0
    %5265 = vmatprep.subr.bf16.mxu0 0
    %5266 = vmatpush2.bf16.msra.mxu0 0
    %5267 = vmatprep.subr.bf16.mxu0 0
    %5268 = vmatpush2.bf16.msra.mxu0 0
    %5269 = vmatprep.subr.bf16.mxu0 0
    %5270 = vmatpush2.bf16.msra.mxu0 0
    %5271 = vmatprep.subr.bf16.mxu0 0
    %5272 = vmatpush2.bf16.msra.mxu0 0
    %5273 = vmatprep.subr.bf16.mxu0 0
    %5274 = vmatpush2.bf16.msra.mxu0 0
    %5275 = vmatprep.subr.bf16.mxu0 0
    %5276 = vmatpush2.bf16.msra.mxu0 0
    %5277 = vmatprep.subr.bf16.mxu0 0
    %5278 = vmatpush2.bf16.msra.mxu0 0
    %5279 = vmatprep.mubr.bf16.mxu0 0
    %5280 = vmatmul.mubr.bf16.gmra.mxu0 %v4574
    %v5281 = vpop.f32.mrf.mxu0
    %v5282 = vadd.f32 %v5242, %v5281
    %v5283 = vpop.f32.mrf.mxu0
    %v5284 = vpop.f32.mrf.mxu0
    %v5285 = vpop.f32.mrf.mxu0
    %5286 = vdwg.mxu0
    %v5287 = vpack.c.bf16 %v5282, %v5282
    %v5289 = vsel %vm866, %v5287, 0
    %5291 = vmatprep.subr.bf16.mxu0 0
    %5292 = vmatpush1.bf16.msra.mxu0 0
    %5293 = vmatprep.subr.bf16.mxu0 0
    %5294 = vmatpush1.bf16.msra.mxu0 0
    %5295 = vmatprep.subr.bf16.mxu0 0
    %5296 = vmatpush1.bf16.msra.mxu0 0
    %5297 = vmatprep.subr.bf16.mxu0 0
    %5298 = vmatpush1.bf16.msra.mxu0 0
    %5299 = vmatprep.subr.bf16.mxu0 0
    %5300 = vmatpush1.bf16.msra.mxu0 0
    %5301 = vmatprep.subr.bf16.mxu0 0
    %5302 = vmatpush1.bf16.msra.mxu0 0
    %5303 = vmatprep.subr.bf16.mxu0 0
    %5304 = vmatpush1.bf16.msra.mxu0 0
    %5305 = vmatprep.subr.bf16.mxu0 0
    %5306 = vmatpush1.bf16.msra.mxu0 %v5289
    %5307 = vmatprep.subr.bf16.mxu0 0
    %5308 = vmatpush2.bf16.msra.mxu0 0
    %5309 = vmatprep.subr.bf16.mxu0 0
    %5310 = vmatpush2.bf16.msra.mxu0 0
    %5311 = vmatprep.subr.bf16.mxu0 0
    %5312 = vmatpush2.bf16.msra.mxu0 0
    %5313 = vmatprep.subr.bf16.mxu0 0
    %5314 = vmatpush2.bf16.msra.mxu0 0
    %5315 = vmatprep.subr.bf16.mxu0 0
    %5316 = vmatpush2.bf16.msra.mxu0 0
    %5317 = vmatprep.subr.bf16.mxu0 0
    %5318 = vmatpush2.bf16.msra.mxu0 0
    %5319 = vmatprep.subr.bf16.mxu0 0
    %5320 = vmatpush2.bf16.msra.mxu0 0
    %5321 = vmatprep.subr.bf16.mxu0 0
    %5322 = vmatpush2.bf16.msra.mxu0 0
    %5323 = vmatprep.mubr.bf16.mxu0 0
    %5324 = vmatmul.mubr.bf16.gmra.mxu0 %v2075
    %v5325 = vpop.f32.mrf.mxu0
    %v5326 = vadd.f32 0.0, %v5325
    %v5327 = vpop.f32.mrf.mxu0
    %v5328 = vpop.f32.mrf.mxu0
    %v5329 = vadd.f32 0.0, %v5328
    %v5330 = vpop.f32.mrf.mxu0
    %5331 = vdwg.mxu0
    %v5332 = vadd.f32 %v5205, %v5326
    %v5333 = vadd.f32 %v5206, %v5329
    %5334 = vmatprep.subr.bf16.mxu0 0
    %5335 = vmatpush1.bf16.msra.mxu0 %v2242
    %5336 = vmatprep.subr.bf16.mxu0 0
    %5337 = vmatpush1.bf16.msra.mxu0 %v2241
    %5338 = vmatprep.subr.bf16.mxu0 0
    %5339 = vmatpush1.bf16.msra.mxu0 %v2240
    %5340 = vmatprep.subr.bf16.mxu0 0
    %5341 = vmatpush1.bf16.msra.mxu0 %v2239
    %5342 = vmatprep.subr.bf16.mxu0 0
    %5343 = vmatpush1.bf16.msra.mxu0 %v2238
    %5344 = vmatprep.subr.bf16.mxu0 0
    %5345 = vmatpush1.bf16.msra.mxu0 %v2237
    %5346 = vmatprep.subr.bf16.mxu0 0
    %5347 = vmatpush1.bf16.msra.mxu0 %v2236
    %5348 = vmatprep.subr.bf16.mxu0 0
    %5349 = vmatpush1.bf16.msra.mxu0 %v2235
    %5350 = vmatprep.subr.bf16.mxu0 0
    %5351 = vmatpush2.bf16.msra.mxu0 %v2250
    %5352 = vmatprep.subr.bf16.mxu0 0
    %5353 = vmatpush2.bf16.msra.mxu0 %v2249
    %5354 = vmatprep.subr.bf16.mxu0 0
    %5355 = vmatpush2.bf16.msra.mxu0 %v2248
    %5356 = vmatprep.subr.bf16.mxu0 0
    %5357 = vmatpush2.bf16.msra.mxu0 %v2247
    %5358 = vmatprep.subr.bf16.mxu0 0
    %5359 = vmatpush2.bf16.msra.mxu0 %v2246
    %5360 = vmatprep.subr.bf16.mxu0 0
    %5361 = vmatpush2.bf16.msra.mxu0 %v2245
    %5362 = vmatprep.subr.bf16.mxu0 0
    %5363 = vmatpush2.bf16.msra.mxu0 %v2244
    %5364 = vmatprep.subr.bf16.mxu0 0
    %5365 = vmatpush2.bf16.msra.mxu0 %v2243
    %5366 = vmatprep.mubr.bf16.mxu0 %v4571
    %5367 = vmatmul.mubr.bf16.gmra.mxu0 %v4570
    %v5368 = vpop.f32.mrf.mxu0
    %v5369 = vadd.f32 0.0, %v5368
    %v5370 = vpop.f32.mrf.mxu0
    %v5371 = vpop.f32.mrf.mxu0
    %v5372 = vpop.f32.mrf.mxu0
    %5373 = vdwg.mxu0
    %5374 = vmatprep.subr.bf16.mxu0 0
    %5375 = vmatpush1.bf16.msra.mxu0 0
    %5376 = vmatprep.subr.bf16.mxu0 0
    %5377 = vmatpush1.bf16.msra.mxu0 0
    %5378 = vmatprep.subr.bf16.mxu0 0
    %5379 = vmatpush1.bf16.msra.mxu0 0
    %5380 = vmatprep.subr.bf16.mxu0 0
    %5381 = vmatpush1.bf16.msra.mxu0 0
    %5382 = vmatprep.subr.bf16.mxu0 0
    %5383 = vmatpush1.bf16.msra.mxu0 0
    %5384 = vmatprep.subr.bf16.mxu0 0
    %5385 = vmatpush1.bf16.msra.mxu0 %v2273
    %5386 = vmatprep.subr.bf16.mxu0 0
    %5387 = vmatpush1.bf16.msra.mxu0 %v2252
    %5388 = vmatprep.subr.bf16.mxu0 0
    %5389 = vmatpush1.bf16.msra.mxu0 %v2251
    %5390 = vmatprep.subr.bf16.mxu0 0
    %5391 = vmatpush2.bf16.msra.mxu0 0
    %5392 = vmatprep.subr.bf16.mxu0 0
    %5393 = vmatpush2.bf16.msra.mxu0 0
    %5394 = vmatprep.subr.bf16.mxu0 0
    %5395 = vmatpush2.bf16.msra.mxu0 0
    %5396 = vmatprep.subr.bf16.mxu0 0
    %5397 = vmatpush2.bf16.msra.mxu0 0
    %5398 = vmatprep.subr.bf16.mxu0 0
    %5399 = vmatpush2.bf16.msra.mxu0 0
    %5400 = vmatprep.subr.bf16.mxu0 0
    %5401 = vmatpush2.bf16.msra.mxu0 0
    %5402 = vmatprep.subr.bf16.mxu0 0
    %5403 = vmatpush2.bf16.msra.mxu0 0
    %5404 = vmatprep.subr.bf16.mxu0 0
    %5405 = vmatpush2.bf16.msra.mxu0 0
    %5406 = vmatprep.mubr.bf16.mxu0 0
    %5407 = vmatmul.mubr.bf16.gmra.mxu0 %v4574
    %v5408 = vpop.f32.mrf.mxu0
    %v5409 = vadd.f32 %v5369, %v5408
    %v5410 = vpop.f32.mrf.mxu0
    %v5411 = vpop.f32.mrf.mxu0
    %v5412 = vpop.f32.mrf.mxu0
    %5413 = vdwg.mxu0
    %v5414 = vpack.c.bf16 %v5409, %v5409
    %v5416 = vsel %vm866, %v5414, 0
    %5418 = vmatprep.subr.bf16.mxu0 0
    %5419 = vmatpush1.bf16.msra.mxu0 0
    %5420 = vmatprep.subr.bf16.mxu0 0
    %5421 = vmatpush1.bf16.msra.mxu0 0
    %5422 = vmatprep.subr.bf16.mxu0 0
    %5423 = vmatpush1.bf16.msra.mxu0 0
    %5424 = vmatprep.subr.bf16.mxu0 0
    %5425 = vmatpush1.bf16.msra.mxu0 0
    %5426 = vmatprep.subr.bf16.mxu0 0
    %5427 = vmatpush1.bf16.msra.mxu0 0
    %5428 = vmatprep.subr.bf16.mxu0 0
    %5429 = vmatpush1.bf16.msra.mxu0 0
    %5430 = vmatprep.subr.bf16.mxu0 0
    %5431 = vmatpush1.bf16.msra.mxu0 0
    %5432 = vmatprep.subr.bf16.mxu0 0
    %5433 = vmatpush1.bf16.msra.mxu0 %v5416
    %5434 = vmatprep.subr.bf16.mxu0 0
    %5435 = vmatpush2.bf16.msra.mxu0 0
    %5436 = vmatprep.subr.bf16.mxu0 0
    %5437 = vmatpush2.bf16.msra.mxu0 0
    %5438 = vmatprep.subr.bf16.mxu0 0
    %5439 = vmatpush2.bf16.msra.mxu0 0
    %5440 = vmatprep.subr.bf16.mxu0 0
    %5441 = vmatpush2.bf16.msra.mxu0 0
    %5442 = vmatprep.subr.bf16.mxu0 0
    %5443 = vmatpush2.bf16.msra.mxu0 0
    %5444 = vmatprep.subr.bf16.mxu0 0
    %5445 = vmatpush2.bf16.msra.mxu0 0
    %5446 = vmatprep.subr.bf16.mxu0 0
    %5447 = vmatpush2.bf16.msra.mxu0 0
    %5448 = vmatprep.subr.bf16.mxu0 0
    %5449 = vmatpush2.bf16.msra.mxu0 0
    %5450 = vmatprep.mubr.bf16.mxu0 0
    %5451 = vmatmul.mubr.bf16.gmra.mxu0 %v2365
    %v5452 = vpop.f32.mrf.mxu0
    %v5453 = vadd.f32 0.0, %v5452
    %v5454 = vpop.f32.mrf.mxu0
    %v5455 = vpop.f32.mrf.mxu0
    %v5456 = vadd.f32 0.0, %v5455
    %v5457 = vpop.f32.mrf.mxu0
    %5458 = vdwg.mxu0
    %v5459 = vadd.f32 %v5332, %v5453
    %v5460 = vadd.f32 %v5333, %v5456
    %5461 = vmatprep.subr.bf16.mxu0 0
    %5462 = vmatpush1.bf16.msra.mxu0 %v2532
    %5463 = vmatprep.subr.bf16.mxu0 0
    %5464 = vmatpush1.bf16.msra.mxu0 %v2531
    %5465 = vmatprep.subr.bf16.mxu0 0
    %5466 = vmatpush1.bf16.msra.mxu0 %v2530
    %5467 = vmatprep.subr.bf16.mxu0 0
    %5468 = vmatpush1.bf16.msra.mxu0 %v2529
    %5469 = vmatprep.subr.bf16.mxu0 0
    %5470 = vmatpush1.bf16.msra.mxu0 %v2528
    %5471 = vmatprep.subr.bf16.mxu0 0
    %5472 = vmatpush1.bf16.msra.mxu0 %v2527
    %5473 = vmatprep.subr.bf16.mxu0 0
    %5474 = vmatpush1.bf16.msra.mxu0 %v2526
    %5475 = vmatprep.subr.bf16.mxu0 0
    %5476 = vmatpush1.bf16.msra.mxu0 %v2525
    %5477 = vmatprep.subr.bf16.mxu0 0
    %5478 = vmatpush2.bf16.msra.mxu0 %v2540
    %5479 = vmatprep.subr.bf16.mxu0 0
    %5480 = vmatpush2.bf16.msra.mxu0 %v2539
    %5481 = vmatprep.subr.bf16.mxu0 0
    %5482 = vmatpush2.bf16.msra.mxu0 %v2538
    %5483 = vmatprep.subr.bf16.mxu0 0
    %5484 = vmatpush2.bf16.msra.mxu0 %v2537
    %5485 = vmatprep.subr.bf16.mxu0 0
    %5486 = vmatpush2.bf16.msra.mxu0 %v2536
    %5487 = vmatprep.subr.bf16.mxu0 0
    %5488 = vmatpush2.bf16.msra.mxu0 %v2535
    %5489 = vmatprep.subr.bf16.mxu0 0
    %5490 = vmatpush2.bf16.msra.mxu0 %v2534
    %5491 = vmatprep.subr.bf16.mxu0 0
    %5492 = vmatpush2.bf16.msra.mxu0 %v2533
    %5493 = vmatprep.mubr.bf16.mxu0 %v4571
    %5494 = vmatmul.mubr.bf16.gmra.mxu0 %v4570
    %v5495 = vpop.f32.mrf.mxu0
    %v5496 = vadd.f32 0.0, %v5495
    %v5497 = vpop.f32.mrf.mxu0
    %v5498 = vpop.f32.mrf.mxu0
    %v5499 = vpop.f32.mrf.mxu0
    %5500 = vdwg.mxu0
    %5501 = vmatprep.subr.bf16.mxu0 0
    %5502 = vmatpush1.bf16.msra.mxu0 0
    %5503 = vmatprep.subr.bf16.mxu0 0
    %5504 = vmatpush1.bf16.msra.mxu0 0
    %5505 = vmatprep.subr.bf16.mxu0 0
    %5506 = vmatpush1.bf16.msra.mxu0 0
    %5507 = vmatprep.subr.bf16.mxu0 0
    %5508 = vmatpush1.bf16.msra.mxu0 0
    %5509 = vmatprep.subr.bf16.mxu0 0
    %5510 = vmatpush1.bf16.msra.mxu0 0
    %5511 = vmatprep.subr.bf16.mxu0 0
    %5512 = vmatpush1.bf16.msra.mxu0 %v2563
    %5513 = vmatprep.subr.bf16.mxu0 0
    %5514 = vmatpush1.bf16.msra.mxu0 %v2542
    %5515 = vmatprep.subr.bf16.mxu0 0
    %5516 = vmatpush1.bf16.msra.mxu0 %v2541
    %5517 = vmatprep.subr.bf16.mxu0 0
    %5518 = vmatpush2.bf16.msra.mxu0 0
    %5519 = vmatprep.subr.bf16.mxu0 0
    %5520 = vmatpush2.bf16.msra.mxu0 0
    %5521 = vmatprep.subr.bf16.mxu0 0
    %5522 = vmatpush2.bf16.msra.mxu0 0
    %5523 = vmatprep.subr.bf16.mxu0 0
    %5524 = vmatpush2.bf16.msra.mxu0 0
    %5525 = vmatprep.subr.bf16.mxu0 0
    %5526 = vmatpush2.bf16.msra.mxu0 0
    %5527 = vmatprep.subr.bf16.mxu0 0
    %5528 = vmatpush2.bf16.msra.mxu0 0
    %5529 = vmatprep.subr.bf16.mxu0 0
    %5530 = vmatpush2.bf16.msra.mxu0 0
    %5531 = vmatprep.subr.bf16.mxu0 0
    %5532 = vmatpush2.bf16.msra.mxu0 0
    %5533 = vmatprep.mubr.bf16.mxu0 0
    %5534 = vmatmul.mubr.bf16.gmra.mxu0 %v4574
    %v5535 = vpop.f32.mrf.mxu0
    %v5536 = vadd.f32 %v5496, %v5535
    %v5537 = vpop.f32.mrf.mxu0
    %v5538 = vpop.f32.mrf.mxu0
    %v5539 = vpop.f32.mrf.mxu0
    %5540 = vdwg.mxu0
    %v5541 = vpack.c.bf16 %v5536, %v5536
    %v5543 = vsel %vm866, %v5541, 0
    %5545 = vmatprep.subr.bf16.mxu0 0
    %5546 = vmatpush1.bf16.msra.mxu0 0
    %5547 = vmatprep.subr.bf16.mxu0 0
    %5548 = vmatpush1.bf16.msra.mxu0 0
    %5549 = vmatprep.subr.bf16.mxu0 0
    %5550 = vmatpush1.bf16.msra.mxu0 0
    %5551 = vmatprep.subr.bf16.mxu0 0
    %5552 = vmatpush1.bf16.msra.mxu0 0
    %5553 = vmatprep.subr.bf16.mxu0 0
    %5554 = vmatpush1.bf16.msra.mxu0 0
    %5555 = vmatprep.subr.bf16.mxu0 0
    %5556 = vmatpush1.bf16.msra.mxu0 0
    %5557 = vmatprep.subr.bf16.mxu0 0
    %5558 = vmatpush1.bf16.msra.mxu0 0
    %5559 = vmatprep.subr.bf16.mxu0 0
    %5560 = vmatpush1.bf16.msra.mxu0 %v5543
    %5561 = vmatprep.subr.bf16.mxu0 0
    %5562 = vmatpush2.bf16.msra.mxu0 0
    %5563 = vmatprep.subr.bf16.mxu0 0
    %5564 = vmatpush2.bf16.msra.mxu0 0
    %5565 = vmatprep.subr.bf16.mxu0 0
    %5566 = vmatpush2.bf16.msra.mxu0 0
    %5567 = vmatprep.subr.bf16.mxu0 0
    %5568 = vmatpush2.bf16.msra.mxu0 0
    %5569 = vmatprep.subr.bf16.mxu0 0
    %5570 = vmatpush2.bf16.msra.mxu0 0
    %5571 = vmatprep.subr.bf16.mxu0 0
    %5572 = vmatpush2.bf16.msra.mxu0 0
    %5573 = vmatprep.subr.bf16.mxu0 0
    %5574 = vmatpush2.bf16.msra.mxu0 0
    %5575 = vmatprep.subr.bf16.mxu0 0
    %5576 = vmatpush2.bf16.msra.mxu0 0
    %5577 = vmatprep.mubr.bf16.mxu0 0
    %5578 = vmatmul.mubr.bf16.gmra.mxu0 %v2655
    %v5579 = vpop.f32.mrf.mxu0
    %v5580 = vadd.f32 0.0, %v5579
    %v5581 = vpop.f32.mrf.mxu0
    %v5582 = vpop.f32.mrf.mxu0
    %v5583 = vadd.f32 0.0, %v5582
    %v5584 = vpop.f32.mrf.mxu0
    %5585 = vdwg.mxu0
    %v5586 = vadd.f32 %v5459, %v5580
    %v5587 = vadd.f32 %v5460, %v5583
    %5588 = vmatprep.subr.bf16.mxu0 0
    %5589 = vmatpush1.bf16.msra.mxu0 %v2822
    %5590 = vmatprep.subr.bf16.mxu0 0
    %5591 = vmatpush1.bf16.msra.mxu0 %v2821
    %5592 = vmatprep.subr.bf16.mxu0 0
    %5593 = vmatpush1.bf16.msra.mxu0 %v2820
    %5594 = vmatprep.subr.bf16.mxu0 0
    %5595 = vmatpush1.bf16.msra.mxu0 %v2819
    %5596 = vmatprep.subr.bf16.mxu0 0
    %5597 = vmatpush1.bf16.msra.mxu0 %v2818
    %5598 = vmatprep.subr.bf16.mxu0 0
    %5599 = vmatpush1.bf16.msra.mxu0 %v2817
    %5600 = vmatprep.subr.bf16.mxu0 0
    %5601 = vmatpush1.bf16.msra.mxu0 %v2816
    %5602 = vmatprep.subr.bf16.mxu0 0
    %5603 = vmatpush1.bf16.msra.mxu0 %v2815
    %5604 = vmatprep.subr.bf16.mxu0 0
    %5605 = vmatpush2.bf16.msra.mxu0 %v2830
    %5606 = vmatprep.subr.bf16.mxu0 0
    %5607 = vmatpush2.bf16.msra.mxu0 %v2829
    %5608 = vmatprep.subr.bf16.mxu0 0
    %5609 = vmatpush2.bf16.msra.mxu0 %v2828
    %5610 = vmatprep.subr.bf16.mxu0 0
    %5611 = vmatpush2.bf16.msra.mxu0 %v2827
    %5612 = vmatprep.subr.bf16.mxu0 0
    %5613 = vmatpush2.bf16.msra.mxu0 %v2826
    %5614 = vmatprep.subr.bf16.mxu0 0
    %5615 = vmatpush2.bf16.msra.mxu0 %v2825
    %5616 = vmatprep.subr.bf16.mxu0 0
    %5617 = vmatpush2.bf16.msra.mxu0 %v2824
    %5618 = vmatprep.subr.bf16.mxu0 0
    %5619 = vmatpush2.bf16.msra.mxu0 %v2823
    %5620 = vmatprep.mubr.bf16.mxu0 %v4571
    %5621 = vmatmul.mubr.bf16.gmra.mxu0 %v4570
    %v5622 = vpop.f32.mrf.mxu0
    %v5623 = vadd.f32 0.0, %v5622
    %v5624 = vpop.f32.mrf.mxu0
    %v5625 = vpop.f32.mrf.mxu0
    %v5626 = vpop.f32.mrf.mxu0
    %5627 = vdwg.mxu0
    %5628 = vmatprep.subr.bf16.mxu0 0
    %5629 = vmatpush1.bf16.msra.mxu0 0
    %5630 = vmatprep.subr.bf16.mxu0 0
    %5631 = vmatpush1.bf16.msra.mxu0 0
    %5632 = vmatprep.subr.bf16.mxu0 0
    %5633 = vmatpush1.bf16.msra.mxu0 0
    %5634 = vmatprep.subr.bf16.mxu0 0
    %5635 = vmatpush1.bf16.msra.mxu0 0
    %5636 = vmatprep.subr.bf16.mxu0 0
    %5637 = vmatpush1.bf16.msra.mxu0 0
    %5638 = vmatprep.subr.bf16.mxu0 0
    %5639 = vmatpush1.bf16.msra.mxu0 %v2853
    %5640 = vmatprep.subr.bf16.mxu0 0
    %5641 = vmatpush1.bf16.msra.mxu0 %v2832
    %5642 = vmatprep.subr.bf16.mxu0 0
    %5643 = vmatpush1.bf16.msra.mxu0 %v2831
    %5644 = vmatprep.subr.bf16.mxu0 0
    %5645 = vmatpush2.bf16.msra.mxu0 0
    %5646 = vmatprep.subr.bf16.mxu0 0
    %5647 = vmatpush2.bf16.msra.mxu0 0
    %5648 = vmatprep.subr.bf16.mxu0 0
    %5649 = vmatpush2.bf16.msra.mxu0 0
    %5650 = vmatprep.subr.bf16.mxu0 0
    %5651 = vmatpush2.bf16.msra.mxu0 0
    %5652 = vmatprep.subr.bf16.mxu0 0
    %5653 = vmatpush2.bf16.msra.mxu0 0
    %5654 = vmatprep.subr.bf16.mxu0 0
    %5655 = vmatpush2.bf16.msra.mxu0 0
    %5656 = vmatprep.subr.bf16.mxu0 0
    %5657 = vmatpush2.bf16.msra.mxu0 0
    %5658 = vmatprep.subr.bf16.mxu0 0
    %5659 = vmatpush2.bf16.msra.mxu0 0
    %5660 = vmatprep.mubr.bf16.mxu0 0
    %5661 = vmatmul.mubr.bf16.gmra.mxu0 %v4574
    %v5662 = vpop.f32.mrf.mxu0
    %v5663 = vadd.f32 %v5623, %v5662
    %v5664 = vpop.f32.mrf.mxu0
    %v5665 = vpop.f32.mrf.mxu0
    %v5666 = vpop.f32.mrf.mxu0
    %5667 = vdwg.mxu0
    %v5668 = vpack.c.bf16 %v5663, %v5663
    %v5670 = vsel %vm866, %v5668, 0
    %5672 = vmatprep.subr.bf16.mxu0 0
    %5673 = vmatpush1.bf16.msra.mxu0 0
    %5674 = vmatprep.subr.bf16.mxu0 0
    %5675 = vmatpush1.bf16.msra.mxu0 0
    %5676 = vmatprep.subr.bf16.mxu0 0
    %5677 = vmatpush1.bf16.msra.mxu0 0
    %5678 = vmatprep.subr.bf16.mxu0 0
    %5679 = vmatpush1.bf16.msra.mxu0 0
    %5680 = vmatprep.subr.bf16.mxu0 0
    %5681 = vmatpush1.bf16.msra.mxu0 0
    %5682 = vmatprep.subr.bf16.mxu0 0
    %5683 = vmatpush1.bf16.msra.mxu0 0
    %5684 = vmatprep.subr.bf16.mxu0 0
    %5685 = vmatpush1.bf16.msra.mxu0 0
    %5686 = vmatprep.subr.bf16.mxu0 0
    %5687 = vmatpush1.bf16.msra.mxu0 %v5670
    %5688 = vmatprep.subr.bf16.mxu0 0
    %5689 = vmatpush2.bf16.msra.mxu0 0
    %5690 = vmatprep.subr.bf16.mxu0 0
    %5691 = vmatpush2.bf16.msra.mxu0 0
    %5692 = vmatprep.subr.bf16.mxu0 0
    %5693 = vmatpush2.bf16.msra.mxu0 0
    %5694 = vmatprep.subr.bf16.mxu0 0
    %5695 = vmatpush2.bf16.msra.mxu0 0
    %5696 = vmatprep.subr.bf16.mxu0 0
    %5697 = vmatpush2.bf16.msra.mxu0 0
    %5698 = vmatprep.subr.bf16.mxu0 0
    %5699 = vmatpush2.bf16.msra.mxu0 0
    %5700 = vmatprep.subr.bf16.mxu0 0
    %5701 = vmatpush2.bf16.msra.mxu0 0
    %5702 = vmatprep.subr.bf16.mxu0 0
    %5703 = vmatpush2.bf16.msra.mxu0 0
    %5704 = vmatprep.mubr.bf16.mxu0 0
    %5705 = vmatmul.mubr.bf16.gmra.mxu0 %v2945
    %v5706 = vpop.f32.mrf.mxu0
    %v5707 = vadd.f32 0.0, %v5706
    %v5708 = vpop.f32.mrf.mxu0
    %v5709 = vpop.f32.mrf.mxu0
    %v5710 = vadd.f32 0.0, %v5709
    %v5711 = vpop.f32.mrf.mxu0
    %5712 = vdwg.mxu0
    %v5713 = vadd.f32 %v5586, %v5707
    %v5714 = vadd.f32 %v5587, %v5710
    %v5715 = vadd.f32 %v5713, %v2996
    %v5716 = vadd.f32 %v5714, %v3001
    %v5717 = vpack.c.bf16 %v5716, %v5715
    %v5719 = vsel %vm3110, %v5717, 0
    %5721 = vmatprep.subr.bf16.mxu0 0
    %5722 = vmatpush1.bf16.msra.mxu0 0
    %5723 = vmatprep.subr.bf16.mxu0 %v3119
    %5724 = vmatpush1.bf16.msra.mxu0 %v3116
    %5725 = vmatprep.subr.bf16.mxu0 %v3087
    %5726 = vmatpush1.bf16.msra.mxu0 %v3086
    %5727 = vmatprep.subr.bf16.mxu0 %v3084
    %5728 = vmatpush1.bf16.msra.mxu0 %v3083
    %5729 = vmatprep.subr.bf16.mxu0 %v3081
    %5730 = vmatpush1.bf16.msra.mxu0 %v3080
    %5731 = vmatprep.subr.bf16.mxu0 %v3078
    %5732 = vmatpush1.bf16.msra.mxu0 %v3077
    %5733 = vmatprep.subr.bf16.mxu0 %v3075
    %5734 = vmatpush1.bf16.msra.mxu0 %v3074
    %5735 = vmatprep.subr.bf16.mxu0 %v3072
    %5736 = vmatpush1.bf16.msra.mxu0 %v3071
    %5737 = vmatprep.subr.bf16.mxu0 0
    %5738 = vmatpush2.bf16.msra.mxu0 0
    %5739 = vmatprep.subr.bf16.mxu0 0
    %5740 = vmatpush2.bf16.msra.mxu0 0
    %5741 = vmatprep.subr.bf16.mxu0 0
    %5742 = vmatpush2.bf16.msra.mxu0 0
    %5743 = vmatprep.subr.bf16.mxu0 0
    %5744 = vmatpush2.bf16.msra.mxu0 0
    %5745 = vmatprep.subr.bf16.mxu0 0
    %5746 = vmatpush2.bf16.msra.mxu0 0
    %5747 = vmatprep.subr.bf16.mxu0 0
    %5748 = vmatpush2.bf16.msra.mxu0 0
    %5749 = vmatprep.subr.bf16.mxu0 0
    %5750 = vmatpush2.bf16.msra.mxu0 0
    %5751 = vmatprep.subr.bf16.mxu0 0
    %5752 = vmatpush2.bf16.msra.mxu0 0
    %5753 = vmatprep.mubr.bf16.mxu0 0
    %5754 = vmatmul.mubr.bf16.gmra.mxu0 %v5719
    %v5755 = vpop.f32.mrf.mxu0
    %v5756 = vadd.f32 0.0, %v5755
    %v5757 = vpop.f32.mrf.mxu0
    %v5758 = vadd.f32 0.0, %v5757
    %v5759 = vpop.f32.mrf.mxu0
    %v5760 = vadd.f32 0.0, %v5759
    %v5761 = vpop.f32.mrf.mxu0
    %v5762 = vadd.f32 0.0, %v5761
    %5763 = vdwg.mxu0
    %5764 = vmatprep.subr.bf16.mxu0 0
    %5765 = vmatpush1.bf16.msra.mxu0 0
    %5766 = vmatprep.subr.bf16.mxu0 0
    %5767 = vmatpush1.bf16.msra.mxu0 %v3122
    %5768 = vmatprep.subr.bf16.mxu0 0
    %5769 = vmatpush1.bf16.msra.mxu0 %v3088
    %5770 = vmatprep.subr.bf16.mxu0 0
    %5771 = vmatpush1.bf16.msra.mxu0 %v3085
    %5772 = vmatprep.subr.bf16.mxu0 0
    %5773 = vmatpush1.bf16.msra.mxu0 %v3082
    %5774 = vmatprep.subr.bf16.mxu0 0
    %5775 = vmatpush1.bf16.msra.mxu0 %v3079
    %5776 = vmatprep.subr.bf16.mxu0 0
    %5777 = vmatpush1.bf16.msra.mxu0 %v3076
    %5778 = vmatprep.subr.bf16.mxu0 0
    %5779 = vmatpush1.bf16.msra.mxu0 %v3073
    %5780 = vmatprep.subr.bf16.mxu0 0
    %5781 = vmatpush2.bf16.msra.mxu0 0
    %5782 = vmatprep.subr.bf16.mxu0 0
    %5783 = vmatpush2.bf16.msra.mxu0 0
    %5784 = vmatprep.subr.bf16.mxu0 0
    %5785 = vmatpush2.bf16.msra.mxu0 0
    %5786 = vmatprep.subr.bf16.mxu0 0
    %5787 = vmatpush2.bf16.msra.mxu0 0
    %5788 = vmatprep.subr.bf16.mxu0 0
    %5789 = vmatpush2.bf16.msra.mxu0 0
    %5790 = vmatprep.subr.bf16.mxu0 0
    %5791 = vmatpush2.bf16.msra.mxu0 0
    %5792 = vmatprep.subr.bf16.mxu0 0
    %5793 = vmatpush2.bf16.msra.mxu0 0
    %5794 = vmatprep.subr.bf16.mxu0 0
    %5795 = vmatpush2.bf16.msra.mxu0 0
    %5796 = vmatprep.mubr.bf16.mxu0 0
    %5797 = vmatmul.mubr.bf16.gmra.mxu0 %v5719
    %v5798 = vpop.f32.mrf.mxu0
    %v5799 = vadd.f32 0.0, %v5798
    %v5800 = vpop.f32.mrf.mxu0
    %v5801 = vpop.f32.mrf.mxu0
    %v5802 = vadd.f32 0.0, %v5801
    %v5803 = vpop.f32.mrf.mxu0
    %5804 = vdwg.mxu0
    %v5805 = vadd.f32 %v4393, %v5756
    %v5806 = vadd.f32 %v4395, %v5758
    %v5807 = vadd.f32 %v4436, %v5799
    %v5808 = vadd.f32 %v4397, %v5760
    %v5809 = vadd.f32 %v4399, %v5762
    %v5810 = vadd.f32 %v4439, %v5802
    %v5811 = vmax.f32 %v5805, 0.0
    %v5812 = vmax.f32 %v5806, 0.0
    %v5813 = vmax.f32 %v5807, 0.0
    %v5814 = vmax.f32 %v5808, 0.0
    %v5815 = vmax.f32 %v5809, 0.0
    %v5816 = vmax.f32 %v5810, 0.0
    %v5817 = vpack.c.bf16 %v5814, %v5811
    %v5818 = vpack.c.bf16 %v5815, %v5812
    %v5819 = vpack.c.bf16 %v5816, %v5813
    %v5821 = vsel %vm3387, %v5819, 0
    %5823 = vmatprep.subr.bf16.mxu0 0
    %5824 = vmatpush1.bf16.msra.mxu0 %v3353
    %5825 = vmatprep.subr.bf16.mxu0 0
    %5826 = vmatpush1.bf16.msra.mxu0 %v3352
    %5827 = vmatprep.subr.bf16.mxu0 0
    %5828 = vmatpush1.bf16.msra.mxu0 %v3351
    %5829 = vmatprep.subr.bf16.mxu0 0
    %5830 = vmatpush1.bf16.msra.mxu0 %v3350
    %5831 = vmatprep.subr.bf16.mxu0 0
    %5832 = vmatpush1.bf16.msra.mxu0 %v3349
    %5833 = vmatprep.subr.bf16.mxu0 0
    %5834 = vmatpush1.bf16.msra.mxu0 %v3348
    %5835 = vmatprep.subr.bf16.mxu0 0
    %5836 = vmatpush1.bf16.msra.mxu0 %v3347
    %5837 = vmatprep.subr.bf16.mxu0 0
    %5838 = vmatpush1.bf16.msra.mxu0 %v3346
    %5839 = vmatprep.subr.bf16.mxu0 0
    %5840 = vmatpush2.bf16.msra.mxu0 %v3361
    %5841 = vmatprep.subr.bf16.mxu0 0
    %5842 = vmatpush2.bf16.msra.mxu0 %v3360
    %5843 = vmatprep.subr.bf16.mxu0 0
    %5844 = vmatpush2.bf16.msra.mxu0 %v3359
    %5845 = vmatprep.subr.bf16.mxu0 0
    %5846 = vmatpush2.bf16.msra.mxu0 %v3358
    %5847 = vmatprep.subr.bf16.mxu0 0
    %5848 = vmatpush2.bf16.msra.mxu0 %v3357
    %5849 = vmatprep.subr.bf16.mxu0 0
    %5850 = vmatpush2.bf16.msra.mxu0 %v3356
    %5851 = vmatprep.subr.bf16.mxu0 0
    %5852 = vmatpush2.bf16.msra.mxu0 %v3355
    %5853 = vmatprep.subr.bf16.mxu0 0
    %5854 = vmatpush2.bf16.msra.mxu0 %v3354
    %5855 = vmatprep.mubr.bf16.mxu0 %v5818
    %5856 = vmatmul.mubr.bf16.gmra.mxu0 %v5817
    %v5857 = vpop.f32.mrf.mxu0
    %v5858 = vadd.f32 0.0, %v5857
    %v5859 = vpop.f32.mrf.mxu0
    %v5860 = vpop.f32.mrf.mxu0
    %v5861 = vadd.f32 0.0, %v5860
    %v5862 = vpop.f32.mrf.mxu0
    %5863 = vdwg.mxu0
    %5864 = vmatprep.subr.bf16.mxu0 0
    %5865 = vmatpush1.bf16.msra.mxu0 0
    %5866 = vmatprep.subr.bf16.mxu0 0
    %5867 = vmatpush1.bf16.msra.mxu0 0
    %5868 = vmatprep.subr.bf16.mxu0 0
    %5869 = vmatpush1.bf16.msra.mxu0 0
    %5870 = vmatprep.subr.bf16.mxu0 0
    %5871 = vmatpush1.bf16.msra.mxu0 %v3392
    %5872 = vmatprep.subr.bf16.mxu0 0
    %5873 = vmatpush1.bf16.msra.mxu0 %v3365
    %5874 = vmatprep.subr.bf16.mxu0 0
    %5875 = vmatpush1.bf16.msra.mxu0 %v3364
    %5876 = vmatprep.subr.bf16.mxu0 0
    %5877 = vmatpush1.bf16.msra.mxu0 %v3363
    %5878 = vmatprep.subr.bf16.mxu0 0
    %5879 = vmatpush1.bf16.msra.mxu0 %v3362
    %5880 = vmatprep.subr.bf16.mxu0 0
    %5881 = vmatpush2.bf16.msra.mxu0 0
    %5882 = vmatprep.subr.bf16.mxu0 0
    %5883 = vmatpush2.bf16.msra.mxu0 0
    %5884 = vmatprep.subr.bf16.mxu0 0
    %5885 = vmatpush2.bf16.msra.mxu0 0
    %5886 = vmatprep.subr.bf16.mxu0 0
    %5887 = vmatpush2.bf16.msra.mxu0 0
    %5888 = vmatprep.subr.bf16.mxu0 0
    %5889 = vmatpush2.bf16.msra.mxu0 0
    %5890 = vmatprep.subr.bf16.mxu0 0
    %5891 = vmatpush2.bf16.msra.mxu0 0
    %5892 = vmatprep.subr.bf16.mxu0 0
    %5893 = vmatpush2.bf16.msra.mxu0 0
    %5894 = vmatprep.subr.bf16.mxu0 0
    %5895 = vmatpush2.bf16.msra.mxu0 0
    %5896 = vmatprep.mubr.bf16.mxu0 0
    %5897 = vmatmul.mubr.bf16.gmra.mxu0 %v5821
    %v5898 = vpop.f32.mrf.mxu0
    %v5899 = vadd.f32 %v5858, %v5898
    %v5900 = vpop.f32.mrf.mxu0
    %v5901 = vpop.f32.mrf.mxu0
    %v5902 = vadd.f32 %v5861, %v5901
    %v5903 = vpop.f32.mrf.mxu0
    %5904 = vdwg.mxu0
    %5905 = vmatprep.subr.bf16.mxu0 0
    %5906 = vmatpush1.bf16.msra.mxu0 %v3607
    %5907 = vmatprep.subr.bf16.mxu0 0
    %5908 = vmatpush1.bf16.msra.mxu0 %v3606
    %5909 = vmatprep.subr.bf16.mxu0 0
    %5910 = vmatpush1.bf16.msra.mxu0 %v3605
    %5911 = vmatprep.subr.bf16.mxu0 0
    %5912 = vmatpush1.bf16.msra.mxu0 %v3604
    %5913 = vmatprep.subr.bf16.mxu0 0
    %5914 = vmatpush1.bf16.msra.mxu0 %v3603
    %5915 = vmatprep.subr.bf16.mxu0 0
    %5916 = vmatpush1.bf16.msra.mxu0 %v3602
    %5917 = vmatprep.subr.bf16.mxu0 0
    %5918 = vmatpush1.bf16.msra.mxu0 %v3601
    %5919 = vmatprep.subr.bf16.mxu0 0
    %5920 = vmatpush1.bf16.msra.mxu0 %v3600
    %5921 = vmatprep.subr.bf16.mxu0 0
    %5922 = vmatpush2.bf16.msra.mxu0 %v3615
    %5923 = vmatprep.subr.bf16.mxu0 0
    %5924 = vmatpush2.bf16.msra.mxu0 %v3614
    %5925 = vmatprep.subr.bf16.mxu0 0
    %5926 = vmatpush2.bf16.msra.mxu0 %v3613
    %5927 = vmatprep.subr.bf16.mxu0 0
    %5928 = vmatpush2.bf16.msra.mxu0 %v3612
    %5929 = vmatprep.subr.bf16.mxu0 0
    %5930 = vmatpush2.bf16.msra.mxu0 %v3611
    %5931 = vmatprep.subr.bf16.mxu0 0
    %5932 = vmatpush2.bf16.msra.mxu0 %v3610
    %5933 = vmatprep.subr.bf16.mxu0 0
    %5934 = vmatpush2.bf16.msra.mxu0 %v3609
    %5935 = vmatprep.subr.bf16.mxu0 0
    %5936 = vmatpush2.bf16.msra.mxu0 %v3608
    %5937 = vmatprep.mubr.bf16.mxu0 %v5818
    %5938 = vmatmul.mubr.bf16.gmra.mxu0 %v5817
    %v5939 = vpop.f32.mrf.mxu0
    %v5940 = vadd.f32 0.0, %v5939
    %v5941 = vpop.f32.mrf.mxu0
    %v5942 = vpop.f32.mrf.mxu0
    %v5943 = vadd.f32 0.0, %v5942
    %v5944 = vpop.f32.mrf.mxu0
    %5945 = vdwg.mxu0
    %5946 = vmatprep.subr.bf16.mxu0 0
    %5947 = vmatpush1.bf16.msra.mxu0 0
    %5948 = vmatprep.subr.bf16.mxu0 0
    %5949 = vmatpush1.bf16.msra.mxu0 0
    %5950 = vmatprep.subr.bf16.mxu0 0
    %5951 = vmatpush1.bf16.msra.mxu0 0
    %5952 = vmatprep.subr.bf16.mxu0 0
    %5953 = vmatpush1.bf16.msra.mxu0 %v3642
    %5954 = vmatprep.subr.bf16.mxu0 0
    %5955 = vmatpush1.bf16.msra.mxu0 %v3619
    %5956 = vmatprep.subr.bf16.mxu0 0
    %5957 = vmatpush1.bf16.msra.mxu0 %v3618
    %5958 = vmatprep.subr.bf16.mxu0 0
    %5959 = vmatpush1.bf16.msra.mxu0 %v3617
    %5960 = vmatprep.subr.bf16.mxu0 0
    %5961 = vmatpush1.bf16.msra.mxu0 %v3616
    %5962 = vmatprep.subr.bf16.mxu0 0
    %5963 = vmatpush2.bf16.msra.mxu0 0
    %5964 = vmatprep.subr.bf16.mxu0 0
    %5965 = vmatpush2.bf16.msra.mxu0 0
    %5966 = vmatprep.subr.bf16.mxu0 0
    %5967 = vmatpush2.bf16.msra.mxu0 0
    %5968 = vmatprep.subr.bf16.mxu0 0
    %5969 = vmatpush2.bf16.msra.mxu0 0
    %5970 = vmatprep.subr.bf16.mxu0 0
    %5971 = vmatpush2.bf16.msra.mxu0 0
    %5972 = vmatprep.subr.bf16.mxu0 0
    %5973 = vmatpush2.bf16.msra.mxu0 0
    %5974 = vmatprep.subr.bf16.mxu0 0
    %5975 = vmatpush2.bf16.msra.mxu0 0
    %5976 = vmatprep.subr.bf16.mxu0 0
    %5977 = vmatpush2.bf16.msra.mxu0 0
    %5978 = vmatprep.mubr.bf16.mxu0 0
    %5979 = vmatmul.mubr.bf16.gmra.mxu0 %v5821
    %v5980 = vpop.f32.mrf.mxu0
    %v5981 = vadd.f32 %v5940, %v5980
    %v5982 = vpop.f32.mrf.mxu0
    %v5983 = vpop.f32.mrf.mxu0
    %v5984 = vadd.f32 %v5943, %v5983
    %v5985 = vpop.f32.mrf.mxu0
    %5986 = vdwg.mxu0
    %v5987 = vmax.f32 %v5899, %v5981
    %v5988 = vmax.f32 %v5902, %v5984
    %5989 = vmatprep.subr.bf16.mxu0 0
    %5990 = vmatpush1.bf16.msra.mxu0 %v3859
    %5991 = vmatprep.subr.bf16.mxu0 0
    %5992 = vmatpush1.bf16.msra.mxu0 %v3858
    %5993 = vmatprep.subr.bf16.mxu0 0
    %5994 = vmatpush1.bf16.msra.mxu0 %v3857
    %5995 = vmatprep.subr.bf16.mxu0 0
    %5996 = vmatpush1.bf16.msra.mxu0 %v3856
    %5997 = vmatprep.subr.bf16.mxu0 0
    %5998 = vmatpush1.bf16.msra.mxu0 %v3855
    %5999 = vmatprep.subr.bf16.mxu0 0
    %6000 = vmatpush1.bf16.msra.mxu0 %v3854
    %6001 = vmatprep.subr.bf16.mxu0 0
    %6002 = vmatpush1.bf16.msra.mxu0 %v3853
    %6003 = vmatprep.subr.bf16.mxu0 0
    %6004 = vmatpush1.bf16.msra.mxu0 %v3852
    %6005 = vmatprep.subr.bf16.mxu0 0
    %6006 = vmatpush2.bf16.msra.mxu0 %v3867
    %6007 = vmatprep.subr.bf16.mxu0 0
    %6008 = vmatpush2.bf16.msra.mxu0 %v3866
    %6009 = vmatprep.subr.bf16.mxu0 0
    %6010 = vmatpush2.bf16.msra.mxu0 %v3865
    %6011 = vmatprep.subr.bf16.mxu0 0
    %6012 = vmatpush2.bf16.msra.mxu0 %v3864
    %6013 = vmatprep.subr.bf16.mxu0 0
    %6014 = vmatpush2.bf16.msra.mxu0 %v3863
    %6015 = vmatprep.subr.bf16.mxu0 0
    %6016 = vmatpush2.bf16.msra.mxu0 %v3862
    %6017 = vmatprep.subr.bf16.mxu0 0
    %6018 = vmatpush2.bf16.msra.mxu0 %v3861
    %6019 = vmatprep.subr.bf16.mxu0 0
    %6020 = vmatpush2.bf16.msra.mxu0 %v3860
    %6021 = vmatprep.mubr.bf16.mxu0 %v5818
    %6022 = vmatmul.mubr.bf16.gmra.mxu0 %v5817
    %v6023 = vpop.f32.mrf.mxu0
    %v6024 = vadd.f32 0.0, %v6023
    %v6025 = vpop.f32.mrf.mxu0
    %v6026 = vpop.f32.mrf.mxu0
    %v6027 = vadd.f32 0.0, %v6026
    %v6028 = vpop.f32.mrf.mxu0
    %6029 = vdwg.mxu0
    %6030 = vmatprep.subr.bf16.mxu0 0
    %6031 = vmatpush1.bf16.msra.mxu0 0
    %6032 = vmatprep.subr.bf16.mxu0 0
    %6033 = vmatpush1.bf16.msra.mxu0 0
    %6034 = vmatprep.subr.bf16.mxu0 0
    %6035 = vmatpush1.bf16.msra.mxu0 0
    %6036 = vmatprep.subr.bf16.mxu0 0
    %6037 = vmatpush1.bf16.msra.mxu0 %v3894
    %6038 = vmatprep.subr.bf16.mxu0 0
    %6039 = vmatpush1.bf16.msra.mxu0 %v3871
    %6040 = vmatprep.subr.bf16.mxu0 0
    %6041 = vmatpush1.bf16.msra.mxu0 %v3870
    %6042 = vmatprep.subr.bf16.mxu0 0
    %6043 = vmatpush1.bf16.msra.mxu0 %v3869
    %6044 = vmatprep.subr.bf16.mxu0 0
    %6045 = vmatpush1.bf16.msra.mxu0 %v3868
    %6046 = vmatprep.subr.bf16.mxu0 0
    %6047 = vmatpush2.bf16.msra.mxu0 0
    %6048 = vmatprep.subr.bf16.mxu0 0
    %6049 = vmatpush2.bf16.msra.mxu0 0
    %6050 = vmatprep.subr.bf16.mxu0 0
    %6051 = vmatpush2.bf16.msra.mxu0 0
    %6052 = vmatprep.subr.bf16.mxu0 0
    %6053 = vmatpush2.bf16.msra.mxu0 0
    %6054 = vmatprep.subr.bf16.mxu0 0
    %6055 = vmatpush2.bf16.msra.mxu0 0
    %6056 = vmatprep.subr.bf16.mxu0 0
    %6057 = vmatpush2.bf16.msra.mxu0 0
    %6058 = vmatprep.subr.bf16.mxu0 0
    %6059 = vmatpush2.bf16.msra.mxu0 0
    %6060 = vmatprep.subr.bf16.mxu0 0
    %6061 = vmatpush2.bf16.msra.mxu0 0
    %6062 = vmatprep.mubr.bf16.mxu0 0
    %6063 = vmatmul.mubr.bf16.gmra.mxu0 %v5821
    %v6064 = vpop.f32.mrf.mxu0
    %v6065 = vadd.f32 %v6024, %v6064
    %v6066 = vpop.f32.mrf.mxu0
    %v6067 = vpop.f32.mrf.mxu0
    %v6068 = vadd.f32 %v6027, %v6067
    %v6069 = vpop.f32.mrf.mxu0
    %6070 = vdwg.mxu0
    %v6071 = vmax.f32 %v5987, %v6065
    %v6072 = vmax.f32 %v5988, %v6068
    %6073 = vmatprep.subr.bf16.mxu0 0
    %6074 = vmatpush1.bf16.msra.mxu0 %v4111
    %6075 = vmatprep.subr.bf16.mxu0 0
    %6076 = vmatpush1.bf16.msra.mxu0 %v4110
    %6077 = vmatprep.subr.bf16.mxu0 0
    %6078 = vmatpush1.bf16.msra.mxu0 %v4109
    %6079 = vmatprep.subr.bf16.mxu0 0
    %6080 = vmatpush1.bf16.msra.mxu0 %v4108
    %6081 = vmatprep.subr.bf16.mxu0 0
    %6082 = vmatpush1.bf16.msra.mxu0 %v4107
    %6083 = vmatprep.subr.bf16.mxu0 0
    %6084 = vmatpush1.bf16.msra.mxu0 %v4106
    %6085 = vmatprep.subr.bf16.mxu0 0
    %6086 = vmatpush1.bf16.msra.mxu0 %v4105
    %6087 = vmatprep.subr.bf16.mxu0 0
    %6088 = vmatpush1.bf16.msra.mxu0 %v4104
    %6089 = vmatprep.subr.bf16.mxu0 0
    %6090 = vmatpush2.bf16.msra.mxu0 %v4119
    %6091 = vmatprep.subr.bf16.mxu0 0
    %6092 = vmatpush2.bf16.msra.mxu0 %v4118
    %6093 = vmatprep.subr.bf16.mxu0 0
    %6094 = vmatpush2.bf16.msra.mxu0 %v4117
    %6095 = vmatprep.subr.bf16.mxu0 0
    %6096 = vmatpush2.bf16.msra.mxu0 %v4116
    %6097 = vmatprep.subr.bf16.mxu0 0
    %6098 = vmatpush2.bf16.msra.mxu0 %v4115
    %6099 = vmatprep.subr.bf16.mxu0 0
    %6100 = vmatpush2.bf16.msra.mxu0 %v4114
    %6101 = vmatprep.subr.bf16.mxu0 0
    %6102 = vmatpush2.bf16.msra.mxu0 %v4113
    %6103 = vmatprep.subr.bf16.mxu0 0
    %6104 = vmatpush2.bf16.msra.mxu0 %v4112
    %6105 = vmatprep.mubr.bf16.mxu0 %v5818
    %6106 = vmatmul.mubr.bf16.gmra.mxu0 %v5817
    %v6107 = vpop.f32.mrf.mxu0
    %v6108 = vadd.f32 0.0, %v6107
    %v6109 = vpop.f32.mrf.mxu0
    %v6110 = vpop.f32.mrf.mxu0
    %v6111 = vadd.f32 0.0, %v6110
    %v6112 = vpop.f32.mrf.mxu0
    %6113 = vdwg.mxu0
    %6114 = vmatprep.subr.bf16.mxu0 0
    %6115 = vmatpush1.bf16.msra.mxu0 0
    %6116 = vmatprep.subr.bf16.mxu0 0
    %6117 = vmatpush1.bf16.msra.mxu0 0
    %6118 = vmatprep.subr.bf16.mxu0 0
    %6119 = vmatpush1.bf16.msra.mxu0 0
    %6120 = vmatprep.subr.bf16.mxu0 0
    %6121 = vmatpush1.bf16.msra.mxu0 %v4146
    %6122 = vmatprep.subr.bf16.mxu0 0
    %6123 = vmatpush1.bf16.msra.mxu0 %v4123
    %6124 = vmatprep.subr.bf16.mxu0 0
    %6125 = vmatpush1.bf16.msra.mxu0 %v4122
    %6126 = vmatprep.subr.bf16.mxu0 0
    %6127 = vmatpush1.bf16.msra.mxu0 %v4121
    %6128 = vmatprep.subr.bf16.mxu0 0
    %6129 = vmatpush1.bf16.msra.mxu0 %v4120
    %6130 = vmatprep.subr.bf16.mxu0 0
    %6131 = vmatpush2.bf16.msra.mxu0 0
    %6132 = vmatprep.subr.bf16.mxu0 0
    %6133 = vmatpush2.bf16.msra.mxu0 0
    %6134 = vmatprep.subr.bf16.mxu0 0
    %6135 = vmatpush2.bf16.msra.mxu0 0
    %6136 = vmatprep.subr.bf16.mxu0 0
    %6137 = vmatpush2.bf16.msra.mxu0 0
    %6138 = vmatprep.subr.bf16.mxu0 0
    %6139 = vmatpush2.bf16.msra.mxu0 0
    %6140 = vmatprep.subr.bf16.mxu0 0
    %6141 = vmatpush2.bf16.msra.mxu0 0
    %6142 = vmatprep.subr.bf16.mxu0 0
    %6143 = vmatpush2.bf16.msra.mxu0 0
    %6144 = vmatprep.subr.bf16.mxu0 0
    %6145 = vmatpush2.bf16.msra.mxu0 0
    %6146 = vmatprep.mubr.bf16.mxu0 0
    %6147 = vmatmul.mubr.bf16.gmra.mxu0 %v5821
    %v6148 = vpop.f32.mrf.mxu0
    %v6149 = vadd.f32 %v6108, %v6148
    %v6150 = vpop.f32.mrf.mxu0
    %v6151 = vpop.f32.mrf.mxu0
    %v6152 = vadd.f32 %v6111, %v6151
    %v6153 = vpop.f32.mrf.mxu0
    %6154 = vdwg.mxu0
    %v6155 = vmax.f32 %v6071, %v6149
    %v6156 = vmax.f32 %v6072, %v6152
    %v6157 = vpack.c.bf16 %v6156, %v6155
    %v6159 = vsel %vm3110, %v6157, 0
    %6161 = vmatprep.subr.bf16.mxu0 0
    %6162 = vmatpush1.bf16.msra.mxu0 0
    %6163 = vmatprep.subr.bf16.mxu0 0
    %6164 = vmatpush1.bf16.msra.mxu0 %v4276
    %6165 = vmatprep.subr.bf16.mxu0 0
    %6166 = vmatpush1.bf16.msra.mxu0 %v4264
    %6167 = vmatprep.subr.bf16.mxu0 0
    %6168 = vmatpush1.bf16.msra.mxu0 %v4263
    %6169 = vmatprep.subr.bf16.mxu0 0
    %6170 = vmatpush1.bf16.msra.mxu0 %v4262
    %6171 = vmatprep.subr.bf16.mxu0 0
    %6172 = vmatpush1.bf16.msra.mxu0 %v4261
    %6173 = vmatprep.subr.bf16.mxu0 0
    %6174 = vmatpush1.bf16.msra.mxu0 %v4260
    %6175 = vmatprep.subr.bf16.mxu0 0
    %6176 = vmatpush1.bf16.msra.mxu0 %v4259
    %6177 = vmatprep.subr.bf16.mxu0 0
    %6178 = vmatpush2.bf16.msra.mxu0 0
    %6179 = vmatprep.subr.bf16.mxu0 0
    %6180 = vmatpush2.bf16.msra.mxu0 0
    %6181 = vmatprep.subr.bf16.mxu0 0
    %6182 = vmatpush2.bf16.msra.mxu0 0
    %6183 = vmatprep.subr.bf16.mxu0 0
    %6184 = vmatpush2.bf16.msra.mxu0 0
    %6185 = vmatprep.subr.bf16.mxu0 0
    %6186 = vmatpush2.bf16.msra.mxu0 0
    %6187 = vmatprep.subr.bf16.mxu0 0
    %6188 = vmatpush2.bf16.msra.mxu0 0
    %6189 = vmatprep.subr.bf16.mxu0 0
    %6190 = vmatpush2.bf16.msra.mxu0 0
    %6191 = vmatprep.subr.bf16.mxu0 0
    %6192 = vmatpush2.bf16.msra.mxu0 0
    %6193 = vmatprep.mubr.bf16.mxu0 0
    %6194 = vmatmul.mubr.bf16.gmra.mxu0 %v6159
    %v6195 = vpop.f32.mrf.mxu0
    %v6196 = vadd.f32 0.0, %v6195
    %v6197 = vpop.f32.mrf.mxu0
    %v6198 = vpop.f32.mrf.mxu0
    %v6199 = vadd.f32 0.0, %v6198
    %v6200 = vpop.f32.mrf.mxu0
    %6201 = vdwg.mxu0
    %v6202 = vmul.f32 %v6196, %v99
    %v6203 = vmul.f32 %v6199, %v100
    %v6204 = vsel %vm4321, %v6202, 0.0
    %v6205 = vsel %vm4321, %v6203, 0.0
    %v6206 = vadd.f32 %v6204, %v6205
    %v6207 = vrot.slane %v6206, 4
    %v6208 = vadd.f32 %v6206, %v6207
    %v6209 = vrot.slane %v6208, 2
    %v6210 = vadd.f32 %v6208, %v6209
    %v6211 = vrot.slane %v6210, 1
    %v6212 = vadd.f32 %v6210, %v6211
    %v6213 = vsel %vm532, %v4330, %v6212
    %v6215 = vlaneseq
    %v6216 = vshrl.u32 %v6215, 7
    %v6217 = vsub.s32 0, %v6216
    %v6218 = vrot.slane %v107, %v6217
    %v6221 = vsel %vm4321, %v6213, 0
    %6223 = vmatprep.subr.mxu0 0.0
    %6224 = vmatpush1.msra.mxu0 0.0
    %6225 = vmatprep.subr.mxu0 0.0
    %6226 = vmatpush1.msra.mxu0 0.0
    %6227 = vmatprep.subr.mxu0 0.0
    %6228 = vmatpush1.msra.mxu0 0.0
    %6229 = vmatprep.subr.mxu0 0.0
    %6230 = vmatpush1.msra.mxu0 0.0
    %6231 = vmatprep.subr.mxu0 0.0
    %6232 = vmatpush1.msra.mxu0 0.0
    %6233 = vmatprep.subr.mxu0 0.0
    %6234 = vmatpush1.msra.mxu0 0.0
    %6235 = vmatprep.subr.mxu0 0.0
    %6236 = vmatpush1.msra.mxu0 0.0
    %6237 = vmatprep.subr.mxu0 0.0
    %6238 = vmatpush1.msra.mxu0 0.0
    %6239 = vmatprep.subr.mxu0 0.0
    %6240 = vmatpush1.msra.mxu0 0.0
    %6241 = vmatprep.subr.mxu0 0.0
    %6242 = vmatpush1.msra.mxu0 0.0
    %6243 = vmatprep.subr.mxu0 0.0
    %6244 = vmatpush1.msra.mxu0 %v106
    %6245 = vmatprep.subr.mxu0 0.0
    %6246 = vmatpush1.msra.mxu0 %v105
    %6247 = vmatprep.subr.mxu0 0.0
    %6248 = vmatpush1.msra.mxu0 %v104
    %6249 = vmatprep.subr.mxu0 0.0
    %6250 = vmatpush1.msra.mxu0 %v103
    %6251 = vmatprep.subr.mxu0 0.0
    %6252 = vmatpush1.msra.mxu0 %v102
    %6253 = vmatprep.subr.mxu0 0.0
    %6254 = vmatpush1.msra.mxu0 %v101
    %6255 = vmatprep.subr.mxu0 0.0
    %6256 = vmatpush2.msra.mxu0 0.0
    %6257 = vmatprep.subr.mxu0 0.0
    %6258 = vmatpush2.msra.mxu0 0.0
    %6259 = vmatprep.subr.mxu0 0.0
    %6260 = vmatpush2.msra.mxu0 0.0
    %6261 = vmatprep.subr.mxu0 0.0
    %6262 = vmatpush2.msra.mxu0 0.0
    %6263 = vmatprep.subr.mxu0 0.0
    %6264 = vmatpush2.msra.mxu0 0.0
    %6265 = vmatprep.subr.mxu0 0.0
    %6266 = vmatpush2.msra.mxu0 0.0
    %6267 = vmatprep.subr.mxu0 0.0
    %6268 = vmatpush2.msra.mxu0 0.0
    %6269 = vmatprep.subr.mxu0 0.0
    %6270 = vmatpush2.msra.mxu0 0.0
    %6271 = vmatprep.subr.mxu0 0.0
    %6272 = vmatpush2.msra.mxu0 0.0
    %6273 = vmatprep.subr.mxu0 0.0
    %6274 = vmatpush2.msra.mxu0 0.0
    %6275 = vmatprep.subr.mxu0 0.0
    %6276 = vmatpush2.msra.mxu0 0.0
    %6277 = vmatprep.subr.mxu0 0.0
    %6278 = vmatpush2.msra.mxu0 0.0
    %6279 = vmatprep.subr.mxu0 0.0
    %6280 = vmatpush2.msra.mxu0 0.0
    %6281 = vmatprep.subr.mxu0 0.0
    %6282 = vmatpush2.msra.mxu0 0.0
    %6283 = vmatprep.subr.mxu0 0.0
    %6284 = vmatpush2.msra.mxu0 0.0
    %6285 = vmatprep.subr.mxu0 0.0
    %6286 = vmatpush2.msra.mxu0 0.0
    %6287 = vmatprep.mubr.f32.mxu0 0.0
    %6288 = vmatmul.mubr.f32.gmra.mxu0 %v6221
    %v6289 = vpop.f32.mrf.mxu0
    %v6290 = vadd.f32 %v6218, %v6289
    %v6291 = vpop.f32.mrf.mxu0
    %6292 = vdwg.mxu0
    %vm6293 = vcmask 17408
    %6294 = vst.msk [vmem:[#allocation2] sm:$0x3] %vm6293, %v6290
    // Predicated region
    $region62: #{two_inputs_forward.1} parent=1 // pred_check
      _
    $region63: #{two_inputs_forward.1} parent=1 // pred_check_branch
      %6296 = sbr.rel (0) target = $region65
    $region64: #{two_inputs_forward.1} parent=1 // pred_region
      %s6298 = ssub.s32 32, 32
      %6299 = vsyncadd [#allocation3], %s6298
      %s6301 = sshll.u32 [#allocation2], 4
      %s6302 = int_to_ptr.vmem [resolvable:$true] %s6301
      %6304 = dma.vmem_to_hbm [thread:$0]  %s6302, 32, %s15, [#allocation3]
    $region65: #{two_inputs_forward.1} parent=1 // pred_fallthru
      _
    // Predicated region
    $region66: #{two_inputs_forward.1} parent=1 // pred_check
      _
    $region67: #{two_inputs_forward.1} parent=1 // pred_check_branch
      %6306 = sbr.rel (0) target = $region69
    $region68: #{two_inputs_forward.1} parent=1 // pred_region
      %6307 = dma.done [#allocation3], 32
    $region69: #{two_inputs_forward.1} parent=1 // pred_fallthru
      _
    %6308 = vsyncpa [#allocation3], 1

</llo_original>
